<compile_context>
chip_gen: v7x
topology: tpu7x:2x2x1
jax: 0.10.0
libtpu: 0.0.40
codegen_flags: <defaults>
</compile_context>

<pallas_src>
import functools
import math

import jax
import jax.numpy as jnp
from jax import lax
from jax.experimental import pallas as pl
from jax.experimental.pallas import tpu as pltpu

LN_EPS = 1e-6
LN_ALPHA = 1.0   # nn.Parameter(torch.ones(1))
LN_BETA = 0.0    # nn.Parameter(torch.zeros(1))
NEG_INF = -1e20


# ----------------------------------------------------------------------------
# In-kernel helpers (operate on VMEM-resident values)
# ----------------------------------------------------------------------------
def _layernorm(z):
    # Matches the reference: alpha * (x - mean) / (x.std(unbiased) + eps) + beta
    n = z.shape[-1]
    mean = jnp.mean(z, axis=-1, keepdims=True)
    c = z - mean
    var = jnp.sum(c * c, axis=-1, keepdims=True) * (1.0 / (n - 1))   # unbiased
    inv = pl.reciprocal(jnp.sqrt(var) + LN_EPS, approx=True)         # EUP slot
    return LN_ALPHA * (c * inv) + LN_BETA


def _mm(a, w):
    # bf16 MXU operands, f32 accumulation.
    return jnp.dot(a.astype(jnp.bfloat16), w.astype(jnp.bfloat16),
                   preferred_element_type=jnp.float32)


def _attention(q, k, v, keep_mask, heads, Bt, Sq, Skv):
    """Multi-head attention core.

    q: (Bt*Sq, E) f32, k/v: (Bt*Skv, E) f32,
    keep_mask: bool, broadcastable to (Bt, Sq, Skv) (True = keep).
    Returns (Bt*Sq, E) f32 (pre output-projection head merge).
    """
    E = q.shape[-1]
    Dh = E // heads
    scale = 1.0 / math.sqrt(Dh)

    # One reshape + bf16 cast per tensor, hoisted out of the per-head loop
    # (f32 reshape first: per-batch row count stays aligned to the f32 tile).
    qb = q.reshape(Bt, Sq, E).astype(jnp.bfloat16)
    kb = k.reshape(Bt, Skv, E).astype(jnp.bfloat16)
    vb = v.reshape(Bt, Skv, E).astype(jnp.bfloat16)

    head_outs = []
    for h in range(heads):                       # statically unrolled
        sl = slice(h * Dh, (h + 1) * Dh)
        # scores: batched Q K^T via dot_general contracting last dims.
        s = lax.dot_general(
            qb[..., sl], kb[..., sl],
            dimension_numbers=(((2,), (2,)), ((0,), (0,))),
            preferred_element_type=jnp.float32) * scale            # (Bt,Sq,Skv)
        s = jnp.where(keep_mask, s, NEG_INF)
        s = s - jnp.max(s, axis=-1, keepdims=True)
        p = jnp.exp(s)
        p = p * pl.reciprocal(jnp.sum(p, axis=-1, keepdims=True), approx=True)
        head_outs.append(
            lax.dot_general(p.astype(jnp.bfloat16), vb[..., sl],
                            dimension_numbers=(((2,), (1,)), ((0,), (0,))),
                            preferred_element_type=jnp.float32))    # (Bt,Sq,Dh)

    attn = jnp.concatenate(head_outs, axis=-1)                      # (Bt,Sq,E)
    return attn.reshape(Bt * Sq, E)


# ----------------------------------------------------------------------------
# Fused decoder-block kernel (one grid step == one block of Bt batch elements)
# ----------------------------------------------------------------------------
def _decoder_block_kernel(x_ref, enc_ref, emask_ref,
                          sa_wqkv_ref, sa_bqkv_ref, sa_wo_ref, sa_bo_ref,
                          ca_wqkv_ref, ca_bqkv_ref, ca_wo_ref, ca_bo_ref,
                          ff_w1_ref, ff_b1_ref, ff_w2_ref, ff_b2_ref,
                          o_ref, *, heads, ff_chunk, exact_gelu):
    Bt, S, E = x_ref.shape
    S_enc = enc_ref.shape[1]
    M = Bt * S

    # Fold batch into the matmul M dimension (review): (Bt,S,E) -> (Bt*S,E).
    x = x_ref[...].reshape(M, E)
    enc = enc_ref[...].reshape(Bt * S_enc, E)

    # Masks, computed once (hoisted out of the per-head loops).
    row = lax.broadcasted_iota(jnp.int32, (S, S), 0)
    col = lax.broadcasted_iota(jnp.int32, (S, S), 1)
    causal_keep = row >= col                                     # in-kernel, no HBM
    enc_keep = emask_ref[...].reshape(Bt, 1, S_enc) != 0.0       # per-batch padding

    # --- residual 1: pre-norm + causal self-attention -----------------------
    xn = _layernorm(x)
    qkv = _mm(xn, sa_wqkv_ref[...]) + sa_bqkv_ref[...]           # one MXU pass
    attn = _attention(qkv[:, :E], qkv[:, E:2 * E], qkv[:, 2 * E:],
                      causal_keep, heads, Bt, S, S)
    x = x + (_mm(attn, sa_wo_ref[...]) + sa_bo_ref[...])

    # --- residual 2: pre-norm + cross-attention over encoder output ---------
    xn = _layernorm(x)
    q = _mm(xn, ca_wqkv_ref[:, :E]) + ca_bqkv_ref[:, :E]
    kv = _mm(enc, ca_wqkv_ref[:, E:]) + ca_bqkv_ref[:, E:]       # fused K|V pass
    attn = _attention(q, kv[:, :E], kv[:, E:],
                      enc_keep, heads, Bt, S, S_enc)
    x = x + (_mm(attn, ca_wo_ref[...]) + ca_bo_ref[...])

    # --- residual 3: pre-norm + feed-forward (hidden dim processed in chunks)
    xn = _layernorm(x).astype(jnp.bfloat16)
    F = ff_w1_ref.shape[1]
    for lo in range(0, F, ff_chunk):                             # static K-loop
        hi = min(F, lo + ff_chunk)
        h = jnp.dot(xn, ff_w1_ref[:, lo:hi],
                    preferred_element_type=jnp.float32) + ff_b1_ref[:, lo:hi]
        h = jax.nn.gelu(h, approximate=not exact_gelu)
        x = x + jnp.dot(h.astype(jnp.bfloat16), ff_w2_ref[lo:hi, :],
                        preferred_element_type=jnp.float32)
    x = x + ff_b2_ref[...]

    o_ref[...] = x.reshape(Bt, S, E).astype(o_ref.dtype)


# ----------------------------------------------------------------------------
# Wrapper: grid / BlockSpecs / VMEM budgeting
# ----------------------------------------------------------------------------
def _vmem_capacity_bytes():
    try:
        return int(pltpu.get_tpu_info().vmem_capacity_bytes)
    except Exception:                                    # pragma: no cover
        return 64 * 1024 * 1024                          # v7x per-TC VMEM (safe)


def _weight_spec(arr, single_buffer):
    nd = arr.ndim
    kwargs = {}
    if single_buffer:
        # Block index never changes -> single buffer (halves weight VMEM; v7x).
        kwargs["pipeline_mode"] = pl.Buffered(1)
    return pl.BlockSpec(arr.shape, lambda b, _nd=nd: (0,) * _nd, **kwargs)


def decoder_block(x, encoder_output, encoder_mask, kparams, heads, *,
                  batch_tile=None, ff_chunk=1024,
                  single_buffer_weights=True, exact_gelu=True):
    B, S, E = x.shape
    S_enc = encoder_output.shape[1]
    assert E % heads == 0
    sa, ca, ff = kparams["self_attn"], kparams["cross_attn"], kparams["ff"]
    F = ff["w1"].shape[1]

    # Batch tile: fold Bt batch elements into the matmul M dimension.
    if batch_tile is None:
        if S % 8 == 0 and S_enc % 8 == 0:
            batch_tile = max(1, min(B, max(1, 1024 // S)))
        else:
            batch_tile = 1
    while B % batch_tile:
        batch_tile -= 1
    Bt = batch_tile
    M = Bt * S

    # VMEM budget: weights (x buffering) + double-buffered activation blocks
    # + live intermediates, with headroom, capped at 90% of physical VMEM.
    weight_bytes = sum(int(v.size) * v.dtype.itemsize
                       for grp in (sa, ca, ff) for v in grp.values())
    wbuf = 1 if single_buffer_weights else 2
    f32 = 4
    act_bytes = 2 * f32 * (2 * Bt * S * E + Bt * S_enc * E + Bt * S_enc)
    live_bytes = f32 * (3 * M * E                     # fused qkv
                        + 6 * M * E                   # x / xn / attn / residuals
                        + 2 * Bt * S * max(S, S_enc)  # scores + probs
                        + 2 * M * min(F, ff_chunk))   # ff hidden chunk
    estimate = wbuf * weight_bytes + act_bytes + live_bytes
    vmem_limit = int(min(max(int(1.5 * estimate), 32 * 1024 * 1024),
                         int(0.9 * _vmem_capacity_bytes())))

    ws = functools.partial(_weight_spec, single_buffer=single_buffer_weights)
    in_specs = [
        pl.BlockSpec((Bt, S, E), lambda b: (b, 0, 0)),             # x
        pl.BlockSpec((Bt, S_enc, E), lambda b: (b, 0, 0)),         # encoder output
        pl.BlockSpec((Bt, 1, 1, S_enc), lambda b: (b, 0, 0, 0)),   # encoder mask
        ws(sa["wqkv"]), ws(sa["bqkv"]), ws(sa["wo"]), ws(sa["bo"]),
        ws(ca["wqkv"]), ws(ca["bqkv"]), ws(ca["wo"]), ws(ca["bo"]),
        ws(ff["w1"]), ws(ff["b1"]), ws(ff["w2"]), ws(ff["b2"]),
    ]

    kernel = functools.partial(_decoder_block_kernel, heads=heads,
                               ff_chunk=ff_chunk, exact_gelu=exact_gelu)
    return pl.pallas_call(
        kernel,
        out_shape=jax.ShapeDtypeStruct((B, S, E), jnp.float32),
        grid=(B // Bt,),
        in_specs=in_specs,
        out_specs=pl.BlockSpec((Bt, S, E), lambda b: (b, 0, 0)),
        compiler_params=pltpu.CompilerParams(
            dimension_semantics=("parallel",),
            vmem_limit_bytes=vmem_limit),
    )(x, encoder_output, encoder_mask,
      sa["wqkv"], sa["bqkv"], sa["wo"], sa["bo"],
      ca["wqkv"], ca["bqkv"], ca["wo"], ca["bo"],
      ff["w1"], ff["b1"], ff["w2"], ff["b2"])


# ----------------------------------------------------------------------------
# Parameter init (matches nn.Linear shapes) + kernel-side packing
# ----------------------------------------------------------------------------
def _init_linear(key, fan_in, fan_out):
    k1, k2 = jax.random.split(key)
    bound = 1.0 / math.sqrt(fan_in)
    w = jax.random.uniform(k1, (fan_in, fan_out), jnp.float32, -bound, bound)
    b = jax.random.uniform(k2, (fan_out,), jnp.float32, -bound, bound)
    return w, b


def init_params(key, embed, ff_hidden):
    keys = jax.random.split(key, 10)

    def mha_params(ks):
        wq, bq = _init_linear(ks[0], embed, embed)
        wk, bk = _init_linear(ks[1], embed, embed)
        wv, bv = _init_linear(ks[2], embed, embed)
        wo, bo = _init_linear(ks[3], embed, embed)
        return dict(wq=wq, bq=bq, wk=wk, bk=bk, wv=wv, bv=bv, wo=wo, bo=bo)

    self_attn = mha_params(keys[0:4])
    cross_attn = mha_params(keys[4:8])
    w1, b1 = _init_linear(keys[8], embed, ff_hidden)
    w2, b2 = _init_linear(keys[9], ff_hidden, embed)
    return dict(self_attn=self_attn, cross_attn=cross_attn,
                ff=dict(w1=w1, b1=b1, w2=w2, b2=b2))


def prep_kernel_params(params):
    """Fuse QKV weights, reshape biases to (1, N), cast weights to bf16."""
    def mha(p):
        wqkv = jnp.concatenate([p["wq"], p["wk"], p["wv"]], axis=1)
        bqkv = jnp.concatenate([p["bq"], p["bk"], p["bv"]])[None, :]
        return dict(wqkv=wqkv.astype(jnp.bfloat16),
                    bqkv=bqkv.astype(jnp.float32),
                    wo=p["wo"].astype(jnp.bfloat16),
                    bo=p["bo"][None, :].astype(jnp.float32))

    ff = params["ff"]
    return dict(
        self_attn=mha(params["self_attn"]),
        cross_attn=mha(params["cross_attn"]),
        ff=dict(w1=ff["w1"].astype(jnp.bfloat16),
                b1=ff["b1"][None, :].astype(jnp.float32),
                w2=ff["w2"].astype(jnp.bfloat16),
                b2=ff["b2"][None, :].astype(jnp.float32)),
    )


# ----------------------------------------------------------------------------
# Pure-JAX f32 reference (mirrors the PyTorch module) for validation
# ----------------------------------------------------------------------------
def _ref_layernorm(x):
    mean = jnp.mean(x, -1, keepdims=True)
    std = jnp.std(x, -1, keepdims=True, ddof=1)
    return LN_ALPHA * (x - mean) / (std + LN_EPS) + LN_BETA


def _ref_mha(xq, xkv, mask, p, heads):
    B, Sq, E = xq.shape
    Skv = xkv.shape[1]
    Dh = E // heads
    Q = (xq @ p["wq"] + p["bq"]).reshape(B, Sq, heads, Dh).transpose(0, 2, 1, 3)
    K = (xkv @ p["wk"] + p["bk"]).reshape(B, Skv, heads, Dh).transpose(0, 2, 1, 3)
    V = (xkv @ p["wv"] + p["bv"]).reshape(B, Skv, heads, Dh).transpose(0, 2, 1, 3)
    s = jnp.einsum("bhqd,bhkd->bhqk", Q, K) / math.sqrt(Dh)
    s = jnp.where(mask == 0, NEG_INF, s)
    a = jax.nn.softmax(s, axis=-1)
    attn = jnp.einsum("bhqk,bhkd->bhqd", a, V).transpose(0, 2, 1, 3).reshape(B, Sq, E)
    return attn @ p["wo"] + p["bo"]


def _ref_decoder_block(x, enc, enc_mask, dec_mask, params, heads):
    xn = _ref_layernorm(x)
    x = x + _ref_mha(xn, xn, dec_mask, params["self_attn"], heads)
    xn = _ref_layernorm(x)
    x = x + _ref_mha(xn, enc, enc_mask, params["cross_attn"], heads)
    xn = _ref_layernorm(x)
    ff = params["ff"]
    h = jax.nn.gelu(xn @ ff["w1"] + ff["b1"], approximate=False)
    return x + h @ ff["w2"] + ff["b2"]


# ----------------------------------------------------------------------------
# Main
# ----------------------------------------------------------------------------
if __name__ == "__main__":
    B, S, S_ENC = 2, 8, 8
    EMBED, HEADS, FF_HIDDEN = 32, 4, 64

    key = jax.random.PRNGKey(0)
    k_x, k_enc, k_p = jax.random.split(key, 3)

    x = jax.random.normal(k_x, (B, S, EMBED), jnp.float32)
    encoder_output = jax.random.normal(k_enc, (B, S_ENC, EMBED), jnp.float32)

    # encoder mask: per-batch key padding mask (B, 1, 1, S_enc); batch 1 pads last 2
    encoder_mask = jnp.ones((B, 1, 1, S_ENC), jnp.float32)
    encoder_mask = encoder_mask.at[1, :, :, -2:].set(0.0)
    # decoder (causal) mask is generated inside the kernel; built here for the ref only
    decoder_mask = jnp.tril(jnp.ones((S, S), jnp.float32)).reshape(1, 1, S, S)

    params = init_params(k_p, EMBED, FF_HIDDEN)
    kparams = prep_kernel_params(params)

    # Graceful degradation if the installed jax lacks pl.Buffered(1) single
    # buffering on pallas_call inputs, or an exact-GELU (erf) Mosaic lowering.
    attempts = (
        dict(single_buffer_weights=True, exact_gelu=True),
        dict(single_buffer_weights=False, exact_gelu=True),
        dict(single_buffer_weights=True, exact_gelu=False),
        dict(single_buffer_weights=False, exact_gelu=False),
    )
    out, last_err = None, None
    for opts in attempts:
        try:
            fwd = jax.jit(functools.partial(decoder_block, heads=HEADS, **opts))
            out = jax.block_until_ready(
                fwd(x, encoder_output, encoder_mask, kparams))
            break
        except Exception as e:          # fall through to the next config
            last_err = e
    if out is None:
        raise last_err

    assert out.shape == (B, S, EMBED)
    assert bool(jnp.all(jnp.isfinite(out)))

    # validate against f32 reference (loose tol: bf16 MXU operands, approx recip)
    ref = _ref_decoder_block(x, encoder_output, encoder_mask, decoder_mask,
                             params, HEADS)
    max_err = float(jnp.max(jnp.abs(out - ref)))
    assert max_err < 1e-1, f"max abs err vs f32 reference = {max_err}"

    print("KERNEL_OK")
</pallas_src>

<mosaic_0001>
module attributes {stable_mosaic.version = 11 : i64} {
  func.func @_decoder_block_kernel(%arg0: i32, %arg1: memref<2x8x32xf32, #tpu.memory_space<vmem>>, %arg2: memref<2x8x32xf32, #tpu.memory_space<vmem>>, %arg3: memref<2x1x1x8xf32, #tpu.memory_space<vmem>>, %arg4: memref<32x96xbf16, #tpu.memory_space<vmem>>, %arg5: memref<1x96xf32, #tpu.memory_space<vmem>>, %arg6: memref<32x32xbf16, #tpu.memory_space<vmem>>, %arg7: memref<1x32xf32, #tpu.memory_space<vmem>>, %arg8: memref<32x96xbf16, #tpu.memory_space<vmem>>, %arg9: memref<1x96xf32, #tpu.memory_space<vmem>>, %arg10: memref<32x32xbf16, #tpu.memory_space<vmem>>, %arg11: memref<1x32xf32, #tpu.memory_space<vmem>>, %arg12: memref<32x64xbf16, #tpu.memory_space<vmem>>, %arg13: memref<1x64xf32, #tpu.memory_space<vmem>>, %arg14: memref<64x32xbf16, #tpu.memory_space<vmem>>, %arg15: memref<1x32xf32, #tpu.memory_space<vmem>>, %arg16: memref<2x8x32xf32, #tpu.memory_space<vmem>>) attributes {dimension_semantics = [#tpu.dimension_semantics<parallel>], iteration_bounds = array<i64: 1>, scalar_prefetch = 0 : i64, scratch_operands = 0 : i64, tpu.core_type = #tpu.core_type<tc>, window_params = [{transform_indices = @transform_0, window_bounds = array<i64: 2, 8, 32>}, {transform_indices = @transform_1, window_bounds = array<i64: 2, 8, 32>}, {transform_indices = @transform_2, window_bounds = array<i64: 2, 1, 1, 8>}, {pipeline_mode = #tpu.pipeline_mode<synchronous>, transform_indices = @transform_3, window_bounds = array<i64: 32, 96>}, {pipeline_mode = #tpu.pipeline_mode<synchronous>, transform_indices = @transform_4, window_bounds = array<i64: 1, 96>}, {pipeline_mode = #tpu.pipeline_mode<synchronous>, transform_indices = @transform_5, window_bounds = array<i64: 32, 32>}, {pipeline_mode = #tpu.pipeline_mode<synchronous>, transform_indices = @transform_6, window_bounds = array<i64: 1, 32>}, {pipeline_mode = #tpu.pipeline_mode<synchronous>, transform_indices = @transform_7, window_bounds = array<i64: 32, 96>}, {pipeline_mode = #tpu.pipeline_mode<synchronous>, transform_indices = @transform_8, window_bounds = array<i64: 1, 96>}, {pipeline_mode = #tpu.pipeline_mode<synchronous>, transform_indices = @transform_9, window_bounds = array<i64: 32, 32>}, {pipeline_mode = #tpu.pipeline_mode<synchronous>, transform_indices = @transform_10, window_bounds = array<i64: 1, 32>}, {pipeline_mode = #tpu.pipeline_mode<synchronous>, transform_indices = @transform_11, window_bounds = array<i64: 32, 64>}, {pipeline_mode = #tpu.pipeline_mode<synchronous>, transform_indices = @transform_12, window_bounds = array<i64: 1, 64>}, {pipeline_mode = #tpu.pipeline_mode<synchronous>, transform_indices = @transform_13, window_bounds = array<i64: 64, 32>}, {pipeline_mode = #tpu.pipeline_mode<synchronous>, transform_indices = @transform_14, window_bounds = array<i64: 1, 32>}, {transform_indices = @transform_15, window_bounds = array<i64: 2, 8, 32>}]} {
    %c0 = arith.constant 0 : index
    %c0_0 = arith.constant 0 : index
    %c0_1 = arith.constant 0 : index
    %0 = vector.load %arg1[%c0, %c0_0, %c0_1] : memref<2x8x32xf32, #tpu.memory_space<vmem>>, vector<2x8x32xf32>
    %1 = vector.shape_cast %0 : vector<2x8x32xf32> to vector<16x32xf32>
    %c0_2 = arith.constant 0 : index
    %c0_3 = arith.constant 0 : index
    %c0_4 = arith.constant 0 : index
    %2 = vector.load %arg2[%c0_2, %c0_3, %c0_4] : memref<2x8x32xf32, #tpu.memory_space<vmem>>, vector<2x8x32xf32>
    %3 = vector.shape_cast %2 : vector<2x8x32xf32> to vector<16x32xf32>
    %4 = tpu.iota {dimensions = array<i32: 0>} : vector<8x8xi32>
    %5 = tpu.iota {dimensions = array<i32: 1>} : vector<8x8xi32>
    %6 = arith.cmpi sge, %4, %5 : vector<8x8xi32>
    %c0_5 = arith.constant 0 : index
    %c0_6 = arith.constant 0 : index
    %c0_7 = arith.constant 0 : index
    %c0_8 = arith.constant 0 : index
    %7 = vector.load %arg3[%c0_5, %c0_6, %c0_7, %c0_8] : memref<2x1x1x8xf32, #tpu.memory_space<vmem>>, vector<2x1x1x8xf32>
    %8 = vector.shape_cast %7 : vector<2x1x1x8xf32> to vector<2x1x8xf32>
    %cst = arith.constant 0.000000e+00 : f32
    %9 = vector.broadcast %cst : f32 to vector<2x1x8xf32>
    %10 = arith.cmpf one, %8, %9 : vector<2x1x8xf32>
    %cst_9 = arith.constant dense<0.000000e+00> : vector<16xf32>
    %11 = vector.multi_reduction <add>, %1, %cst_9 [1] : vector<16x32xf32> to vector<16xf32>
    %12 = vector.shape_cast %11 : vector<16xf32> to vector<16x1xf32>
    %cst_10 = arith.constant 3.200000e+01 : f32
    %13 = vector.broadcast %cst_10 : f32 to vector<16x1xf32>
    %14 = arith.divf %12, %13 : vector<16x1xf32>
    %15 = vector.broadcast %14 : vector<16x1xf32> to vector<16x32xf32>
    %16 = arith.subf %1, %15 : vector<16x32xf32>
    %17 = arith.mulf %16, %16 : vector<16x32xf32>
    %cst_11 = arith.constant dense<0.000000e+00> : vector<16xf32>
    %18 = vector.multi_reduction <add>, %17, %cst_11 [1] : vector<16x32xf32> to vector<16xf32>
    %19 = vector.shape_cast %18 : vector<16xf32> to vector<16x1xf32>
    %cst_12 = arith.constant 0.0322580636 : f32
    %20 = vector.broadcast %cst_12 : f32 to vector<16x1xf32>
    %21 = arith.mulf %19, %20 : vector<16x1xf32>
    %22 = math.sqrt %21 : vector<16x1xf32>
    %cst_13 = arith.constant 9.99999997E-7 : f32
    %23 = vector.broadcast %cst_13 : f32 to vector<16x1xf32>
    %24 = arith.addf %22, %23 : vector<16x1xf32>
    %25 = tpu.reciprocal %24 {approx = true} : vector<16x1xf32> -> vector<16x1xf32>
    %26 = vector.broadcast %25 : vector<16x1xf32> to vector<16x32xf32>
    %27 = arith.mulf %16, %26 : vector<16x32xf32>
    %cst_14 = arith.constant 1.000000e+00 : f32
    %28 = vector.broadcast %cst_14 : f32 to vector<16x32xf32>
    %29 = arith.mulf %28, %27 : vector<16x32xf32>
    %cst_15 = arith.constant 0.000000e+00 : f32
    %30 = vector.broadcast %cst_15 : f32 to vector<16x32xf32>
    %31 = arith.addf %29, %30 : vector<16x32xf32>
    %c0_16 = arith.constant 0 : index
    %c0_17 = arith.constant 0 : index
    %32 = vector.load %arg4[%c0_16, %c0_17] : memref<32x96xbf16, #tpu.memory_space<vmem>>, vector<32x96xbf16>
    %33 = arith.truncf %31 : vector<16x32xf32> to vector<16x32xbf16>
    %cst_18 = arith.constant dense<0.000000e+00> : vector<16x96xf32>
    %34 = tpu.matmul %33, %32, %cst_18 {dimension_numbers = #tpu.dot_dimension_numbers<[1], [0], [0], [1], [0, 0, 1, 1], [], []>} : vector<16x32xbf16>, vector<32x96xbf16>, vector<16x96xf32> -> vector<16x96xf32>
    %c0_19 = arith.constant 0 : index
    %c0_20 = arith.constant 0 : index
    %35 = vector.load %arg5[%c0_19, %c0_20] : memref<1x96xf32, #tpu.memory_space<vmem>>, vector<1x96xf32>
    %36 = vector.broadcast %35 : vector<1x96xf32> to vector<16x96xf32>
    %37 = arith.addf %34, %36 : vector<16x96xf32>
    %38 = vector.extract_strided_slice %37 {offsets = [0, 0], sizes = [16, 32], strides = [1, 1]} : vector<16x96xf32> to vector<16x32xf32>
    %39 = vector.extract_strided_slice %37 {offsets = [0, 32], sizes = [16, 32], strides = [1, 1]} : vector<16x96xf32> to vector<16x32xf32>
    %40 = vector.extract_strided_slice %37 {offsets = [0, 64], sizes = [16, 32], strides = [1, 1]} : vector<16x96xf32> to vector<16x32xf32>
    %41 = vector.shape_cast %38 : vector<16x32xf32> to vector<2x8x32xf32>
    %42 = arith.truncf %41 : vector<2x8x32xf32> to vector<2x8x32xbf16>
    %43 = vector.shape_cast %39 : vector<16x32xf32> to vector<2x8x32xf32>
    %44 = arith.truncf %43 : vector<2x8x32xf32> to vector<2x8x32xbf16>
    %45 = vector.shape_cast %40 : vector<16x32xf32> to vector<2x8x32xf32>
    %46 = arith.truncf %45 : vector<2x8x32xf32> to vector<2x8x32xbf16>
    %47 = vector.extract_strided_slice %42 {offsets = [0, 0, 0], sizes = [2, 8, 8], strides = [1, 1, 1]} : vector<2x8x32xbf16> to vector<2x8x8xbf16>
    %48 = vector.extract_strided_slice %44 {offsets = [0, 0, 0], sizes = [2, 8, 8], strides = [1, 1, 1]} : vector<2x8x32xbf16> to vector<2x8x8xbf16>
    %cst_21 = arith.constant dense<0.000000e+00> : vector<2x8x8xf32>
    %49 = tpu.matmul %47, %48, %cst_21 {dimension_numbers = #tpu.dot_dimension_numbers<[2], [2], [1], [1], [0, 0, 0, 1, 1, 1], [0], [0]>} : vector<2x8x8xbf16>, vector<2x8x8xbf16>, vector<2x8x8xf32> -> vector<2x8x8xf32>
    %cst_22 = arith.constant 0.353553385 : f32
    %50 = vector.broadcast %cst_22 : f32 to vector<2x8x8xf32>
    %51 = arith.mulf %49, %50 : vector<2x8x8xf32>
    %cst_23 = arith.constant -1.000000e+20 : f32
    %52 = vector.shape_cast %6 : vector<8x8xi1> to vector<1x8x8xi1>
    %53 = vector.broadcast %52 : vector<1x8x8xi1> to vector<2x8x8xi1>
    %54 = vector.broadcast %cst_23 : f32 to vector<2x8x8xf32>
    %55 = arith.select %53, %51, %54 : vector<2x8x8xi1>, vector<2x8x8xf32>
    %cst_24 = arith.constant dense<0xFF800000> : vector<2x8xf32>
    %56 = vector.multi_reduction <maximumf>, %55, %cst_24 [2] : vector<2x8x8xf32> to vector<2x8xf32>
    %57 = vector.shape_cast %56 : vector<2x8xf32> to vector<2x8x1xf32>
    %58 = vector.broadcast %57 : vector<2x8x1xf32> to vector<2x8x8xf32>
    %59 = arith.subf %55, %58 : vector<2x8x8xf32>
    %60 = math.exp %59 : vector<2x8x8xf32>
    %cst_25 = arith.constant dense<0.000000e+00> : vector<2x8xf32>
    %61 = vector.multi_reduction <add>, %60, %cst_25 [2] : vector<2x8x8xf32> to vector<2x8xf32>
    %62 = vector.shape_cast %61 : vector<2x8xf32> to vector<2x8x1xf32>
    %63 = tpu.reciprocal %62 {approx = true} : vector<2x8x1xf32> -> vector<2x8x1xf32>
    %64 = vector.broadcast %63 : vector<2x8x1xf32> to vector<2x8x8xf32>
    %65 = arith.mulf %60, %64 : vector<2x8x8xf32>
    %66 = arith.truncf %65 : vector<2x8x8xf32> to vector<2x8x8xbf16>
    %67 = vector.extract_strided_slice %46 {offsets = [0, 0, 0], sizes = [2, 8, 8], strides = [1, 1, 1]} : vector<2x8x32xbf16> to vector<2x8x8xbf16>
    %cst_26 = arith.constant dense<0.000000e+00> : vector<2x8x8xf32>
    %68 = tpu.matmul %66, %67, %cst_26 {dimension_numbers = #tpu.dot_dimension_numbers<[2], [1], [1], [2], [0, 0, 0, 1, 1, 2], [0], [0]>} : vector<2x8x8xbf16>, vector<2x8x8xbf16>, vector<2x8x8xf32> -> vector<2x8x8xf32>
    %69 = vector.extract_strided_slice %42 {offsets = [0, 0, 8], sizes = [2, 8, 8], strides = [1, 1, 1]} : vector<2x8x32xbf16> to vector<2x8x8xbf16>
    %70 = vector.extract_strided_slice %44 {offsets = [0, 0, 8], sizes = [2, 8, 8], strides = [1, 1, 1]} : vector<2x8x32xbf16> to vector<2x8x8xbf16>
    %cst_27 = arith.constant dense<0.000000e+00> : vector<2x8x8xf32>
    %71 = tpu.matmul %69, %70, %cst_27 {dimension_numbers = #tpu.dot_dimension_numbers<[2], [2], [1], [1], [0, 0, 0, 1, 1, 1], [0], [0]>} : vector<2x8x8xbf16>, vector<2x8x8xbf16>, vector<2x8x8xf32> -> vector<2x8x8xf32>
    %cst_28 = arith.constant 0.353553385 : f32
    %72 = vector.broadcast %cst_28 : f32 to vector<2x8x8xf32>
    %73 = arith.mulf %71, %72 : vector<2x8x8xf32>
    %cst_29 = arith.constant -1.000000e+20 : f32
    %74 = vector.shape_cast %6 : vector<8x8xi1> to vector<1x8x8xi1>
    %75 = vector.broadcast %74 : vector<1x8x8xi1> to vector<2x8x8xi1>
    %76 = vector.broadcast %cst_29 : f32 to vector<2x8x8xf32>
    %77 = arith.select %75, %73, %76 : vector<2x8x8xi1>, vector<2x8x8xf32>
    %cst_30 = arith.constant dense<0xFF800000> : vector<2x8xf32>
    %78 = vector.multi_reduction <maximumf>, %77, %cst_30 [2] : vector<2x8x8xf32> to vector<2x8xf32>
    %79 = vector.shape_cast %78 : vector<2x8xf32> to vector<2x8x1xf32>
    %80 = vector.broadcast %79 : vector<2x8x1xf32> to vector<2x8x8xf32>
    %81 = arith.subf %77, %80 : vector<2x8x8xf32>
    %82 = math.exp %81 : vector<2x8x8xf32>
    %cst_31 = arith.constant dense<0.000000e+00> : vector<2x8xf32>
    %83 = vector.multi_reduction <add>, %82, %cst_31 [2] : vector<2x8x8xf32> to vector<2x8xf32>
    %84 = vector.shape_cast %83 : vector<2x8xf32> to vector<2x8x1xf32>
    %85 = tpu.reciprocal %84 {approx = true} : vector<2x8x1xf32> -> vector<2x8x1xf32>
    %86 = vector.broadcast %85 : vector<2x8x1xf32> to vector<2x8x8xf32>
    %87 = arith.mulf %82, %86 : vector<2x8x8xf32>
    %88 = arith.truncf %87 : vector<2x8x8xf32> to vector<2x8x8xbf16>
    %89 = vector.extract_strided_slice %46 {offsets = [0, 0, 8], sizes = [2, 8, 8], strides = [1, 1, 1]} : vector<2x8x32xbf16> to vector<2x8x8xbf16>
    %cst_32 = arith.constant dense<0.000000e+00> : vector<2x8x8xf32>
    %90 = tpu.matmul %88, %89, %cst_32 {dimension_numbers = #tpu.dot_dimension_numbers<[2], [1], [1], [2], [0, 0, 0, 1, 1, 2], [0], [0]>} : vector<2x8x8xbf16>, vector<2x8x8xbf16>, vector<2x8x8xf32> -> vector<2x8x8xf32>
    %91 = vector.extract_strided_slice %42 {offsets = [0, 0, 16], sizes = [2, 8, 8], strides = [1, 1, 1]} : vector<2x8x32xbf16> to vector<2x8x8xbf16>
    %92 = vector.extract_strided_slice %44 {offsets = [0, 0, 16], sizes = [2, 8, 8], strides = [1, 1, 1]} : vector<2x8x32xbf16> to vector<2x8x8xbf16>
    %cst_33 = arith.constant dense<0.000000e+00> : vector<2x8x8xf32>
    %93 = tpu.matmul %91, %92, %cst_33 {dimension_numbers = #tpu.dot_dimension_numbers<[2], [2], [1], [1], [0, 0, 0, 1, 1, 1], [0], [0]>} : vector<2x8x8xbf16>, vector<2x8x8xbf16>, vector<2x8x8xf32> -> vector<2x8x8xf32>
    %cst_34 = arith.constant 0.353553385 : f32
    %94 = vector.broadcast %cst_34 : f32 to vector<2x8x8xf32>
    %95 = arith.mulf %93, %94 : vector<2x8x8xf32>
    %cst_35 = arith.constant -1.000000e+20 : f32
    %96 = vector.shape_cast %6 : vector<8x8xi1> to vector<1x8x8xi1>
    %97 = vector.broadcast %96 : vector<1x8x8xi1> to vector<2x8x8xi1>
    %98 = vector.broadcast %cst_35 : f32 to vector<2x8x8xf32>
    %99 = arith.select %97, %95, %98 : vector<2x8x8xi1>, vector<2x8x8xf32>
    %cst_36 = arith.constant dense<0xFF800000> : vector<2x8xf32>
    %100 = vector.multi_reduction <maximumf>, %99, %cst_36 [2] : vector<2x8x8xf32> to vector<2x8xf32>
    %101 = vector.shape_cast %100 : vector<2x8xf32> to vector<2x8x1xf32>
    %102 = vector.broadcast %101 : vector<2x8x1xf32> to vector<2x8x8xf32>
    %103 = arith.subf %99, %102 : vector<2x8x8xf32>
    %104 = math.exp %103 : vector<2x8x8xf32>
    %cst_37 = arith.constant dense<0.000000e+00> : vector<2x8xf32>
    %105 = vector.multi_reduction <add>, %104, %cst_37 [2] : vector<2x8x8xf32> to vector<2x8xf32>
    %106 = vector.shape_cast %105 : vector<2x8xf32> to vector<2x8x1xf32>
    %107 = tpu.reciprocal %106 {approx = true} : vector<2x8x1xf32> -> vector<2x8x1xf32>
    %108 = vector.broadcast %107 : vector<2x8x1xf32> to vector<2x8x8xf32>
    %109 = arith.mulf %104, %108 : vector<2x8x8xf32>
    %110 = arith.truncf %109 : vector<2x8x8xf32> to vector<2x8x8xbf16>
    %111 = vector.extract_strided_slice %46 {offsets = [0, 0, 16], sizes = [2, 8, 8], strides = [1, 1, 1]} : vector<2x8x32xbf16> to vector<2x8x8xbf16>
    %cst_38 = arith.constant dense<0.000000e+00> : vector<2x8x8xf32>
    %112 = tpu.matmul %110, %111, %cst_38 {dimension_numbers = #tpu.dot_dimension_numbers<[2], [1], [1], [2], [0, 0, 0, 1, 1, 2], [0], [0]>} : vector<2x8x8xbf16>, vector<2x8x8xbf16>, vector<2x8x8xf32> -> vector<2x8x8xf32>
    %113 = vector.extract_strided_slice %42 {offsets = [0, 0, 24], sizes = [2, 8, 8], strides = [1, 1, 1]} : vector<2x8x32xbf16> to vector<2x8x8xbf16>
    %114 = vector.extract_strided_slice %44 {offsets = [0, 0, 24], sizes = [2, 8, 8], strides = [1, 1, 1]} : vector<2x8x32xbf16> to vector<2x8x8xbf16>
    %cst_39 = arith.constant dense<0.000000e+00> : vector<2x8x8xf32>
    %115 = tpu.matmul %113, %114, %cst_39 {dimension_numbers = #tpu.dot_dimension_numbers<[2], [2], [1], [1], [0, 0, 0, 1, 1, 1], [0], [0]>} : vector<2x8x8xbf16>, vector<2x8x8xbf16>, vector<2x8x8xf32> -> vector<2x8x8xf32>
    %cst_40 = arith.constant 0.353553385 : f32
    %116 = vector.broadcast %cst_40 : f32 to vector<2x8x8xf32>
    %117 = arith.mulf %115, %116 : vector<2x8x8xf32>
    %cst_41 = arith.constant -1.000000e+20 : f32
    %118 = vector.shape_cast %6 : vector<8x8xi1> to vector<1x8x8xi1>
    %119 = vector.broadcast %118 : vector<1x8x8xi1> to vector<2x8x8xi1>
    %120 = vector.broadcast %cst_41 : f32 to vector<2x8x8xf32>
    %121 = arith.select %119, %117, %120 : vector<2x8x8xi1>, vector<2x8x8xf32>
    %cst_42 = arith.constant dense<0xFF800000> : vector<2x8xf32>
    %122 = vector.multi_reduction <maximumf>, %121, %cst_42 [2] : vector<2x8x8xf32> to vector<2x8xf32>
    %123 = vector.shape_cast %122 : vector<2x8xf32> to vector<2x8x1xf32>
    %124 = vector.broadcast %123 : vector<2x8x1xf32> to vector<2x8x8xf32>
    %125 = arith.subf %121, %124 : vector<2x8x8xf32>
    %126 = math.exp %125 : vector<2x8x8xf32>
    %cst_43 = arith.constant dense<0.000000e+00> : vector<2x8xf32>
    %127 = vector.multi_reduction <add>, %126, %cst_43 [2] : vector<2x8x8xf32> to vector<2x8xf32>
    %128 = vector.shape_cast %127 : vector<2x8xf32> to vector<2x8x1xf32>
    %129 = tpu.reciprocal %128 {approx = true} : vector<2x8x1xf32> -> vector<2x8x1xf32>
    %130 = vector.broadcast %129 : vector<2x8x1xf32> to vector<2x8x8xf32>
    %131 = arith.mulf %126, %130 : vector<2x8x8xf32>
    %132 = arith.truncf %131 : vector<2x8x8xf32> to vector<2x8x8xbf16>
    %133 = vector.extract_strided_slice %46 {offsets = [0, 0, 24], sizes = [2, 8, 8], strides = [1, 1, 1]} : vector<2x8x32xbf16> to vector<2x8x8xbf16>
    %cst_44 = arith.constant dense<0.000000e+00> : vector<2x8x8xf32>
    %134 = tpu.matmul %132, %133, %cst_44 {dimension_numbers = #tpu.dot_dimension_numbers<[2], [1], [1], [2], [0, 0, 0, 1, 1, 2], [0], [0]>} : vector<2x8x8xbf16>, vector<2x8x8xbf16>, vector<2x8x8xf32> -> vector<2x8x8xf32>
    %135 = tpu.concatenate %68, %90, %112, %134 in 2 : vector<2x8x8xf32>, vector<2x8x8xf32>, vector<2x8x8xf32>, vector<2x8x8xf32> -> vector<2x8x32xf32>
    %136 = vector.shape_cast %135 : vector<2x8x32xf32> to vector<16x32xf32>
    %c0_45 = arith.constant 0 : index
    %c0_46 = arith.constant 0 : index
    %137 = vector.load %arg6[%c0_45, %c0_46] : memref<32x32xbf16, #tpu.memory_space<vmem>>, vector<32x32xbf16>
    %138 = arith.truncf %136 : vector<16x32xf32> to vector<16x32xbf16>
    %cst_47 = arith.constant dense<0.000000e+00> : vector<16x32xf32>
    %139 = tpu.matmul %138, %137, %cst_47 {dimension_numbers = #tpu.dot_dimension_numbers<[1], [0], [0], [1], [0, 0, 1, 1], [], []>} : vector<16x32xbf16>, vector<32x32xbf16>, vector<16x32xf32> -> vector<16x32xf32>
    %c0_48 = arith.constant 0 : index
    %c0_49 = arith.constant 0 : index
    %140 = vector.load %arg7[%c0_48, %c0_49] : memref<1x32xf32, #tpu.memory_space<vmem>>, vector<1x32xf32>
    %141 = vector.broadcast %140 : vector<1x32xf32> to vector<16x32xf32>
    %142 = arith.addf %139, %141 : vector<16x32xf32>
    %143 = arith.addf %1, %142 : vector<16x32xf32>
    %cst_50 = arith.constant dense<0.000000e+00> : vector<16xf32>
    %144 = vector.multi_reduction <add>, %143, %cst_50 [1] : vector<16x32xf32> to vector<16xf32>
    %145 = vector.shape_cast %144 : vector<16xf32> to vector<16x1xf32>
    %cst_51 = arith.constant 3.200000e+01 : f32
    %146 = vector.broadcast %cst_51 : f32 to vector<16x1xf32>
    %147 = arith.divf %145, %146 : vector<16x1xf32>
    %148 = vector.broadcast %147 : vector<16x1xf32> to vector<16x32xf32>
    %149 = arith.subf %143, %148 : vector<16x32xf32>
    %150 = arith.mulf %149, %149 : vector<16x32xf32>
    %cst_52 = arith.constant dense<0.000000e+00> : vector<16xf32>
    %151 = vector.multi_reduction <add>, %150, %cst_52 [1] : vector<16x32xf32> to vector<16xf32>
    %152 = vector.shape_cast %151 : vector<16xf32> to vector<16x1xf32>
    %cst_53 = arith.constant 0.0322580636 : f32
    %153 = vector.broadcast %cst_53 : f32 to vector<16x1xf32>
    %154 = arith.mulf %152, %153 : vector<16x1xf32>
    %155 = math.sqrt %154 : vector<16x1xf32>
    %cst_54 = arith.constant 9.99999997E-7 : f32
    %156 = vector.broadcast %cst_54 : f32 to vector<16x1xf32>
    %157 = arith.addf %155, %156 : vector<16x1xf32>
    %158 = tpu.reciprocal %157 {approx = true} : vector<16x1xf32> -> vector<16x1xf32>
    %159 = vector.broadcast %158 : vector<16x1xf32> to vector<16x32xf32>
    %160 = arith.mulf %149, %159 : vector<16x32xf32>
    %cst_55 = arith.constant 1.000000e+00 : f32
    %161 = vector.broadcast %cst_55 : f32 to vector<16x32xf32>
    %162 = arith.mulf %161, %160 : vector<16x32xf32>
    %cst_56 = arith.constant 0.000000e+00 : f32
    %163 = vector.broadcast %cst_56 : f32 to vector<16x32xf32>
    %164 = arith.addf %162, %163 : vector<16x32xf32>
    %c0_57 = arith.constant 0 : index
    %c0_58 = arith.constant 0 : index
    %165 = vector.load %arg8[%c0_57, %c0_58] : memref<32x96xbf16, #tpu.memory_space<vmem>>, vector<32x32xbf16>
    %166 = arith.truncf %164 : vector<16x32xf32> to vector<16x32xbf16>
    %cst_59 = arith.constant dense<0.000000e+00> : vector<16x32xf32>
    %167 = tpu.matmul %166, %165, %cst_59 {dimension_numbers = #tpu.dot_dimension_numbers<[1], [0], [0], [1], [0, 0, 1, 1], [], []>} : vector<16x32xbf16>, vector<32x32xbf16>, vector<16x32xf32> -> vector<16x32xf32>
    %c0_60 = arith.constant 0 : index
    %c0_61 = arith.constant 0 : index
    %168 = vector.load %arg9[%c0_60, %c0_61] : memref<1x96xf32, #tpu.memory_space<vmem>>, vector<1x32xf32>
    %169 = vector.broadcast %168 : vector<1x32xf32> to vector<16x32xf32>
    %170 = arith.addf %167, %169 : vector<16x32xf32>
    %c0_62 = arith.constant 0 : index
    %c32 = arith.constant 32 : index
    %171 = vector.load %arg8[%c0_62, %c32] : memref<32x96xbf16, #tpu.memory_space<vmem>>, vector<32x64xbf16>
    %172 = arith.truncf %3 : vector<16x32xf32> to vector<16x32xbf16>
    %cst_63 = arith.constant dense<0.000000e+00> : vector<16x64xf32>
    %173 = tpu.matmul %172, %171, %cst_63 {dimension_numbers = #tpu.dot_dimension_numbers<[1], [0], [0], [1], [0, 0, 1, 1], [], []>} : vector<16x32xbf16>, vector<32x64xbf16>, vector<16x64xf32> -> vector<16x64xf32>
    %c0_64 = arith.constant 0 : index
    %c32_65 = arith.constant 32 : index
    %174 = vector.load %arg9[%c0_64, %c32_65] : memref<1x96xf32, #tpu.memory_space<vmem>>, vector<1x64xf32>
    %175 = vector.broadcast %174 : vector<1x64xf32> to vector<16x64xf32>
    %176 = arith.addf %173, %175 : vector<16x64xf32>
    %177 = vector.extract_strided_slice %176 {offsets = [0, 0], sizes = [16, 32], strides = [1, 1]} : vector<16x64xf32> to vector<16x32xf32>
    %178 = vector.extract_strided_slice %176 {offsets = [0, 32], sizes = [16, 32], strides = [1, 1]} : vector<16x64xf32> to vector<16x32xf32>
    %179 = vector.shape_cast %170 : vector<16x32xf32> to vector<2x8x32xf32>
    %180 = arith.truncf %179 : vector<2x8x32xf32> to vector<2x8x32xbf16>
    %181 = vector.shape_cast %177 : vector<16x32xf32> to vector<2x8x32xf32>
    %182 = arith.truncf %181 : vector<2x8x32xf32> to vector<2x8x32xbf16>
    %183 = vector.shape_cast %178 : vector<16x32xf32> to vector<2x8x32xf32>
    %184 = arith.truncf %183 : vector<2x8x32xf32> to vector<2x8x32xbf16>
    %185 = vector.extract_strided_slice %180 {offsets = [0, 0, 0], sizes = [2, 8, 8], strides = [1, 1, 1]} : vector<2x8x32xbf16> to vector<2x8x8xbf16>
    %186 = vector.extract_strided_slice %182 {offsets = [0, 0, 0], sizes = [2, 8, 8], strides = [1, 1, 1]} : vector<2x8x32xbf16> to vector<2x8x8xbf16>
    %cst_66 = arith.constant dense<0.000000e+00> : vector<2x8x8xf32>
    %187 = tpu.matmul %185, %186, %cst_66 {dimension_numbers = #tpu.dot_dimension_numbers<[2], [2], [1], [1], [0, 0, 0, 1, 1, 1], [0], [0]>} : vector<2x8x8xbf16>, vector<2x8x8xbf16>, vector<2x8x8xf32> -> vector<2x8x8xf32>
    %cst_67 = arith.constant 0.353553385 : f32
    %188 = vector.broadcast %cst_67 : f32 to vector<2x8x8xf32>
    %189 = arith.mulf %187, %188 : vector<2x8x8xf32>
    %cst_68 = arith.constant -1.000000e+20 : f32
    %190 = vector.shape_cast %10 : vector<2x1x8xi1> to vector<2x1x8xi1>
    %191 = vector.broadcast %190 : vector<2x1x8xi1> to vector<2x8x8xi1>
    %192 = vector.broadcast %cst_68 : f32 to vector<2x8x8xf32>
    %193 = arith.select %191, %189, %192 : vector<2x8x8xi1>, vector<2x8x8xf32>
    %cst_69 = arith.constant dense<0xFF800000> : vector<2x8xf32>
    %194 = vector.multi_reduction <maximumf>, %193, %cst_69 [2] : vector<2x8x8xf32> to vector<2x8xf32>
    %195 = vector.shape_cast %194 : vector<2x8xf32> to vector<2x8x1xf32>
    %196 = vector.broadcast %195 : vector<2x8x1xf32> to vector<2x8x8xf32>
    %197 = arith.subf %193, %196 : vector<2x8x8xf32>
    %198 = math.exp %197 : vector<2x8x8xf32>
    %cst_70 = arith.constant dense<0.000000e+00> : vector<2x8xf32>
    %199 = vector.multi_reduction <add>, %198, %cst_70 [2] : vector<2x8x8xf32> to vector<2x8xf32>
    %200 = vector.shape_cast %199 : vector<2x8xf32> to vector<2x8x1xf32>
    %201 = tpu.reciprocal %200 {approx = true} : vector<2x8x1xf32> -> vector<2x8x1xf32>
    %202 = vector.broadcast %201 : vector<2x8x1xf32> to vector<2x8x8xf32>
    %203 = arith.mulf %198, %202 : vector<2x8x8xf32>
    %204 = arith.truncf %203 : vector<2x8x8xf32> to vector<2x8x8xbf16>
    %205 = vector.extract_strided_slice %184 {offsets = [0, 0, 0], sizes = [2, 8, 8], strides = [1, 1, 1]} : vector<2x8x32xbf16> to vector<2x8x8xbf16>
    %cst_71 = arith.constant dense<0.000000e+00> : vector<2x8x8xf32>
    %206 = tpu.matmul %204, %205, %cst_71 {dimension_numbers = #tpu.dot_dimension_numbers<[2], [1], [1], [2], [0, 0, 0, 1, 1, 2], [0], [0]>} : vector<2x8x8xbf16>, vector<2x8x8xbf16>, vector<2x8x8xf32> -> vector<2x8x8xf32>
    %207 = vector.extract_strided_slice %180 {offsets = [0, 0, 8], sizes = [2, 8, 8], strides = [1, 1, 1]} : vector<2x8x32xbf16> to vector<2x8x8xbf16>
    %208 = vector.extract_strided_slice %182 {offsets = [0, 0, 8], sizes = [2, 8, 8], strides = [1, 1, 1]} : vector<2x8x32xbf16> to vector<2x8x8xbf16>
    %cst_72 = arith.constant dense<0.000000e+00> : vector<2x8x8xf32>
    %209 = tpu.matmul %207, %208, %cst_72 {dimension_numbers = #tpu.dot_dimension_numbers<[2], [2], [1], [1], [0, 0, 0, 1, 1, 1], [0], [0]>} : vector<2x8x8xbf16>, vector<2x8x8xbf16>, vector<2x8x8xf32> -> vector<2x8x8xf32>
    %cst_73 = arith.constant 0.353553385 : f32
    %210 = vector.broadcast %cst_73 : f32 to vector<2x8x8xf32>
    %211 = arith.mulf %209, %210 : vector<2x8x8xf32>
    %cst_74 = arith.constant -1.000000e+20 : f32
    %212 = vector.shape_cast %10 : vector<2x1x8xi1> to vector<2x1x8xi1>
    %213 = vector.broadcast %212 : vector<2x1x8xi1> to vector<2x8x8xi1>
    %214 = vector.broadcast %cst_74 : f32 to vector<2x8x8xf32>
    %215 = arith.select %213, %211, %214 : vector<2x8x8xi1>, vector<2x8x8xf32>
    %cst_75 = arith.constant dense<0xFF800000> : vector<2x8xf32>
    %216 = vector.multi_reduction <maximumf>, %215, %cst_75 [2] : vector<2x8x8xf32> to vector<2x8xf32>
    %217 = vector.shape_cast %216 : vector<2x8xf32> to vector<2x8x1xf32>
    %218 = vector.broadcast %217 : vector<2x8x1xf32> to vector<2x8x8xf32>
    %219 = arith.subf %215, %218 : vector<2x8x8xf32>
    %220 = math.exp %219 : vector<2x8x8xf32>
    %cst_76 = arith.constant dense<0.000000e+00> : vector<2x8xf32>
    %221 = vector.multi_reduction <add>, %220, %cst_76 [2] : vector<2x8x8xf32> to vector<2x8xf32>
    %222 = vector.shape_cast %221 : vector<2x8xf32> to vector<2x8x1xf32>
    %223 = tpu.reciprocal %222 {approx = true} : vector<2x8x1xf32> -> vector<2x8x1xf32>
    %224 = vector.broadcast %223 : vector<2x8x1xf32> to vector<2x8x8xf32>
    %225 = arith.mulf %220, %224 : vector<2x8x8xf32>
    %226 = arith.truncf %225 : vector<2x8x8xf32> to vector<2x8x8xbf16>
    %227 = vector.extract_strided_slice %184 {offsets = [0, 0, 8], sizes = [2, 8, 8], strides = [1, 1, 1]} : vector<2x8x32xbf16> to vector<2x8x8xbf16>
    %cst_77 = arith.constant dense<0.000000e+00> : vector<2x8x8xf32>
    %228 = tpu.matmul %226, %227, %cst_77 {dimension_numbers = #tpu.dot_dimension_numbers<[2], [1], [1], [2], [0, 0, 0, 1, 1, 2], [0], [0]>} : vector<2x8x8xbf16>, vector<2x8x8xbf16>, vector<2x8x8xf32> -> vector<2x8x8xf32>
    %229 = vector.extract_strided_slice %180 {offsets = [0, 0, 16], sizes = [2, 8, 8], strides = [1, 1, 1]} : vector<2x8x32xbf16> to vector<2x8x8xbf16>
    %230 = vector.extract_strided_slice %182 {offsets = [0, 0, 16], sizes = [2, 8, 8], strides = [1, 1, 1]} : vector<2x8x32xbf16> to vector<2x8x8xbf16>
    %cst_78 = arith.constant dense<0.000000e+00> : vector<2x8x8xf32>
    %231 = tpu.matmul %229, %230, %cst_78 {dimension_numbers = #tpu.dot_dimension_numbers<[2], [2], [1], [1], [0, 0, 0, 1, 1, 1], [0], [0]>} : vector<2x8x8xbf16>, vector<2x8x8xbf16>, vector<2x8x8xf32> -> vector<2x8x8xf32>
    %cst_79 = arith.constant 0.353553385 : f32
    %232 = vector.broadcast %cst_79 : f32 to vector<2x8x8xf32>
    %233 = arith.mulf %231, %232 : vector<2x8x8xf32>
    %cst_80 = arith.constant -1.000000e+20 : f32
    %234 = vector.shape_cast %10 : vector<2x1x8xi1> to vector<2x1x8xi1>
    %235 = vector.broadcast %234 : vector<2x1x8xi1> to vector<2x8x8xi1>
    %236 = vector.broadcast %cst_80 : f32 to vector<2x8x8xf32>
    %237 = arith.select %235, %233, %236 : vector<2x8x8xi1>, vector<2x8x8xf32>
    %cst_81 = arith.constant dense<0xFF800000> : vector<2x8xf32>
    %238 = vector.multi_reduction <maximumf>, %237, %cst_81 [2] : vector<2x8x8xf32> to vector<2x8xf32>
    %239 = vector.shape_cast %238 : vector<2x8xf32> to vector<2x8x1xf32>
    %240 = vector.broadcast %239 : vector<2x8x1xf32> to vector<2x8x8xf32>
    %241 = arith.subf %237, %240 : vector<2x8x8xf32>
    %242 = math.exp %241 : vector<2x8x8xf32>
    %cst_82 = arith.constant dense<0.000000e+00> : vector<2x8xf32>
    %243 = vector.multi_reduction <add>, %242, %cst_82 [2] : vector<2x8x8xf32> to vector<2x8xf32>
    %244 = vector.shape_cast %243 : vector<2x8xf32> to vector<2x8x1xf32>
    %245 = tpu.reciprocal %244 {approx = true} : vector<2x8x1xf32> -> vector<2x8x1xf32>
    %246 = vector.broadcast %245 : vector<2x8x1xf32> to vector<2x8x8xf32>
    %247 = arith.mulf %242, %246 : vector<2x8x8xf32>
    %248 = arith.truncf %247 : vector<2x8x8xf32> to vector<2x8x8xbf16>
    %249 = vector.extract_strided_slice %184 {offsets = [0, 0, 16], sizes = [2, 8, 8], strides = [1, 1, 1]} : vector<2x8x32xbf16> to vector<2x8x8xbf16>
    %cst_83 = arith.constant dense<0.000000e+00> : vector<2x8x8xf32>
    %250 = tpu.matmul %248, %249, %cst_83 {dimension_numbers = #tpu.dot_dimension_numbers<[2], [1], [1], [2], [0, 0, 0, 1, 1, 2], [0], [0]>} : vector<2x8x8xbf16>, vector<2x8x8xbf16>, vector<2x8x8xf32> -> vector<2x8x8xf32>
    %251 = vector.extract_strided_slice %180 {offsets = [0, 0, 24], sizes = [2, 8, 8], strides = [1, 1, 1]} : vector<2x8x32xbf16> to vector<2x8x8xbf16>
    %252 = vector.extract_strided_slice %182 {offsets = [0, 0, 24], sizes = [2, 8, 8], strides = [1, 1, 1]} : vector<2x8x32xbf16> to vector<2x8x8xbf16>
    %cst_84 = arith.constant dense<0.000000e+00> : vector<2x8x8xf32>
    %253 = tpu.matmul %251, %252, %cst_84 {dimension_numbers = #tpu.dot_dimension_numbers<[2], [2], [1], [1], [0, 0, 0, 1, 1, 1], [0], [0]>} : vector<2x8x8xbf16>, vector<2x8x8xbf16>, vector<2x8x8xf32> -> vector<2x8x8xf32>
    %cst_85 = arith.constant 0.353553385 : f32
    %254 = vector.broadcast %cst_85 : f32 to vector<2x8x8xf32>
    %255 = arith.mulf %253, %254 : vector<2x8x8xf32>
    %cst_86 = arith.constant -1.000000e+20 : f32
    %256 = vector.shape_cast %10 : vector<2x1x8xi1> to vector<2x1x8xi1>
    %257 = vector.broadcast %256 : vector<2x1x8xi1> to vector<2x8x8xi1>
    %258 = vector.broadcast %cst_86 : f32 to vector<2x8x8xf32>
    %259 = arith.select %257, %255, %258 : vector<2x8x8xi1>, vector<2x8x8xf32>
    %cst_87 = arith.constant dense<0xFF800000> : vector<2x8xf32>
    %260 = vector.multi_reduction <maximumf>, %259, %cst_87 [2] : vector<2x8x8xf32> to vector<2x8xf32>
    %261 = vector.shape_cast %260 : vector<2x8xf32> to vector<2x8x1xf32>
    %262 = vector.broadcast %261 : vector<2x8x1xf32> to vector<2x8x8xf32>
    %263 = arith.subf %259, %262 : vector<2x8x8xf32>
    %264 = math.exp %263 : vector<2x8x8xf32>
    %cst_88 = arith.constant dense<0.000000e+00> : vector<2x8xf32>
    %265 = vector.multi_reduction <add>, %264, %cst_88 [2] : vector<2x8x8xf32> to vector<2x8xf32>
    %266 = vector.shape_cast %265 : vector<2x8xf32> to vector<2x8x1xf32>
    %267 = tpu.reciprocal %266 {approx = true} : vector<2x8x1xf32> -> vector<2x8x1xf32>
    %268 = vector.broadcast %267 : vector<2x8x1xf32> to vector<2x8x8xf32>
    %269 = arith.mulf %264, %268 : vector<2x8x8xf32>
    %270 = arith.truncf %269 : vector<2x8x8xf32> to vector<2x8x8xbf16>
    %271 = vector.extract_strided_slice %184 {offsets = [0, 0, 24], sizes = [2, 8, 8], strides = [1, 1, 1]} : vector<2x8x32xbf16> to vector<2x8x8xbf16>
    %cst_89 = arith.constant dense<0.000000e+00> : vector<2x8x8xf32>
    %272 = tpu.matmul %270, %271, %cst_89 {dimension_numbers = #tpu.dot_dimension_numbers<[2], [1], [1], [2], [0, 0, 0, 1, 1, 2], [0], [0]>} : vector<2x8x8xbf16>, vector<2x8x8xbf16>, vector<2x8x8xf32> -> vector<2x8x8xf32>
    %273 = tpu.concatenate %206, %228, %250, %272 in 2 : vector<2x8x8xf32>, vector<2x8x8xf32>, vector<2x8x8xf32>, vector<2x8x8xf32> -> vector<2x8x32xf32>
    %274 = vector.shape_cast %273 : vector<2x8x32xf32> to vector<16x32xf32>
    %c0_90 = arith.constant 0 : index
    %c0_91 = arith.constant 0 : index
    %275 = vector.load %arg10[%c0_90, %c0_91] : memref<32x32xbf16, #tpu.memory_space<vmem>>, vector<32x32xbf16>
    %276 = arith.truncf %274 : vector<16x32xf32> to vector<16x32xbf16>
    %cst_92 = arith.constant dense<0.000000e+00> : vector<16x32xf32>
    %277 = tpu.matmul %276, %275, %cst_92 {dimension_numbers = #tpu.dot_dimension_numbers<[1], [0], [0], [1], [0, 0, 1, 1], [], []>} : vector<16x32xbf16>, vector<32x32xbf16>, vector<16x32xf32> -> vector<16x32xf32>
    %c0_93 = arith.constant 0 : index
    %c0_94 = arith.constant 0 : index
    %278 = vector.load %arg11[%c0_93, %c0_94] : memref<1x32xf32, #tpu.memory_space<vmem>>, vector<1x32xf32>
    %279 = vector.broadcast %278 : vector<1x32xf32> to vector<16x32xf32>
    %280 = arith.addf %277, %279 : vector<16x32xf32>
    %281 = arith.addf %143, %280 : vector<16x32xf32>
    %cst_95 = arith.constant dense<0.000000e+00> : vector<16xf32>
    %282 = vector.multi_reduction <add>, %281, %cst_95 [1] : vector<16x32xf32> to vector<16xf32>
    %283 = vector.shape_cast %282 : vector<16xf32> to vector<16x1xf32>
    %cst_96 = arith.constant 3.200000e+01 : f32
    %284 = vector.broadcast %cst_96 : f32 to vector<16x1xf32>
    %285 = arith.divf %283, %284 : vector<16x1xf32>
    %286 = vector.broadcast %285 : vector<16x1xf32> to vector<16x32xf32>
    %287 = arith.subf %281, %286 : vector<16x32xf32>
    %288 = arith.mulf %287, %287 : vector<16x32xf32>
    %cst_97 = arith.constant dense<0.000000e+00> : vector<16xf32>
    %289 = vector.multi_reduction <add>, %288, %cst_97 [1] : vector<16x32xf32> to vector<16xf32>
    %290 = vector.shape_cast %289 : vector<16xf32> to vector<16x1xf32>
    %cst_98 = arith.constant 0.0322580636 : f32
    %291 = vector.broadcast %cst_98 : f32 to vector<16x1xf32>
    %292 = arith.mulf %290, %291 : vector<16x1xf32>
    %293 = math.sqrt %292 : vector<16x1xf32>
    %cst_99 = arith.constant 9.99999997E-7 : f32
    %294 = vector.broadcast %cst_99 : f32 to vector<16x1xf32>
    %295 = arith.addf %293, %294 : vector<16x1xf32>
    %296 = tpu.reciprocal %295 {approx = true} : vector<16x1xf32> -> vector<16x1xf32>
    %297 = vector.broadcast %296 : vector<16x1xf32> to vector<16x32xf32>
    %298 = arith.mulf %287, %297 : vector<16x32xf32>
    %cst_100 = arith.constant 1.000000e+00 : f32
    %299 = vector.broadcast %cst_100 : f32 to vector<16x32xf32>
    %300 = arith.mulf %299, %298 : vector<16x32xf32>
    %cst_101 = arith.constant 0.000000e+00 : f32
    %301 = vector.broadcast %cst_101 : f32 to vector<16x32xf32>
    %302 = arith.addf %300, %301 : vector<16x32xf32>
    %303 = arith.truncf %302 : vector<16x32xf32> to vector<16x32xbf16>
    %c0_102 = arith.constant 0 : index
    %c0_103 = arith.constant 0 : index
    %304 = vector.load %arg12[%c0_102, %c0_103] : memref<32x64xbf16, #tpu.memory_space<vmem>>, vector<32x64xbf16>
    %cst_104 = arith.constant dense<0.000000e+00> : vector<16x64xf32>
    %305 = tpu.matmul %303, %304, %cst_104 {dimension_numbers = #tpu.dot_dimension_numbers<[1], [0], [0], [1], [0, 0, 1, 1], [], []>} : vector<16x32xbf16>, vector<32x64xbf16>, vector<16x64xf32> -> vector<16x64xf32>
    %c0_105 = arith.constant 0 : index
    %c0_106 = arith.constant 0 : index
    %306 = vector.load %arg13[%c0_105, %c0_106] : memref<1x64xf32, #tpu.memory_space<vmem>>, vector<1x64xf32>
    %307 = vector.broadcast %306 : vector<1x64xf32> to vector<16x64xf32>
    %308 = arith.addf %305, %307 : vector<16x64xf32>
    %309 = arith.mulf %308, %308 : vector<16x64xf32>
    %310 = arith.mulf %308, %309 : vector<16x64xf32>
    %cst_107 = arith.constant 4.471500e-02 : f32
    %311 = vector.broadcast %cst_107 : f32 to vector<16x64xf32>
    %312 = arith.mulf %311, %310 : vector<16x64xf32>
    %313 = arith.addf %308, %312 : vector<16x64xf32>
    %cst_108 = arith.constant 0.797884583 : f32
    %314 = vector.broadcast %cst_108 : f32 to vector<16x64xf32>
    %315 = arith.mulf %314, %313 : vector<16x64xf32>
    %316 = math.tanh %315 : vector<16x64xf32>
    %cst_109 = arith.constant 1.000000e+00 : f32
    %317 = vector.broadcast %cst_109 : f32 to vector<16x64xf32>
    %318 = arith.addf %317, %316 : vector<16x64xf32>
    %cst_110 = arith.constant 5.000000e-01 : f32
    %319 = vector.broadcast %cst_110 : f32 to vector<16x64xf32>
    %320 = arith.mulf %319, %318 : vector<16x64xf32>
    %321 = arith.mulf %308, %320 : vector<16x64xf32>
    %322 = arith.truncf %321 : vector<16x64xf32> to vector<16x64xbf16>
    %c0_111 = arith.constant 0 : index
    %c0_112 = arith.constant 0 : index
    %323 = vector.load %arg14[%c0_111, %c0_112] : memref<64x32xbf16, #tpu.memory_space<vmem>>, vector<64x32xbf16>
    %cst_113 = arith.constant dense<0.000000e+00> : vector<16x32xf32>
    %324 = tpu.matmul %322, %323, %cst_113 {dimension_numbers = #tpu.dot_dimension_numbers<[1], [0], [0], [1], [0, 0, 1, 1], [], []>} : vector<16x64xbf16>, vector<64x32xbf16>, vector<16x32xf32> -> vector<16x32xf32>
    %325 = arith.addf %281, %324 : vector<16x32xf32>
    %c0_114 = arith.constant 0 : index
    %c0_115 = arith.constant 0 : index
    %326 = vector.load %arg15[%c0_114, %c0_115] : memref<1x32xf32, #tpu.memory_space<vmem>>, vector<1x32xf32>
    %327 = vector.broadcast %326 : vector<1x32xf32> to vector<16x32xf32>
    %328 = arith.addf %325, %327 : vector<16x32xf32>
    %329 = vector.shape_cast %328 : vector<16x32xf32> to vector<2x8x32xf32>
    %c0_116 = arith.constant 0 : index
    %c0_117 = arith.constant 0 : index
    %c0_118 = arith.constant 0 : index
    %330 = vector.load %arg16[%c0_116, %c0_117, %c0_118] : memref<2x8x32xf32, #tpu.memory_space<vmem>>, vector<2x8x32xf32>
    tpu.vector_store %arg16[%c0_116, %c0_117, %c0_118], %329 {strides = array<i32>} : memref<2x8x32xf32, #tpu.memory_space<vmem>>, vector<2x8x32xf32>,
    return
  }
  func.func @transform_0(%arg0: i32) -> (i32, i32, i32) {
    %c0_i32 = arith.constant 0 : i32
    %c0_i32_0 = arith.constant 0 : i32
    %c0_i32_1 = arith.constant 0 : i32
    return %arg0, %c0_i32, %c0_i32_0 : i32, i32, i32
  }
  func.func @transform_1(%arg0: i32) -> (i32, i32, i32) {
    %c0_i32 = arith.constant 0 : i32
    %c0_i32_0 = arith.constant 0 : i32
    %c0_i32_1 = arith.constant 0 : i32
    return %arg0, %c0_i32, %c0_i32_0 : i32, i32, i32
  }
  func.func @transform_2(%arg0: i32) -> (i32, i32, i32, i32) {
    %c0_i32 = arith.constant 0 : i32
    %c0_i32_0 = arith.constant 0 : i32
    %c0_i32_1 = arith.constant 0 : i32
    %c0_i32_2 = arith.constant 0 : i32
    return %arg0, %c0_i32, %c0_i32_0, %c0_i32_1 : i32, i32, i32, i32
  }
  func.func @transform_3(%arg0: i32) -> (i32, i32) {
    %c0_i32 = arith.constant 0 : i32
    %c0_i32_0 = arith.constant 0 : i32
    %c0_i32_1 = arith.constant 0 : i32
    return %c0_i32, %c0_i32_0 : i32, i32
  }
  func.func @transform_4(%arg0: i32) -> (i32, i32) {
    %c0_i32 = arith.constant 0 : i32
    %c0_i32_0 = arith.constant 0 : i32
    %c0_i32_1 = arith.constant 0 : i32
    return %c0_i32, %c0_i32_0 : i32, i32
  }
  func.func @transform_5(%arg0: i32) -> (i32, i32) {
    %c0_i32 = arith.constant 0 : i32
    %c0_i32_0 = arith.constant 0 : i32
    %c0_i32_1 = arith.constant 0 : i32
    return %c0_i32, %c0_i32_0 : i32, i32
  }
  func.func @transform_6(%arg0: i32) -> (i32, i32) {
    %c0_i32 = arith.constant 0 : i32
    %c0_i32_0 = arith.constant 0 : i32
    %c0_i32_1 = arith.constant 0 : i32
    return %c0_i32, %c0_i32_0 : i32, i32
  }
  func.func @transform_7(%arg0: i32) -> (i32, i32) {
    %c0_i32 = arith.constant 0 : i32
    %c0_i32_0 = arith.constant 0 : i32
    %c0_i32_1 = arith.constant 0 : i32
    return %c0_i32, %c0_i32_0 : i32, i32
  }
  func.func @transform_8(%arg0: i32) -> (i32, i32) {
    %c0_i32 = arith.constant 0 : i32
    %c0_i32_0 = arith.constant 0 : i32
    %c0_i32_1 = arith.constant 0 : i32
    return %c0_i32, %c0_i32_0 : i32, i32
  }
  func.func @transform_9(%arg0: i32) -> (i32, i32) {
    %c0_i32 = arith.constant 0 : i32
    %c0_i32_0 = arith.constant 0 : i32
    %c0_i32_1 = arith.constant 0 : i32
    return %c0_i32, %c0_i32_0 : i32, i32
  }
  func.func @transform_10(%arg0: i32) -> (i32, i32) {
    %c0_i32 = arith.constant 0 : i32
    %c0_i32_0 = arith.constant 0 : i32
    %c0_i32_1 = arith.constant 0 : i32
    return %c0_i32, %c0_i32_0 : i32, i32
  }
  func.func @transform_11(%arg0: i32) -> (i32, i32) {
    %c0_i32 = arith.constant 0 : i32
    %c0_i32_0 = arith.constant 0 : i32
    %c0_i32_1 = arith.constant 0 : i32
    return %c0_i32, %c0_i32_0 : i32, i32
  }
  func.func @transform_12(%arg0: i32) -> (i32, i32) {
    %c0_i32 = arith.constant 0 : i32
    %c0_i32_0 = arith.constant 0 : i32
    %c0_i32_1 = arith.constant 0 : i32
    return %c0_i32, %c0_i32_0 : i32, i32
  }
  func.func @transform_13(%arg0: i32) -> (i32, i32) {
    %c0_i32 = arith.constant 0 : i32
    %c0_i32_0 = arith.constant 0 : i32
    %c0_i32_1 = arith.constant 0 : i32
    return %c0_i32, %c0_i32_0 : i32, i32
  }
  func.func @transform_14(%arg0: i32) -> (i32, i32) {
    %c0_i32 = arith.constant 0 : i32
    %c0_i32_0 = arith.constant 0 : i32
    %c0_i32_1 = arith.constant 0 : i32
    return %c0_i32, %c0_i32_0 : i32, i32
  }
  func.func @transform_15(%arg0: i32) -> (i32, i32, i32) {
    %c0_i32 = arith.constant 0 : i32
    %c0_i32_0 = arith.constant 0 : i32
    %c0_i32_1 = arith.constant 0 : i32
    return %arg0, %c0_i32, %c0_i32_0 : i32, i32, i32
  }
}

module attributes {stable_mosaic.version = 11 : i64} {
  func.func @_decoder_block_kernel(%arg0: i32, %arg1: memref<2x8x32xf32, #tpu.memory_space<vmem>>, %arg2: memref<2x8x32xf32, #tpu.memory_space<vmem>>, %arg3: memref<2x1x1x8xf32, #tpu.memory_space<vmem>>, %arg4: memref<32x96xbf16, #tpu.memory_space<vmem>>, %arg5: memref<1x96xf32, #tpu.memory_space<vmem>>, %arg6: memref<32x32xbf16, #tpu.memory_space<vmem>>, %arg7: memref<1x32xf32, #tpu.memory_space<vmem>>, %arg8: memref<32x96xbf16, #tpu.memory_space<vmem>>, %arg9: memref<1x96xf32, #tpu.memory_space<vmem>>, %arg10: memref<32x32xbf16, #tpu.memory_space<vmem>>, %arg11: memref<1x32xf32, #tpu.memory_space<vmem>>, %arg12: memref<32x64xbf16, #tpu.memory_space<vmem>>, %arg13: memref<1x64xf32, #tpu.memory_space<vmem>>, %arg14: memref<64x32xbf16, #tpu.memory_space<vmem>>, %arg15: memref<1x32xf32, #tpu.memory_space<vmem>>, %arg16: memref<2x8x32xf32, #tpu.memory_space<vmem>>) attributes {dimension_semantics = [#tpu.dimension_semantics<parallel>], iteration_bounds = array<i64: 1>, scalar_prefetch = 0 : i64, scratch_operands = 0 : i64, tpu.core_type = #tpu.core_type<tc>, window_params = [{transform_indices = @transform_0, window_bounds = array<i64: 2, 8, 32>}, {transform_indices = @transform_1, window_bounds = array<i64: 2, 8, 32>}, {transform_indices = @transform_2, window_bounds = array<i64: 2, 1, 1, 8>}, {pipeline_mode = #tpu.pipeline_mode<synchronous>, transform_indices = @transform_3, window_bounds = array<i64: 32, 96>}, {pipeline_mode = #tpu.pipeline_mode<synchronous>, transform_indices = @transform_4, window_bounds = array<i64: 1, 96>}, {pipeline_mode = #tpu.pipeline_mode<synchronous>, transform_indices = @transform_5, window_bounds = array<i64: 32, 32>}, {pipeline_mode = #tpu.pipeline_mode<synchronous>, transform_indices = @transform_6, window_bounds = array<i64: 1, 32>}, {pipeline_mode = #tpu.pipeline_mode<synchronous>, transform_indices = @transform_7, window_bounds = array<i64: 32, 96>}, {pipeline_mode = #tpu.pipeline_mode<synchronous>, transform_indices = @transform_8, window_bounds = array<i64: 1, 96>}, {pipeline_mode = #tpu.pipeline_mode<synchronous>, transform_indices = @transform_9, window_bounds = array<i64: 32, 32>}, {pipeline_mode = #tpu.pipeline_mode<synchronous>, transform_indices = @transform_10, window_bounds = array<i64: 1, 32>}, {pipeline_mode = #tpu.pipeline_mode<synchronous>, transform_indices = @transform_11, window_bounds = array<i64: 32, 64>}, {pipeline_mode = #tpu.pipeline_mode<synchronous>, transform_indices = @transform_12, window_bounds = array<i64: 1, 64>}, {pipeline_mode = #tpu.pipeline_mode<synchronous>, transform_indices = @transform_13, window_bounds = array<i64: 64, 32>}, {pipeline_mode = #tpu.pipeline_mode<synchronous>, transform_indices = @transform_14, window_bounds = array<i64: 1, 32>}, {transform_indices = @transform_15, window_bounds = array<i64: 2, 8, 32>}]} {
    %c0 = arith.constant 0 : index
    %c0_0 = arith.constant 0 : index
    %c0_1 = arith.constant 0 : index
    %0 = vector.load %arg1[%c0, %c0_0, %c0_1] : memref<2x8x32xf32, #tpu.memory_space<vmem>>, vector<2x8x32xf32>
    %1 = vector.shape_cast %0 : vector<2x8x32xf32> to vector<16x32xf32>
    %c0_2 = arith.constant 0 : index
    %c0_3 = arith.constant 0 : index
    %c0_4 = arith.constant 0 : index
    %2 = vector.load %arg2[%c0_2, %c0_3, %c0_4] : memref<2x8x32xf32, #tpu.memory_space<vmem>>, vector<2x8x32xf32>
    %3 = vector.shape_cast %2 : vector<2x8x32xf32> to vector<16x32xf32>
    %4 = tpu.iota {dimensions = array<i32: 0>} : vector<8x8xi32>
    %5 = tpu.iota {dimensions = array<i32: 1>} : vector<8x8xi32>
    %6 = arith.cmpi sge, %4, %5 : vector<8x8xi32>
    %c0_5 = arith.constant 0 : index
    %c0_6 = arith.constant 0 : index
    %c0_7 = arith.constant 0 : index
    %c0_8 = arith.constant 0 : index
    %7 = vector.load %arg3[%c0_5, %c0_6, %c0_7, %c0_8] : memref<2x1x1x8xf32, #tpu.memory_space<vmem>>, vector<2x1x1x8xf32>
    %8 = vector.shape_cast %7 : vector<2x1x1x8xf32> to vector<2x1x8xf32>
    %cst = arith.constant 0.000000e+00 : f32
    %9 = vector.broadcast %cst : f32 to vector<2x1x8xf32>
    %10 = arith.cmpf one, %8, %9 : vector<2x1x8xf32>
    %cst_9 = arith.constant dense<0.000000e+00> : vector<16xf32>
    %11 = vector.multi_reduction <add>, %1, %cst_9 [1] : vector<16x32xf32> to vector<16xf32>
    %12 = vector.shape_cast %11 : vector<16xf32> to vector<16x1xf32>
    %cst_10 = arith.constant 3.200000e+01 : f32
    %13 = vector.broadcast %cst_10 : f32 to vector<16x1xf32>
    %14 = arith.divf %12, %13 : vector<16x1xf32>
    %15 = vector.broadcast %14 : vector<16x1xf32> to vector<16x32xf32>
    %16 = arith.subf %1, %15 : vector<16x32xf32>
    %17 = arith.mulf %16, %16 : vector<16x32xf32>
    %cst_11 = arith.constant dense<0.000000e+00> : vector<16xf32>
    %18 = vector.multi_reduction <add>, %17, %cst_11 [1] : vector<16x32xf32> to vector<16xf32>
    %19 = vector.shape_cast %18 : vector<16xf32> to vector<16x1xf32>
    %cst_12 = arith.constant 0.0322580636 : f32
    %20 = vector.broadcast %cst_12 : f32 to vector<16x1xf32>
    %21 = arith.mulf %19, %20 : vector<16x1xf32>
    %22 = math.sqrt %21 : vector<16x1xf32>
    %cst_13 = arith.constant 9.99999997E-7 : f32
    %23 = vector.broadcast %cst_13 : f32 to vector<16x1xf32>
    %24 = arith.addf %22, %23 : vector<16x1xf32>
    %25 = tpu.reciprocal %24 {approx = true} : vector<16x1xf32> -> vector<16x1xf32>
    %26 = vector.broadcast %25 : vector<16x1xf32> to vector<16x32xf32>
    %27 = arith.mulf %16, %26 : vector<16x32xf32>
    %cst_14 = arith.constant 1.000000e+00 : f32
    %28 = vector.broadcast %cst_14 : f32 to vector<16x32xf32>
    %29 = arith.mulf %28, %27 : vector<16x32xf32>
    %cst_15 = arith.constant 0.000000e+00 : f32
    %30 = vector.broadcast %cst_15 : f32 to vector<16x32xf32>
    %31 = arith.addf %29, %30 : vector<16x32xf32>
    %c0_16 = arith.constant 0 : index
    %c0_17 = arith.constant 0 : index
    %32 = vector.load %arg4[%c0_16, %c0_17] : memref<32x96xbf16, #tpu.memory_space<vmem>>, vector<32x96xbf16>
    %33 = arith.truncf %31 : vector<16x32xf32> to vector<16x32xbf16>
    %cst_18 = arith.constant dense<0.000000e+00> : vector<16x96xf32>
    %34 = tpu.matmul %33, %32, %cst_18 {dimension_numbers = #tpu.dot_dimension_numbers<[1], [0], [0], [1], [0, 0, 1, 1], [], []>} : vector<16x32xbf16>, vector<32x96xbf16>, vector<16x96xf32> -> vector<16x96xf32>
    %c0_19 = arith.constant 0 : index
    %c0_20 = arith.constant 0 : index
    %35 = vector.load %arg5[%c0_19, %c0_20] : memref<1x96xf32, #tpu.memory_space<vmem>>, vector<1x96xf32>
    %36 = vector.broadcast %35 : vector<1x96xf32> to vector<16x96xf32>
    %37 = arith.addf %34, %36 : vector<16x96xf32>
    %38 = vector.extract_strided_slice %37 {offsets = [0, 0], sizes = [16, 32], strides = [1, 1]} : vector<16x96xf32> to vector<16x32xf32>
    %39 = vector.extract_strided_slice %37 {offsets = [0, 32], sizes = [16, 32], strides = [1, 1]} : vector<16x96xf32> to vector<16x32xf32>
    %40 = vector.extract_strided_slice %37 {offsets = [0, 64], sizes = [16, 32], strides = [1, 1]} : vector<16x96xf32> to vector<16x32xf32>
    %41 = vector.shape_cast %38 : vector<16x32xf32> to vector<2x8x32xf32>
    %42 = arith.truncf %41 : vector<2x8x32xf32> to vector<2x8x32xbf16>
    %43 = vector.shape_cast %39 : vector<16x32xf32> to vector<2x8x32xf32>
    %44 = arith.truncf %43 : vector<2x8x32xf32> to vector<2x8x32xbf16>
    %45 = vector.shape_cast %40 : vector<16x32xf32> to vector<2x8x32xf32>
    %46 = arith.truncf %45 : vector<2x8x32xf32> to vector<2x8x32xbf16>
    %47 = vector.extract_strided_slice %42 {offsets = [0, 0, 0], sizes = [2, 8, 8], strides = [1, 1, 1]} : vector<2x8x32xbf16> to vector<2x8x8xbf16>
    %48 = vector.extract_strided_slice %44 {offsets = [0, 0, 0], sizes = [2, 8, 8], strides = [1, 1, 1]} : vector<2x8x32xbf16> to vector<2x8x8xbf16>
    %cst_21 = arith.constant dense<0.000000e+00> : vector<2x8x8xf32>
    %49 = tpu.matmul %47, %48, %cst_21 {dimension_numbers = #tpu.dot_dimension_numbers<[2], [2], [1], [1], [0, 0, 0, 1, 1, 1], [0], [0]>} : vector<2x8x8xbf16>, vector<2x8x8xbf16>, vector<2x8x8xf32> -> vector<2x8x8xf32>
    %cst_22 = arith.constant 0.353553385 : f32
    %50 = vector.broadcast %cst_22 : f32 to vector<2x8x8xf32>
    %51 = arith.mulf %49, %50 : vector<2x8x8xf32>
    %cst_23 = arith.constant -1.000000e+20 : f32
    %52 = vector.shape_cast %6 : vector<8x8xi1> to vector<1x8x8xi1>
    %53 = vector.broadcast %52 : vector<1x8x8xi1> to vector<2x8x8xi1>
    %54 = vector.broadcast %cst_23 : f32 to vector<2x8x8xf32>
    %55 = arith.select %53, %51, %54 : vector<2x8x8xi1>, vector<2x8x8xf32>
    %cst_24 = arith.constant dense<0xFF800000> : vector<2x8xf32>
    %56 = vector.multi_reduction <maximumf>, %55, %cst_24 [2] : vector<2x8x8xf32> to vector<2x8xf32>
    %57 = vector.shape_cast %56 : vector<2x8xf32> to vector<2x8x1xf32>
    %58 = vector.broadcast %57 : vector<2x8x1xf32> to vector<2x8x8xf32>
    %59 = arith.subf %55, %58 : vector<2x8x8xf32>
    %60 = math.exp %59 : vector<2x8x8xf32>
    %cst_25 = arith.constant dense<0.000000e+00> : vector<2x8xf32>
    %61 = vector.multi_reduction <add>, %60, %cst_25 [2] : vector<2x8x8xf32> to vector<2x8xf32>
    %62 = vector.shape_cast %61 : vector<2x8xf32> to vector<2x8x1xf32>
    %63 = tpu.reciprocal %62 {approx = true} : vector<2x8x1xf32> -> vector<2x8x1xf32>
    %64 = vector.broadcast %63 : vector<2x8x1xf32> to vector<2x8x8xf32>
    %65 = arith.mulf %60, %64 : vector<2x8x8xf32>
    %66 = arith.truncf %65 : vector<2x8x8xf32> to vector<2x8x8xbf16>
    %67 = vector.extract_strided_slice %46 {offsets = [0, 0, 0], sizes = [2, 8, 8], strides = [1, 1, 1]} : vector<2x8x32xbf16> to vector<2x8x8xbf16>
    %cst_26 = arith.constant dense<0.000000e+00> : vector<2x8x8xf32>
    %68 = tpu.matmul %66, %67, %cst_26 {dimension_numbers = #tpu.dot_dimension_numbers<[2], [1], [1], [2], [0, 0, 0, 1, 1, 2], [0], [0]>} : vector<2x8x8xbf16>, vector<2x8x8xbf16>, vector<2x8x8xf32> -> vector<2x8x8xf32>
    %69 = vector.extract_strided_slice %42 {offsets = [0, 0, 8], sizes = [2, 8, 8], strides = [1, 1, 1]} : vector<2x8x32xbf16> to vector<2x8x8xbf16>
    %70 = vector.extract_strided_slice %44 {offsets = [0, 0, 8], sizes = [2, 8, 8], strides = [1, 1, 1]} : vector<2x8x32xbf16> to vector<2x8x8xbf16>
    %cst_27 = arith.constant dense<0.000000e+00> : vector<2x8x8xf32>
    %71 = tpu.matmul %69, %70, %cst_27 {dimension_numbers = #tpu.dot_dimension_numbers<[2], [2], [1], [1], [0, 0, 0, 1, 1, 1], [0], [0]>} : vector<2x8x8xbf16>, vector<2x8x8xbf16>, vector<2x8x8xf32> -> vector<2x8x8xf32>
    %cst_28 = arith.constant 0.353553385 : f32
    %72 = vector.broadcast %cst_28 : f32 to vector<2x8x8xf32>
    %73 = arith.mulf %71, %72 : vector<2x8x8xf32>
    %cst_29 = arith.constant -1.000000e+20 : f32
    %74 = vector.shape_cast %6 : vector<8x8xi1> to vector<1x8x8xi1>
    %75 = vector.broadcast %74 : vector<1x8x8xi1> to vector<2x8x8xi1>
    %76 = vector.broadcast %cst_29 : f32 to vector<2x8x8xf32>
    %77 = arith.select %75, %73, %76 : vector<2x8x8xi1>, vector<2x8x8xf32>
    %cst_30 = arith.constant dense<0xFF800000> : vector<2x8xf32>
    %78 = vector.multi_reduction <maximumf>, %77, %cst_30 [2] : vector<2x8x8xf32> to vector<2x8xf32>
    %79 = vector.shape_cast %78 : vector<2x8xf32> to vector<2x8x1xf32>
    %80 = vector.broadcast %79 : vector<2x8x1xf32> to vector<2x8x8xf32>
    %81 = arith.subf %77, %80 : vector<2x8x8xf32>
    %82 = math.exp %81 : vector<2x8x8xf32>
    %cst_31 = arith.constant dense<0.000000e+00> : vector<2x8xf32>
    %83 = vector.multi_reduction <add>, %82, %cst_31 [2] : vector<2x8x8xf32> to vector<2x8xf32>
    %84 = vector.shape_cast %83 : vector<2x8xf32> to vector<2x8x1xf32>
    %85 = tpu.reciprocal %84 {approx = true} : vector<2x8x1xf32> -> vector<2x8x1xf32>
    %86 = vector.broadcast %85 : vector<2x8x1xf32> to vector<2x8x8xf32>
    %87 = arith.mulf %82, %86 : vector<2x8x8xf32>
    %88 = arith.truncf %87 : vector<2x8x8xf32> to vector<2x8x8xbf16>
    %89 = vector.extract_strided_slice %46 {offsets = [0, 0, 8], sizes = [2, 8, 8], strides = [1, 1, 1]} : vector<2x8x32xbf16> to vector<2x8x8xbf16>
    %cst_32 = arith.constant dense<0.000000e+00> : vector<2x8x8xf32>
    %90 = tpu.matmul %88, %89, %cst_32 {dimension_numbers = #tpu.dot_dimension_numbers<[2], [1], [1], [2], [0, 0, 0, 1, 1, 2], [0], [0]>} : vector<2x8x8xbf16>, vector<2x8x8xbf16>, vector<2x8x8xf32> -> vector<2x8x8xf32>
    %91 = vector.extract_strided_slice %42 {offsets = [0, 0, 16], sizes = [2, 8, 8], strides = [1, 1, 1]} : vector<2x8x32xbf16> to vector<2x8x8xbf16>
    %92 = vector.extract_strided_slice %44 {offsets = [0, 0, 16], sizes = [2, 8, 8], strides = [1, 1, 1]} : vector<2x8x32xbf16> to vector<2x8x8xbf16>
    %cst_33 = arith.constant dense<0.000000e+00> : vector<2x8x8xf32>
    %93 = tpu.matmul %91, %92, %cst_33 {dimension_numbers = #tpu.dot_dimension_numbers<[2], [2], [1], [1], [0, 0, 0, 1, 1, 1], [0], [0]>} : vector<2x8x8xbf16>, vector<2x8x8xbf16>, vector<2x8x8xf32> -> vector<2x8x8xf32>
    %cst_34 = arith.constant 0.353553385 : f32
    %94 = vector.broadcast %cst_34 : f32 to vector<2x8x8xf32>
    %95 = arith.mulf %93, %94 : vector<2x8x8xf32>
    %cst_35 = arith.constant -1.000000e+20 : f32
    %96 = vector.shape_cast %6 : vector<8x8xi1> to vector<1x8x8xi1>
    %97 = vector.broadcast %96 : vector<1x8x8xi1> to vector<2x8x8xi1>
    %98 = vector.broadcast %cst_35 : f32 to vector<2x8x8xf32>
    %99 = arith.select %97, %95, %98 : vector<2x8x8xi1>, vector<2x8x8xf32>
    %cst_36 = arith.constant dense<0xFF800000> : vector<2x8xf32>
    %100 = vector.multi_reduction <maximumf>, %99, %cst_36 [2] : vector<2x8x8xf32> to vector<2x8xf32>
    %101 = vector.shape_cast %100 : vector<2x8xf32> to vector<2x8x1xf32>
    %102 = vector.broadcast %101 : vector<2x8x1xf32> to vector<2x8x8xf32>
    %103 = arith.subf %99, %102 : vector<2x8x8xf32>
    %104 = math.exp %103 : vector<2x8x8xf32>
    %cst_37 = arith.constant dense<0.000000e+00> : vector<2x8xf32>
    %105 = vector.multi_reduction <add>, %104, %cst_37 [2] : vector<2x8x8xf32> to vector<2x8xf32>
    %106 = vector.shape_cast %105 : vector<2x8xf32> to vector<2x8x1xf32>
    %107 = tpu.reciprocal %106 {approx = true} : vector<2x8x1xf32> -> vector<2x8x1xf32>
    %108 = vector.broadcast %107 : vector<2x8x1xf32> to vector<2x8x8xf32>
    %109 = arith.mulf %104, %108 : vector<2x8x8xf32>
    %110 = arith.truncf %109 : vector<2x8x8xf32> to vector<2x8x8xbf16>
    %111 = vector.extract_strided_slice %46 {offsets = [0, 0, 16], sizes = [2, 8, 8], strides = [1, 1, 1]} : vector<2x8x32xbf16> to vector<2x8x8xbf16>
    %cst_38 = arith.constant dense<0.000000e+00> : vector<2x8x8xf32>
    %112 = tpu.matmul %110, %111, %cst_38 {dimension_numbers = #tpu.dot_dimension_numbers<[2], [1], [1], [2], [0, 0, 0, 1, 1, 2], [0], [0]>} : vector<2x8x8xbf16>, vector<2x8x8xbf16>, vector<2x8x8xf32> -> vector<2x8x8xf32>
    %113 = vector.extract_strided_slice %42 {offsets = [0, 0, 24], sizes = [2, 8, 8], strides = [1, 1, 1]} : vector<2x8x32xbf16> to vector<2x8x8xbf16>
    %114 = vector.extract_strided_slice %44 {offsets = [0, 0, 24], sizes = [2, 8, 8], strides = [1, 1, 1]} : vector<2x8x32xbf16> to vector<2x8x8xbf16>
    %cst_39 = arith.constant dense<0.000000e+00> : vector<2x8x8xf32>
    %115 = tpu.matmul %113, %114, %cst_39 {dimension_numbers = #tpu.dot_dimension_numbers<[2], [2], [1], [1], [0, 0, 0, 1, 1, 1], [0], [0]>} : vector<2x8x8xbf16>, vector<2x8x8xbf16>, vector<2x8x8xf32> -> vector<2x8x8xf32>
    %cst_40 = arith.constant 0.353553385 : f32
    %116 = vector.broadcast %cst_40 : f32 to vector<2x8x8xf32>
    %117 = arith.mulf %115, %116 : vector<2x8x8xf32>
    %cst_41 = arith.constant -1.000000e+20 : f32
    %118 = vector.shape_cast %6 : vector<8x8xi1> to vector<1x8x8xi1>
    %119 = vector.broadcast %118 : vector<1x8x8xi1> to vector<2x8x8xi1>
    %120 = vector.broadcast %cst_41 : f32 to vector<2x8x8xf32>
    %121 = arith.select %119, %117, %120 : vector<2x8x8xi1>, vector<2x8x8xf32>
    %cst_42 = arith.constant dense<0xFF800000> : vector<2x8xf32>
    %122 = vector.multi_reduction <maximumf>, %121, %cst_42 [2] : vector<2x8x8xf32> to vector<2x8xf32>
    %123 = vector.shape_cast %122 : vector<2x8xf32> to vector<2x8x1xf32>
    %124 = vector.broadcast %123 : vector<2x8x1xf32> to vector<2x8x8xf32>
    %125 = arith.subf %121, %124 : vector<2x8x8xf32>
    %126 = math.exp %125 : vector<2x8x8xf32>
    %cst_43 = arith.constant dense<0.000000e+00> : vector<2x8xf32>
    %127 = vector.multi_reduction <add>, %126, %cst_43 [2] : vector<2x8x8xf32> to vector<2x8xf32>
    %128 = vector.shape_cast %127 : vector<2x8xf32> to vector<2x8x1xf32>
    %129 = tpu.reciprocal %128 {approx = true} : vector<2x8x1xf32> -> vector<2x8x1xf32>
    %130 = vector.broadcast %129 : vector<2x8x1xf32> to vector<2x8x8xf32>
    %131 = arith.mulf %126, %130 : vector<2x8x8xf32>
    %132 = arith.truncf %131 : vector<2x8x8xf32> to vector<2x8x8xbf16>
    %133 = vector.extract_strided_slice %46 {offsets = [0, 0, 24], sizes = [2, 8, 8], strides = [1, 1, 1]} : vector<2x8x32xbf16> to vector<2x8x8xbf16>
    %cst_44 = arith.constant dense<0.000000e+00> : vector<2x8x8xf32>
    %134 = tpu.matmul %132, %133, %cst_44 {dimension_numbers = #tpu.dot_dimension_numbers<[2], [1], [1], [2], [0, 0, 0, 1, 1, 2], [0], [0]>} : vector<2x8x8xbf16>, vector<2x8x8xbf16>, vector<2x8x8xf32> -> vector<2x8x8xf32>
    %135 = tpu.concatenate %68, %90, %112, %134 in 2 : vector<2x8x8xf32>, vector<2x8x8xf32>, vector<2x8x8xf32>, vector<2x8x8xf32> -> vector<2x8x32xf32>
    %136 = vector.shape_cast %135 : vector<2x8x32xf32> to vector<16x32xf32>
    %c0_45 = arith.constant 0 : index
    %c0_46 = arith.constant 0 : index
    %137 = vector.load %arg6[%c0_45, %c0_46] : memref<32x32xbf16, #tpu.memory_space<vmem>>, vector<32x32xbf16>
    %138 = arith.truncf %136 : vector<16x32xf32> to vector<16x32xbf16>
    %cst_47 = arith.constant dense<0.000000e+00> : vector<16x32xf32>
    %139 = tpu.matmul %138, %137, %cst_47 {dimension_numbers = #tpu.dot_dimension_numbers<[1], [0], [0], [1], [0, 0, 1, 1], [], []>} : vector<16x32xbf16>, vector<32x32xbf16>, vector<16x32xf32> -> vector<16x32xf32>
    %c0_48 = arith.constant 0 : index
    %c0_49 = arith.constant 0 : index
    %140 = vector.load %arg7[%c0_48, %c0_49] : memref<1x32xf32, #tpu.memory_space<vmem>>, vector<1x32xf32>
    %141 = vector.broadcast %140 : vector<1x32xf32> to vector<16x32xf32>
    %142 = arith.addf %139, %141 : vector<16x32xf32>
    %143 = arith.addf %1, %142 : vector<16x32xf32>
    %cst_50 = arith.constant dense<0.000000e+00> : vector<16xf32>
    %144 = vector.multi_reduction <add>, %143, %cst_50 [1] : vector<16x32xf32> to vector<16xf32>
    %145 = vector.shape_cast %144 : vector<16xf32> to vector<16x1xf32>
    %cst_51 = arith.constant 3.200000e+01 : f32
    %146 = vector.broadcast %cst_51 : f32 to vector<16x1xf32>
    %147 = arith.divf %145, %146 : vector<16x1xf32>
    %148 = vector.broadcast %147 : vector<16x1xf32> to vector<16x32xf32>
    %149 = arith.subf %143, %148 : vector<16x32xf32>
    %150 = arith.mulf %149, %149 : vector<16x32xf32>
    %cst_52 = arith.constant dense<0.000000e+00> : vector<16xf32>
    %151 = vector.multi_reduction <add>, %150, %cst_52 [1] : vector<16x32xf32> to vector<16xf32>
    %152 = vector.shape_cast %151 : vector<16xf32> to vector<16x1xf32>
    %cst_53 = arith.constant 0.0322580636 : f32
    %153 = vector.broadcast %cst_53 : f32 to vector<16x1xf32>
    %154 = arith.mulf %152, %153 : vector<16x1xf32>
    %155 = math.sqrt %154 : vector<16x1xf32>
    %cst_54 = arith.constant 9.99999997E-7 : f32
    %156 = vector.broadcast %cst_54 : f32 to vector<16x1xf32>
    %157 = arith.addf %155, %156 : vector<16x1xf32>
    %158 = tpu.reciprocal %157 {approx = true} : vector<16x1xf32> -> vector<16x1xf32>
    %159 = vector.broadcast %158 : vector<16x1xf32> to vector<16x32xf32>
    %160 = arith.mulf %149, %159 : vector<16x32xf32>
    %cst_55 = arith.constant 1.000000e+00 : f32
    %161 = vector.broadcast %cst_55 : f32 to vector<16x32xf32>
    %162 = arith.mulf %161, %160 : vector<16x32xf32>
    %cst_56 = arith.constant 0.000000e+00 : f32
    %163 = vector.broadcast %cst_56 : f32 to vector<16x32xf32>
    %164 = arith.addf %162, %163 : vector<16x32xf32>
    %c0_57 = arith.constant 0 : index
    %c0_58 = arith.constant 0 : index
    %165 = vector.load %arg8[%c0_57, %c0_58] : memref<32x96xbf16, #tpu.memory_space<vmem>>, vector<32x32xbf16>
    %166 = arith.truncf %164 : vector<16x32xf32> to vector<16x32xbf16>
    %cst_59 = arith.constant dense<0.000000e+00> : vector<16x32xf32>
    %167 = tpu.matmul %166, %165, %cst_59 {dimension_numbers = #tpu.dot_dimension_numbers<[1], [0], [0], [1], [0, 0, 1, 1], [], []>} : vector<16x32xbf16>, vector<32x32xbf16>, vector<16x32xf32> -> vector<16x32xf32>
    %c0_60 = arith.constant 0 : index
    %c0_61 = arith.constant 0 : index
    %168 = vector.load %arg9[%c0_60, %c0_61] : memref<1x96xf32, #tpu.memory_space<vmem>>, vector<1x32xf32>
    %169 = vector.broadcast %168 : vector<1x32xf32> to vector<16x32xf32>
    %170 = arith.addf %167, %169 : vector<16x32xf32>
    %c0_62 = arith.constant 0 : index
    %c32 = arith.constant 32 : index
    %171 = vector.load %arg8[%c0_62, %c32] : memref<32x96xbf16, #tpu.memory_space<vmem>>, vector<32x64xbf16>
    %172 = arith.truncf %3 : vector<16x32xf32> to vector<16x32xbf16>
    %cst_63 = arith.constant dense<0.000000e+00> : vector<16x64xf32>
    %173 = tpu.matmul %172, %171, %cst_63 {dimension_numbers = #tpu.dot_dimension_numbers<[1], [0], [0], [1], [0, 0, 1, 1], [], []>} : vector<16x32xbf16>, vector<32x64xbf16>, vector<16x64xf32> -> vector<16x64xf32>
    %c0_64 = arith.constant 0 : index
    %c32_65 = arith.constant 32 : index
    %174 = vector.load %arg9[%c0_64, %c32_65] : memref<1x96xf32, #tpu.memory_space<vmem>>, vector<1x64xf32>
    %175 = vector.broadcast %174 : vector<1x64xf32> to vector<16x64xf32>
    %176 = arith.addf %173, %175 : vector<16x64xf32>
    %177 = vector.extract_strided_slice %176 {offsets = [0, 0], sizes = [16, 32], strides = [1, 1]} : vector<16x64xf32> to vector<16x32xf32>
    %178 = vector.extract_strided_slice %176 {offsets = [0, 32], sizes = [16, 32], strides = [1, 1]} : vector<16x64xf32> to vector<16x32xf32>
    %179 = vector.shape_cast %170 : vector<16x32xf32> to vector<2x8x32xf32>
    %180 = arith.truncf %179 : vector<2x8x32xf32> to vector<2x8x32xbf16>
    %181 = vector.shape_cast %177 : vector<16x32xf32> to vector<2x8x32xf32>
    %182 = arith.truncf %181 : vector<2x8x32xf32> to vector<2x8x32xbf16>
    %183 = vector.shape_cast %178 : vector<16x32xf32> to vector<2x8x32xf32>
    %184 = arith.truncf %183 : vector<2x8x32xf32> to vector<2x8x32xbf16>
    %185 = vector.extract_strided_slice %180 {offsets = [0, 0, 0], sizes = [2, 8, 8], strides = [1, 1, 1]} : vector<2x8x32xbf16> to vector<2x8x8xbf16>
    %186 = vector.extract_strided_slice %182 {offsets = [0, 0, 0], sizes = [2, 8, 8], strides = [1, 1, 1]} : vector<2x8x32xbf16> to vector<2x8x8xbf16>
    %cst_66 = arith.constant dense<0.000000e+00> : vector<2x8x8xf32>
    %187 = tpu.matmul %185, %186, %cst_66 {dimension_numbers = #tpu.dot_dimension_numbers<[2], [2], [1], [1], [0, 0, 0, 1, 1, 1], [0], [0]>} : vector<2x8x8xbf16>, vector<2x8x8xbf16>, vector<2x8x8xf32> -> vector<2x8x8xf32>
    %cst_67 = arith.constant 0.353553385 : f32
    %188 = vector.broadcast %cst_67 : f32 to vector<2x8x8xf32>
    %189 = arith.mulf %187, %188 : vector<2x8x8xf32>
    %cst_68 = arith.constant -1.000000e+20 : f32
    %190 = vector.shape_cast %10 : vector<2x1x8xi1> to vector<2x1x8xi1>
    %191 = vector.broadcast %190 : vector<2x1x8xi1> to vector<2x8x8xi1>
    %192 = vector.broadcast %cst_68 : f32 to vector<2x8x8xf32>
    %193 = arith.select %191, %189, %192 : vector<2x8x8xi1>, vector<2x8x8xf32>
    %cst_69 = arith.constant dense<0xFF800000> : vector<2x8xf32>
    %194 = vector.multi_reduction <maximumf>, %193, %cst_69 [2] : vector<2x8x8xf32> to vector<2x8xf32>
    %195 = vector.shape_cast %194 : vector<2x8xf32> to vector<2x8x1xf32>
    %196 = vector.broadcast %195 : vector<2x8x1xf32> to vector<2x8x8xf32>
    %197 = arith.subf %193, %196 : vector<2x8x8xf32>
    %198 = math.exp %197 : vector<2x8x8xf32>
    %cst_70 = arith.constant dense<0.000000e+00> : vector<2x8xf32>
    %199 = vector.multi_reduction <add>, %198, %cst_70 [2] : vector<2x8x8xf32> to vector<2x8xf32>
    %200 = vector.shape_cast %199 : vector<2x8xf32> to vector<2x8x1xf32>
    %201 = tpu.reciprocal %200 {approx = true} : vector<2x8x1xf32> -> vector<2x8x1xf32>
    %202 = vector.broadcast %201 : vector<2x8x1xf32> to vector<2x8x8xf32>
    %203 = arith.mulf %198, %202 : vector<2x8x8xf32>
    %204 = arith.truncf %203 : vector<2x8x8xf32> to vector<2x8x8xbf16>
    %205 = vector.extract_strided_slice %184 {offsets = [0, 0, 0], sizes = [2, 8, 8], strides = [1, 1, 1]} : vector<2x8x32xbf16> to vector<2x8x8xbf16>
    %cst_71 = arith.constant dense<0.000000e+00> : vector<2x8x8xf32>
    %206 = tpu.matmul %204, %205, %cst_71 {dimension_numbers = #tpu.dot_dimension_numbers<[2], [1], [1], [2], [0, 0, 0, 1, 1, 2], [0], [0]>} : vector<2x8x8xbf16>, vector<2x8x8xbf16>, vector<2x8x8xf32> -> vector<2x8x8xf32>
    %207 = vector.extract_strided_slice %180 {offsets = [0, 0, 8], sizes = [2, 8, 8], strides = [1, 1, 1]} : vector<2x8x32xbf16> to vector<2x8x8xbf16>
    %208 = vector.extract_strided_slice %182 {offsets = [0, 0, 8], sizes = [2, 8, 8], strides = [1, 1, 1]} : vector<2x8x32xbf16> to vector<2x8x8xbf16>
    %cst_72 = arith.constant dense<0.000000e+00> : vector<2x8x8xf32>
    %209 = tpu.matmul %207, %208, %cst_72 {dimension_numbers = #tpu.dot_dimension_numbers<[2], [2], [1], [1], [0, 0, 0, 1, 1, 1], [0], [0]>} : vector<2x8x8xbf16>, vector<2x8x8xbf16>, vector<2x8x8xf32> -> vector<2x8x8xf32>
    %cst_73 = arith.constant 0.353553385 : f32
    %210 = vector.broadcast %cst_73 : f32 to vector<2x8x8xf32>
    %211 = arith.mulf %209, %210 : vector<2x8x8xf32>
    %cst_74 = arith.constant -1.000000e+20 : f32
    %212 = vector.shape_cast %10 : vector<2x1x8xi1> to vector<2x1x8xi1>
    %213 = vector.broadcast %212 : vector<2x1x8xi1> to vector<2x8x8xi1>
    %214 = vector.broadcast %cst_74 : f32 to vector<2x8x8xf32>
    %215 = arith.select %213, %211, %214 : vector<2x8x8xi1>, vector<2x8x8xf32>
    %cst_75 = arith.constant dense<0xFF800000> : vector<2x8xf32>
    %216 = vector.multi_reduction <maximumf>, %215, %cst_75 [2] : vector<2x8x8xf32> to vector<2x8xf32>
    %217 = vector.shape_cast %216 : vector<2x8xf32> to vector<2x8x1xf32>
    %218 = vector.broadcast %217 : vector<2x8x1xf32> to vector<2x8x8xf32>
    %219 = arith.subf %215, %218 : vector<2x8x8xf32>
    %220 = math.exp %219 : vector<2x8x8xf32>
    %cst_76 = arith.constant dense<0.000000e+00> : vector<2x8xf32>
    %221 = vector.multi_reduction <add>, %220, %cst_76 [2] : vector<2x8x8xf32> to vector<2x8xf32>
    %222 = vector.shape_cast %221 : vector<2x8xf32> to vector<2x8x1xf32>
    %223 = tpu.reciprocal %222 {approx = true} : vector<2x8x1xf32> -> vector<2x8x1xf32>
    %224 = vector.broadcast %223 : vector<2x8x1xf32> to vector<2x8x8xf32>
    %225 = arith.mulf %220, %224 : vector<2x8x8xf32>
    %226 = arith.truncf %225 : vector<2x8x8xf32> to vector<2x8x8xbf16>
    %227 = vector.extract_strided_slice %184 {offsets = [0, 0, 8], sizes = [2, 8, 8], strides = [1, 1, 1]} : vector<2x8x32xbf16> to vector<2x8x8xbf16>
    %cst_77 = arith.constant dense<0.000000e+00> : vector<2x8x8xf32>
    %228 = tpu.matmul %226, %227, %cst_77 {dimension_numbers = #tpu.dot_dimension_numbers<[2], [1], [1], [2], [0, 0, 0, 1, 1, 2], [0], [0]>} : vector<2x8x8xbf16>, vector<2x8x8xbf16>, vector<2x8x8xf32> -> vector<2x8x8xf32>
    %229 = vector.extract_strided_slice %180 {offsets = [0, 0, 16], sizes = [2, 8, 8], strides = [1, 1, 1]} : vector<2x8x32xbf16> to vector<2x8x8xbf16>
    %230 = vector.extract_strided_slice %182 {offsets = [0, 0, 16], sizes = [2, 8, 8], strides = [1, 1, 1]} : vector<2x8x32xbf16> to vector<2x8x8xbf16>
    %cst_78 = arith.constant dense<0.000000e+00> : vector<2x8x8xf32>
    %231 = tpu.matmul %229, %230, %cst_78 {dimension_numbers = #tpu.dot_dimension_numbers<[2], [2], [1], [1], [0, 0, 0, 1, 1, 1], [0], [0]>} : vector<2x8x8xbf16>, vector<2x8x8xbf16>, vector<2x8x8xf32> -> vector<2x8x8xf32>
    %cst_79 = arith.constant 0.353553385 : f32
    %232 = vector.broadcast %cst_79 : f32 to vector<2x8x8xf32>
    %233 = arith.mulf %231, %232 : vector<2x8x8xf32>
    %cst_80 = arith.constant -1.000000e+20 : f32
    %234 = vector.shape_cast %10 : vector<2x1x8xi1> to vector<2x1x8xi1>
    %235 = vector.broadcast %234 : vector<2x1x8xi1> to vector<2x8x8xi1>
    %236 = vector.broadcast %cst_80 : f32 to vector<2x8x8xf32>
    %237 = arith.select %235, %233, %236 : vector<2x8x8xi1>, vector<2x8x8xf32>
    %cst_81 = arith.constant dense<0xFF800000> : vector<2x8xf32>
    %238 = vector.multi_reduction <maximumf>, %237, %cst_81 [2] : vector<2x8x8xf32> to vector<2x8xf32>
    %239 = vector.shape_cast %238 : vector<2x8xf32> to vector<2x8x1xf32>
    %240 = vector.broadcast %239 : vector<2x8x1xf32> to vector<2x8x8xf32>
    %241 = arith.subf %237, %240 : vector<2x8x8xf32>
    %242 = math.exp %241 : vector<2x8x8xf32>
    %cst_82 = arith.constant dense<0.000000e+00> : vector<2x8xf32>
    %243 = vector.multi_reduction <add>, %242, %cst_82 [2] : vector<2x8x8xf32> to vector<2x8xf32>
    %244 = vector.shape_cast %243 : vector<2x8xf32> to vector<2x8x1xf32>
    %245 = tpu.reciprocal %244 {approx = true} : vector<2x8x1xf32> -> vector<2x8x1xf32>
    %246 = vector.broadcast %245 : vector<2x8x1xf32> to vector<2x8x8xf32>
    %247 = arith.mulf %242, %246 : vector<2x8x8xf32>
    %248 = arith.truncf %247 : vector<2x8x8xf32> to vector<2x8x8xbf16>
    %249 = vector.extract_strided_slice %184 {offsets = [0, 0, 16], sizes = [2, 8, 8], strides = [1, 1, 1]} : vector<2x8x32xbf16> to vector<2x8x8xbf16>
    %cst_83 = arith.constant dense<0.000000e+00> : vector<2x8x8xf32>
    %250 = tpu.matmul %248, %249, %cst_83 {dimension_numbers = #tpu.dot_dimension_numbers<[2], [1], [1], [2], [0, 0, 0, 1, 1, 2], [0], [0]>} : vector<2x8x8xbf16>, vector<2x8x8xbf16>, vector<2x8x8xf32> -> vector<2x8x8xf32>
    %251 = vector.extract_strided_slice %180 {offsets = [0, 0, 24], sizes = [2, 8, 8], strides = [1, 1, 1]} : vector<2x8x32xbf16> to vector<2x8x8xbf16>
    %252 = vector.extract_strided_slice %182 {offsets = [0, 0, 24], sizes = [2, 8, 8], strides = [1, 1, 1]} : vector<2x8x32xbf16> to vector<2x8x8xbf16>
    %cst_84 = arith.constant dense<0.000000e+00> : vector<2x8x8xf32>
    %253 = tpu.matmul %251, %252, %cst_84 {dimension_numbers = #tpu.dot_dimension_numbers<[2], [2], [1], [1], [0, 0, 0, 1, 1, 1], [0], [0]>} : vector<2x8x8xbf16>, vector<2x8x8xbf16>, vector<2x8x8xf32> -> vector<2x8x8xf32>
    %cst_85 = arith.constant 0.353553385 : f32
    %254 = vector.broadcast %cst_85 : f32 to vector<2x8x8xf32>
    %255 = arith.mulf %253, %254 : vector<2x8x8xf32>
    %cst_86 = arith.constant -1.000000e+20 : f32
    %256 = vector.shape_cast %10 : vector<2x1x8xi1> to vector<2x1x8xi1>
    %257 = vector.broadcast %256 : vector<2x1x8xi1> to vector<2x8x8xi1>
    %258 = vector.broadcast %cst_86 : f32 to vector<2x8x8xf32>
    %259 = arith.select %257, %255, %258 : vector<2x8x8xi1>, vector<2x8x8xf32>
    %cst_87 = arith.constant dense<0xFF800000> : vector<2x8xf32>
    %260 = vector.multi_reduction <maximumf>, %259, %cst_87 [2] : vector<2x8x8xf32> to vector<2x8xf32>
    %261 = vector.shape_cast %260 : vector<2x8xf32> to vector<2x8x1xf32>
    %262 = vector.broadcast %261 : vector<2x8x1xf32> to vector<2x8x8xf32>
    %263 = arith.subf %259, %262 : vector<2x8x8xf32>
    %264 = math.exp %263 : vector<2x8x8xf32>
    %cst_88 = arith.constant dense<0.000000e+00> : vector<2x8xf32>
    %265 = vector.multi_reduction <add>, %264, %cst_88 [2] : vector<2x8x8xf32> to vector<2x8xf32>
    %266 = vector.shape_cast %265 : vector<2x8xf32> to vector<2x8x1xf32>
    %267 = tpu.reciprocal %266 {approx = true} : vector<2x8x1xf32> -> vector<2x8x1xf32>
    %268 = vector.broadcast %267 : vector<2x8x1xf32> to vector<2x8x8xf32>
    %269 = arith.mulf %264, %268 : vector<2x8x8xf32>
    %270 = arith.truncf %269 : vector<2x8x8xf32> to vector<2x8x8xbf16>
    %271 = vector.extract_strided_slice %184 {offsets = [0, 0, 24], sizes = [2, 8, 8], strides = [1, 1, 1]} : vector<2x8x32xbf16> to vector<2x8x8xbf16>
    %cst_89 = arith.constant dense<0.000000e+00> : vector<2x8x8xf32>
    %272 = tpu.matmul %270, %271, %cst_89 {dimension_numbers = #tpu.dot_dimension_numbers<[2], [1], [1], [2], [0, 0, 0, 1, 1, 2], [0], [0]>} : vector<2x8x8xbf16>, vector<2x8x8xbf16>, vector<2x8x8xf32> -> vector<2x8x8xf32>
    %273 = tpu.concatenate %206, %228, %250, %272 in 2 : vector<2x8x8xf32>, vector<2x8x8xf32>, vector<2x8x8xf32>, vector<2x8x8xf32> -> vector<2x8x32xf32>
    %274 = vector.shape_cast %273 : vector<2x8x32xf32> to vector<16x32xf32>
    %c0_90 = arith.constant 0 : index
    %c0_91 = arith.constant 0 : index
    %275 = vector.load %arg10[%c0_90, %c0_91] : memref<32x32xbf16, #tpu.memory_space<vmem>>, vector<32x32xbf16>
    %276 = arith.truncf %274 : vector<16x32xf32> to vector<16x32xbf16>
    %cst_92 = arith.constant dense<0.000000e+00> : vector<16x32xf32>
    %277 = tpu.matmul %276, %275, %cst_92 {dimension_numbers = #tpu.dot_dimension_numbers<[1], [0], [0], [1], [0, 0, 1, 1], [], []>} : vector<16x32xbf16>, vector<32x32xbf16>, vector<16x32xf32> -> vector<16x32xf32>
    %c0_93 = arith.constant 0 : index
    %c0_94 = arith.constant 0 : index
    %278 = vector.load %arg11[%c0_93, %c0_94] : memref<1x32xf32, #tpu.memory_space<vmem>>, vector<1x32xf32>
    %279 = vector.broadcast %278 : vector<1x32xf32> to vector<16x32xf32>
    %280 = arith.addf %277, %279 : vector<16x32xf32>
    %281 = arith.addf %143, %280 : vector<16x32xf32>
    %cst_95 = arith.constant dense<0.000000e+00> : vector<16xf32>
    %282 = vector.multi_reduction <add>, %281, %cst_95 [1] : vector<16x32xf32> to vector<16xf32>
    %283 = vector.shape_cast %282 : vector<16xf32> to vector<16x1xf32>
    %cst_96 = arith.constant 3.200000e+01 : f32
    %284 = vector.broadcast %cst_96 : f32 to vector<16x1xf32>
    %285 = arith.divf %283, %284 : vector<16x1xf32>
    %286 = vector.broadcast %285 : vector<16x1xf32> to vector<16x32xf32>
    %287 = arith.subf %281, %286 : vector<16x32xf32>
    %288 = arith.mulf %287, %287 : vector<16x32xf32>
    %cst_97 = arith.constant dense<0.000000e+00> : vector<16xf32>
    %289 = vector.multi_reduction <add>, %288, %cst_97 [1] : vector<16x32xf32> to vector<16xf32>
    %290 = vector.shape_cast %289 : vector<16xf32> to vector<16x1xf32>
    %cst_98 = arith.constant 0.0322580636 : f32
    %291 = vector.broadcast %cst_98 : f32 to vector<16x1xf32>
    %292 = arith.mulf %290, %291 : vector<16x1xf32>
    %293 = math.sqrt %292 : vector<16x1xf32>
    %cst_99 = arith.constant 9.99999997E-7 : f32
    %294 = vector.broadcast %cst_99 : f32 to vector<16x1xf32>
    %295 = arith.addf %293, %294 : vector<16x1xf32>
    %296 = tpu.reciprocal %295 {approx = true} : vector<16x1xf32> -> vector<16x1xf32>
    %297 = vector.broadcast %296 : vector<16x1xf32> to vector<16x32xf32>
    %298 = arith.mulf %287, %297 : vector<16x32xf32>
    %cst_100 = arith.constant 1.000000e+00 : f32
    %299 = vector.broadcast %cst_100 : f32 to vector<16x32xf32>
    %300 = arith.mulf %299, %298 : vector<16x32xf32>
    %cst_101 = arith.constant 0.000000e+00 : f32
    %301 = vector.broadcast %cst_101 : f32 to vector<16x32xf32>
    %302 = arith.addf %300, %301 : vector<16x32xf32>
    %303 = arith.truncf %302 : vector<16x32xf32> to vector<16x32xbf16>
    %c0_102 = arith.constant 0 : index
    %c0_103 = arith.constant 0 : index
    %304 = vector.load %arg12[%c0_102, %c0_103] : memref<32x64xbf16, #tpu.memory_space<vmem>>, vector<32x64xbf16>
    %cst_104 = arith.constant dense<0.000000e+00> : vector<16x64xf32>
    %305 = tpu.matmul %303, %304, %cst_104 {dimension_numbers = #tpu.dot_dimension_numbers<[1], [0], [0], [1], [0, 0, 1, 1], [], []>} : vector<16x32xbf16>, vector<32x64xbf16>, vector<16x64xf32> -> vector<16x64xf32>
    %c0_105 = arith.constant 0 : index
    %c0_106 = arith.constant 0 : index
    %306 = vector.load %arg13[%c0_105, %c0_106] : memref<1x64xf32, #tpu.memory_space<vmem>>, vector<1x64xf32>
    %307 = vector.broadcast %306 : vector<1x64xf32> to vector<16x64xf32>
    %308 = arith.addf %305, %307 : vector<16x64xf32>
    %309 = arith.mulf %308, %308 : vector<16x64xf32>
    %310 = arith.mulf %308, %309 : vector<16x64xf32>
    %cst_107 = arith.constant 4.471500e-02 : f32
    %311 = vector.broadcast %cst_107 : f32 to vector<16x64xf32>
    %312 = arith.mulf %311, %310 : vector<16x64xf32>
    %313 = arith.addf %308, %312 : vector<16x64xf32>
    %cst_108 = arith.constant 0.797884583 : f32
    %314 = vector.broadcast %cst_108 : f32 to vector<16x64xf32>
    %315 = arith.mulf %314, %313 : vector<16x64xf32>
    %316 = math.tanh %315 : vector<16x64xf32>
    %cst_109 = arith.constant 1.000000e+00 : f32
    %317 = vector.broadcast %cst_109 : f32 to vector<16x64xf32>
    %318 = arith.addf %317, %316 : vector<16x64xf32>
    %cst_110 = arith.constant 5.000000e-01 : f32
    %319 = vector.broadcast %cst_110 : f32 to vector<16x64xf32>
    %320 = arith.mulf %319, %318 : vector<16x64xf32>
    %321 = arith.mulf %308, %320 : vector<16x64xf32>
    %322 = arith.truncf %321 : vector<16x64xf32> to vector<16x64xbf16>
    %c0_111 = arith.constant 0 : index
    %c0_112 = arith.constant 0 : index
    %323 = vector.load %arg14[%c0_111, %c0_112] : memref<64x32xbf16, #tpu.memory_space<vmem>>, vector<64x32xbf16>
    %cst_113 = arith.constant dense<0.000000e+00> : vector<16x32xf32>
    %324 = tpu.matmul %322, %323, %cst_113 {dimension_numbers = #tpu.dot_dimension_numbers<[1], [0], [0], [1], [0, 0, 1, 1], [], []>} : vector<16x64xbf16>, vector<64x32xbf16>, vector<16x32xf32> -> vector<16x32xf32>
    %325 = arith.addf %281, %324 : vector<16x32xf32>
    %c0_114 = arith.constant 0 : index
    %c0_115 = arith.constant 0 : index
    %326 = vector.load %arg15[%c0_114, %c0_115] : memref<1x32xf32, #tpu.memory_space<vmem>>, vector<1x32xf32>
    %327 = vector.broadcast %326 : vector<1x32xf32> to vector<16x32xf32>
    %328 = arith.addf %325, %327 : vector<16x32xf32>
    %329 = vector.shape_cast %328 : vector<16x32xf32> to vector<2x8x32xf32>
    %c0_116 = arith.constant 0 : index
    %c0_117 = arith.constant 0 : index
    %c0_118 = arith.constant 0 : index
    %330 = vector.load %arg16[%c0_116, %c0_117, %c0_118] : memref<2x8x32xf32, #tpu.memory_space<vmem>>, vector<2x8x32xf32>
    tpu.vector_store %arg16[%c0_116, %c0_117, %c0_118], %329 {strides = array<i32>} : memref<2x8x32xf32, #tpu.memory_space<vmem>>, vector<2x8x32xf32>,
    return
  }
  func.func @transform_0(%arg0: i32) -> (i32, i32, i32) {
    %c0_i32 = arith.constant 0 : i32
    %c0_i32_0 = arith.constant 0 : i32
    %c0_i32_1 = arith.constant 0 : i32
    return %arg0, %c0_i32, %c0_i32_0 : i32, i32, i32
  }
  func.func @transform_1(%arg0: i32) -> (i32, i32, i32) {
    %c0_i32 = arith.constant 0 : i32
    %c0_i32_0 = arith.constant 0 : i32
    %c0_i32_1 = arith.constant 0 : i32
    return %arg0, %c0_i32, %c0_i32_0 : i32, i32, i32
  }
  func.func @transform_2(%arg0: i32) -> (i32, i32, i32, i32) {
    %c0_i32 = arith.constant 0 : i32
    %c0_i32_0 = arith.constant 0 : i32
    %c0_i32_1 = arith.constant 0 : i32
    %c0_i32_2 = arith.constant 0 : i32
    return %arg0, %c0_i32, %c0_i32_0, %c0_i32_1 : i32, i32, i32, i32
  }
  func.func @transform_3(%arg0: i32) -> (i32, i32) {
    %c0_i32 = arith.constant 0 : i32
    %c0_i32_0 = arith.constant 0 : i32
    %c0_i32_1 = arith.constant 0 : i32
    return %c0_i32, %c0_i32_0 : i32, i32
  }
  func.func @transform_4(%arg0: i32) -> (i32, i32) {
    %c0_i32 = arith.constant 0 : i32
    %c0_i32_0 = arith.constant 0 : i32
    %c0_i32_1 = arith.constant 0 : i32
    return %c0_i32, %c0_i32_0 : i32, i32
  }
  func.func @transform_5(%arg0: i32) -> (i32, i32) {
    %c0_i32 = arith.constant 0 : i32
    %c0_i32_0 = arith.constant 0 : i32
    %c0_i32_1 = arith.constant 0 : i32
    return %c0_i32, %c0_i32_0 : i32, i32
  }
  func.func @transform_6(%arg0: i32) -> (i32, i32) {
    %c0_i32 = arith.constant 0 : i32
    %c0_i32_0 = arith.constant 0 : i32
    %c0_i32_1 = arith.constant 0 : i32
    return %c0_i32, %c0_i32_0 : i32, i32
  }
  func.func @transform_7(%arg0: i32) -> (i32, i32) {
    %c0_i32 = arith.constant 0 : i32
    %c0_i32_0 = arith.constant 0 : i32
    %c0_i32_1 = arith.constant 0 : i32
    return %c0_i32, %c0_i32_0 : i32, i32
  }
  func.func @transform_8(%arg0: i32) -> (i32, i32) {
    %c0_i32 = arith.constant 0 : i32
    %c0_i32_0 = arith.constant 0 : i32
    %c0_i32_1 = arith.constant 0 : i32
    return %c0_i32, %c0_i32_0 : i32, i32
  }
  func.func @transform_9(%arg0: i32) -> (i32, i32) {
    %c0_i32 = arith.constant 0 : i32
    %c0_i32_0 = arith.constant 0 : i32
    %c0_i32_1 = arith.constant 0 : i32
    return %c0_i32, %c0_i32_0 : i32, i32
  }
  func.func @transform_10(%arg0: i32) -> (i32, i32) {
    %c0_i32 = arith.constant 0 : i32
    %c0_i32_0 = arith.constant 0 : i32
    %c0_i32_1 = arith.constant 0 : i32
    return %c0_i32, %c0_i32_0 : i32, i32
  }
  func.func @transform_11(%arg0: i32) -> (i32, i32) {
    %c0_i32 = arith.constant 0 : i32
    %c0_i32_0 = arith.constant 0 : i32
    %c0_i32_1 = arith.constant 0 : i32
    return %c0_i32, %c0_i32_0 : i32, i32
  }
  func.func @transform_12(%arg0: i32) -> (i32, i32) {
    %c0_i32 = arith.constant 0 : i32
    %c0_i32_0 = arith.constant 0 : i32
    %c0_i32_1 = arith.constant 0 : i32
    return %c0_i32, %c0_i32_0 : i32, i32
  }
  func.func @transform_13(%arg0: i32) -> (i32, i32) {
    %c0_i32 = arith.constant 0 : i32
    %c0_i32_0 = arith.constant 0 : i32
    %c0_i32_1 = arith.constant 0 : i32
    return %c0_i32, %c0_i32_0 : i32, i32
  }
  func.func @transform_14(%arg0: i32) -> (i32, i32) {
    %c0_i32 = arith.constant 0 : i32
    %c0_i32_0 = arith.constant 0 : i32
    %c0_i32_1 = arith.constant 0 : i32
    return %c0_i32, %c0_i32_0 : i32, i32
  }
  func.func @transform_15(%arg0: i32) -> (i32, i32, i32) {
    %c0_i32 = arith.constant 0 : i32
    %c0_i32_0 = arith.constant 0 : i32
    %c0_i32_1 = arith.constant 0 : i32
    return %arg0, %c0_i32, %c0_i32_0 : i32, i32, i32
  }
}

</mosaic_0001>

<llo_original>
// kernel: decoder_block.1
$region0: #{decoder_block.1}
  #allocation0 [shape = 'u32[]', space=smem, size = 0x4, offset = 0x4, fixed_abs, tag = 'smem constant byte address 0x4 - core index']
  #allocation1 [shape = 'u32[144,128]{1,0:T(1,128)}', space=vmem, size = 0x12000, scoped, tag = 'internal scratch']
  %s0 = inlined_call_operand.vmem [shape: f32[2,8,32], index: 0, kind: input, shape index: {}]
  %s1 = inlined_call_operand.vmem [shape: f32[2,8,32], index: 1, kind: input, shape index: {}]
  %s2 = inlined_call_operand.vmem [shape: f32[2,1,1,8], index: 2, kind: input, shape index: {}]
  %s3 = inlined_call_operand.vmem [shape: bf16[32,96], index: 3, kind: input, shape index: {}]
  %s4 = inlined_call_operand.vmem [shape: f32[1,96], index: 4, kind: input, shape index: {}]
  %s5 = inlined_call_operand.vmem [shape: bf16[32,32], index: 5, kind: input, shape index: {}]
  %s6 = inlined_call_operand.vmem [shape: f32[1,32], index: 6, kind: input, shape index: {}]
  %s7 = inlined_call_operand.hbm [shape: bf16[32,96], index: 7, kind: input, shape index: {}]
  %s8 = inlined_call_operand.hbm [shape: f32[1,96], index: 8, kind: input, shape index: {}]
  %s9 = inlined_call_operand.hbm [shape: bf16[32,32], index: 9, kind: input, shape index: {}]
  %s10 = inlined_call_operand.hbm [shape: f32[1,32], index: 10, kind: input, shape index: {}]
  %s11 = inlined_call_operand.hbm [shape: bf16[32,64], index: 11, kind: input, shape index: {}]
  %s12 = inlined_call_operand.hbm [shape: f32[1,64], index: 12, kind: input, shape index: {}]
  %s13 = inlined_call_operand.vmem [shape: bf16[64,32], index: 13, kind: input, shape index: {}]
  %s14 = inlined_call_operand.hbm [shape: f32[1,32], index: 14, kind: input, shape index: {}]
  %s15 = inlined_call_operand.hbm [shape: f32[2,8,32], index: 15, kind: output, shape index: {}]
  %s16 = sld [smem:[#allocation0]]
  $region98: #{decoder_block.1} parent=0
    _
  %s18 = ssub.s32 1, %s16
  %s19 = scalar_select 0, %s18, %s16
  $region1: #{decoder_block.1} parent=0
    #allocation2 [shape = 'u8[8192]{0}', space=vmem, size = 0x2000, scoped, tag = 'input window, operand 7, single buffered']
    #allocation3 [shape = 's32[1]{0}', space=sflag, size = 0x4, scoped, tag = 'scoped memory for decoder_block.1']
    #allocation4 [shape = 's32[1]{0}', space=sflag, size = 0x4, scoped, tag = 'scoped memory for decoder_block.1']
    #allocation5 [shape = 'u8[512]{0}', space=vmem, size = 0x400, scoped, tag = 'input window, operand 8, single buffered']
    #allocation6 [shape = 's32[1]{0}', space=sflag, size = 0x4, scoped, tag = 'scoped memory for decoder_block.1']
    #allocation7 [shape = 'u8[8192]{0}', space=vmem, size = 0x2000, scoped, tag = 'input window, operand 9, single buffered']
    #allocation8 [shape = 'u8[512]{0}', space=vmem, size = 0x400, scoped, tag = 'input window, operand 10, single buffered']
    #allocation9 [shape = 's32[1]{0}', space=sflag, size = 0x4, scoped, tag = 'scoped memory for decoder_block.1']
    #allocation10 [shape = 'u8[8192]{0}', space=vmem, size = 0x2000, scoped, tag = 'input window, operand 11, single buffered']
    #allocation11 [shape = 'u8[512]{0}', space=vmem, size = 0x400, scoped, tag = 'input window, operand 12, single buffered']
    #allocation12 [shape = 's32[1]{0}', space=sflag, size = 0x4, scoped, tag = 'scoped memory for decoder_block.1']
    #allocation13 [shape = 'u8[512]{0}', space=vmem, size = 0x400, scoped, tag = 'input window, operand 14, single buffered']
    #allocation14 [shape = 'u8[8192]{0}', space=vmem, size = 0x2000, scoped, tag = 'output window, operand 0, single buffered']
    %20 = vsyncpa [#allocation3], 0
    %21 = vsyncpa [#allocation6], 0
    %22 = vsyncpa [#allocation9], 0
    %23 = vsyncpa [#allocation12], 0
    %24 = vsyncpa [#allocation4], 0
    // Predicated region
    $region2: #{decoder_block.1} parent=1 // pred_check
      _
    $region3: #{decoder_block.1} parent=1 // pred_check_branch
      %26 = sbr.rel (0) target = $region5
    $region4: #{decoder_block.1} parent=1 // pred_region
      _
    $region5: #{decoder_block.1} parent=1 // pred_fallthru
      _
    // Predicated region
    $region6: #{decoder_block.1} parent=1 // pred_check
      _
    $region7: #{decoder_block.1} parent=1 // pred_check_branch
      %28 = sbr.rel (0) target = $region9
    $region8: #{decoder_block.1} parent=1 // pred_region
      _
    $region9: #{decoder_block.1} parent=1 // pred_fallthru
      _
    // Predicated region
    $region10: #{decoder_block.1} parent=1 // pred_check
      _
    $region11: #{decoder_block.1} parent=1 // pred_check_branch
      %30 = sbr.rel (0) target = $region13
    $region12: #{decoder_block.1} parent=1 // pred_region
      _
    $region13: #{decoder_block.1} parent=1 // pred_fallthru
      _
    // Predicated region
    $region14: #{decoder_block.1} parent=1 // pred_check
      _
    $region15: #{decoder_block.1} parent=1 // pred_check_branch
      %32 = sbr.rel (0) target = $region17
    $region16: #{decoder_block.1} parent=1 // pred_region
      _
    $region17: #{decoder_block.1} parent=1 // pred_fallthru
      _
    // Predicated region
    $region18: #{decoder_block.1} parent=1 // pred_check
      _
    $region19: #{decoder_block.1} parent=1 // pred_check_branch
      %34 = sbr.rel (0) target = $region21
    $region20: #{decoder_block.1} parent=1 // pred_region
      _
    $region21: #{decoder_block.1} parent=1 // pred_fallthru
      _
    // Predicated region
    $region22: #{decoder_block.1} parent=1 // pred_check
      _
    $region23: #{decoder_block.1} parent=1 // pred_check_branch
      %36 = sbr.rel (0) target = $region25
    $region24: #{decoder_block.1} parent=1 // pred_region
      _
    $region25: #{decoder_block.1} parent=1 // pred_fallthru
      _
    // Predicated region
    $region26: #{decoder_block.1} parent=1 // pred_check
      _
    $region27: #{decoder_block.1} parent=1 // pred_check_branch
      %38 = sbr.rel (0) target = $region29
    $region28: #{decoder_block.1} parent=1 // pred_region
      _
    $region29: #{decoder_block.1} parent=1 // pred_fallthru
      _
    // Predicated region
    $region30: #{decoder_block.1} parent=1 // pred_check
      _
    $region31: #{decoder_block.1} parent=1 // pred_check_branch
      %40 = sbr.rel (0) target = $region33
    $region32: #{decoder_block.1} parent=1 // pred_region
      %s42 = ssub.s32 256, 256
      %43 = vsyncadd [#allocation3], %s42
      %s44 = sshll.u32 [#allocation2], 4
      %s45 = int_to_ptr.vmem [resolvable:$true] %s44
      %50 = dma.hbm_to_vmem [thread:$0]  %s7, 256, %s45, [#allocation3], 64, 64, 4
    $region33: #{decoder_block.1} parent=1 // pred_fallthru
      _
    // Predicated region
    $region34: #{decoder_block.1} parent=1 // pred_check
      _
    $region35: #{decoder_block.1} parent=1 // pred_check_branch
      %52 = sbr.rel (0) target = $region37
    $region36: #{decoder_block.1} parent=1 // pred_region
      %s54 = ssub.s32 16, 16
      %55 = vsyncadd [#allocation6], %s54
      %s57 = sshll.u32 [#allocation5], 4
      %s58 = int_to_ptr.vmem [resolvable:$true] %s57
      %60 = dma.hbm_to_vmem [thread:$0]  %s8, 16, %s58, [#allocation6]
    $region37: #{decoder_block.1} parent=1 // pred_fallthru
      _
    // Predicated region
    $region38: #{decoder_block.1} parent=1 // pred_check
      _
    $region39: #{decoder_block.1} parent=1 // pred_check_branch
      %62 = sbr.rel (0) target = $region41
    $region40: #{decoder_block.1} parent=1 // pred_region
      %s64 = ssub.s32 256, 256
      %65 = vsyncadd [#allocation6], %s64
      %s66 = sshll.u32 [#allocation7], 4
      %s67 = int_to_ptr.vmem [resolvable:$true] %s66
      %72 = dma.hbm_to_vmem [thread:$0]  %s9, 256, %s67, [#allocation6], 64, 64, 4
    $region41: #{decoder_block.1} parent=1 // pred_fallthru
      _
    // Predicated region
    $region42: #{decoder_block.1} parent=1 // pred_check
      _
    $region43: #{decoder_block.1} parent=1 // pred_check_branch
      %74 = sbr.rel (0) target = $region45
    $region44: #{decoder_block.1} parent=1 // pred_region
      %s76 = ssub.s32 16, 16
      %77 = vsyncadd [#allocation9], %s76
      %s79 = sshll.u32 [#allocation8], 4
      %s80 = int_to_ptr.vmem [resolvable:$true] %s79
      %82 = dma.hbm_to_vmem [thread:$0]  %s10, 16, %s80, [#allocation9]
    $region45: #{decoder_block.1} parent=1 // pred_fallthru
      _
    // Predicated region
    $region46: #{decoder_block.1} parent=1 // pred_check
      _
    $region47: #{decoder_block.1} parent=1 // pred_check_branch
      %84 = sbr.rel (0) target = $region49
    $region48: #{decoder_block.1} parent=1 // pred_region
      %s86 = ssub.s32 256, 256
      %87 = vsyncadd [#allocation9], %s86
      %s88 = sshll.u32 [#allocation10], 4
      %s89 = int_to_ptr.vmem [resolvable:$true] %s88
      %94 = dma.hbm_to_vmem [thread:$0]  %s11, 256, %s89, [#allocation9], 64, 64, 4
    $region49: #{decoder_block.1} parent=1 // pred_fallthru
      _
    // Predicated region
    $region50: #{decoder_block.1} parent=1 // pred_check
      _
    $region51: #{decoder_block.1} parent=1 // pred_check_branch
      %96 = sbr.rel (0) target = $region53
    $region52: #{decoder_block.1} parent=1 // pred_region
      %s98 = ssub.s32 16, 16
      %99 = vsyncadd [#allocation12], %s98
      %s101 = sshll.u32 [#allocation11], 4
      %s102 = int_to_ptr.vmem [resolvable:$true] %s101
      %104 = dma.hbm_to_vmem [thread:$0]  %s12, 16, %s102, [#allocation12]
    $region53: #{decoder_block.1} parent=1 // pred_fallthru
      _
    // Predicated region
    $region54: #{decoder_block.1} parent=1 // pred_check
      _
    $region55: #{decoder_block.1} parent=1 // pred_check_branch
      %106 = sbr.rel (0) target = $region57
    $region56: #{decoder_block.1} parent=1 // pred_region
      _
    $region57: #{decoder_block.1} parent=1 // pred_fallthru
      _
    // Predicated region
    $region58: #{decoder_block.1} parent=1 // pred_check
      _
    $region59: #{decoder_block.1} parent=1 // pred_check_branch
      %108 = sbr.rel (0) target = $region61
    $region60: #{decoder_block.1} parent=1 // pred_region
      %s110 = ssub.s32 16, 16
      %111 = vsyncadd [#allocation12], %s110
      %s113 = sshll.u32 [#allocation13], 4
      %s114 = int_to_ptr.vmem [resolvable:$true] %s113
      %116 = dma.hbm_to_vmem [thread:$0]  %s14, 16, %s114, [#allocation12]
    $region61: #{decoder_block.1} parent=1 // pred_fallthru
      _
    // Predicated region
    $region62: #{decoder_block.1} parent=1 // pred_check
      _
    $region63: #{decoder_block.1} parent=1 // pred_check_branch
      %118 = sbr.rel (0) target = $region65
    $region64: #{decoder_block.1} parent=1 // pred_region
      %119 = dma.done [#allocation3], 256
    $region65: #{decoder_block.1} parent=1 // pred_fallthru
      _
    // Predicated region
    $region66: #{decoder_block.1} parent=1 // pred_check
      _
    $region67: #{decoder_block.1} parent=1 // pred_check_branch
      %121 = sbr.rel (0) target = $region69
    $region68: #{decoder_block.1} parent=1 // pred_region
      %122 = dma.done [#allocation6], 16
    $region69: #{decoder_block.1} parent=1 // pred_fallthru
      _
    // Predicated region
    $region70: #{decoder_block.1} parent=1 // pred_check
      _
    $region71: #{decoder_block.1} parent=1 // pred_check_branch
      %124 = sbr.rel (0) target = $region73
    $region72: #{decoder_block.1} parent=1 // pred_region
      %125 = dma.done [#allocation6], 256
    $region73: #{decoder_block.1} parent=1 // pred_fallthru
      _
    // Predicated region
    $region74: #{decoder_block.1} parent=1 // pred_check
      _
    $region75: #{decoder_block.1} parent=1 // pred_check_branch
      %127 = sbr.rel (0) target = $region77
    $region76: #{decoder_block.1} parent=1 // pred_region
      %128 = dma.done [#allocation9], 16
    $region77: #{decoder_block.1} parent=1 // pred_fallthru
      _
    // Predicated region
    $region78: #{decoder_block.1} parent=1 // pred_check
      _
    $region79: #{decoder_block.1} parent=1 // pred_check_branch
      %130 = sbr.rel (0) target = $region81
    $region80: #{decoder_block.1} parent=1 // pred_region
      %131 = dma.done [#allocation9], 256
    $region81: #{decoder_block.1} parent=1 // pred_fallthru
      _
    // Predicated region
    $region82: #{decoder_block.1} parent=1 // pred_check
      _
    $region83: #{decoder_block.1} parent=1 // pred_check_branch
      %133 = sbr.rel (0) target = $region85
    $region84: #{decoder_block.1} parent=1 // pred_region
      %134 = dma.done [#allocation12], 16
    $region85: #{decoder_block.1} parent=1 // pred_fallthru
      _
    // Predicated region
    $region86: #{decoder_block.1} parent=1 // pred_check
      _
    $region87: #{decoder_block.1} parent=1 // pred_check_branch
      %136 = sbr.rel (0) target = $region89
    $region88: #{decoder_block.1} parent=1 // pred_region
      %137 = dma.done [#allocation12], 16
    $region89: #{decoder_block.1} parent=1 // pred_fallthru
      _
    %v139 = vld [vmem:[%s0] sm:$0xff]
    %v140 = vld [vmem:[%s0 + $0x8] sm:$0xff]
    %v141 = vld [vmem:[%s1] sm:$0xff]
    %v142 = vld [vmem:[%s1 + $0x8] sm:$0xff]
    %v143 = vlaneseq
    %v144 = vshrl.u32 %v143, 7
    %v145 = vlaneseq
    %v146 = vand.u32 %v145, 127
    %vm147 = vcmp.ge.s32.totalorder %v144, %v146
    %v148 = vld [vmem:[%s2] sm:$0x1]
    %v149 = vld [vmem:[%s2 + $0x1] sm:$0x1]
    %vm150 = vcmp.ne.f32.partialorder %v148, 0.0
    %vm151 = vcmp.ne.f32.partialorder %v149, 0.0
    %vm152 = vcmask 261120
    %v153 = vsel %vm152, %v139, 0.0
    %154 = vadd.xlane.f32.xlu0 %v153
    %v155 = vpop.xlane.xlu0 %154
    %v156 = vsel %vm152, %v140, 0.0
    %157 = vadd.xlane.f32.xlu0 %v156
    %v158 = vpop.xlane.xlu0 %157
    %v159 = vrcp.pop 32.0
    %v160 = vmul.f32 %v155, %v159
    %v161 = vmul.f32 %v158, %v159
    %v162 = vsub.f32 %v139, %v160
    %v163 = vsub.f32 %v140, %v161
    %v164 = vmul.f32 %v162, %v162
    %v165 = vmul.f32 %v163, %v163
    %v166 = vsel %vm152, %v164, 0.0
    %167 = vadd.xlane.f32.xlu0 %v166
    %v168 = vpop.xlane.xlu0 %167
    %v169 = vsel %vm152, %v165, 0.0
    %170 = vadd.xlane.f32.xlu0 %v169
    %v171 = vpop.xlane.xlu0 %170
    %v172 = vmul.f32 %v168, 0.032258064
    %v173 = vmul.f32 %v171, 0.032258064
    %v174 = vrsqrt.pop %v172
    %v175 = vmul.f32 %v172, %v174
    %vm176 = vcmp.eq.f32.partialorder %v172, inf
    %v177 = vsel %vm176, %v172, %v175
    %vm178 = vcmp.eq.f32.partialorder %v172, 0.0
    %v179 = vand.u32 %v172, 2147483648
    %v180 = vsel %vm178, %v179, %v177
    %v181 = vrsqrt.pop %v173
    %v182 = vmul.f32 %v173, %v181
    %vm183 = vcmp.eq.f32.partialorder %v173, inf
    %v184 = vsel %vm183, %v173, %v182
    %vm185 = vcmp.eq.f32.partialorder %v173, 0.0
    %v186 = vand.u32 %v173, 2147483648
    %v187 = vsel %vm185, %v186, %v184
    %v188 = vadd.f32 %v180, 1e-06
    %v189 = vadd.f32 %v187, 1e-06
    %v190 = vrcp.pop %v188
    %v191 = vrcp.pop %v189
    %v192 = vmul.f32 %v162, %v190
    %v193 = vmul.f32 %v163, %v191
    %v194 = vadd.f32 %v192, 0.0
    %v195 = vadd.f32 %v193, 0.0
    %v196 = vld [vmem:[%s3] sm:$0xf]
    %v197 = vld [vmem:[%s3 + $0x4] sm:$0xf]
    %v198 = vld [vmem:[%s3 + $0x8] sm:$0xf]
    %v199 = vld [vmem:[%s3 + $0xc] sm:$0xf]
    %v200 = vpack.c.bf16 %v195, %v194
    %v201 = vld [vmem:[%s4] sm:$0x1]
    %v203 = vlaneseq
    %v204 = vshrl.u32 %v203, 7
    %v205 = vsub.s32 0, %v204
    %v206 = vrot.slane %v201, %v205
    %v212 = vunpack.c.l.b16 %v196
    %v213 = vunpack.c.l.b16 %v197
    %v214 = vunpack.c.l.b16 %v198
    %v215 = vunpack.c.l.b16 %v199
    %v216 = vpack.c.b16 %v213, %v212
    %v217 = vpack.c.b16 %v215, %v214
    %v221 = vsel %vm152, %v200, 0
    %223 = vmatprep.subr.bf16.mxu0 0
    %224 = vmatpush1.bf16.msra.mxu0 %v216
    %225 = vmatprep.subr.bf16.mxu0 0
    %226 = vmatpush1.bf16.msra.mxu0 %v217
    %227 = vmatprep.subr.bf16.mxu0 0
    %228 = vmatpush1.bf16.msra.mxu0 0
    %229 = vmatprep.subr.bf16.mxu0 0
    %230 = vmatpush1.bf16.msra.mxu0 0
    %231 = vmatprep.subr.bf16.mxu0 0
    %232 = vmatpush1.bf16.msra.mxu0 0
    %233 = vmatprep.subr.bf16.mxu0 0
    %234 = vmatpush1.bf16.msra.mxu0 0
    %235 = vmatprep.subr.bf16.mxu0 0
    %236 = vmatpush1.bf16.msra.mxu0 0
    %237 = vmatprep.subr.bf16.mxu0 0
    %238 = vmatpush1.bf16.msra.mxu0 0
    %239 = vmatprep.subr.bf16.mxu0 0
    %240 = vmatpush1.bf16.msra.mxu0 0
    %241 = vmatprep.subr.bf16.mxu0 0
    %242 = vmatpush1.bf16.msra.mxu0 0
    %243 = vmatprep.subr.bf16.mxu0 0
    %244 = vmatpush1.bf16.msra.mxu0 0
    %245 = vmatprep.subr.bf16.mxu0 0
    %246 = vmatpush1.bf16.msra.mxu0 0
    %247 = vmatprep.subr.bf16.mxu0 0
    %248 = vmatpush1.bf16.msra.mxu0 0
    %249 = vmatprep.subr.bf16.mxu0 0
    %250 = vmatpush1.bf16.msra.mxu0 0
    %251 = vmatprep.subr.bf16.mxu0 0
    %252 = vmatpush1.bf16.msra.mxu0 0
    %253 = vmatprep.subr.bf16.mxu0 0
    %254 = vmatpush1.bf16.msra.mxu0 0
    %255 = vmatprep.mubr.bf16.mxu0 0
    %256 = vmatmul.mubr.bf16.gmra.mrb[0].mxu0 %v221
    %v257 = vpop.f32.mrb[0].mxu0
    %v258 = vadd.f32 %v206, %v257
    %v259 = vpop.f32.mrb[0].mxu0
    %v260 = vpop.f32.mrb[0].mxu0
    %v261 = vadd.f32 %v206, %v260
    %v262 = vpop.f32.mrb[0].mxu0
    %263 = vdwg.mxu0
    %v264 = vpack.c.bf16 %v258, %v258
    %v265 = vpack.c.bf16 %v261, %v261
    %267 = vrot.lane.b32.xlu0 %v264, 96
    %v268 = vpop.permute.xlu0 %267
    %vm269 = vcmask 64512
    %v271 = vsel %vm269, %v264, 0
    %v274 = vsel %vm269, %v268, 0
    %276 = vmatprep.subr.bf16.mxu0 0
    %277 = vmatpush1.bf16.xpose.msra.mxu0 %v274
    %278 = vmatprep.subr.bf16.mxu0 0
    %279 = vmatpush1.bf16.xpose.msra.mxu0 0
    %280 = vmatprep.subr.bf16.mxu0 0
    %281 = vmatpush1.bf16.xpose.msra.mxu0 0
    %282 = vmatprep.subr.bf16.mxu0 0
    %283 = vmatpush1.bf16.xpose.msra.mxu0 0
    %284 = vmatprep.subr.bf16.mxu0 0
    %285 = vmatpush1.bf16.xpose.msra.mxu0 0
    %286 = vmatprep.subr.bf16.mxu0 0
    %287 = vmatpush1.bf16.xpose.msra.mxu0 0
    %288 = vmatprep.subr.bf16.mxu0 0
    %289 = vmatpush1.bf16.xpose.msra.mxu0 0
    %290 = vmatprep.subr.bf16.mxu0 0
    %291 = vmatpush1.bf16.xpose.msra.mxu0 0
    %292 = vmatprep.subr.bf16.mxu0 0
    %293 = vmatpush1.bf16.xpose.msra.mxu0 0
    %294 = vmatprep.subr.bf16.mxu0 0
    %295 = vmatpush1.bf16.xpose.msra.mxu0 0
    %296 = vmatprep.subr.bf16.mxu0 0
    %297 = vmatpush1.bf16.xpose.msra.mxu0 0
    %298 = vmatprep.subr.bf16.mxu0 0
    %299 = vmatpush1.bf16.xpose.msra.mxu0 0
    %300 = vmatprep.subr.bf16.mxu0 0
    %301 = vmatpush1.bf16.xpose.msra.mxu0 0
    %302 = vmatprep.subr.bf16.mxu0 0
    %303 = vmatpush1.bf16.xpose.msra.mxu0 0
    %304 = vmatprep.subr.bf16.mxu0 0
    %305 = vmatpush1.bf16.xpose.msra.mxu0 0
    %306 = vmatprep.subr.bf16.mxu0 0
    %307 = vmatpush1.bf16.xpose.msra.mxu0 0
    %308 = vmatprep.mubr.bf16.mxu0 0
    %309 = vmatmul.mubr.bf16.gmra.mrb[0].mxu0 %v271
    %v310 = vpop.f32.mrb[0].mxu0
    %v311 = vadd.f32 0.0, %v310
    %v312 = vpop.f32.mrb[0].mxu0
    %v313 = vpop.f32.mrb[0].mxu0
    %v314 = vpop.f32.mrb[0].mxu0
    %315 = vdwg.mxu0
    %317 = vrot.lane.b32.xlu0 %v265, 96
    %v318 = vpop.permute.xlu0 %317
    %v320 = vsel %vm269, %v265, 0
    %v323 = vsel %vm269, %v318, 0
    %325 = vmatprep.subr.bf16.mxu0 0
    %326 = vmatpush1.bf16.xpose.msra.mxu0 %v323
    %327 = vmatprep.subr.bf16.mxu0 0
    %328 = vmatpush1.bf16.xpose.msra.mxu0 0
    %329 = vmatprep.subr.bf16.mxu0 0
    %330 = vmatpush1.bf16.xpose.msra.mxu0 0
    %331 = vmatprep.subr.bf16.mxu0 0
    %332 = vmatpush1.bf16.xpose.msra.mxu0 0
    %333 = vmatprep.subr.bf16.mxu0 0
    %334 = vmatpush1.bf16.xpose.msra.mxu0 0
    %335 = vmatprep.subr.bf16.mxu0 0
    %336 = vmatpush1.bf16.xpose.msra.mxu0 0
    %337 = vmatprep.subr.bf16.mxu0 0
    %338 = vmatpush1.bf16.xpose.msra.mxu0 0
    %339 = vmatprep.subr.bf16.mxu0 0
    %340 = vmatpush1.bf16.xpose.msra.mxu0 0
    %341 = vmatprep.subr.bf16.mxu0 0
    %342 = vmatpush1.bf16.xpose.msra.mxu0 0
    %343 = vmatprep.subr.bf16.mxu0 0
    %344 = vmatpush1.bf16.xpose.msra.mxu0 0
    %345 = vmatprep.subr.bf16.mxu0 0
    %346 = vmatpush1.bf16.xpose.msra.mxu0 0
    %347 = vmatprep.subr.bf16.mxu0 0
    %348 = vmatpush1.bf16.xpose.msra.mxu0 0
    %349 = vmatprep.subr.bf16.mxu0 0
    %350 = vmatpush1.bf16.xpose.msra.mxu0 0
    %351 = vmatprep.subr.bf16.mxu0 0
    %352 = vmatpush1.bf16.xpose.msra.mxu0 0
    %353 = vmatprep.subr.bf16.mxu0 0
    %354 = vmatpush1.bf16.xpose.msra.mxu0 0
    %355 = vmatprep.subr.bf16.mxu0 0
    %356 = vmatpush1.bf16.xpose.msra.mxu0 0
    %357 = vmatprep.mubr.bf16.mxu0 0
    %358 = vmatmul.mubr.bf16.gmra.mrb[0].mxu0 %v320
    %v359 = vpop.f32.mrb[0].mxu0
    %v360 = vadd.f32 0.0, %v359
    %v361 = vpop.f32.mrb[0].mxu0
    %v362 = vpop.f32.mrb[0].mxu0
    %v363 = vpop.f32.mrb[0].mxu0
    %364 = vdwg.mxu0
    %v365 = vmul.f32 %v311, 0.35355338
    %v366 = vmul.f32 %v360, 0.35355338
    %v367 = vsel %vm147, 1, 0
    %vm368 = vcmp.eq.s32.totalorder %v367, 1
    %v369 = vsel %vm368, %v365, -1e+20
    %v370 = vsel %vm368, %v366, -1e+20
    %v371 = vsel %vm269, %v369, -inf
    %372 = vmax.xlane.f32.xlu0 %v371
    %v373 = vpop.xlane.xlu0 %372
    %v374 = vsel %vm269, %v370, -inf
    %375 = vmax.xlane.f32.xlu0 %v374
    %v376 = vpop.xlane.xlu0 %375
    %v377 = vsub.f32 %v369, %v373
    %v378 = vsub.f32 %v370, %v376
    %v379 = vmul.f32 %v377, 1.442695
    %v380 = vpow.pop %v379
    %v381 = vmul.f32 %v378, 1.442695
    %v382 = vpow.pop %v381
    %v383 = vsel %vm269, %v380, 0.0
    %384 = vadd.xlane.f32.xlu0 %v383
    %v385 = vpop.xlane.xlu0 %384
    %v386 = vsel %vm269, %v382, 0.0
    %387 = vadd.xlane.f32.xlu0 %v386
    %v388 = vpop.xlane.xlu0 %387
    %v389 = vrcp.pop %v385
    %v390 = vrcp.pop %v388
    %v391 = vmul.f32 %v380, %v389
    %v392 = vmul.f32 %v382, %v390
    %v393 = vpack.c.bf16 %v391, %v391
    %v394 = vpack.c.bf16 %v392, %v392
    %395 = vrot.lane.b32.xlu0 %v264, 64
    %v396 = vpop.permute.xlu0 %395
    %v398 = vsel %vm269, %v393, 0
    %vm400 = vcmask 1043456
    %v402 = vsel %vm400, %v396, 0
    %404 = vmatprep.subr.bf16.mxu0 0
    %405 = vmatpush1.bf16.msra.mxu0 %v402
    %406 = vmatprep.subr.bf16.mxu0 0
    %407 = vmatpush1.bf16.msra.mxu0 0
    %408 = vmatprep.subr.bf16.mxu0 0
    %409 = vmatpush1.bf16.msra.mxu0 0
    %410 = vmatprep.subr.bf16.mxu0 0
    %411 = vmatpush1.bf16.msra.mxu0 0
    %412 = vmatprep.subr.bf16.mxu0 0
    %413 = vmatpush1.bf16.msra.mxu0 0
    %414 = vmatprep.subr.bf16.mxu0 0
    %415 = vmatpush1.bf16.msra.mxu0 0
    %416 = vmatprep.subr.bf16.mxu0 0
    %417 = vmatpush1.bf16.msra.mxu0 0
    %418 = vmatprep.subr.bf16.mxu0 0
    %419 = vmatpush1.bf16.msra.mxu0 0
    %420 = vmatprep.subr.bf16.mxu0 0
    %421 = vmatpush1.bf16.msra.mxu0 0
    %422 = vmatprep.subr.bf16.mxu0 0
    %423 = vmatpush1.bf16.msra.mxu0 0
    %424 = vmatprep.subr.bf16.mxu0 0
    %425 = vmatpush1.bf16.msra.mxu0 0
    %426 = vmatprep.subr.bf16.mxu0 0
    %427 = vmatpush1.bf16.msra.mxu0 0
    %428 = vmatprep.subr.bf16.mxu0 0
    %429 = vmatpush1.bf16.msra.mxu0 0
    %430 = vmatprep.subr.bf16.mxu0 0
    %431 = vmatpush1.bf16.msra.mxu0 0
    %432 = vmatprep.subr.bf16.mxu0 0
    %433 = vmatpush1.bf16.msra.mxu0 0
    %434 = vmatprep.subr.bf16.mxu0 0
    %435 = vmatpush1.bf16.msra.mxu0 0
    %436 = vmatprep.mubr.bf16.mxu0 0
    %437 = vmatmul.mubr.bf16.gmra.mrb[0].mxu0 %v398
    %v438 = vpop.f32.mrb[0].mxu0
    %v439 = vadd.f32 0.0, %v438
    %v440 = vpop.f32.mrb[0].mxu0
    %v441 = vpop.f32.mrb[0].mxu0
    %v442 = vpop.f32.mrb[0].mxu0
    %443 = vdwg.mxu0
    %444 = vrot.lane.b32.xlu0 %v265, 64
    %v445 = vpop.permute.xlu0 %444
    %v447 = vsel %vm269, %v394, 0
    %v450 = vsel %vm400, %v445, 0
    %452 = vmatprep.subr.bf16.mxu0 0
    %453 = vmatpush1.bf16.msra.mxu0 %v450
    %454 = vmatprep.subr.bf16.mxu0 0
    %455 = vmatpush1.bf16.msra.mxu0 0
    %456 = vmatprep.subr.bf16.mxu0 0
    %457 = vmatpush1.bf16.msra.mxu0 0
    %458 = vmatprep.subr.bf16.mxu0 0
    %459 = vmatpush1.bf16.msra.mxu0 0
    %460 = vmatprep.subr.bf16.mxu0 0
    %461 = vmatpush1.bf16.msra.mxu0 0
    %462 = vmatprep.subr.bf16.mxu0 0
    %463 = vmatpush1.bf16.msra.mxu0 0
    %464 = vmatprep.subr.bf16.mxu0 0
    %465 = vmatpush1.bf16.msra.mxu0 0
    %466 = vmatprep.subr.bf16.mxu0 0
    %467 = vmatpush1.bf16.msra.mxu0 0
    %468 = vmatprep.subr.bf16.mxu0 0
    %469 = vmatpush1.bf16.msra.mxu0 0
    %470 = vmatprep.subr.bf16.mxu0 0
    %471 = vmatpush1.bf16.msra.mxu0 0
    %472 = vmatprep.subr.bf16.mxu0 0
    %473 = vmatpush1.bf16.msra.mxu0 0
    %474 = vmatprep.subr.bf16.mxu0 0
    %475 = vmatpush1.bf16.msra.mxu0 0
    %476 = vmatprep.subr.bf16.mxu0 0
    %477 = vmatpush1.bf16.msra.mxu0 0
    %478 = vmatprep.subr.bf16.mxu0 0
    %479 = vmatpush1.bf16.msra.mxu0 0
    %480 = vmatprep.subr.bf16.mxu0 0
    %481 = vmatpush1.bf16.msra.mxu0 0
    %482 = vmatprep.subr.bf16.mxu0 0
    %483 = vmatpush1.bf16.msra.mxu0 0
    %484 = vmatprep.mubr.bf16.mxu0 0
    %485 = vmatmul.mubr.bf16.gmra.mrb[0].mxu0 %v447
    %v486 = vpop.f32.mrb[0].mxu0
    %v487 = vadd.f32 0.0, %v486
    %v488 = vpop.f32.mrb[0].mxu0
    %v489 = vpop.f32.mrb[0].mxu0
    %v490 = vpop.f32.mrb[0].mxu0
    %491 = vdwg.mxu0
    %492 = vrot.lane.b32.xlu0 %v264, 120
    %v493 = vpop.permute.xlu0 %492
    %494 = vrot.lane.b32.xlu0 %v264, 88
    %v495 = vpop.permute.xlu0 %494
    %v497 = vsel %vm269, %v493, 0
    %v500 = vsel %vm269, %v495, 0
    %502 = vmatprep.subr.bf16.mxu0 0
    %503 = vmatpush1.bf16.xpose.msra.mxu0 %v500
    %504 = vmatprep.subr.bf16.mxu0 0
    %505 = vmatpush1.bf16.xpose.msra.mxu0 0
    %506 = vmatprep.subr.bf16.mxu0 0
    %507 = vmatpush1.bf16.xpose.msra.mxu0 0
    %508 = vmatprep.subr.bf16.mxu0 0
    %509 = vmatpush1.bf16.xpose.msra.mxu0 0
    %510 = vmatprep.subr.bf16.mxu0 0
    %511 = vmatpush1.bf16.xpose.msra.mxu0 0
    %512 = vmatprep.subr.bf16.mxu0 0
    %513 = vmatpush1.bf16.xpose.msra.mxu0 0
    %514 = vmatprep.subr.bf16.mxu0 0
    %515 = vmatpush1.bf16.xpose.msra.mxu0 0
    %516 = vmatprep.subr.bf16.mxu0 0
    %517 = vmatpush1.bf16.xpose.msra.mxu0 0
    %518 = vmatprep.subr.bf16.mxu0 0
    %519 = vmatpush1.bf16.xpose.msra.mxu0 0
    %520 = vmatprep.subr.bf16.mxu0 0
    %521 = vmatpush1.bf16.xpose.msra.mxu0 0
    %522 = vmatprep.subr.bf16.mxu0 0
    %523 = vmatpush1.bf16.xpose.msra.mxu0 0
    %524 = vmatprep.subr.bf16.mxu0 0
    %525 = vmatpush1.bf16.xpose.msra.mxu0 0
    %526 = vmatprep.subr.bf16.mxu0 0
    %527 = vmatpush1.bf16.xpose.msra.mxu0 0
    %528 = vmatprep.subr.bf16.mxu0 0
    %529 = vmatpush1.bf16.xpose.msra.mxu0 0
    %530 = vmatprep.subr.bf16.mxu0 0
    %531 = vmatpush1.bf16.xpose.msra.mxu0 0
    %532 = vmatprep.subr.bf16.mxu0 0
    %533 = vmatpush1.bf16.xpose.msra.mxu0 0
    %534 = vmatprep.mubr.bf16.mxu0 0
    %535 = vmatmul.mubr.bf16.gmra.mrb[0].mxu0 %v497
    %v536 = vpop.f32.mrb[0].mxu0
    %v537 = vadd.f32 0.0, %v536
    %v538 = vpop.f32.mrb[0].mxu0
    %v539 = vpop.f32.mrb[0].mxu0
    %v540 = vpop.f32.mrb[0].mxu0
    %541 = vdwg.mxu0
    %542 = vrot.lane.b32.xlu0 %v265, 120
    %v543 = vpop.permute.xlu0 %542
    %544 = vrot.lane.b32.xlu0 %v265, 88
    %v545 = vpop.permute.xlu0 %544
    %v547 = vsel %vm269, %v543, 0
    %v550 = vsel %vm269, %v545, 0
    %552 = vmatprep.subr.bf16.mxu0 0
    %553 = vmatpush1.bf16.xpose.msra.mxu0 %v550
    %554 = vmatprep.subr.bf16.mxu0 0
    %555 = vmatpush1.bf16.xpose.msra.mxu0 0
    %556 = vmatprep.subr.bf16.mxu0 0
    %557 = vmatpush1.bf16.xpose.msra.mxu0 0
    %558 = vmatprep.subr.bf16.mxu0 0
    %559 = vmatpush1.bf16.xpose.msra.mxu0 0
    %560 = vmatprep.subr.bf16.mxu0 0
    %561 = vmatpush1.bf16.xpose.msra.mxu0 0
    %562 = vmatprep.subr.bf16.mxu0 0
    %563 = vmatpush1.bf16.xpose.msra.mxu0 0
    %564 = vmatprep.subr.bf16.mxu0 0
    %565 = vmatpush1.bf16.xpose.msra.mxu0 0
    %566 = vmatprep.subr.bf16.mxu0 0
    %567 = vmatpush1.bf16.xpose.msra.mxu0 0
    %568 = vmatprep.subr.bf16.mxu0 0
    %569 = vmatpush1.bf16.xpose.msra.mxu0 0
    %570 = vmatprep.subr.bf16.mxu0 0
    %571 = vmatpush1.bf16.xpose.msra.mxu0 0
    %572 = vmatprep.subr.bf16.mxu0 0
    %573 = vmatpush1.bf16.xpose.msra.mxu0 0
    %574 = vmatprep.subr.bf16.mxu0 0
    %575 = vmatpush1.bf16.xpose.msra.mxu0 0
    %576 = vmatprep.subr.bf16.mxu0 0
    %577 = vmatpush1.bf16.xpose.msra.mxu0 0
    %578 = vmatprep.subr.bf16.mxu0 0
    %579 = vmatpush1.bf16.xpose.msra.mxu0 0
    %580 = vmatprep.subr.bf16.mxu0 0
    %581 = vmatpush1.bf16.xpose.msra.mxu0 0
    %582 = vmatprep.subr.bf16.mxu0 0
    %583 = vmatpush1.bf16.xpose.msra.mxu0 0
    %584 = vmatprep.mubr.bf16.mxu0 0
    %585 = vmatmul.mubr.bf16.gmra.mrb[0].mxu0 %v547
    %v586 = vpop.f32.mrb[0].mxu0
    %v587 = vadd.f32 0.0, %v586
    %v588 = vpop.f32.mrb[0].mxu0
    %v589 = vpop.f32.mrb[0].mxu0
    %v590 = vpop.f32.mrb[0].mxu0
    %591 = vdwg.mxu0
    %v592 = vmul.f32 %v537, 0.35355338
    %v593 = vmul.f32 %v587, 0.35355338
    %v594 = vsel %vm368, %v592, -1e+20
    %v595 = vsel %vm368, %v593, -1e+20
    %v596 = vsel %vm269, %v594, -inf
    %597 = vmax.xlane.f32.xlu0 %v596
    %v598 = vpop.xlane.xlu0 %597
    %v599 = vsel %vm269, %v595, -inf
    %600 = vmax.xlane.f32.xlu0 %v599
    %v601 = vpop.xlane.xlu0 %600
    %v602 = vsub.f32 %v594, %v598
    %v603 = vsub.f32 %v595, %v601
    %v604 = vmul.f32 %v602, 1.442695
    %v605 = vpow.pop %v604
    %v606 = vmul.f32 %v603, 1.442695
    %v607 = vpow.pop %v606
    %v608 = vsel %vm269, %v605, 0.0
    %609 = vadd.xlane.f32.xlu0 %v608
    %v610 = vpop.xlane.xlu0 %609
    %v611 = vsel %vm269, %v607, 0.0
    %612 = vadd.xlane.f32.xlu0 %v611
    %v613 = vpop.xlane.xlu0 %612
    %v614 = vrcp.pop %v610
    %v615 = vrcp.pop %v613
    %v616 = vmul.f32 %v605, %v614
    %v617 = vmul.f32 %v607, %v615
    %v618 = vpack.c.bf16 %v616, %v616
    %v619 = vpack.c.bf16 %v617, %v617
    %620 = vrot.lane.b32.xlu0 %v264, 56
    %v621 = vpop.permute.xlu0 %620
    %v623 = vsel %vm269, %v618, 0
    %v626 = vsel %vm400, %v621, 0
    %628 = vmatprep.subr.bf16.mxu0 0
    %629 = vmatpush1.bf16.msra.mxu0 %v626
    %630 = vmatprep.subr.bf16.mxu0 0
    %631 = vmatpush1.bf16.msra.mxu0 0
    %632 = vmatprep.subr.bf16.mxu0 0
    %633 = vmatpush1.bf16.msra.mxu0 0
    %634 = vmatprep.subr.bf16.mxu0 0
    %635 = vmatpush1.bf16.msra.mxu0 0
    %636 = vmatprep.subr.bf16.mxu0 0
    %637 = vmatpush1.bf16.msra.mxu0 0
    %638 = vmatprep.subr.bf16.mxu0 0
    %639 = vmatpush1.bf16.msra.mxu0 0
    %640 = vmatprep.subr.bf16.mxu0 0
    %641 = vmatpush1.bf16.msra.mxu0 0
    %642 = vmatprep.subr.bf16.mxu0 0
    %643 = vmatpush1.bf16.msra.mxu0 0
    %644 = vmatprep.subr.bf16.mxu0 0
    %645 = vmatpush1.bf16.msra.mxu0 0
    %646 = vmatprep.subr.bf16.mxu0 0
    %647 = vmatpush1.bf16.msra.mxu0 0
    %648 = vmatprep.subr.bf16.mxu0 0
    %649 = vmatpush1.bf16.msra.mxu0 0
    %650 = vmatprep.subr.bf16.mxu0 0
    %651 = vmatpush1.bf16.msra.mxu0 0
    %652 = vmatprep.subr.bf16.mxu0 0
    %653 = vmatpush1.bf16.msra.mxu0 0
    %654 = vmatprep.subr.bf16.mxu0 0
    %655 = vmatpush1.bf16.msra.mxu0 0
    %656 = vmatprep.subr.bf16.mxu0 0
    %657 = vmatpush1.bf16.msra.mxu0 0
    %658 = vmatprep.subr.bf16.mxu0 0
    %659 = vmatpush1.bf16.msra.mxu0 0
    %660 = vmatprep.mubr.bf16.mxu0 0
    %661 = vmatmul.mubr.bf16.gmra.mrb[0].mxu0 %v623
    %v662 = vpop.f32.mrb[0].mxu0
    %v663 = vadd.f32 0.0, %v662
    %v664 = vpop.f32.mrb[0].mxu0
    %v665 = vpop.f32.mrb[0].mxu0
    %v666 = vpop.f32.mrb[0].mxu0
    %667 = vdwg.mxu0
    %668 = vrot.lane.b32.xlu0 %v265, 56
    %v669 = vpop.permute.xlu0 %668
    %v671 = vsel %vm269, %v619, 0
    %v674 = vsel %vm400, %v669, 0
    %676 = vmatprep.subr.bf16.mxu0 0
    %677 = vmatpush1.bf16.msra.mxu0 %v674
    %678 = vmatprep.subr.bf16.mxu0 0
    %679 = vmatpush1.bf16.msra.mxu0 0
    %680 = vmatprep.subr.bf16.mxu0 0
    %681 = vmatpush1.bf16.msra.mxu0 0
    %682 = vmatprep.subr.bf16.mxu0 0
    %683 = vmatpush1.bf16.msra.mxu0 0
    %684 = vmatprep.subr.bf16.mxu0 0
    %685 = vmatpush1.bf16.msra.mxu0 0
    %686 = vmatprep.subr.bf16.mxu0 0
    %687 = vmatpush1.bf16.msra.mxu0 0
    %688 = vmatprep.subr.bf16.mxu0 0
    %689 = vmatpush1.bf16.msra.mxu0 0
    %690 = vmatprep.subr.bf16.mxu0 0
    %691 = vmatpush1.bf16.msra.mxu0 0
    %692 = vmatprep.subr.bf16.mxu0 0
    %693 = vmatpush1.bf16.msra.mxu0 0
    %694 = vmatprep.subr.bf16.mxu0 0
    %695 = vmatpush1.bf16.msra.mxu0 0
    %696 = vmatprep.subr.bf16.mxu0 0
    %697 = vmatpush1.bf16.msra.mxu0 0
    %698 = vmatprep.subr.bf16.mxu0 0
    %699 = vmatpush1.bf16.msra.mxu0 0
    %700 = vmatprep.subr.bf16.mxu0 0
    %701 = vmatpush1.bf16.msra.mxu0 0
    %702 = vmatprep.subr.bf16.mxu0 0
    %703 = vmatpush1.bf16.msra.mxu0 0
    %704 = vmatprep.subr.bf16.mxu0 0
    %705 = vmatpush1.bf16.msra.mxu0 0
    %706 = vmatprep.subr.bf16.mxu0 0
    %707 = vmatpush1.bf16.msra.mxu0 0
    %708 = vmatprep.mubr.bf16.mxu0 0
    %709 = vmatmul.mubr.bf16.gmra.mrb[0].mxu0 %v671
    %v710 = vpop.f32.mrb[0].mxu0
    %v711 = vadd.f32 0.0, %v710
    %v712 = vpop.f32.mrb[0].mxu0
    %v713 = vpop.f32.mrb[0].mxu0
    %v714 = vpop.f32.mrb[0].mxu0
    %715 = vdwg.mxu0
    %716 = vrot.lane.b32.xlu0 %v264, 112
    %v717 = vpop.permute.xlu0 %716
    %718 = vrot.lane.b32.xlu0 %v264, 80
    %v719 = vpop.permute.xlu0 %718
    %v721 = vsel %vm269, %v717, 0
    %v724 = vsel %vm269, %v719, 0
    %726 = vmatprep.subr.bf16.mxu0 0
    %727 = vmatpush1.bf16.xpose.msra.mxu0 %v724
    %728 = vmatprep.subr.bf16.mxu0 0
    %729 = vmatpush1.bf16.xpose.msra.mxu0 0
    %730 = vmatprep.subr.bf16.mxu0 0
    %731 = vmatpush1.bf16.xpose.msra.mxu0 0
    %732 = vmatprep.subr.bf16.mxu0 0
    %733 = vmatpush1.bf16.xpose.msra.mxu0 0
    %734 = vmatprep.subr.bf16.mxu0 0
    %735 = vmatpush1.bf16.xpose.msra.mxu0 0
    %736 = vmatprep.subr.bf16.mxu0 0
    %737 = vmatpush1.bf16.xpose.msra.mxu0 0
    %738 = vmatprep.subr.bf16.mxu0 0
    %739 = vmatpush1.bf16.xpose.msra.mxu0 0
    %740 = vmatprep.subr.bf16.mxu0 0
    %741 = vmatpush1.bf16.xpose.msra.mxu0 0
    %742 = vmatprep.subr.bf16.mxu0 0
    %743 = vmatpush1.bf16.xpose.msra.mxu0 0
    %744 = vmatprep.subr.bf16.mxu0 0
    %745 = vmatpush1.bf16.xpose.msra.mxu0 0
    %746 = vmatprep.subr.bf16.mxu0 0
    %747 = vmatpush1.bf16.xpose.msra.mxu0 0
    %748 = vmatprep.subr.bf16.mxu0 0
    %749 = vmatpush1.bf16.xpose.msra.mxu0 0
    %750 = vmatprep.subr.bf16.mxu0 0
    %751 = vmatpush1.bf16.xpose.msra.mxu0 0
    %752 = vmatprep.subr.bf16.mxu0 0
    %753 = vmatpush1.bf16.xpose.msra.mxu0 0
    %754 = vmatprep.subr.bf16.mxu0 0
    %755 = vmatpush1.bf16.xpose.msra.mxu0 0
    %756 = vmatprep.subr.bf16.mxu0 0
    %757 = vmatpush1.bf16.xpose.msra.mxu0 0
    %758 = vmatprep.mubr.bf16.mxu0 0
    %759 = vmatmul.mubr.bf16.gmra.mrb[0].mxu0 %v721
    %v760 = vpop.f32.mrb[0].mxu0
    %v761 = vadd.f32 0.0, %v760
    %v762 = vpop.f32.mrb[0].mxu0
    %v763 = vpop.f32.mrb[0].mxu0
    %v764 = vpop.f32.mrb[0].mxu0
    %765 = vdwg.mxu0
    %766 = vrot.lane.b32.xlu0 %v265, 112
    %v767 = vpop.permute.xlu0 %766
    %768 = vrot.lane.b32.xlu0 %v265, 80
    %v769 = vpop.permute.xlu0 %768
    %v771 = vsel %vm269, %v767, 0
    %v774 = vsel %vm269, %v769, 0
    %776 = vmatprep.subr.bf16.mxu0 0
    %777 = vmatpush1.bf16.xpose.msra.mxu0 %v774
    %778 = vmatprep.subr.bf16.mxu0 0
    %779 = vmatpush1.bf16.xpose.msra.mxu0 0
    %780 = vmatprep.subr.bf16.mxu0 0
    %781 = vmatpush1.bf16.xpose.msra.mxu0 0
    %782 = vmatprep.subr.bf16.mxu0 0
    %783 = vmatpush1.bf16.xpose.msra.mxu0 0
    %784 = vmatprep.subr.bf16.mxu0 0
    %785 = vmatpush1.bf16.xpose.msra.mxu0 0
    %786 = vmatprep.subr.bf16.mxu0 0
    %787 = vmatpush1.bf16.xpose.msra.mxu0 0
    %788 = vmatprep.subr.bf16.mxu0 0
    %789 = vmatpush1.bf16.xpose.msra.mxu0 0
    %790 = vmatprep.subr.bf16.mxu0 0
    %791 = vmatpush1.bf16.xpose.msra.mxu0 0
    %792 = vmatprep.subr.bf16.mxu0 0
    %793 = vmatpush1.bf16.xpose.msra.mxu0 0
    %794 = vmatprep.subr.bf16.mxu0 0
    %795 = vmatpush1.bf16.xpose.msra.mxu0 0
    %796 = vmatprep.subr.bf16.mxu0 0
    %797 = vmatpush1.bf16.xpose.msra.mxu0 0
    %798 = vmatprep.subr.bf16.mxu0 0
    %799 = vmatpush1.bf16.xpose.msra.mxu0 0
    %800 = vmatprep.subr.bf16.mxu0 0
    %801 = vmatpush1.bf16.xpose.msra.mxu0 0
    %802 = vmatprep.subr.bf16.mxu0 0
    %803 = vmatpush1.bf16.xpose.msra.mxu0 0
    %804 = vmatprep.subr.bf16.mxu0 0
    %805 = vmatpush1.bf16.xpose.msra.mxu0 0
    %806 = vmatprep.subr.bf16.mxu0 0
    %807 = vmatpush1.bf16.xpose.msra.mxu0 0
    %808 = vmatprep.mubr.bf16.mxu0 0
    %809 = vmatmul.mubr.bf16.gmra.mrb[0].mxu0 %v771
    %v810 = vpop.f32.mrb[0].mxu0
    %v811 = vadd.f32 0.0, %v810
    %v812 = vpop.f32.mrb[0].mxu0
    %v813 = vpop.f32.mrb[0].mxu0
    %v814 = vpop.f32.mrb[0].mxu0
    %815 = vdwg.mxu0
    %v816 = vmul.f32 %v761, 0.35355338
    %v817 = vmul.f32 %v811, 0.35355338
    %v818 = vsel %vm368, %v816, -1e+20
    %v819 = vsel %vm368, %v817, -1e+20
    %v820 = vsel %vm269, %v818, -inf
    %821 = vmax.xlane.f32.xlu0 %v820
    %v822 = vpop.xlane.xlu0 %821
    %v823 = vsel %vm269, %v819, -inf
    %824 = vmax.xlane.f32.xlu0 %v823
    %v825 = vpop.xlane.xlu0 %824
    %v826 = vsub.f32 %v818, %v822
    %v827 = vsub.f32 %v819, %v825
    %v828 = vmul.f32 %v826, 1.442695
    %v829 = vpow.pop %v828
    %v830 = vmul.f32 %v827, 1.442695
    %v831 = vpow.pop %v830
    %v832 = vsel %vm269, %v829, 0.0
    %833 = vadd.xlane.f32.xlu0 %v832
    %v834 = vpop.xlane.xlu0 %833
    %v835 = vsel %vm269, %v831, 0.0
    %836 = vadd.xlane.f32.xlu0 %v835
    %v837 = vpop.xlane.xlu0 %836
    %v838 = vrcp.pop %v834
    %v839 = vrcp.pop %v837
    %v840 = vmul.f32 %v829, %v838
    %v841 = vmul.f32 %v831, %v839
    %v842 = vpack.c.bf16 %v840, %v840
    %v843 = vpack.c.bf16 %v841, %v841
    %844 = vrot.lane.b32.xlu0 %v264, 48
    %v845 = vpop.permute.xlu0 %844
    %v847 = vsel %vm269, %v842, 0
    %v850 = vsel %vm400, %v845, 0
    %852 = vmatprep.subr.bf16.mxu0 0
    %853 = vmatpush1.bf16.msra.mxu0 %v850
    %854 = vmatprep.subr.bf16.mxu0 0
    %855 = vmatpush1.bf16.msra.mxu0 0
    %856 = vmatprep.subr.bf16.mxu0 0
    %857 = vmatpush1.bf16.msra.mxu0 0
    %858 = vmatprep.subr.bf16.mxu0 0
    %859 = vmatpush1.bf16.msra.mxu0 0
    %860 = vmatprep.subr.bf16.mxu0 0
    %861 = vmatpush1.bf16.msra.mxu0 0
    %862 = vmatprep.subr.bf16.mxu0 0
    %863 = vmatpush1.bf16.msra.mxu0 0
    %864 = vmatprep.subr.bf16.mxu0 0
    %865 = vmatpush1.bf16.msra.mxu0 0
    %866 = vmatprep.subr.bf16.mxu0 0
    %867 = vmatpush1.bf16.msra.mxu0 0
    %868 = vmatprep.subr.bf16.mxu0 0
    %869 = vmatpush1.bf16.msra.mxu0 0
    %870 = vmatprep.subr.bf16.mxu0 0
    %871 = vmatpush1.bf16.msra.mxu0 0
    %872 = vmatprep.subr.bf16.mxu0 0
    %873 = vmatpush1.bf16.msra.mxu0 0
    %874 = vmatprep.subr.bf16.mxu0 0
    %875 = vmatpush1.bf16.msra.mxu0 0
    %876 = vmatprep.subr.bf16.mxu0 0
    %877 = vmatpush1.bf16.msra.mxu0 0
    %878 = vmatprep.subr.bf16.mxu0 0
    %879 = vmatpush1.bf16.msra.mxu0 0
    %880 = vmatprep.subr.bf16.mxu0 0
    %881 = vmatpush1.bf16.msra.mxu0 0
    %882 = vmatprep.subr.bf16.mxu0 0
    %883 = vmatpush1.bf16.msra.mxu0 0
    %884 = vmatprep.mubr.bf16.mxu0 0
    %885 = vmatmul.mubr.bf16.gmra.mrb[0].mxu0 %v847
    %v886 = vpop.f32.mrb[0].mxu0
    %v887 = vadd.f32 0.0, %v886
    %v888 = vpop.f32.mrb[0].mxu0
    %v889 = vpop.f32.mrb[0].mxu0
    %v890 = vpop.f32.mrb[0].mxu0
    %891 = vdwg.mxu0
    %892 = vrot.lane.b32.xlu0 %v265, 48
    %v893 = vpop.permute.xlu0 %892
    %v895 = vsel %vm269, %v843, 0
    %v898 = vsel %vm400, %v893, 0
    %900 = vmatprep.subr.bf16.mxu0 0
    %901 = vmatpush1.bf16.msra.mxu0 %v898
    %902 = vmatprep.subr.bf16.mxu0 0
    %903 = vmatpush1.bf16.msra.mxu0 0
    %904 = vmatprep.subr.bf16.mxu0 0
    %905 = vmatpush1.bf16.msra.mxu0 0
    %906 = vmatprep.subr.bf16.mxu0 0
    %907 = vmatpush1.bf16.msra.mxu0 0
    %908 = vmatprep.subr.bf16.mxu0 0
    %909 = vmatpush1.bf16.msra.mxu0 0
    %910 = vmatprep.subr.bf16.mxu0 0
    %911 = vmatpush1.bf16.msra.mxu0 0
    %912 = vmatprep.subr.bf16.mxu0 0
    %913 = vmatpush1.bf16.msra.mxu0 0
    %914 = vmatprep.subr.bf16.mxu0 0
    %915 = vmatpush1.bf16.msra.mxu0 0
    %916 = vmatprep.subr.bf16.mxu0 0
    %917 = vmatpush1.bf16.msra.mxu0 0
    %918 = vmatprep.subr.bf16.mxu0 0
    %919 = vmatpush1.bf16.msra.mxu0 0
    %920 = vmatprep.subr.bf16.mxu0 0
    %921 = vmatpush1.bf16.msra.mxu0 0
    %922 = vmatprep.subr.bf16.mxu0 0
    %923 = vmatpush1.bf16.msra.mxu0 0
    %924 = vmatprep.subr.bf16.mxu0 0
    %925 = vmatpush1.bf16.msra.mxu0 0
    %926 = vmatprep.subr.bf16.mxu0 0
    %927 = vmatpush1.bf16.msra.mxu0 0
    %928 = vmatprep.subr.bf16.mxu0 0
    %929 = vmatpush1.bf16.msra.mxu0 0
    %930 = vmatprep.subr.bf16.mxu0 0
    %931 = vmatpush1.bf16.msra.mxu0 0
    %932 = vmatprep.mubr.bf16.mxu0 0
    %933 = vmatmul.mubr.bf16.gmra.mrb[0].mxu0 %v895
    %v934 = vpop.f32.mrb[0].mxu0
    %v935 = vadd.f32 0.0, %v934
    %v936 = vpop.f32.mrb[0].mxu0
    %v937 = vpop.f32.mrb[0].mxu0
    %v938 = vpop.f32.mrb[0].mxu0
    %939 = vdwg.mxu0
    %940 = vrot.lane.b32.xlu0 %v264, 104
    %v941 = vpop.permute.xlu0 %940
    %942 = vrot.lane.b32.xlu0 %v264, 72
    %v943 = vpop.permute.xlu0 %942
    %v945 = vsel %vm269, %v941, 0
    %v948 = vsel %vm269, %v943, 0
    %950 = vmatprep.subr.bf16.mxu0 0
    %951 = vmatpush1.bf16.xpose.msra.mxu0 %v948
    %952 = vmatprep.subr.bf16.mxu0 0
    %953 = vmatpush1.bf16.xpose.msra.mxu0 0
    %954 = vmatprep.subr.bf16.mxu0 0
    %955 = vmatpush1.bf16.xpose.msra.mxu0 0
    %956 = vmatprep.subr.bf16.mxu0 0
    %957 = vmatpush1.bf16.xpose.msra.mxu0 0
    %958 = vmatprep.subr.bf16.mxu0 0
    %959 = vmatpush1.bf16.xpose.msra.mxu0 0
    %960 = vmatprep.subr.bf16.mxu0 0
    %961 = vmatpush1.bf16.xpose.msra.mxu0 0
    %962 = vmatprep.subr.bf16.mxu0 0
    %963 = vmatpush1.bf16.xpose.msra.mxu0 0
    %964 = vmatprep.subr.bf16.mxu0 0
    %965 = vmatpush1.bf16.xpose.msra.mxu0 0
    %966 = vmatprep.subr.bf16.mxu0 0
    %967 = vmatpush1.bf16.xpose.msra.mxu0 0
    %968 = vmatprep.subr.bf16.mxu0 0
    %969 = vmatpush1.bf16.xpose.msra.mxu0 0
    %970 = vmatprep.subr.bf16.mxu0 0
    %971 = vmatpush1.bf16.xpose.msra.mxu0 0
    %972 = vmatprep.subr.bf16.mxu0 0
    %973 = vmatpush1.bf16.xpose.msra.mxu0 0
    %974 = vmatprep.subr.bf16.mxu0 0
    %975 = vmatpush1.bf16.xpose.msra.mxu0 0
    %976 = vmatprep.subr.bf16.mxu0 0
    %977 = vmatpush1.bf16.xpose.msra.mxu0 0
    %978 = vmatprep.subr.bf16.mxu0 0
    %979 = vmatpush1.bf16.xpose.msra.mxu0 0
    %980 = vmatprep.subr.bf16.mxu0 0
    %981 = vmatpush1.bf16.xpose.msra.mxu0 0
    %982 = vmatprep.mubr.bf16.mxu0 0
    %983 = vmatmul.mubr.bf16.gmra.mrb[0].mxu0 %v945
    %v984 = vpop.f32.mrb[0].mxu0
    %v985 = vadd.f32 0.0, %v984
    %v986 = vpop.f32.mrb[0].mxu0
    %v987 = vpop.f32.mrb[0].mxu0
    %v988 = vpop.f32.mrb[0].mxu0
    %989 = vdwg.mxu0
    %990 = vrot.lane.b32.xlu0 %v265, 104
    %v991 = vpop.permute.xlu0 %990
    %992 = vrot.lane.b32.xlu0 %v265, 72
    %v993 = vpop.permute.xlu0 %992
    %v995 = vsel %vm269, %v991, 0
    %v998 = vsel %vm269, %v993, 0
    %1000 = vmatprep.subr.bf16.mxu0 0
    %1001 = vmatpush1.bf16.xpose.msra.mxu0 %v998
    %1002 = vmatprep.subr.bf16.mxu0 0
    %1003 = vmatpush1.bf16.xpose.msra.mxu0 0
    %1004 = vmatprep.subr.bf16.mxu0 0
    %1005 = vmatpush1.bf16.xpose.msra.mxu0 0
    %1006 = vmatprep.subr.bf16.mxu0 0
    %1007 = vmatpush1.bf16.xpose.msra.mxu0 0
    %1008 = vmatprep.subr.bf16.mxu0 0
    %1009 = vmatpush1.bf16.xpose.msra.mxu0 0
    %1010 = vmatprep.subr.bf16.mxu0 0
    %1011 = vmatpush1.bf16.xpose.msra.mxu0 0
    %1012 = vmatprep.subr.bf16.mxu0 0
    %1013 = vmatpush1.bf16.xpose.msra.mxu0 0
    %1014 = vmatprep.subr.bf16.mxu0 0
    %1015 = vmatpush1.bf16.xpose.msra.mxu0 0
    %1016 = vmatprep.subr.bf16.mxu0 0
    %1017 = vmatpush1.bf16.xpose.msra.mxu0 0
    %1018 = vmatprep.subr.bf16.mxu0 0
    %1019 = vmatpush1.bf16.xpose.msra.mxu0 0
    %1020 = vmatprep.subr.bf16.mxu0 0
    %1021 = vmatpush1.bf16.xpose.msra.mxu0 0
    %1022 = vmatprep.subr.bf16.mxu0 0
    %1023 = vmatpush1.bf16.xpose.msra.mxu0 0
    %1024 = vmatprep.subr.bf16.mxu0 0
    %1025 = vmatpush1.bf16.xpose.msra.mxu0 0
    %1026 = vmatprep.subr.bf16.mxu0 0
    %1027 = vmatpush1.bf16.xpose.msra.mxu0 0
    %1028 = vmatprep.subr.bf16.mxu0 0
    %1029 = vmatpush1.bf16.xpose.msra.mxu0 0
    %1030 = vmatprep.subr.bf16.mxu0 0
    %1031 = vmatpush1.bf16.xpose.msra.mxu0 0
    %1032 = vmatprep.mubr.bf16.mxu0 0
    %1033 = vmatmul.mubr.bf16.gmra.mrb[0].mxu0 %v995
    %v1034 = vpop.f32.mrb[0].mxu0
    %v1035 = vadd.f32 0.0, %v1034
    %v1036 = vpop.f32.mrb[0].mxu0
    %v1037 = vpop.f32.mrb[0].mxu0
    %v1038 = vpop.f32.mrb[0].mxu0
    %1039 = vdwg.mxu0
    %v1040 = vmul.f32 %v985, 0.35355338
    %v1041 = vmul.f32 %v1035, 0.35355338
    %v1042 = vsel %vm368, %v1040, -1e+20
    %v1043 = vsel %vm368, %v1041, -1e+20
    %v1044 = vsel %vm269, %v1042, -inf
    %1045 = vmax.xlane.f32.xlu0 %v1044
    %v1046 = vpop.xlane.xlu0 %1045
    %v1047 = vsel %vm269, %v1043, -inf
    %1048 = vmax.xlane.f32.xlu0 %v1047
    %v1049 = vpop.xlane.xlu0 %1048
    %v1050 = vsub.f32 %v1042, %v1046
    %v1051 = vsub.f32 %v1043, %v1049
    %v1052 = vmul.f32 %v1050, 1.442695
    %v1053 = vpow.pop %v1052
    %v1054 = vmul.f32 %v1051, 1.442695
    %v1055 = vpow.pop %v1054
    %v1056 = vsel %vm269, %v1053, 0.0
    %1057 = vadd.xlane.f32.xlu0 %v1056
    %v1058 = vpop.xlane.xlu0 %1057
    %v1059 = vsel %vm269, %v1055, 0.0
    %1060 = vadd.xlane.f32.xlu0 %v1059
    %v1061 = vpop.xlane.xlu0 %1060
    %v1062 = vrcp.pop %v1058
    %v1063 = vrcp.pop %v1061
    %v1064 = vmul.f32 %v1053, %v1062
    %v1065 = vmul.f32 %v1055, %v1063
    %v1066 = vpack.c.bf16 %v1064, %v1064
    %v1067 = vpack.c.bf16 %v1065, %v1065
    %1068 = vrot.lane.b32.xlu0 %v264, 40
    %v1069 = vpop.permute.xlu0 %1068
    %v1071 = vsel %vm269, %v1066, 0
    %v1074 = vsel %vm400, %v1069, 0
    %1076 = vmatprep.subr.bf16.mxu0 0
    %1077 = vmatpush1.bf16.msra.mxu0 %v1074
    %1078 = vmatprep.subr.bf16.mxu0 0
    %1079 = vmatpush1.bf16.msra.mxu0 0
    %1080 = vmatprep.subr.bf16.mxu0 0
    %1081 = vmatpush1.bf16.msra.mxu0 0
    %1082 = vmatprep.subr.bf16.mxu0 0
    %1083 = vmatpush1.bf16.msra.mxu0 0
    %1084 = vmatprep.subr.bf16.mxu0 0
    %1085 = vmatpush1.bf16.msra.mxu0 0
    %1086 = vmatprep.subr.bf16.mxu0 0
    %1087 = vmatpush1.bf16.msra.mxu0 0
    %1088 = vmatprep.subr.bf16.mxu0 0
    %1089 = vmatpush1.bf16.msra.mxu0 0
    %1090 = vmatprep.subr.bf16.mxu0 0
    %1091 = vmatpush1.bf16.msra.mxu0 0
    %1092 = vmatprep.subr.bf16.mxu0 0
    %1093 = vmatpush1.bf16.msra.mxu0 0
    %1094 = vmatprep.subr.bf16.mxu0 0
    %1095 = vmatpush1.bf16.msra.mxu0 0
    %1096 = vmatprep.subr.bf16.mxu0 0
    %1097 = vmatpush1.bf16.msra.mxu0 0
    %1098 = vmatprep.subr.bf16.mxu0 0
    %1099 = vmatpush1.bf16.msra.mxu0 0
    %1100 = vmatprep.subr.bf16.mxu0 0
    %1101 = vmatpush1.bf16.msra.mxu0 0
    %1102 = vmatprep.subr.bf16.mxu0 0
    %1103 = vmatpush1.bf16.msra.mxu0 0
    %1104 = vmatprep.subr.bf16.mxu0 0
    %1105 = vmatpush1.bf16.msra.mxu0 0
    %1106 = vmatprep.subr.bf16.mxu0 0
    %1107 = vmatpush1.bf16.msra.mxu0 0
    %1108 = vmatprep.mubr.bf16.mxu0 0
    %1109 = vmatmul.mubr.bf16.gmra.mrb[0].mxu0 %v1071
    %v1110 = vpop.f32.mrb[0].mxu0
    %v1111 = vadd.f32 0.0, %v1110
    %v1112 = vpop.f32.mrb[0].mxu0
    %v1113 = vpop.f32.mrb[0].mxu0
    %v1114 = vpop.f32.mrb[0].mxu0
    %1115 = vdwg.mxu0
    %1116 = vrot.lane.b32.xlu0 %v265, 40
    %v1117 = vpop.permute.xlu0 %1116
    %v1119 = vsel %vm269, %v1067, 0
    %v1122 = vsel %vm400, %v1117, 0
    %1124 = vmatprep.subr.bf16.mxu0 0
    %1125 = vmatpush1.bf16.msra.mxu0 %v1122
    %1126 = vmatprep.subr.bf16.mxu0 0
    %1127 = vmatpush1.bf16.msra.mxu0 0
    %1128 = vmatprep.subr.bf16.mxu0 0
    %1129 = vmatpush1.bf16.msra.mxu0 0
    %1130 = vmatprep.subr.bf16.mxu0 0
    %1131 = vmatpush1.bf16.msra.mxu0 0
    %1132 = vmatprep.subr.bf16.mxu0 0
    %1133 = vmatpush1.bf16.msra.mxu0 0
    %1134 = vmatprep.subr.bf16.mxu0 0
    %1135 = vmatpush1.bf16.msra.mxu0 0
    %1136 = vmatprep.subr.bf16.mxu0 0
    %1137 = vmatpush1.bf16.msra.mxu0 0
    %1138 = vmatprep.subr.bf16.mxu0 0
    %1139 = vmatpush1.bf16.msra.mxu0 0
    %1140 = vmatprep.subr.bf16.mxu0 0
    %1141 = vmatpush1.bf16.msra.mxu0 0
    %1142 = vmatprep.subr.bf16.mxu0 0
    %1143 = vmatpush1.bf16.msra.mxu0 0
    %1144 = vmatprep.subr.bf16.mxu0 0
    %1145 = vmatpush1.bf16.msra.mxu0 0
    %1146 = vmatprep.subr.bf16.mxu0 0
    %1147 = vmatpush1.bf16.msra.mxu0 0
    %1148 = vmatprep.subr.bf16.mxu0 0
    %1149 = vmatpush1.bf16.msra.mxu0 0
    %1150 = vmatprep.subr.bf16.mxu0 0
    %1151 = vmatpush1.bf16.msra.mxu0 0
    %1152 = vmatprep.subr.bf16.mxu0 0
    %1153 = vmatpush1.bf16.msra.mxu0 0
    %1154 = vmatprep.subr.bf16.mxu0 0
    %1155 = vmatpush1.bf16.msra.mxu0 0
    %1156 = vmatprep.mubr.bf16.mxu0 0
    %1157 = vmatmul.mubr.bf16.gmra.mrb[0].mxu0 %v1119
    %v1158 = vpop.f32.mrb[0].mxu0
    %v1159 = vadd.f32 0.0, %v1158
    %v1160 = vpop.f32.mrb[0].mxu0
    %v1161 = vpop.f32.mrb[0].mxu0
    %v1162 = vpop.f32.mrb[0].mxu0
    %1163 = vdwg.mxu0
    %1166 = vrot.lane.b32.xlu0 %v663, 8
    %v1167 = vpop.permute.xlu0 %1166
    %1168 = vrot.lane.b32.xlu0 %v711, 8
    %v1169 = vpop.permute.xlu0 %1168
    %1174 = vrot.lane.b32.xlu0 %v887, 16
    %v1175 = vpop.permute.xlu0 %1174
    %1176 = vrot.lane.b32.xlu0 %v935, 16
    %v1177 = vpop.permute.xlu0 %1176
    %1182 = vrot.lane.b32.xlu0 %v1111, 24
    %v1183 = vpop.permute.xlu0 %1182
    %1184 = vrot.lane.b32.xlu0 %v1159, 24
    %v1185 = vpop.permute.xlu0 %1184
    %v1188 = vsel %vm269, %v439, %v1167
    %v1189 = vsel %vm269, %v487, %v1169
    %vm1190 = vcmask 130048
    %v1191 = vsel %vm1190, %v1188, %v1175
    %v1192 = vsel %vm1190, %v1189, %v1177
    %vm1193 = vcmask 195584
    %v1194 = vsel %vm1193, %v1191, %v1183
    %v1195 = vsel %vm1193, %v1192, %v1185
    %v1196 = vld [vmem:[%s5] sm:$0xf]
    %v1197 = vld [vmem:[%s5 + $0x4] sm:$0xf]
    %v1198 = vld [vmem:[%s5 + $0x8] sm:$0xf]
    %v1199 = vld [vmem:[%s5 + $0xc] sm:$0xf]
    %v1200 = vpack.c.bf16 %v1195, %v1194
    %v1201 = vld [vmem:[%s6] sm:$0x1]
    %v1203 = vlaneseq
    %v1204 = vshrl.u32 %v1203, 7
    %v1205 = vsub.s32 0, %v1204
    %v1206 = vrot.slane %v1201, %v1205
    %v1212 = vunpack.c.l.b16 %v1196
    %v1213 = vunpack.c.l.b16 %v1197
    %v1214 = vunpack.c.l.b16 %v1198
    %v1215 = vunpack.c.l.b16 %v1199
    %v1216 = vpack.c.b16 %v1213, %v1212
    %v1217 = vpack.c.b16 %v1215, %v1214
    %v1221 = vsel %vm152, %v1200, 0
    %1223 = vmatprep.subr.bf16.mxu0 0
    %1224 = vmatpush1.bf16.msra.mxu0 %v1216
    %1225 = vmatprep.subr.bf16.mxu0 0
    %1226 = vmatpush1.bf16.msra.mxu0 %v1217
    %1227 = vmatprep.subr.bf16.mxu0 0
    %1228 = vmatpush1.bf16.msra.mxu0 0
    %1229 = vmatprep.subr.bf16.mxu0 0
    %1230 = vmatpush1.bf16.msra.mxu0 0
    %1231 = vmatprep.subr.bf16.mxu0 0
    %1232 = vmatpush1.bf16.msra.mxu0 0
    %1233 = vmatprep.subr.bf16.mxu0 0
    %1234 = vmatpush1.bf16.msra.mxu0 0
    %1235 = vmatprep.subr.bf16.mxu0 0
    %1236 = vmatpush1.bf16.msra.mxu0 0
    %1237 = vmatprep.subr.bf16.mxu0 0
    %1238 = vmatpush1.bf16.msra.mxu0 0
    %1239 = vmatprep.subr.bf16.mxu0 0
    %1240 = vmatpush1.bf16.msra.mxu0 0
    %1241 = vmatprep.subr.bf16.mxu0 0
    %1242 = vmatpush1.bf16.msra.mxu0 0
    %1243 = vmatprep.subr.bf16.mxu0 0
    %1244 = vmatpush1.bf16.msra.mxu0 0
    %1245 = vmatprep.subr.bf16.mxu0 0
    %1246 = vmatpush1.bf16.msra.mxu0 0
    %1247 = vmatprep.subr.bf16.mxu0 0
    %1248 = vmatpush1.bf16.msra.mxu0 0
    %1249 = vmatprep.subr.bf16.mxu0 0
    %1250 = vmatpush1.bf16.msra.mxu0 0
    %1251 = vmatprep.subr.bf16.mxu0 0
    %1252 = vmatpush1.bf16.msra.mxu0 0
    %1253 = vmatprep.subr.bf16.mxu0 0
    %1254 = vmatpush1.bf16.msra.mxu0 0
    %1255 = vmatprep.mubr.bf16.mxu0 0
    %1256 = vmatmul.mubr.bf16.gmra.mrb[0].mxu0 %v1221
    %v1257 = vpop.f32.mrb[0].mxu0
    %v1258 = vadd.f32 %v1206, %v1257
    %v1259 = vpop.f32.mrb[0].mxu0
    %v1260 = vpop.f32.mrb[0].mxu0
    %v1261 = vadd.f32 %v1206, %v1260
    %v1262 = vpop.f32.mrb[0].mxu0
    %1263 = vdwg.mxu0
    %v1264 = vadd.f32 %v139, %v1258
    %v1265 = vadd.f32 %v140, %v1261
    %v1266 = vsel %vm152, %v1264, 0.0
    %1267 = vadd.xlane.f32.xlu0 %v1266
    %v1268 = vpop.xlane.xlu0 %1267
    %v1269 = vsel %vm152, %v1265, 0.0
    %1270 = vadd.xlane.f32.xlu0 %v1269
    %v1271 = vpop.xlane.xlu0 %1270
    %v1272 = vmul.f32 %v1268, %v159
    %v1273 = vmul.f32 %v1271, %v159
    %v1274 = vsub.f32 %v1264, %v1272
    %v1275 = vsub.f32 %v1265, %v1273
    %v1276 = vmul.f32 %v1274, %v1274
    %v1277 = vmul.f32 %v1275, %v1275
    %v1278 = vsel %vm152, %v1276, 0.0
    %1279 = vadd.xlane.f32.xlu0 %v1278
    %v1280 = vpop.xlane.xlu0 %1279
    %v1281 = vsel %vm152, %v1277, 0.0
    %1282 = vadd.xlane.f32.xlu0 %v1281
    %v1283 = vpop.xlane.xlu0 %1282
    %v1284 = vmul.f32 %v1280, 0.032258064
    %v1285 = vmul.f32 %v1283, 0.032258064
    %v1286 = vrsqrt.pop %v1284
    %v1287 = vmul.f32 %v1284, %v1286
    %vm1288 = vcmp.eq.f32.partialorder %v1284, inf
    %v1289 = vsel %vm1288, %v1284, %v1287
    %vm1290 = vcmp.eq.f32.partialorder %v1284, 0.0
    %v1291 = vand.u32 %v1284, 2147483648
    %v1292 = vsel %vm1290, %v1291, %v1289
    %v1293 = vrsqrt.pop %v1285
    %v1294 = vmul.f32 %v1285, %v1293
    %vm1295 = vcmp.eq.f32.partialorder %v1285, inf
    %v1296 = vsel %vm1295, %v1285, %v1294
    %vm1297 = vcmp.eq.f32.partialorder %v1285, 0.0
    %v1298 = vand.u32 %v1285, 2147483648
    %v1299 = vsel %vm1297, %v1298, %v1296
    %v1300 = vadd.f32 %v1292, 1e-06
    %v1301 = vadd.f32 %v1299, 1e-06
    %v1302 = vrcp.pop %v1300
    %v1303 = vrcp.pop %v1301
    %v1304 = vmul.f32 %v1274, %v1302
    %v1305 = vmul.f32 %v1275, %v1303
    %v1306 = vadd.f32 %v1304, 0.0
    %v1307 = vadd.f32 %v1305, 0.0
    %v1308 = vld [vmem:[#allocation2] sm:$0xf]
    %v1309 = vld [vmem:[#allocation2 + $0x4] sm:$0xf]
    %v1310 = vld [vmem:[#allocation2 + $0x8] sm:$0xf]
    %v1311 = vld [vmem:[#allocation2 + $0xc] sm:$0xf]
    %v1312 = vpack.c.bf16 %v1307, %v1306
    %v1313 = vld [vmem:[#allocation5] sm:$0x1]
    %v1315 = vlaneseq
    %v1316 = vshrl.u32 %v1315, 7
    %v1317 = vsub.s32 0, %v1316
    %v1318 = vrot.slane %v1313, %v1317
    %v1324 = vunpack.c.l.b16 %v1308
    %v1325 = vunpack.c.l.b16 %v1309
    %v1326 = vunpack.c.l.b16 %v1310
    %v1327 = vunpack.c.l.b16 %v1311
    %v1328 = vpack.c.b16 %v1325, %v1324
    %v1329 = vpack.c.b16 %v1327, %v1326
    %v1333 = vsel %vm152, %v1312, 0
    %1335 = vmatprep.subr.bf16.mxu0 0
    %1336 = vmatpush1.bf16.msra.mxu0 %v1328
    %1337 = vmatprep.subr.bf16.mxu0 0
    %1338 = vmatpush1.bf16.msra.mxu0 %v1329
    %1339 = vmatprep.subr.bf16.mxu0 0
    %1340 = vmatpush1.bf16.msra.mxu0 0
    %1341 = vmatprep.subr.bf16.mxu0 0
    %1342 = vmatpush1.bf16.msra.mxu0 0
    %1343 = vmatprep.subr.bf16.mxu0 0
    %1344 = vmatpush1.bf16.msra.mxu0 0
    %1345 = vmatprep.subr.bf16.mxu0 0
    %1346 = vmatpush1.bf16.msra.mxu0 0
    %1347 = vmatprep.subr.bf16.mxu0 0
    %1348 = vmatpush1.bf16.msra.mxu0 0
    %1349 = vmatprep.subr.bf16.mxu0 0
    %1350 = vmatpush1.bf16.msra.mxu0 0
    %1351 = vmatprep.subr.bf16.mxu0 0
    %1352 = vmatpush1.bf16.msra.mxu0 0
    %1353 = vmatprep.subr.bf16.mxu0 0
    %1354 = vmatpush1.bf16.msra.mxu0 0
    %1355 = vmatprep.subr.bf16.mxu0 0
    %1356 = vmatpush1.bf16.msra.mxu0 0
    %1357 = vmatprep.subr.bf16.mxu0 0
    %1358 = vmatpush1.bf16.msra.mxu0 0
    %1359 = vmatprep.subr.bf16.mxu0 0
    %1360 = vmatpush1.bf16.msra.mxu0 0
    %1361 = vmatprep.subr.bf16.mxu0 0
    %1362 = vmatpush1.bf16.msra.mxu0 0
    %1363 = vmatprep.subr.bf16.mxu0 0
    %1364 = vmatpush1.bf16.msra.mxu0 0
    %1365 = vmatprep.subr.bf16.mxu0 0
    %1366 = vmatpush1.bf16.msra.mxu0 0
    %1367 = vmatprep.mubr.bf16.mxu0 0
    %1368 = vmatmul.mubr.bf16.gmra.mrb[0].mxu0 %v1333
    %v1369 = vpop.f32.mrb[0].mxu0
    %v1370 = vadd.f32 %v1318, %v1369
    %v1371 = vpop.f32.mrb[0].mxu0
    %v1372 = vpop.f32.mrb[0].mxu0
    %v1373 = vadd.f32 %v1318, %v1372
    %v1374 = vpop.f32.mrb[0].mxu0
    %1375 = vdwg.mxu0
    %v1376 = vpack.c.bf16 %v142, %v141
    %1377 = vrot.lane.b32.xlu0 %v1328, 96
    %v1378 = vpop.permute.xlu0 %1377
    %1379 = vrot.lane.b32.xlu0 %v1329, 96
    %v1380 = vpop.permute.xlu0 %1379
    %1383 = vrot.lane.b32.xlu0 %v1318, 96
    %v1384 = vpop.permute.xlu0 %1383
    %v1387 = vsel %vm152, %v1376, 0
    %1389 = vmatprep.subr.bf16.mxu0 0
    %1390 = vmatpush1.bf16.msra.mxu0 %v1378
    %1391 = vmatprep.subr.bf16.mxu0 0
    %1392 = vmatpush1.bf16.msra.mxu0 %v1380
    %1393 = vmatprep.subr.bf16.mxu0 0
    %1394 = vmatpush1.bf16.msra.mxu0 0
    %1395 = vmatprep.subr.bf16.mxu0 0
    %1396 = vmatpush1.bf16.msra.mxu0 0
    %1397 = vmatprep.subr.bf16.mxu0 0
    %1398 = vmatpush1.bf16.msra.mxu0 0
    %1399 = vmatprep.subr.bf16.mxu0 0
    %1400 = vmatpush1.bf16.msra.mxu0 0
    %1401 = vmatprep.subr.bf16.mxu0 0
    %1402 = vmatpush1.bf16.msra.mxu0 0
    %1403 = vmatprep.subr.bf16.mxu0 0
    %1404 = vmatpush1.bf16.msra.mxu0 0
    %1405 = vmatprep.subr.bf16.mxu0 0
    %1406 = vmatpush1.bf16.msra.mxu0 0
    %1407 = vmatprep.subr.bf16.mxu0 0
    %1408 = vmatpush1.bf16.msra.mxu0 0
    %1409 = vmatprep.subr.bf16.mxu0 0
    %1410 = vmatpush1.bf16.msra.mxu0 0
    %1411 = vmatprep.subr.bf16.mxu0 0
    %1412 = vmatpush1.bf16.msra.mxu0 0
    %1413 = vmatprep.subr.bf16.mxu0 0
    %1414 = vmatpush1.bf16.msra.mxu0 0
    %1415 = vmatprep.subr.bf16.mxu0 0
    %1416 = vmatpush1.bf16.msra.mxu0 0
    %1417 = vmatprep.subr.bf16.mxu0 0
    %1418 = vmatpush1.bf16.msra.mxu0 0
    %1419 = vmatprep.subr.bf16.mxu0 0
    %1420 = vmatpush1.bf16.msra.mxu0 0
    %1421 = vmatprep.mubr.bf16.mxu0 0
    %1422 = vmatmul.mubr.bf16.gmra.mrb[0].mxu0 %v1387
    %v1423 = vpop.f32.mrb[0].mxu0
    %v1424 = vadd.f32 %v1384, %v1423
    %v1425 = vpop.f32.mrb[0].mxu0
    %v1426 = vpop.f32.mrb[0].mxu0
    %v1427 = vadd.f32 %v1384, %v1426
    %v1428 = vpop.f32.mrb[0].mxu0
    %1429 = vdwg.mxu0
    %v1430 = vpack.c.bf16 %v1370, %v1370
    %v1431 = vpack.c.bf16 %v1373, %v1373
    %v1432 = vpack.c.bf16 %v1424, %v1424
    %v1433 = vpack.c.bf16 %v1427, %v1427
    %v1435 = vsel %vm269, %v1430, 0
    %v1438 = vsel %vm269, %v1432, 0
    %1440 = vmatprep.subr.bf16.mxu0 0
    %1441 = vmatpush1.bf16.xpose.msra.mxu0 %v1438
    %1442 = vmatprep.subr.bf16.mxu0 0
    %1443 = vmatpush1.bf16.xpose.msra.mxu0 0
    %1444 = vmatprep.subr.bf16.mxu0 0
    %1445 = vmatpush1.bf16.xpose.msra.mxu0 0
    %1446 = vmatprep.subr.bf16.mxu0 0
    %1447 = vmatpush1.bf16.xpose.msra.mxu0 0
    %1448 = vmatprep.subr.bf16.mxu0 0
    %1449 = vmatpush1.bf16.xpose.msra.mxu0 0
    %1450 = vmatprep.subr.bf16.mxu0 0
    %1451 = vmatpush1.bf16.xpose.msra.mxu0 0
    %1452 = vmatprep.subr.bf16.mxu0 0
    %1453 = vmatpush1.bf16.xpose.msra.mxu0 0
    %1454 = vmatprep.subr.bf16.mxu0 0
    %1455 = vmatpush1.bf16.xpose.msra.mxu0 0
    %1456 = vmatprep.subr.bf16.mxu0 0
    %1457 = vmatpush1.bf16.xpose.msra.mxu0 0
    %1458 = vmatprep.subr.bf16.mxu0 0
    %1459 = vmatpush1.bf16.xpose.msra.mxu0 0
    %1460 = vmatprep.subr.bf16.mxu0 0
    %1461 = vmatpush1.bf16.xpose.msra.mxu0 0
    %1462 = vmatprep.subr.bf16.mxu0 0
    %1463 = vmatpush1.bf16.xpose.msra.mxu0 0
    %1464 = vmatprep.subr.bf16.mxu0 0
    %1465 = vmatpush1.bf16.xpose.msra.mxu0 0
    %1466 = vmatprep.subr.bf16.mxu0 0
    %1467 = vmatpush1.bf16.xpose.msra.mxu0 0
    %1468 = vmatprep.subr.bf16.mxu0 0
    %1469 = vmatpush1.bf16.xpose.msra.mxu0 0
    %1470 = vmatprep.subr.bf16.mxu0 0
    %1471 = vmatpush1.bf16.xpose.msra.mxu0 0
    %1472 = vmatprep.mubr.bf16.mxu0 0
    %1473 = vmatmul.mubr.bf16.gmra.mrb[0].mxu0 %v1435
    %v1474 = vpop.f32.mrb[0].mxu0
    %v1475 = vadd.f32 0.0, %v1474
    %v1476 = vpop.f32.mrb[0].mxu0
    %v1477 = vpop.f32.mrb[0].mxu0
    %v1478 = vpop.f32.mrb[0].mxu0
    %1479 = vdwg.mxu0
    %v1481 = vsel %vm269, %v1431, 0
    %v1484 = vsel %vm269, %v1433, 0
    %1486 = vmatprep.subr.bf16.mxu0 0
    %1487 = vmatpush1.bf16.xpose.msra.mxu0 %v1484
    %1488 = vmatprep.subr.bf16.mxu0 0
    %1489 = vmatpush1.bf16.xpose.msra.mxu0 0
    %1490 = vmatprep.subr.bf16.mxu0 0
    %1491 = vmatpush1.bf16.xpose.msra.mxu0 0
    %1492 = vmatprep.subr.bf16.mxu0 0
    %1493 = vmatpush1.bf16.xpose.msra.mxu0 0
    %1494 = vmatprep.subr.bf16.mxu0 0
    %1495 = vmatpush1.bf16.xpose.msra.mxu0 0
    %1496 = vmatprep.subr.bf16.mxu0 0
    %1497 = vmatpush1.bf16.xpose.msra.mxu0 0
    %1498 = vmatprep.subr.bf16.mxu0 0
    %1499 = vmatpush1.bf16.xpose.msra.mxu0 0
    %1500 = vmatprep.subr.bf16.mxu0 0
    %1501 = vmatpush1.bf16.xpose.msra.mxu0 0
    %1502 = vmatprep.subr.bf16.mxu0 0
    %1503 = vmatpush1.bf16.xpose.msra.mxu0 0
    %1504 = vmatprep.subr.bf16.mxu0 0
    %1505 = vmatpush1.bf16.xpose.msra.mxu0 0
    %1506 = vmatprep.subr.bf16.mxu0 0
    %1507 = vmatpush1.bf16.xpose.msra.mxu0 0
    %1508 = vmatprep.subr.bf16.mxu0 0
    %1509 = vmatpush1.bf16.xpose.msra.mxu0 0
    %1510 = vmatprep.subr.bf16.mxu0 0
    %1511 = vmatpush1.bf16.xpose.msra.mxu0 0
    %1512 = vmatprep.subr.bf16.mxu0 0
    %1513 = vmatpush1.bf16.xpose.msra.mxu0 0
    %1514 = vmatprep.subr.bf16.mxu0 0
    %1515 = vmatpush1.bf16.xpose.msra.mxu0 0
    %1516 = vmatprep.subr.bf16.mxu0 0
    %1517 = vmatpush1.bf16.xpose.msra.mxu0 0
    %1518 = vmatprep.mubr.bf16.mxu0 0
    %1519 = vmatmul.mubr.bf16.gmra.mrb[0].mxu0 %v1481
    %v1520 = vpop.f32.mrb[0].mxu0
    %v1521 = vadd.f32 0.0, %v1520
    %v1522 = vpop.f32.mrb[0].mxu0
    %v1523 = vpop.f32.mrb[0].mxu0
    %v1524 = vpop.f32.mrb[0].mxu0
    %1525 = vdwg.mxu0
    %v1526 = vmul.f32 %v1475, 0.35355338
    %v1527 = vmul.f32 %v1521, 0.35355338
    %v1528 = vsel %vm150, 1, 0
    %v1529 = vsel %vm151, 1, 0
    %v1530 = vlaneseq
    %v1531 = vshrl.u32 %v1530, 7
    %v1532 = vsub.s32 0, %v1531
    %v1533 = vrot.slane %v1528, %v1532
    %v1534 = vlaneseq
    %v1535 = vshrl.u32 %v1534, 7
    %v1536 = vsub.s32 0, %v1535
    %v1537 = vrot.slane %v1529, %v1536
    %vm1538 = vcmp.eq.s32.totalorder %v1533, 1
    %vm1539 = vcmp.eq.s32.totalorder %v1537, 1
    %v1540 = vsel %vm1538, %v1526, -1e+20
    %v1541 = vsel %vm1539, %v1527, -1e+20
    %v1542 = vsel %vm269, %v1540, -inf
    %1543 = vmax.xlane.f32.xlu0 %v1542
    %v1544 = vpop.xlane.xlu0 %1543
    %v1545 = vsel %vm269, %v1541, -inf
    %1546 = vmax.xlane.f32.xlu0 %v1545
    %v1547 = vpop.xlane.xlu0 %1546
    %v1548 = vsub.f32 %v1540, %v1544
    %v1549 = vsub.f32 %v1541, %v1547
    %v1550 = vmul.f32 %v1548, 1.442695
    %v1551 = vpow.pop %v1550
    %v1552 = vmul.f32 %v1549, 1.442695
    %v1553 = vpow.pop %v1552
    %v1554 = vsel %vm269, %v1551, 0.0
    %1555 = vadd.xlane.f32.xlu0 %v1554
    %v1556 = vpop.xlane.xlu0 %1555
    %v1557 = vsel %vm269, %v1553, 0.0
    %1558 = vadd.xlane.f32.xlu0 %v1557
    %v1559 = vpop.xlane.xlu0 %1558
    %v1560 = vrcp.pop %v1556
    %v1561 = vrcp.pop %v1559
    %v1562 = vmul.f32 %v1551, %v1560
    %v1563 = vmul.f32 %v1553, %v1561
    %v1564 = vpack.c.bf16 %v1562, %v1562
    %v1565 = vpack.c.bf16 %v1563, %v1563
    %1567 = vrot.lane.b32.xlu0 %v1432, 96
    %v1568 = vpop.permute.xlu0 %1567
    %v1570 = vsel %vm269, %v1564, 0
    %v1573 = vsel %vm400, %v1568, 0
    %1575 = vmatprep.subr.bf16.mxu0 0
    %1576 = vmatpush1.bf16.msra.mxu0 %v1573
    %1577 = vmatprep.subr.bf16.mxu0 0
    %1578 = vmatpush1.bf16.msra.mxu0 0
    %1579 = vmatprep.subr.bf16.mxu0 0
    %1580 = vmatpush1.bf16.msra.mxu0 0
    %1581 = vmatprep.subr.bf16.mxu0 0
    %1582 = vmatpush1.bf16.msra.mxu0 0
    %1583 = vmatprep.subr.bf16.mxu0 0
    %1584 = vmatpush1.bf16.msra.mxu0 0
    %1585 = vmatprep.subr.bf16.mxu0 0
    %1586 = vmatpush1.bf16.msra.mxu0 0
    %1587 = vmatprep.subr.bf16.mxu0 0
    %1588 = vmatpush1.bf16.msra.mxu0 0
    %1589 = vmatprep.subr.bf16.mxu0 0
    %1590 = vmatpush1.bf16.msra.mxu0 0
    %1591 = vmatprep.subr.bf16.mxu0 0
    %1592 = vmatpush1.bf16.msra.mxu0 0
    %1593 = vmatprep.subr.bf16.mxu0 0
    %1594 = vmatpush1.bf16.msra.mxu0 0
    %1595 = vmatprep.subr.bf16.mxu0 0
    %1596 = vmatpush1.bf16.msra.mxu0 0
    %1597 = vmatprep.subr.bf16.mxu0 0
    %1598 = vmatpush1.bf16.msra.mxu0 0
    %1599 = vmatprep.subr.bf16.mxu0 0
    %1600 = vmatpush1.bf16.msra.mxu0 0
    %1601 = vmatprep.subr.bf16.mxu0 0
    %1602 = vmatpush1.bf16.msra.mxu0 0
    %1603 = vmatprep.subr.bf16.mxu0 0
    %1604 = vmatpush1.bf16.msra.mxu0 0
    %1605 = vmatprep.subr.bf16.mxu0 0
    %1606 = vmatpush1.bf16.msra.mxu0 0
    %1607 = vmatprep.mubr.bf16.mxu0 0
    %1608 = vmatmul.mubr.bf16.gmra.mrb[0].mxu0 %v1570
    %v1609 = vpop.f32.mrb[0].mxu0
    %v1610 = vadd.f32 0.0, %v1609
    %v1611 = vpop.f32.mrb[0].mxu0
    %v1612 = vpop.f32.mrb[0].mxu0
    %v1613 = vpop.f32.mrb[0].mxu0
    %1614 = vdwg.mxu0
    %1616 = vrot.lane.b32.xlu0 %v1433, 96
    %v1617 = vpop.permute.xlu0 %1616
    %v1619 = vsel %vm269, %v1565, 0
    %v1622 = vsel %vm400, %v1617, 0
    %1624 = vmatprep.subr.bf16.mxu0 0
    %1625 = vmatpush1.bf16.msra.mxu0 %v1622
    %1626 = vmatprep.subr.bf16.mxu0 0
    %1627 = vmatpush1.bf16.msra.mxu0 0
    %1628 = vmatprep.subr.bf16.mxu0 0
    %1629 = vmatpush1.bf16.msra.mxu0 0
    %1630 = vmatprep.subr.bf16.mxu0 0
    %1631 = vmatpush1.bf16.msra.mxu0 0
    %1632 = vmatprep.subr.bf16.mxu0 0
    %1633 = vmatpush1.bf16.msra.mxu0 0
    %1634 = vmatprep.subr.bf16.mxu0 0
    %1635 = vmatpush1.bf16.msra.mxu0 0
    %1636 = vmatprep.subr.bf16.mxu0 0
    %1637 = vmatpush1.bf16.msra.mxu0 0
    %1638 = vmatprep.subr.bf16.mxu0 0
    %1639 = vmatpush1.bf16.msra.mxu0 0
    %1640 = vmatprep.subr.bf16.mxu0 0
    %1641 = vmatpush1.bf16.msra.mxu0 0
    %1642 = vmatprep.subr.bf16.mxu0 0
    %1643 = vmatpush1.bf16.msra.mxu0 0
    %1644 = vmatprep.subr.bf16.mxu0 0
    %1645 = vmatpush1.bf16.msra.mxu0 0
    %1646 = vmatprep.subr.bf16.mxu0 0
    %1647 = vmatpush1.bf16.msra.mxu0 0
    %1648 = vmatprep.subr.bf16.mxu0 0
    %1649 = vmatpush1.bf16.msra.mxu0 0
    %1650 = vmatprep.subr.bf16.mxu0 0
    %1651 = vmatpush1.bf16.msra.mxu0 0
    %1652 = vmatprep.subr.bf16.mxu0 0
    %1653 = vmatpush1.bf16.msra.mxu0 0
    %1654 = vmatprep.subr.bf16.mxu0 0
    %1655 = vmatpush1.bf16.msra.mxu0 0
    %1656 = vmatprep.mubr.bf16.mxu0 0
    %1657 = vmatmul.mubr.bf16.gmra.mrb[0].mxu0 %v1619
    %v1658 = vpop.f32.mrb[0].mxu0
    %v1659 = vadd.f32 0.0, %v1658
    %v1660 = vpop.f32.mrb[0].mxu0
    %v1661 = vpop.f32.mrb[0].mxu0
    %v1662 = vpop.f32.mrb[0].mxu0
    %1663 = vdwg.mxu0
    %1665 = vrot.lane.b32.xlu0 %v1430, 120
    %v1666 = vpop.permute.xlu0 %1665
    %1667 = vrot.lane.b32.xlu0 %v1432, 120
    %v1668 = vpop.permute.xlu0 %1667
    %v1670 = vsel %vm269, %v1666, 0
    %v1673 = vsel %vm269, %v1668, 0
    %1675 = vmatprep.subr.bf16.mxu0 0
    %1676 = vmatpush1.bf16.xpose.msra.mxu0 %v1673
    %1677 = vmatprep.subr.bf16.mxu0 0
    %1678 = vmatpush1.bf16.xpose.msra.mxu0 0
    %1679 = vmatprep.subr.bf16.mxu0 0
    %1680 = vmatpush1.bf16.xpose.msra.mxu0 0
    %1681 = vmatprep.subr.bf16.mxu0 0
    %1682 = vmatpush1.bf16.xpose.msra.mxu0 0
    %1683 = vmatprep.subr.bf16.mxu0 0
    %1684 = vmatpush1.bf16.xpose.msra.mxu0 0
    %1685 = vmatprep.subr.bf16.mxu0 0
    %1686 = vmatpush1.bf16.xpose.msra.mxu0 0
    %1687 = vmatprep.subr.bf16.mxu0 0
    %1688 = vmatpush1.bf16.xpose.msra.mxu0 0
    %1689 = vmatprep.subr.bf16.mxu0 0
    %1690 = vmatpush1.bf16.xpose.msra.mxu0 0
    %1691 = vmatprep.subr.bf16.mxu0 0
    %1692 = vmatpush1.bf16.xpose.msra.mxu0 0
    %1693 = vmatprep.subr.bf16.mxu0 0
    %1694 = vmatpush1.bf16.xpose.msra.mxu0 0
    %1695 = vmatprep.subr.bf16.mxu0 0
    %1696 = vmatpush1.bf16.xpose.msra.mxu0 0
    %1697 = vmatprep.subr.bf16.mxu0 0
    %1698 = vmatpush1.bf16.xpose.msra.mxu0 0
    %1699 = vmatprep.subr.bf16.mxu0 0
    %1700 = vmatpush1.bf16.xpose.msra.mxu0 0
    %1701 = vmatprep.subr.bf16.mxu0 0
    %1702 = vmatpush1.bf16.xpose.msra.mxu0 0
    %1703 = vmatprep.subr.bf16.mxu0 0
    %1704 = vmatpush1.bf16.xpose.msra.mxu0 0
    %1705 = vmatprep.subr.bf16.mxu0 0
    %1706 = vmatpush1.bf16.xpose.msra.mxu0 0
    %1707 = vmatprep.mubr.bf16.mxu0 0
    %1708 = vmatmul.mubr.bf16.gmra.mrb[0].mxu0 %v1670
    %v1709 = vpop.f32.mrb[0].mxu0
    %v1710 = vadd.f32 0.0, %v1709
    %v1711 = vpop.f32.mrb[0].mxu0
    %v1712 = vpop.f32.mrb[0].mxu0
    %v1713 = vpop.f32.mrb[0].mxu0
    %1714 = vdwg.mxu0
    %1716 = vrot.lane.b32.xlu0 %v1431, 120
    %v1717 = vpop.permute.xlu0 %1716
    %1718 = vrot.lane.b32.xlu0 %v1433, 120
    %v1719 = vpop.permute.xlu0 %1718
    %v1721 = vsel %vm269, %v1717, 0
    %v1724 = vsel %vm269, %v1719, 0
    %1726 = vmatprep.subr.bf16.mxu0 0
    %1727 = vmatpush1.bf16.xpose.msra.mxu0 %v1724
    %1728 = vmatprep.subr.bf16.mxu0 0
    %1729 = vmatpush1.bf16.xpose.msra.mxu0 0
    %1730 = vmatprep.subr.bf16.mxu0 0
    %1731 = vmatpush1.bf16.xpose.msra.mxu0 0
    %1732 = vmatprep.subr.bf16.mxu0 0
    %1733 = vmatpush1.bf16.xpose.msra.mxu0 0
    %1734 = vmatprep.subr.bf16.mxu0 0
    %1735 = vmatpush1.bf16.xpose.msra.mxu0 0
    %1736 = vmatprep.subr.bf16.mxu0 0
    %1737 = vmatpush1.bf16.xpose.msra.mxu0 0
    %1738 = vmatprep.subr.bf16.mxu0 0
    %1739 = vmatpush1.bf16.xpose.msra.mxu0 0
    %1740 = vmatprep.subr.bf16.mxu0 0
    %1741 = vmatpush1.bf16.xpose.msra.mxu0 0
    %1742 = vmatprep.subr.bf16.mxu0 0
    %1743 = vmatpush1.bf16.xpose.msra.mxu0 0
    %1744 = vmatprep.subr.bf16.mxu0 0
    %1745 = vmatpush1.bf16.xpose.msra.mxu0 0
    %1746 = vmatprep.subr.bf16.mxu0 0
    %1747 = vmatpush1.bf16.xpose.msra.mxu0 0
    %1748 = vmatprep.subr.bf16.mxu0 0
    %1749 = vmatpush1.bf16.xpose.msra.mxu0 0
    %1750 = vmatprep.subr.bf16.mxu0 0
    %1751 = vmatpush1.bf16.xpose.msra.mxu0 0
    %1752 = vmatprep.subr.bf16.mxu0 0
    %1753 = vmatpush1.bf16.xpose.msra.mxu0 0
    %1754 = vmatprep.subr.bf16.mxu0 0
    %1755 = vmatpush1.bf16.xpose.msra.mxu0 0
    %1756 = vmatprep.subr.bf16.mxu0 0
    %1757 = vmatpush1.bf16.xpose.msra.mxu0 0
    %1758 = vmatprep.mubr.bf16.mxu0 0
    %1759 = vmatmul.mubr.bf16.gmra.mrb[0].mxu0 %v1721
    %v1760 = vpop.f32.mrb[0].mxu0
    %v1761 = vadd.f32 0.0, %v1760
    %v1762 = vpop.f32.mrb[0].mxu0
    %v1763 = vpop.f32.mrb[0].mxu0
    %v1764 = vpop.f32.mrb[0].mxu0
    %1765 = vdwg.mxu0
    %v1766 = vmul.f32 %v1710, 0.35355338
    %v1767 = vmul.f32 %v1761, 0.35355338
    %v1768 = vsel %vm1538, %v1766, -1e+20
    %v1769 = vsel %vm1539, %v1767, -1e+20
    %v1770 = vsel %vm269, %v1768, -inf
    %1771 = vmax.xlane.f32.xlu0 %v1770
    %v1772 = vpop.xlane.xlu0 %1771
    %v1773 = vsel %vm269, %v1769, -inf
    %1774 = vmax.xlane.f32.xlu0 %v1773
    %v1775 = vpop.xlane.xlu0 %1774
    %v1776 = vsub.f32 %v1768, %v1772
    %v1777 = vsub.f32 %v1769, %v1775
    %v1778 = vmul.f32 %v1776, 1.442695
    %v1779 = vpow.pop %v1778
    %v1780 = vmul.f32 %v1777, 1.442695
    %v1781 = vpow.pop %v1780
    %v1782 = vsel %vm269, %v1779, 0.0
    %1783 = vadd.xlane.f32.xlu0 %v1782
    %v1784 = vpop.xlane.xlu0 %1783
    %v1785 = vsel %vm269, %v1781, 0.0
    %1786 = vadd.xlane.f32.xlu0 %v1785
    %v1787 = vpop.xlane.xlu0 %1786
    %v1788 = vrcp.pop %v1784
    %v1789 = vrcp.pop %v1787
    %v1790 = vmul.f32 %v1779, %v1788
    %v1791 = vmul.f32 %v1781, %v1789
    %v1792 = vpack.c.bf16 %v1790, %v1790
    %v1793 = vpack.c.bf16 %v1791, %v1791
    %1794 = vrot.lane.b32.xlu0 %v1432, 88
    %v1795 = vpop.permute.xlu0 %1794
    %v1797 = vsel %vm269, %v1792, 0
    %v1800 = vsel %vm400, %v1795, 0
    %1802 = vmatprep.subr.bf16.mxu0 0
    %1803 = vmatpush1.bf16.msra.mxu0 %v1800
    %1804 = vmatprep.subr.bf16.mxu0 0
    %1805 = vmatpush1.bf16.msra.mxu0 0
    %1806 = vmatprep.subr.bf16.mxu0 0
    %1807 = vmatpush1.bf16.msra.mxu0 0
    %1808 = vmatprep.subr.bf16.mxu0 0
    %1809 = vmatpush1.bf16.msra.mxu0 0
    %1810 = vmatprep.subr.bf16.mxu0 0
    %1811 = vmatpush1.bf16.msra.mxu0 0
    %1812 = vmatprep.subr.bf16.mxu0 0
    %1813 = vmatpush1.bf16.msra.mxu0 0
    %1814 = vmatprep.subr.bf16.mxu0 0
    %1815 = vmatpush1.bf16.msra.mxu0 0
    %1816 = vmatprep.subr.bf16.mxu0 0
    %1817 = vmatpush1.bf16.msra.mxu0 0
    %1818 = vmatprep.subr.bf16.mxu0 0
    %1819 = vmatpush1.bf16.msra.mxu0 0
    %1820 = vmatprep.subr.bf16.mxu0 0
    %1821 = vmatpush1.bf16.msra.mxu0 0
    %1822 = vmatprep.subr.bf16.mxu0 0
    %1823 = vmatpush1.bf16.msra.mxu0 0
    %1824 = vmatprep.subr.bf16.mxu0 0
    %1825 = vmatpush1.bf16.msra.mxu0 0
    %1826 = vmatprep.subr.bf16.mxu0 0
    %1827 = vmatpush1.bf16.msra.mxu0 0
    %1828 = vmatprep.subr.bf16.mxu0 0
    %1829 = vmatpush1.bf16.msra.mxu0 0
    %1830 = vmatprep.subr.bf16.mxu0 0
    %1831 = vmatpush1.bf16.msra.mxu0 0
    %1832 = vmatprep.subr.bf16.mxu0 0
    %1833 = vmatpush1.bf16.msra.mxu0 0
    %1834 = vmatprep.mubr.bf16.mxu0 0
    %1835 = vmatmul.mubr.bf16.gmra.mrb[0].mxu0 %v1797
    %v1836 = vpop.f32.mrb[0].mxu0
    %v1837 = vadd.f32 0.0, %v1836
    %v1838 = vpop.f32.mrb[0].mxu0
    %v1839 = vpop.f32.mrb[0].mxu0
    %v1840 = vpop.f32.mrb[0].mxu0
    %1841 = vdwg.mxu0
    %1842 = vrot.lane.b32.xlu0 %v1433, 88
    %v1843 = vpop.permute.xlu0 %1842
    %v1845 = vsel %vm269, %v1793, 0
    %v1848 = vsel %vm400, %v1843, 0
    %1850 = vmatprep.subr.bf16.mxu0 0
    %1851 = vmatpush1.bf16.msra.mxu0 %v1848
    %1852 = vmatprep.subr.bf16.mxu0 0
    %1853 = vmatpush1.bf16.msra.mxu0 0
    %1854 = vmatprep.subr.bf16.mxu0 0
    %1855 = vmatpush1.bf16.msra.mxu0 0
    %1856 = vmatprep.subr.bf16.mxu0 0
    %1857 = vmatpush1.bf16.msra.mxu0 0
    %1858 = vmatprep.subr.bf16.mxu0 0
    %1859 = vmatpush1.bf16.msra.mxu0 0
    %1860 = vmatprep.subr.bf16.mxu0 0
    %1861 = vmatpush1.bf16.msra.mxu0 0
    %1862 = vmatprep.subr.bf16.mxu0 0
    %1863 = vmatpush1.bf16.msra.mxu0 0
    %1864 = vmatprep.subr.bf16.mxu0 0
    %1865 = vmatpush1.bf16.msra.mxu0 0
    %1866 = vmatprep.subr.bf16.mxu0 0
    %1867 = vmatpush1.bf16.msra.mxu0 0
    %1868 = vmatprep.subr.bf16.mxu0 0
    %1869 = vmatpush1.bf16.msra.mxu0 0
    %1870 = vmatprep.subr.bf16.mxu0 0
    %1871 = vmatpush1.bf16.msra.mxu0 0
    %1872 = vmatprep.subr.bf16.mxu0 0
    %1873 = vmatpush1.bf16.msra.mxu0 0
    %1874 = vmatprep.subr.bf16.mxu0 0
    %1875 = vmatpush1.bf16.msra.mxu0 0
    %1876 = vmatprep.subr.bf16.mxu0 0
    %1877 = vmatpush1.bf16.msra.mxu0 0
    %1878 = vmatprep.subr.bf16.mxu0 0
    %1879 = vmatpush1.bf16.msra.mxu0 0
    %1880 = vmatprep.subr.bf16.mxu0 0
    %1881 = vmatpush1.bf16.msra.mxu0 0
    %1882 = vmatprep.mubr.bf16.mxu0 0
    %1883 = vmatmul.mubr.bf16.gmra.mrb[0].mxu0 %v1845
    %v1884 = vpop.f32.mrb[0].mxu0
    %v1885 = vadd.f32 0.0, %v1884
    %v1886 = vpop.f32.mrb[0].mxu0
    %v1887 = vpop.f32.mrb[0].mxu0
    %v1888 = vpop.f32.mrb[0].mxu0
    %1889 = vdwg.mxu0
    %1890 = vrot.lane.b32.xlu0 %v1430, 112
    %v1891 = vpop.permute.xlu0 %1890
    %1892 = vrot.lane.b32.xlu0 %v1432, 112
    %v1893 = vpop.permute.xlu0 %1892
    %v1895 = vsel %vm269, %v1891, 0
    %v1898 = vsel %vm269, %v1893, 0
    %1900 = vmatprep.subr.bf16.mxu0 0
    %1901 = vmatpush1.bf16.xpose.msra.mxu0 %v1898
    %1902 = vmatprep.subr.bf16.mxu0 0
    %1903 = vmatpush1.bf16.xpose.msra.mxu0 0
    %1904 = vmatprep.subr.bf16.mxu0 0
    %1905 = vmatpush1.bf16.xpose.msra.mxu0 0
    %1906 = vmatprep.subr.bf16.mxu0 0
    %1907 = vmatpush1.bf16.xpose.msra.mxu0 0
    %1908 = vmatprep.subr.bf16.mxu0 0
    %1909 = vmatpush1.bf16.xpose.msra.mxu0 0
    %1910 = vmatprep.subr.bf16.mxu0 0
    %1911 = vmatpush1.bf16.xpose.msra.mxu0 0
    %1912 = vmatprep.subr.bf16.mxu0 0
    %1913 = vmatpush1.bf16.xpose.msra.mxu0 0
    %1914 = vmatprep.subr.bf16.mxu0 0
    %1915 = vmatpush1.bf16.xpose.msra.mxu0 0
    %1916 = vmatprep.subr.bf16.mxu0 0
    %1917 = vmatpush1.bf16.xpose.msra.mxu0 0
    %1918 = vmatprep.subr.bf16.mxu0 0
    %1919 = vmatpush1.bf16.xpose.msra.mxu0 0
    %1920 = vmatprep.subr.bf16.mxu0 0
    %1921 = vmatpush1.bf16.xpose.msra.mxu0 0
    %1922 = vmatprep.subr.bf16.mxu0 0
    %1923 = vmatpush1.bf16.xpose.msra.mxu0 0
    %1924 = vmatprep.subr.bf16.mxu0 0
    %1925 = vmatpush1.bf16.xpose.msra.mxu0 0
    %1926 = vmatprep.subr.bf16.mxu0 0
    %1927 = vmatpush1.bf16.xpose.msra.mxu0 0
    %1928 = vmatprep.subr.bf16.mxu0 0
    %1929 = vmatpush1.bf16.xpose.msra.mxu0 0
    %1930 = vmatprep.subr.bf16.mxu0 0
    %1931 = vmatpush1.bf16.xpose.msra.mxu0 0
    %1932 = vmatprep.mubr.bf16.mxu0 0
    %1933 = vmatmul.mubr.bf16.gmra.mrb[0].mxu0 %v1895
    %v1934 = vpop.f32.mrb[0].mxu0
    %v1935 = vadd.f32 0.0, %v1934
    %v1936 = vpop.f32.mrb[0].mxu0
    %v1937 = vpop.f32.mrb[0].mxu0
    %v1938 = vpop.f32.mrb[0].mxu0
    %1939 = vdwg.mxu0
    %1940 = vrot.lane.b32.xlu0 %v1431, 112
    %v1941 = vpop.permute.xlu0 %1940
    %1942 = vrot.lane.b32.xlu0 %v1433, 112
    %v1943 = vpop.permute.xlu0 %1942
    %v1945 = vsel %vm269, %v1941, 0
    %v1948 = vsel %vm269, %v1943, 0
    %1950 = vmatprep.subr.bf16.mxu0 0
    %1951 = vmatpush1.bf16.xpose.msra.mxu0 %v1948
    %1952 = vmatprep.subr.bf16.mxu0 0
    %1953 = vmatpush1.bf16.xpose.msra.mxu0 0
    %1954 = vmatprep.subr.bf16.mxu0 0
    %1955 = vmatpush1.bf16.xpose.msra.mxu0 0
    %1956 = vmatprep.subr.bf16.mxu0 0
    %1957 = vmatpush1.bf16.xpose.msra.mxu0 0
    %1958 = vmatprep.subr.bf16.mxu0 0
    %1959 = vmatpush1.bf16.xpose.msra.mxu0 0
    %1960 = vmatprep.subr.bf16.mxu0 0
    %1961 = vmatpush1.bf16.xpose.msra.mxu0 0
    %1962 = vmatprep.subr.bf16.mxu0 0
    %1963 = vmatpush1.bf16.xpose.msra.mxu0 0
    %1964 = vmatprep.subr.bf16.mxu0 0
    %1965 = vmatpush1.bf16.xpose.msra.mxu0 0
    %1966 = vmatprep.subr.bf16.mxu0 0
    %1967 = vmatpush1.bf16.xpose.msra.mxu0 0
    %1968 = vmatprep.subr.bf16.mxu0 0
    %1969 = vmatpush1.bf16.xpose.msra.mxu0 0
    %1970 = vmatprep.subr.bf16.mxu0 0
    %1971 = vmatpush1.bf16.xpose.msra.mxu0 0
    %1972 = vmatprep.subr.bf16.mxu0 0
    %1973 = vmatpush1.bf16.xpose.msra.mxu0 0
    %1974 = vmatprep.subr.bf16.mxu0 0
    %1975 = vmatpush1.bf16.xpose.msra.mxu0 0
    %1976 = vmatprep.subr.bf16.mxu0 0
    %1977 = vmatpush1.bf16.xpose.msra.mxu0 0
    %1978 = vmatprep.subr.bf16.mxu0 0
    %1979 = vmatpush1.bf16.xpose.msra.mxu0 0
    %1980 = vmatprep.subr.bf16.mxu0 0
    %1981 = vmatpush1.bf16.xpose.msra.mxu0 0
    %1982 = vmatprep.mubr.bf16.mxu0 0
    %1983 = vmatmul.mubr.bf16.gmra.mrb[0].mxu0 %v1945
    %v1984 = vpop.f32.mrb[0].mxu0
    %v1985 = vadd.f32 0.0, %v1984
    %v1986 = vpop.f32.mrb[0].mxu0
    %v1987 = vpop.f32.mrb[0].mxu0
    %v1988 = vpop.f32.mrb[0].mxu0
    %1989 = vdwg.mxu0
    %v1990 = vmul.f32 %v1935, 0.35355338
    %v1991 = vmul.f32 %v1985, 0.35355338
    %v1992 = vsel %vm1538, %v1990, -1e+20
    %v1993 = vsel %vm1539, %v1991, -1e+20
    %v1994 = vsel %vm269, %v1992, -inf
    %1995 = vmax.xlane.f32.xlu0 %v1994
    %v1996 = vpop.xlane.xlu0 %1995
    %v1997 = vsel %vm269, %v1993, -inf
    %1998 = vmax.xlane.f32.xlu0 %v1997
    %v1999 = vpop.xlane.xlu0 %1998
    %v2000 = vsub.f32 %v1992, %v1996
    %v2001 = vsub.f32 %v1993, %v1999
    %v2002 = vmul.f32 %v2000, 1.442695
    %v2003 = vpow.pop %v2002
    %v2004 = vmul.f32 %v2001, 1.442695
    %v2005 = vpow.pop %v2004
    %v2006 = vsel %vm269, %v2003, 0.0
    %2007 = vadd.xlane.f32.xlu0 %v2006
    %v2008 = vpop.xlane.xlu0 %2007
    %v2009 = vsel %vm269, %v2005, 0.0
    %2010 = vadd.xlane.f32.xlu0 %v2009
    %v2011 = vpop.xlane.xlu0 %2010
    %v2012 = vrcp.pop %v2008
    %v2013 = vrcp.pop %v2011
    %v2014 = vmul.f32 %v2003, %v2012
    %v2015 = vmul.f32 %v2005, %v2013
    %v2016 = vpack.c.bf16 %v2014, %v2014
    %v2017 = vpack.c.bf16 %v2015, %v2015
    %2018 = vrot.lane.b32.xlu0 %v1432, 80
    %v2019 = vpop.permute.xlu0 %2018
    %v2021 = vsel %vm269, %v2016, 0
    %v2024 = vsel %vm400, %v2019, 0
    %2026 = vmatprep.subr.bf16.mxu0 0
    %2027 = vmatpush1.bf16.msra.mxu0 %v2024
    %2028 = vmatprep.subr.bf16.mxu0 0
    %2029 = vmatpush1.bf16.msra.mxu0 0
    %2030 = vmatprep.subr.bf16.mxu0 0
    %2031 = vmatpush1.bf16.msra.mxu0 0
    %2032 = vmatprep.subr.bf16.mxu0 0
    %2033 = vmatpush1.bf16.msra.mxu0 0
    %2034 = vmatprep.subr.bf16.mxu0 0
    %2035 = vmatpush1.bf16.msra.mxu0 0
    %2036 = vmatprep.subr.bf16.mxu0 0
    %2037 = vmatpush1.bf16.msra.mxu0 0
    %2038 = vmatprep.subr.bf16.mxu0 0
    %2039 = vmatpush1.bf16.msra.mxu0 0
    %2040 = vmatprep.subr.bf16.mxu0 0
    %2041 = vmatpush1.bf16.msra.mxu0 0
    %2042 = vmatprep.subr.bf16.mxu0 0
    %2043 = vmatpush1.bf16.msra.mxu0 0
    %2044 = vmatprep.subr.bf16.mxu0 0
    %2045 = vmatpush1.bf16.msra.mxu0 0
    %2046 = vmatprep.subr.bf16.mxu0 0
    %2047 = vmatpush1.bf16.msra.mxu0 0
    %2048 = vmatprep.subr.bf16.mxu0 0
    %2049 = vmatpush1.bf16.msra.mxu0 0
    %2050 = vmatprep.subr.bf16.mxu0 0
    %2051 = vmatpush1.bf16.msra.mxu0 0
    %2052 = vmatprep.subr.bf16.mxu0 0
    %2053 = vmatpush1.bf16.msra.mxu0 0
    %2054 = vmatprep.subr.bf16.mxu0 0
    %2055 = vmatpush1.bf16.msra.mxu0 0
    %2056 = vmatprep.subr.bf16.mxu0 0
    %2057 = vmatpush1.bf16.msra.mxu0 0
    %2058 = vmatprep.mubr.bf16.mxu0 0
    %2059 = vmatmul.mubr.bf16.gmra.mrb[0].mxu0 %v2021
    %v2060 = vpop.f32.mrb[0].mxu0
    %v2061 = vadd.f32 0.0, %v2060
    %v2062 = vpop.f32.mrb[0].mxu0
    %v2063 = vpop.f32.mrb[0].mxu0
    %v2064 = vpop.f32.mrb[0].mxu0
    %2065 = vdwg.mxu0
    %2066 = vrot.lane.b32.xlu0 %v1433, 80
    %v2067 = vpop.permute.xlu0 %2066
    %v2069 = vsel %vm269, %v2017, 0
    %v2072 = vsel %vm400, %v2067, 0
    %2074 = vmatprep.subr.bf16.mxu0 0
    %2075 = vmatpush1.bf16.msra.mxu0 %v2072
    %2076 = vmatprep.subr.bf16.mxu0 0
    %2077 = vmatpush1.bf16.msra.mxu0 0
    %2078 = vmatprep.subr.bf16.mxu0 0
    %2079 = vmatpush1.bf16.msra.mxu0 0
    %2080 = vmatprep.subr.bf16.mxu0 0
    %2081 = vmatpush1.bf16.msra.mxu0 0
    %2082 = vmatprep.subr.bf16.mxu0 0
    %2083 = vmatpush1.bf16.msra.mxu0 0
    %2084 = vmatprep.subr.bf16.mxu0 0
    %2085 = vmatpush1.bf16.msra.mxu0 0
    %2086 = vmatprep.subr.bf16.mxu0 0
    %2087 = vmatpush1.bf16.msra.mxu0 0
    %2088 = vmatprep.subr.bf16.mxu0 0
    %2089 = vmatpush1.bf16.msra.mxu0 0
    %2090 = vmatprep.subr.bf16.mxu0 0
    %2091 = vmatpush1.bf16.msra.mxu0 0
    %2092 = vmatprep.subr.bf16.mxu0 0
    %2093 = vmatpush1.bf16.msra.mxu0 0
    %2094 = vmatprep.subr.bf16.mxu0 0
    %2095 = vmatpush1.bf16.msra.mxu0 0
    %2096 = vmatprep.subr.bf16.mxu0 0
    %2097 = vmatpush1.bf16.msra.mxu0 0
    %2098 = vmatprep.subr.bf16.mxu0 0
    %2099 = vmatpush1.bf16.msra.mxu0 0
    %2100 = vmatprep.subr.bf16.mxu0 0
    %2101 = vmatpush1.bf16.msra.mxu0 0
    %2102 = vmatprep.subr.bf16.mxu0 0
    %2103 = vmatpush1.bf16.msra.mxu0 0
    %2104 = vmatprep.subr.bf16.mxu0 0
    %2105 = vmatpush1.bf16.msra.mxu0 0
    %2106 = vmatprep.mubr.bf16.mxu0 0
    %2107 = vmatmul.mubr.bf16.gmra.mrb[0].mxu0 %v2069
    %v2108 = vpop.f32.mrb[0].mxu0
    %v2109 = vadd.f32 0.0, %v2108
    %v2110 = vpop.f32.mrb[0].mxu0
    %v2111 = vpop.f32.mrb[0].mxu0
    %v2112 = vpop.f32.mrb[0].mxu0
    %2113 = vdwg.mxu0
    %2114 = vrot.lane.b32.xlu0 %v1430, 104
    %v2115 = vpop.permute.xlu0 %2114
    %2116 = vrot.lane.b32.xlu0 %v1432, 104
    %v2117 = vpop.permute.xlu0 %2116
    %v2119 = vsel %vm269, %v2115, 0
    %v2122 = vsel %vm269, %v2117, 0
    %2124 = vmatprep.subr.bf16.mxu0 0
    %2125 = vmatpush1.bf16.xpose.msra.mxu0 %v2122
    %2126 = vmatprep.subr.bf16.mxu0 0
    %2127 = vmatpush1.bf16.xpose.msra.mxu0 0
    %2128 = vmatprep.subr.bf16.mxu0 0
    %2129 = vmatpush1.bf16.xpose.msra.mxu0 0
    %2130 = vmatprep.subr.bf16.mxu0 0
    %2131 = vmatpush1.bf16.xpose.msra.mxu0 0
    %2132 = vmatprep.subr.bf16.mxu0 0
    %2133 = vmatpush1.bf16.xpose.msra.mxu0 0
    %2134 = vmatprep.subr.bf16.mxu0 0
    %2135 = vmatpush1.bf16.xpose.msra.mxu0 0
    %2136 = vmatprep.subr.bf16.mxu0 0
    %2137 = vmatpush1.bf16.xpose.msra.mxu0 0
    %2138 = vmatprep.subr.bf16.mxu0 0
    %2139 = vmatpush1.bf16.xpose.msra.mxu0 0
    %2140 = vmatprep.subr.bf16.mxu0 0
    %2141 = vmatpush1.bf16.xpose.msra.mxu0 0
    %2142 = vmatprep.subr.bf16.mxu0 0
    %2143 = vmatpush1.bf16.xpose.msra.mxu0 0
    %2144 = vmatprep.subr.bf16.mxu0 0
    %2145 = vmatpush1.bf16.xpose.msra.mxu0 0
    %2146 = vmatprep.subr.bf16.mxu0 0
    %2147 = vmatpush1.bf16.xpose.msra.mxu0 0
    %2148 = vmatprep.subr.bf16.mxu0 0
    %2149 = vmatpush1.bf16.xpose.msra.mxu0 0
    %2150 = vmatprep.subr.bf16.mxu0 0
    %2151 = vmatpush1.bf16.xpose.msra.mxu0 0
    %2152 = vmatprep.subr.bf16.mxu0 0
    %2153 = vmatpush1.bf16.xpose.msra.mxu0 0
    %2154 = vmatprep.subr.bf16.mxu0 0
    %2155 = vmatpush1.bf16.xpose.msra.mxu0 0
    %2156 = vmatprep.mubr.bf16.mxu0 0
    %2157 = vmatmul.mubr.bf16.gmra.mrb[0].mxu0 %v2119
    %v2158 = vpop.f32.mrb[0].mxu0
    %v2159 = vadd.f32 0.0, %v2158
    %v2160 = vpop.f32.mrb[0].mxu0
    %v2161 = vpop.f32.mrb[0].mxu0
    %v2162 = vpop.f32.mrb[0].mxu0
    %2163 = vdwg.mxu0
    %2164 = vrot.lane.b32.xlu0 %v1431, 104
    %v2165 = vpop.permute.xlu0 %2164
    %2166 = vrot.lane.b32.xlu0 %v1433, 104
    %v2167 = vpop.permute.xlu0 %2166
    %v2169 = vsel %vm269, %v2165, 0
    %v2172 = vsel %vm269, %v2167, 0
    %2174 = vmatprep.subr.bf16.mxu0 0
    %2175 = vmatpush1.bf16.xpose.msra.mxu0 %v2172
    %2176 = vmatprep.subr.bf16.mxu0 0
    %2177 = vmatpush1.bf16.xpose.msra.mxu0 0
    %2178 = vmatprep.subr.bf16.mxu0 0
    %2179 = vmatpush1.bf16.xpose.msra.mxu0 0
    %2180 = vmatprep.subr.bf16.mxu0 0
    %2181 = vmatpush1.bf16.xpose.msra.mxu0 0
    %2182 = vmatprep.subr.bf16.mxu0 0
    %2183 = vmatpush1.bf16.xpose.msra.mxu0 0
    %2184 = vmatprep.subr.bf16.mxu0 0
    %2185 = vmatpush1.bf16.xpose.msra.mxu0 0
    %2186 = vmatprep.subr.bf16.mxu0 0
    %2187 = vmatpush1.bf16.xpose.msra.mxu0 0
    %2188 = vmatprep.subr.bf16.mxu0 0
    %2189 = vmatpush1.bf16.xpose.msra.mxu0 0
    %2190 = vmatprep.subr.bf16.mxu0 0
    %2191 = vmatpush1.bf16.xpose.msra.mxu0 0
    %2192 = vmatprep.subr.bf16.mxu0 0
    %2193 = vmatpush1.bf16.xpose.msra.mxu0 0
    %2194 = vmatprep.subr.bf16.mxu0 0
    %2195 = vmatpush1.bf16.xpose.msra.mxu0 0
    %2196 = vmatprep.subr.bf16.mxu0 0
    %2197 = vmatpush1.bf16.xpose.msra.mxu0 0
    %2198 = vmatprep.subr.bf16.mxu0 0
    %2199 = vmatpush1.bf16.xpose.msra.mxu0 0
    %2200 = vmatprep.subr.bf16.mxu0 0
    %2201 = vmatpush1.bf16.xpose.msra.mxu0 0
    %2202 = vmatprep.subr.bf16.mxu0 0
    %2203 = vmatpush1.bf16.xpose.msra.mxu0 0
    %2204 = vmatprep.subr.bf16.mxu0 0
    %2205 = vmatpush1.bf16.xpose.msra.mxu0 0
    %2206 = vmatprep.mubr.bf16.mxu0 0
    %2207 = vmatmul.mubr.bf16.gmra.mrb[0].mxu0 %v2169
    %v2208 = vpop.f32.mrb[0].mxu0
    %v2209 = vadd.f32 0.0, %v2208
    %v2210 = vpop.f32.mrb[0].mxu0
    %v2211 = vpop.f32.mrb[0].mxu0
    %v2212 = vpop.f32.mrb[0].mxu0
    %2213 = vdwg.mxu0
    %v2214 = vmul.f32 %v2159, 0.35355338
    %v2215 = vmul.f32 %v2209, 0.35355338
    %v2216 = vsel %vm1538, %v2214, -1e+20
    %v2217 = vsel %vm1539, %v2215, -1e+20
    %v2218 = vsel %vm269, %v2216, -inf
    %2219 = vmax.xlane.f32.xlu0 %v2218
    %v2220 = vpop.xlane.xlu0 %2219
    %v2221 = vsel %vm269, %v2217, -inf
    %2222 = vmax.xlane.f32.xlu0 %v2221
    %v2223 = vpop.xlane.xlu0 %2222
    %v2224 = vsub.f32 %v2216, %v2220
    %v2225 = vsub.f32 %v2217, %v2223
    %v2226 = vmul.f32 %v2224, 1.442695
    %v2227 = vpow.pop %v2226
    %v2228 = vmul.f32 %v2225, 1.442695
    %v2229 = vpow.pop %v2228
    %v2230 = vsel %vm269, %v2227, 0.0
    %2231 = vadd.xlane.f32.xlu0 %v2230
    %v2232 = vpop.xlane.xlu0 %2231
    %v2233 = vsel %vm269, %v2229, 0.0
    %2234 = vadd.xlane.f32.xlu0 %v2233
    %v2235 = vpop.xlane.xlu0 %2234
    %v2236 = vrcp.pop %v2232
    %v2237 = vrcp.pop %v2235
    %v2238 = vmul.f32 %v2227, %v2236
    %v2239 = vmul.f32 %v2229, %v2237
    %v2240 = vpack.c.bf16 %v2238, %v2238
    %v2241 = vpack.c.bf16 %v2239, %v2239
    %2242 = vrot.lane.b32.xlu0 %v1432, 72
    %v2243 = vpop.permute.xlu0 %2242
    %v2245 = vsel %vm269, %v2240, 0
    %v2248 = vsel %vm400, %v2243, 0
    %2250 = vmatprep.subr.bf16.mxu0 0
    %2251 = vmatpush1.bf16.msra.mxu0 %v2248
    %2252 = vmatprep.subr.bf16.mxu0 0
    %2253 = vmatpush1.bf16.msra.mxu0 0
    %2254 = vmatprep.subr.bf16.mxu0 0
    %2255 = vmatpush1.bf16.msra.mxu0 0
    %2256 = vmatprep.subr.bf16.mxu0 0
    %2257 = vmatpush1.bf16.msra.mxu0 0
    %2258 = vmatprep.subr.bf16.mxu0 0
    %2259 = vmatpush1.bf16.msra.mxu0 0
    %2260 = vmatprep.subr.bf16.mxu0 0
    %2261 = vmatpush1.bf16.msra.mxu0 0
    %2262 = vmatprep.subr.bf16.mxu0 0
    %2263 = vmatpush1.bf16.msra.mxu0 0
    %2264 = vmatprep.subr.bf16.mxu0 0
    %2265 = vmatpush1.bf16.msra.mxu0 0
    %2266 = vmatprep.subr.bf16.mxu0 0
    %2267 = vmatpush1.bf16.msra.mxu0 0
    %2268 = vmatprep.subr.bf16.mxu0 0
    %2269 = vmatpush1.bf16.msra.mxu0 0
    %2270 = vmatprep.subr.bf16.mxu0 0
    %2271 = vmatpush1.bf16.msra.mxu0 0
    %2272 = vmatprep.subr.bf16.mxu0 0
    %2273 = vmatpush1.bf16.msra.mxu0 0
    %2274 = vmatprep.subr.bf16.mxu0 0
    %2275 = vmatpush1.bf16.msra.mxu0 0
    %2276 = vmatprep.subr.bf16.mxu0 0
    %2277 = vmatpush1.bf16.msra.mxu0 0
    %2278 = vmatprep.subr.bf16.mxu0 0
    %2279 = vmatpush1.bf16.msra.mxu0 0
    %2280 = vmatprep.subr.bf16.mxu0 0
    %2281 = vmatpush1.bf16.msra.mxu0 0
    %2282 = vmatprep.mubr.bf16.mxu0 0
    %2283 = vmatmul.mubr.bf16.gmra.mrb[0].mxu0 %v2245
    %v2284 = vpop.f32.mrb[0].mxu0
    %v2285 = vadd.f32 0.0, %v2284
    %v2286 = vpop.f32.mrb[0].mxu0
    %v2287 = vpop.f32.mrb[0].mxu0
    %v2288 = vpop.f32.mrb[0].mxu0
    %2289 = vdwg.mxu0
    %2290 = vrot.lane.b32.xlu0 %v1433, 72
    %v2291 = vpop.permute.xlu0 %2290
    %v2293 = vsel %vm269, %v2241, 0
    %v2296 = vsel %vm400, %v2291, 0
    %2298 = vmatprep.subr.bf16.mxu0 0
    %2299 = vmatpush1.bf16.msra.mxu0 %v2296
    %2300 = vmatprep.subr.bf16.mxu0 0
    %2301 = vmatpush1.bf16.msra.mxu0 0
    %2302 = vmatprep.subr.bf16.mxu0 0
    %2303 = vmatpush1.bf16.msra.mxu0 0
    %2304 = vmatprep.subr.bf16.mxu0 0
    %2305 = vmatpush1.bf16.msra.mxu0 0
    %2306 = vmatprep.subr.bf16.mxu0 0
    %2307 = vmatpush1.bf16.msra.mxu0 0
    %2308 = vmatprep.subr.bf16.mxu0 0
    %2309 = vmatpush1.bf16.msra.mxu0 0
    %2310 = vmatprep.subr.bf16.mxu0 0
    %2311 = vmatpush1.bf16.msra.mxu0 0
    %2312 = vmatprep.subr.bf16.mxu0 0
    %2313 = vmatpush1.bf16.msra.mxu0 0
    %2314 = vmatprep.subr.bf16.mxu0 0
    %2315 = vmatpush1.bf16.msra.mxu0 0
    %2316 = vmatprep.subr.bf16.mxu0 0
    %2317 = vmatpush1.bf16.msra.mxu0 0
    %2318 = vmatprep.subr.bf16.mxu0 0
    %2319 = vmatpush1.bf16.msra.mxu0 0
    %2320 = vmatprep.subr.bf16.mxu0 0
    %2321 = vmatpush1.bf16.msra.mxu0 0
    %2322 = vmatprep.subr.bf16.mxu0 0
    %2323 = vmatpush1.bf16.msra.mxu0 0
    %2324 = vmatprep.subr.bf16.mxu0 0
    %2325 = vmatpush1.bf16.msra.mxu0 0
    %2326 = vmatprep.subr.bf16.mxu0 0
    %2327 = vmatpush1.bf16.msra.mxu0 0
    %2328 = vmatprep.subr.bf16.mxu0 0
    %2329 = vmatpush1.bf16.msra.mxu0 0
    %2330 = vmatprep.mubr.bf16.mxu0 0
    %2331 = vmatmul.mubr.bf16.gmra.mrb[0].mxu0 %v2293
    %v2332 = vpop.f32.mrb[0].mxu0
    %v2333 = vadd.f32 0.0, %v2332
    %v2334 = vpop.f32.mrb[0].mxu0
    %v2335 = vpop.f32.mrb[0].mxu0
    %v2336 = vpop.f32.mrb[0].mxu0
    %2337 = vdwg.mxu0
    %2340 = vrot.lane.b32.xlu0 %v1837, 8
    %v2341 = vpop.permute.xlu0 %2340
    %2342 = vrot.lane.b32.xlu0 %v1885, 8
    %v2343 = vpop.permute.xlu0 %2342
    %2348 = vrot.lane.b32.xlu0 %v2061, 16
    %v2349 = vpop.permute.xlu0 %2348
    %2350 = vrot.lane.b32.xlu0 %v2109, 16
    %v2351 = vpop.permute.xlu0 %2350
    %2356 = vrot.lane.b32.xlu0 %v2285, 24
    %v2357 = vpop.permute.xlu0 %2356
    %2358 = vrot.lane.b32.xlu0 %v2333, 24
    %v2359 = vpop.permute.xlu0 %2358
    %v2362 = vsel %vm269, %v1610, %v2341
    %v2363 = vsel %vm269, %v1659, %v2343
    %v2364 = vsel %vm1190, %v2362, %v2349
    %v2365 = vsel %vm1190, %v2363, %v2351
    %v2366 = vsel %vm1193, %v2364, %v2357
    %v2367 = vsel %vm1193, %v2365, %v2359
    %v2368 = vld [vmem:[#allocation7] sm:$0xf]
    %v2369 = vld [vmem:[#allocation7 + $0x4] sm:$0xf]
    %v2370 = vld [vmem:[#allocation7 + $0x8] sm:$0xf]
    %v2371 = vld [vmem:[#allocation7 + $0xc] sm:$0xf]
    %v2372 = vpack.c.bf16 %v2367, %v2366
    %v2373 = vld [vmem:[#allocation8] sm:$0x1]
    %v2375 = vlaneseq
    %v2376 = vshrl.u32 %v2375, 7
    %v2377 = vsub.s32 0, %v2376
    %v2378 = vrot.slane %v2373, %v2377
    %v2384 = vunpack.c.l.b16 %v2368
    %v2385 = vunpack.c.l.b16 %v2369
    %v2386 = vunpack.c.l.b16 %v2370
    %v2387 = vunpack.c.l.b16 %v2371
    %v2388 = vpack.c.b16 %v2385, %v2384
    %v2389 = vpack.c.b16 %v2387, %v2386
    %v2393 = vsel %vm152, %v2372, 0
    %2395 = vmatprep.subr.bf16.mxu0 0
    %2396 = vmatpush1.bf16.msra.mxu0 %v2388
    %2397 = vmatprep.subr.bf16.mxu0 0
    %2398 = vmatpush1.bf16.msra.mxu0 %v2389
    %2399 = vmatprep.subr.bf16.mxu0 0
    %2400 = vmatpush1.bf16.msra.mxu0 0
    %2401 = vmatprep.subr.bf16.mxu0 0
    %2402 = vmatpush1.bf16.msra.mxu0 0
    %2403 = vmatprep.subr.bf16.mxu0 0
    %2404 = vmatpush1.bf16.msra.mxu0 0
    %2405 = vmatprep.subr.bf16.mxu0 0
    %2406 = vmatpush1.bf16.msra.mxu0 0
    %2407 = vmatprep.subr.bf16.mxu0 0
    %2408 = vmatpush1.bf16.msra.mxu0 0
    %2409 = vmatprep.subr.bf16.mxu0 0
    %2410 = vmatpush1.bf16.msra.mxu0 0
    %2411 = vmatprep.subr.bf16.mxu0 0
    %2412 = vmatpush1.bf16.msra.mxu0 0
    %2413 = vmatprep.subr.bf16.mxu0 0
    %2414 = vmatpush1.bf16.msra.mxu0 0
    %2415 = vmatprep.subr.bf16.mxu0 0
    %2416 = vmatpush1.bf16.msra.mxu0 0
    %2417 = vmatprep.subr.bf16.mxu0 0
    %2418 = vmatpush1.bf16.msra.mxu0 0
    %2419 = vmatprep.subr.bf16.mxu0 0
    %2420 = vmatpush1.bf16.msra.mxu0 0
    %2421 = vmatprep.subr.bf16.mxu0 0
    %2422 = vmatpush1.bf16.msra.mxu0 0
    %2423 = vmatprep.subr.bf16.mxu0 0
    %2424 = vmatpush1.bf16.msra.mxu0 0
    %2425 = vmatprep.subr.bf16.mxu0 0
    %2426 = vmatpush1.bf16.msra.mxu0 0
    %2427 = vmatprep.mubr.bf16.mxu0 0
    %2428 = vmatmul.mubr.bf16.gmra.mrb[0].mxu0 %v2393
    %v2429 = vpop.f32.mrb[0].mxu0
    %v2430 = vadd.f32 %v2378, %v2429
    %v2431 = vpop.f32.mrb[0].mxu0
    %v2432 = vpop.f32.mrb[0].mxu0
    %v2433 = vadd.f32 %v2378, %v2432
    %v2434 = vpop.f32.mrb[0].mxu0
    %2435 = vdwg.mxu0
    %v2436 = vadd.f32 %v1264, %v2430
    %v2437 = vadd.f32 %v1265, %v2433
    %v2438 = vsel %vm152, %v2436, 0.0
    %2439 = vadd.xlane.f32.xlu0 %v2438
    %v2440 = vpop.xlane.xlu0 %2439
    %v2441 = vsel %vm152, %v2437, 0.0
    %2442 = vadd.xlane.f32.xlu0 %v2441
    %v2443 = vpop.xlane.xlu0 %2442
    %v2444 = vmul.f32 %v2440, %v159
    %v2445 = vmul.f32 %v2443, %v159
    %v2446 = vsub.f32 %v2436, %v2444
    %v2447 = vsub.f32 %v2437, %v2445
    %v2448 = vmul.f32 %v2446, %v2446
    %v2449 = vmul.f32 %v2447, %v2447
    %v2450 = vsel %vm152, %v2448, 0.0
    %2451 = vadd.xlane.f32.xlu0 %v2450
    %v2452 = vpop.xlane.xlu0 %2451
    %v2453 = vsel %vm152, %v2449, 0.0
    %2454 = vadd.xlane.f32.xlu0 %v2453
    %v2455 = vpop.xlane.xlu0 %2454
    %v2456 = vmul.f32 %v2452, 0.032258064
    %v2457 = vmul.f32 %v2455, 0.032258064
    %v2458 = vrsqrt.pop %v2456
    %v2459 = vmul.f32 %v2456, %v2458
    %vm2460 = vcmp.eq.f32.partialorder %v2456, inf
    %v2461 = vsel %vm2460, %v2456, %v2459
    %vm2462 = vcmp.eq.f32.partialorder %v2456, 0.0
    %v2463 = vand.u32 %v2456, 2147483648
    %v2464 = vsel %vm2462, %v2463, %v2461
    %v2465 = vrsqrt.pop %v2457
    %v2466 = vmul.f32 %v2457, %v2465
    %vm2467 = vcmp.eq.f32.partialorder %v2457, inf
    %v2468 = vsel %vm2467, %v2457, %v2466
    %vm2469 = vcmp.eq.f32.partialorder %v2457, 0.0
    %v2470 = vand.u32 %v2457, 2147483648
    %v2471 = vsel %vm2469, %v2470, %v2468
    %v2472 = vadd.f32 %v2464, 1e-06
    %v2473 = vadd.f32 %v2471, 1e-06
    %v2474 = vrcp.pop %v2472
    %v2475 = vrcp.pop %v2473
    %v2476 = vmul.f32 %v2446, %v2474
    %v2477 = vmul.f32 %v2447, %v2475
    %v2478 = vadd.f32 %v2476, 0.0
    %v2479 = vadd.f32 %v2477, 0.0
    %v2480 = vpack.c.bf16 %v2479, %v2478
    %v2481 = vld [vmem:[#allocation10] sm:$0xf]
    %v2482 = vld [vmem:[#allocation10 + $0x4] sm:$0xf]
    %v2483 = vld [vmem:[#allocation10 + $0x8] sm:$0xf]
    %v2484 = vld [vmem:[#allocation10 + $0xc] sm:$0xf]
    %v2485 = vld [vmem:[#allocation11] sm:$0x1]
    %v2487 = vlaneseq
    %v2488 = vshrl.u32 %v2487, 7
    %v2489 = vsub.s32 0, %v2488
    %v2490 = vrot.slane %v2485, %v2489
    %v2496 = vunpack.c.l.b16 %v2481
    %v2497 = vunpack.c.l.b16 %v2482
    %v2498 = vunpack.c.l.b16 %v2483
    %v2499 = vunpack.c.l.b16 %v2484
    %v2500 = vpack.c.b16 %v2497, %v2496
    %v2501 = vpack.c.b16 %v2499, %v2498
    %v2505 = vsel %vm152, %v2480, 0
    %2507 = vmatprep.subr.bf16.mxu0 0
    %2508 = vmatpush1.bf16.msra.mxu0 %v2500
    %2509 = vmatprep.subr.bf16.mxu0 0
    %2510 = vmatpush1.bf16.msra.mxu0 %v2501
    %2511 = vmatprep.subr.bf16.mxu0 0
    %2512 = vmatpush1.bf16.msra.mxu0 0
    %2513 = vmatprep.subr.bf16.mxu0 0
    %2514 = vmatpush1.bf16.msra.mxu0 0
    %2515 = vmatprep.subr.bf16.mxu0 0
    %2516 = vmatpush1.bf16.msra.mxu0 0
    %2517 = vmatprep.subr.bf16.mxu0 0
    %2518 = vmatpush1.bf16.msra.mxu0 0
    %2519 = vmatprep.subr.bf16.mxu0 0
    %2520 = vmatpush1.bf16.msra.mxu0 0
    %2521 = vmatprep.subr.bf16.mxu0 0
    %2522 = vmatpush1.bf16.msra.mxu0 0
    %2523 = vmatprep.subr.bf16.mxu0 0
    %2524 = vmatpush1.bf16.msra.mxu0 0
    %2525 = vmatprep.subr.bf16.mxu0 0
    %2526 = vmatpush1.bf16.msra.mxu0 0
    %2527 = vmatprep.subr.bf16.mxu0 0
    %2528 = vmatpush1.bf16.msra.mxu0 0
    %2529 = vmatprep.subr.bf16.mxu0 0
    %2530 = vmatpush1.bf16.msra.mxu0 0
    %2531 = vmatprep.subr.bf16.mxu0 0
    %2532 = vmatpush1.bf16.msra.mxu0 0
    %2533 = vmatprep.subr.bf16.mxu0 0
    %2534 = vmatpush1.bf16.msra.mxu0 0
    %2535 = vmatprep.subr.bf16.mxu0 0
    %2536 = vmatpush1.bf16.msra.mxu0 0
    %2537 = vmatprep.subr.bf16.mxu0 0
    %2538 = vmatpush1.bf16.msra.mxu0 0
    %2539 = vmatprep.mubr.bf16.mxu0 0
    %2540 = vmatmul.mubr.bf16.gmra.mrb[0].mxu0 %v2505
    %v2541 = vpop.f32.mrb[0].mxu0
    %v2542 = vadd.f32 %v2490, %v2541
    %v2543 = vpop.f32.mrb[0].mxu0
    %v2544 = vpop.f32.mrb[0].mxu0
    %v2545 = vadd.f32 %v2490, %v2544
    %v2546 = vpop.f32.mrb[0].mxu0
    %2547 = vdwg.mxu0
    %v2548 = vmul.f32 %v2542, %v2542
    %v2549 = vmul.f32 %v2545, %v2545
    %v2550 = vmul.f32 %v2542, %v2548
    %v2551 = vmul.f32 %v2545, %v2549
    %v2552 = vmul.f32 %v2550, 0.044715
    %v2553 = vmul.f32 %v2551, 0.044715
    %v2554 = vadd.f32 %v2542, %v2552
    %v2555 = vadd.f32 %v2545, %v2553
    %v2556 = vmul.f32 %v2554, 0.7978846
    %v2557 = vmul.f32 %v2555, 0.7978846
    %v2558 = vtanh.pop %v2556
    %v2559 = vtanh.pop %v2557
    %v2560 = vadd.f32 %v2558, 1.0
    %v2561 = vadd.f32 %v2559, 1.0
    %v2562 = vmul.f32 %v2560, 0.5
    %v2563 = vmul.f32 %v2561, 0.5
    %v2564 = vmul.f32 %v2542, %v2562
    %v2565 = vmul.f32 %v2545, %v2563
    %v2566 = vpack.c.bf16 %v2565, %v2564
    %v2567 = vld [vmem:[%s13] sm:$0xf]
    %v2568 = vld [vmem:[%s13 + $0x4] sm:$0xf]
    %v2569 = vld [vmem:[%s13 + $0x8] sm:$0xf]
    %v2570 = vld [vmem:[%s13 + $0xc] sm:$0xf]
    %v2571 = vld [vmem:[%s13 + $0x10] sm:$0xf]
    %v2572 = vld [vmem:[%s13 + $0x14] sm:$0xf]
    %v2573 = vld [vmem:[%s13 + $0x18] sm:$0xf]
    %v2574 = vld [vmem:[%s13 + $0x1c] sm:$0xf]
    %v2583 = vunpack.c.l.b16 %v2567
    %v2584 = vunpack.c.l.b16 %v2568
    %v2585 = vunpack.c.l.b16 %v2569
    %v2586 = vunpack.c.l.b16 %v2570
    %v2587 = vunpack.c.l.b16 %v2571
    %v2588 = vunpack.c.l.b16 %v2572
    %v2589 = vunpack.c.l.b16 %v2573
    %v2590 = vunpack.c.l.b16 %v2574
    %v2591 = vpack.c.b16 %v2584, %v2583
    %v2592 = vpack.c.b16 %v2586, %v2585
    %v2593 = vpack.c.b16 %v2588, %v2587
    %v2594 = vpack.c.b16 %v2590, %v2589
    %vm2599 = vcmask 523264
    %v2601 = vsel %vm2599, %v2566, 0
    %2603 = vmatprep.subr.bf16.mxu0 0
    %2604 = vmatpush1.bf16.msra.mxu0 %v2591
    %2605 = vmatprep.subr.bf16.mxu0 0
    %2606 = vmatpush1.bf16.msra.mxu0 %v2592
    %2607 = vmatprep.subr.bf16.mxu0 0
    %2608 = vmatpush1.bf16.msra.mxu0 %v2593
    %2609 = vmatprep.subr.bf16.mxu0 0
    %2610 = vmatpush1.bf16.msra.mxu0 %v2594
    %2611 = vmatprep.subr.bf16.mxu0 0
    %2612 = vmatpush1.bf16.msra.mxu0 0
    %2613 = vmatprep.subr.bf16.mxu0 0
    %2614 = vmatpush1.bf16.msra.mxu0 0
    %2615 = vmatprep.subr.bf16.mxu0 0
    %2616 = vmatpush1.bf16.msra.mxu0 0
    %2617 = vmatprep.subr.bf16.mxu0 0
    %2618 = vmatpush1.bf16.msra.mxu0 0
    %2619 = vmatprep.subr.bf16.mxu0 0
    %2620 = vmatpush1.bf16.msra.mxu0 0
    %2621 = vmatprep.subr.bf16.mxu0 0
    %2622 = vmatpush1.bf16.msra.mxu0 0
    %2623 = vmatprep.subr.bf16.mxu0 0
    %2624 = vmatpush1.bf16.msra.mxu0 0
    %2625 = vmatprep.subr.bf16.mxu0 0
    %2626 = vmatpush1.bf16.msra.mxu0 0
    %2627 = vmatprep.subr.bf16.mxu0 0
    %2628 = vmatpush1.bf16.msra.mxu0 0
    %2629 = vmatprep.subr.bf16.mxu0 0
    %2630 = vmatpush1.bf16.msra.mxu0 0
    %2631 = vmatprep.subr.bf16.mxu0 0
    %2632 = vmatpush1.bf16.msra.mxu0 0
    %2633 = vmatprep.subr.bf16.mxu0 0
    %2634 = vmatpush1.bf16.msra.mxu0 0
    %2635 = vmatprep.mubr.bf16.mxu0 0
    %2636 = vmatmul.mubr.bf16.gmra.mrb[0].mxu0 %v2601
    %v2637 = vpop.f32.mrb[0].mxu0
    %v2638 = vadd.f32 0.0, %v2637
    %v2639 = vpop.f32.mrb[0].mxu0
    %v2640 = vpop.f32.mrb[0].mxu0
    %v2641 = vadd.f32 0.0, %v2640
    %v2642 = vpop.f32.mrb[0].mxu0
    %2643 = vdwg.mxu0
    %v2644 = vadd.f32 %v2436, %v2638
    %v2645 = vadd.f32 %v2437, %v2641
    %v2646 = vld [vmem:[#allocation13] sm:$0x1]
    %v2648 = vlaneseq
    %v2649 = vshrl.u32 %v2648, 7
    %v2650 = vsub.s32 0, %v2649
    %v2651 = vrot.slane %v2646, %v2650
    %v2653 = vadd.f32 %v2644, %v2651
    %v2654 = vadd.f32 %v2645, %v2651
    %2655 = vst.msk [vmem:[#allocation14] sm:$0xff] %vm152, %v2653
    %2656 = vst.msk [vmem:[#allocation14 + $0x8] sm:$0xff] %vm152, %v2654
    // Predicated region
    $region90: #{decoder_block.1} parent=1 // pred_check
      _
    $region91: #{decoder_block.1} parent=1 // pred_check_branch
      %2658 = sbr.rel (0) target = $region93
    $region92: #{decoder_block.1} parent=1 // pred_region
      %s2660 = ssub.s32 256, 256
      %2661 = vsyncadd [#allocation4], %s2660
      %s2662 = sshll.u32 [#allocation14], 4
      %s2663 = int_to_ptr.vmem [resolvable:$true] %s2662
      %2668 = dma.vmem_to_hbm [thread:$0]  %s2663, 256, %s15, [#allocation4], 128, 128, 8
    $region93: #{decoder_block.1} parent=1 // pred_fallthru
      _
    // Predicated region
    $region94: #{decoder_block.1} parent=1 // pred_check
      _
    $region95: #{decoder_block.1} parent=1 // pred_check_branch
      %2670 = sbr.rel (0) target = $region97
    $region96: #{decoder_block.1} parent=1 // pred_region
      %2671 = dma.done [#allocation4], 256
    $region97: #{decoder_block.1} parent=1 // pred_fallthru
      _
    %2672 = vsyncpa [#allocation3], 1
    %2673 = vsyncpa [#allocation6], 1
    %2674 = vsyncpa [#allocation9], 1
    %2675 = vsyncpa [#allocation12], 1
    %2676 = vsyncpa [#allocation4], 1

// kernel: decoder_block.1
$region0: #{decoder_block.1}
  #allocation0 [shape = 'u32[]', space=smem, size = 0x4, offset = 0x4, fixed_abs, tag = 'smem constant byte address 0x4 - core index']
  #allocation1 [shape = 'u32[144,128]{1,0:T(1,128)}', space=vmem, size = 0x12000, scoped, tag = 'internal scratch']
  %s0 = inlined_call_operand.vmem [shape: f32[2,8,32], index: 0, kind: input, shape index: {}]
  %s1 = inlined_call_operand.vmem [shape: f32[2,8,32], index: 1, kind: input, shape index: {}]
  %s2 = inlined_call_operand.vmem [shape: f32[2,1,1,8], index: 2, kind: input, shape index: {}]
  %s3 = inlined_call_operand.vmem [shape: bf16[32,96], index: 3, kind: input, shape index: {}]
  %s4 = inlined_call_operand.vmem [shape: f32[1,96], index: 4, kind: input, shape index: {}]
  %s5 = inlined_call_operand.vmem [shape: bf16[32,32], index: 5, kind: input, shape index: {}]
  %s6 = inlined_call_operand.vmem [shape: f32[1,32], index: 6, kind: input, shape index: {}]
  %s7 = inlined_call_operand.hbm [shape: bf16[32,96], index: 7, kind: input, shape index: {}]
  %s8 = inlined_call_operand.hbm [shape: f32[1,96], index: 8, kind: input, shape index: {}]
  %s9 = inlined_call_operand.hbm [shape: bf16[32,32], index: 9, kind: input, shape index: {}]
  %s10 = inlined_call_operand.hbm [shape: f32[1,32], index: 10, kind: input, shape index: {}]
  %s11 = inlined_call_operand.hbm [shape: bf16[32,64], index: 11, kind: input, shape index: {}]
  %s12 = inlined_call_operand.hbm [shape: f32[1,64], index: 12, kind: input, shape index: {}]
  %s13 = inlined_call_operand.vmem [shape: bf16[64,32], index: 13, kind: input, shape index: {}]
  %s14 = inlined_call_operand.hbm [shape: f32[1,32], index: 14, kind: input, shape index: {}]
  %s15 = inlined_call_operand.hbm [shape: f32[2,8,32], index: 15, kind: output, shape index: {}]
  %s16 = sld [smem:[#allocation0]]
  $region98: #{decoder_block.1} parent=0
    _
  %s18 = ssub.s32 1, %s16
  %s19 = scalar_select 0, %s18, %s16
  $region1: #{decoder_block.1} parent=0
    #allocation2 [shape = 'u8[8192]{0}', space=vmem, size = 0x2000, scoped, tag = 'input window, operand 7, single buffered']
    #allocation3 [shape = 's32[1]{0}', space=sflag, size = 0x4, scoped, tag = 'scoped memory for decoder_block.1']
    #allocation4 [shape = 's32[1]{0}', space=sflag, size = 0x4, scoped, tag = 'scoped memory for decoder_block.1']
    #allocation5 [shape = 'u8[512]{0}', space=vmem, size = 0x400, scoped, tag = 'input window, operand 8, single buffered']
    #allocation6 [shape = 's32[1]{0}', space=sflag, size = 0x4, scoped, tag = 'scoped memory for decoder_block.1']
    #allocation7 [shape = 'u8[8192]{0}', space=vmem, size = 0x2000, scoped, tag = 'input window, operand 9, single buffered']
    #allocation8 [shape = 'u8[512]{0}', space=vmem, size = 0x400, scoped, tag = 'input window, operand 10, single buffered']
    #allocation9 [shape = 's32[1]{0}', space=sflag, size = 0x4, scoped, tag = 'scoped memory for decoder_block.1']
    #allocation10 [shape = 'u8[8192]{0}', space=vmem, size = 0x2000, scoped, tag = 'input window, operand 11, single buffered']
    #allocation11 [shape = 'u8[512]{0}', space=vmem, size = 0x400, scoped, tag = 'input window, operand 12, single buffered']
    #allocation12 [shape = 's32[1]{0}', space=sflag, size = 0x4, scoped, tag = 'scoped memory for decoder_block.1']
    #allocation13 [shape = 'u8[512]{0}', space=vmem, size = 0x400, scoped, tag = 'input window, operand 14, single buffered']
    #allocation14 [shape = 'u8[8192]{0}', space=vmem, size = 0x2000, scoped, tag = 'output window, operand 0, single buffered']
    %20 = vsyncpa [#allocation3], 0
    %21 = vsyncpa [#allocation6], 0
    %22 = vsyncpa [#allocation9], 0
    %23 = vsyncpa [#allocation12], 0
    %24 = vsyncpa [#allocation4], 0
    // Predicated region
    $region2: #{decoder_block.1} parent=1 // pred_check
      _
    $region3: #{decoder_block.1} parent=1 // pred_check_branch
      %26 = sbr.rel (0) target = $region5
    $region4: #{decoder_block.1} parent=1 // pred_region
      _
    $region5: #{decoder_block.1} parent=1 // pred_fallthru
      _
    // Predicated region
    $region6: #{decoder_block.1} parent=1 // pred_check
      _
    $region7: #{decoder_block.1} parent=1 // pred_check_branch
      %28 = sbr.rel (0) target = $region9
    $region8: #{decoder_block.1} parent=1 // pred_region
      _
    $region9: #{decoder_block.1} parent=1 // pred_fallthru
      _
    // Predicated region
    $region10: #{decoder_block.1} parent=1 // pred_check
      _
    $region11: #{decoder_block.1} parent=1 // pred_check_branch
      %30 = sbr.rel (0) target = $region13
    $region12: #{decoder_block.1} parent=1 // pred_region
      _
    $region13: #{decoder_block.1} parent=1 // pred_fallthru
      _
    // Predicated region
    $region14: #{decoder_block.1} parent=1 // pred_check
      _
    $region15: #{decoder_block.1} parent=1 // pred_check_branch
      %32 = sbr.rel (0) target = $region17
    $region16: #{decoder_block.1} parent=1 // pred_region
      _
    $region17: #{decoder_block.1} parent=1 // pred_fallthru
      _
    // Predicated region
    $region18: #{decoder_block.1} parent=1 // pred_check
      _
    $region19: #{decoder_block.1} parent=1 // pred_check_branch
      %34 = sbr.rel (0) target = $region21
    $region20: #{decoder_block.1} parent=1 // pred_region
      _
    $region21: #{decoder_block.1} parent=1 // pred_fallthru
      _
    // Predicated region
    $region22: #{decoder_block.1} parent=1 // pred_check
      _
    $region23: #{decoder_block.1} parent=1 // pred_check_branch
      %36 = sbr.rel (0) target = $region25
    $region24: #{decoder_block.1} parent=1 // pred_region
      _
    $region25: #{decoder_block.1} parent=1 // pred_fallthru
      _
    // Predicated region
    $region26: #{decoder_block.1} parent=1 // pred_check
      _
    $region27: #{decoder_block.1} parent=1 // pred_check_branch
      %38 = sbr.rel (0) target = $region29
    $region28: #{decoder_block.1} parent=1 // pred_region
      _
    $region29: #{decoder_block.1} parent=1 // pred_fallthru
      _
    // Predicated region
    $region30: #{decoder_block.1} parent=1 // pred_check
      _
    $region31: #{decoder_block.1} parent=1 // pred_check_branch
      %40 = sbr.rel (0) target = $region33
    $region32: #{decoder_block.1} parent=1 // pred_region
      %s42 = ssub.s32 256, 256
      %43 = vsyncadd [#allocation3], %s42
      %s44 = sshll.u32 [#allocation2], 4
      %s45 = int_to_ptr.vmem [resolvable:$true] %s44
      %50 = dma.hbm_to_vmem [thread:$0]  %s7, 256, %s45, [#allocation3], 64, 64, 4
    $region33: #{decoder_block.1} parent=1 // pred_fallthru
      _
    // Predicated region
    $region34: #{decoder_block.1} parent=1 // pred_check
      _
    $region35: #{decoder_block.1} parent=1 // pred_check_branch
      %52 = sbr.rel (0) target = $region37
    $region36: #{decoder_block.1} parent=1 // pred_region
      %s54 = ssub.s32 16, 16
      %55 = vsyncadd [#allocation6], %s54
      %s57 = sshll.u32 [#allocation5], 4
      %s58 = int_to_ptr.vmem [resolvable:$true] %s57
      %60 = dma.hbm_to_vmem [thread:$0]  %s8, 16, %s58, [#allocation6]
    $region37: #{decoder_block.1} parent=1 // pred_fallthru
      _
    // Predicated region
    $region38: #{decoder_block.1} parent=1 // pred_check
      _
    $region39: #{decoder_block.1} parent=1 // pred_check_branch
      %62 = sbr.rel (0) target = $region41
    $region40: #{decoder_block.1} parent=1 // pred_region
      %s64 = ssub.s32 256, 256
      %65 = vsyncadd [#allocation6], %s64
      %s66 = sshll.u32 [#allocation7], 4
      %s67 = int_to_ptr.vmem [resolvable:$true] %s66
      %72 = dma.hbm_to_vmem [thread:$0]  %s9, 256, %s67, [#allocation6], 64, 64, 4
    $region41: #{decoder_block.1} parent=1 // pred_fallthru
      _
    // Predicated region
    $region42: #{decoder_block.1} parent=1 // pred_check
      _
    $region43: #{decoder_block.1} parent=1 // pred_check_branch
      %74 = sbr.rel (0) target = $region45
    $region44: #{decoder_block.1} parent=1 // pred_region
      %s76 = ssub.s32 16, 16
      %77 = vsyncadd [#allocation9], %s76
      %s79 = sshll.u32 [#allocation8], 4
      %s80 = int_to_ptr.vmem [resolvable:$true] %s79
      %82 = dma.hbm_to_vmem [thread:$0]  %s10, 16, %s80, [#allocation9]
    $region45: #{decoder_block.1} parent=1 // pred_fallthru
      _
    // Predicated region
    $region46: #{decoder_block.1} parent=1 // pred_check
      _
    $region47: #{decoder_block.1} parent=1 // pred_check_branch
      %84 = sbr.rel (0) target = $region49
    $region48: #{decoder_block.1} parent=1 // pred_region
      %s86 = ssub.s32 256, 256
      %87 = vsyncadd [#allocation9], %s86
      %s88 = sshll.u32 [#allocation10], 4
      %s89 = int_to_ptr.vmem [resolvable:$true] %s88
      %94 = dma.hbm_to_vmem [thread:$0]  %s11, 256, %s89, [#allocation9], 64, 64, 4
    $region49: #{decoder_block.1} parent=1 // pred_fallthru
      _
    // Predicated region
    $region50: #{decoder_block.1} parent=1 // pred_check
      _
    $region51: #{decoder_block.1} parent=1 // pred_check_branch
      %96 = sbr.rel (0) target = $region53
    $region52: #{decoder_block.1} parent=1 // pred_region
      %s98 = ssub.s32 16, 16
      %99 = vsyncadd [#allocation12], %s98
      %s101 = sshll.u32 [#allocation11], 4
      %s102 = int_to_ptr.vmem [resolvable:$true] %s101
      %104 = dma.hbm_to_vmem [thread:$0]  %s12, 16, %s102, [#allocation12]
    $region53: #{decoder_block.1} parent=1 // pred_fallthru
      _
    // Predicated region
    $region54: #{decoder_block.1} parent=1 // pred_check
      _
    $region55: #{decoder_block.1} parent=1 // pred_check_branch
      %106 = sbr.rel (0) target = $region57
    $region56: #{decoder_block.1} parent=1 // pred_region
      _
    $region57: #{decoder_block.1} parent=1 // pred_fallthru
      _
    // Predicated region
    $region58: #{decoder_block.1} parent=1 // pred_check
      _
    $region59: #{decoder_block.1} parent=1 // pred_check_branch
      %108 = sbr.rel (0) target = $region61
    $region60: #{decoder_block.1} parent=1 // pred_region
      %s110 = ssub.s32 16, 16
      %111 = vsyncadd [#allocation12], %s110
      %s113 = sshll.u32 [#allocation13], 4
      %s114 = int_to_ptr.vmem [resolvable:$true] %s113
      %116 = dma.hbm_to_vmem [thread:$0]  %s14, 16, %s114, [#allocation12]
    $region61: #{decoder_block.1} parent=1 // pred_fallthru
      _
    // Predicated region
    $region62: #{decoder_block.1} parent=1 // pred_check
      _
    $region63: #{decoder_block.1} parent=1 // pred_check_branch
      %118 = sbr.rel (0) target = $region65
    $region64: #{decoder_block.1} parent=1 // pred_region
      %119 = dma.done [#allocation3], 256
    $region65: #{decoder_block.1} parent=1 // pred_fallthru
      _
    // Predicated region
    $region66: #{decoder_block.1} parent=1 // pred_check
      _
    $region67: #{decoder_block.1} parent=1 // pred_check_branch
      %121 = sbr.rel (0) target = $region69
    $region68: #{decoder_block.1} parent=1 // pred_region
      %122 = dma.done [#allocation6], 16
    $region69: #{decoder_block.1} parent=1 // pred_fallthru
      _
    // Predicated region
    $region70: #{decoder_block.1} parent=1 // pred_check
      _
    $region71: #{decoder_block.1} parent=1 // pred_check_branch
      %124 = sbr.rel (0) target = $region73
    $region72: #{decoder_block.1} parent=1 // pred_region
      %125 = dma.done [#allocation6], 256
    $region73: #{decoder_block.1} parent=1 // pred_fallthru
      _
    // Predicated region
    $region74: #{decoder_block.1} parent=1 // pred_check
      _
    $region75: #{decoder_block.1} parent=1 // pred_check_branch
      %127 = sbr.rel (0) target = $region77
    $region76: #{decoder_block.1} parent=1 // pred_region
      %128 = dma.done [#allocation9], 16
    $region77: #{decoder_block.1} parent=1 // pred_fallthru
      _
    // Predicated region
    $region78: #{decoder_block.1} parent=1 // pred_check
      _
    $region79: #{decoder_block.1} parent=1 // pred_check_branch
      %130 = sbr.rel (0) target = $region81
    $region80: #{decoder_block.1} parent=1 // pred_region
      %131 = dma.done [#allocation9], 256
    $region81: #{decoder_block.1} parent=1 // pred_fallthru
      _
    // Predicated region
    $region82: #{decoder_block.1} parent=1 // pred_check
      _
    $region83: #{decoder_block.1} parent=1 // pred_check_branch
      %133 = sbr.rel (0) target = $region85
    $region84: #{decoder_block.1} parent=1 // pred_region
      %134 = dma.done [#allocation12], 16
    $region85: #{decoder_block.1} parent=1 // pred_fallthru
      _
    // Predicated region
    $region86: #{decoder_block.1} parent=1 // pred_check
      _
    $region87: #{decoder_block.1} parent=1 // pred_check_branch
      %136 = sbr.rel (0) target = $region89
    $region88: #{decoder_block.1} parent=1 // pred_region
      %137 = dma.done [#allocation12], 16
    $region89: #{decoder_block.1} parent=1 // pred_fallthru
      _
    %v139 = vld [vmem:[%s0] sm:$0xff]
    %v140 = vld [vmem:[%s0 + $0x8] sm:$0xff]
    %v141 = vld [vmem:[%s1] sm:$0xff]
    %v142 = vld [vmem:[%s1 + $0x8] sm:$0xff]
    %v143 = vlaneseq
    %v144 = vshrl.u32 %v143, 7
    %v145 = vlaneseq
    %v146 = vand.u32 %v145, 127
    %vm147 = vcmp.ge.s32.totalorder %v144, %v146
    %v148 = vld [vmem:[%s2] sm:$0x1]
    %v149 = vld [vmem:[%s2 + $0x1] sm:$0x1]
    %vm150 = vcmp.ne.f32.partialorder %v148, 0.0
    %vm151 = vcmp.ne.f32.partialorder %v149, 0.0
    %vm152 = vcmask 261120
    %v153 = vsel %vm152, %v139, 0.0
    %154 = vadd.xlane.f32.xlu0 %v153
    %v155 = vpop.xlane.xlu0 %154
    %v156 = vsel %vm152, %v140, 0.0
    %157 = vadd.xlane.f32.xlu0 %v156
    %v158 = vpop.xlane.xlu0 %157
    %v159 = vrcp.pop 32.0
    %v160 = vmul.f32 %v155, %v159
    %v161 = vmul.f32 %v158, %v159
    %v162 = vsub.f32 %v139, %v160
    %v163 = vsub.f32 %v140, %v161
    %v164 = vmul.f32 %v162, %v162
    %v165 = vmul.f32 %v163, %v163
    %v166 = vsel %vm152, %v164, 0.0
    %167 = vadd.xlane.f32.xlu0 %v166
    %v168 = vpop.xlane.xlu0 %167
    %v169 = vsel %vm152, %v165, 0.0
    %170 = vadd.xlane.f32.xlu0 %v169
    %v171 = vpop.xlane.xlu0 %170
    %v172 = vmul.f32 %v168, 0.032258064
    %v173 = vmul.f32 %v171, 0.032258064
    %v174 = vrsqrt.pop %v172
    %v175 = vmul.f32 %v172, %v174
    %vm176 = vcmp.eq.f32.partialorder %v172, inf
    %v177 = vsel %vm176, %v172, %v175
    %vm178 = vcmp.eq.f32.partialorder %v172, 0.0
    %v179 = vand.u32 %v172, 2147483648
    %v180 = vsel %vm178, %v179, %v177
    %v181 = vrsqrt.pop %v173
    %v182 = vmul.f32 %v173, %v181
    %vm183 = vcmp.eq.f32.partialorder %v173, inf
    %v184 = vsel %vm183, %v173, %v182
    %vm185 = vcmp.eq.f32.partialorder %v173, 0.0
    %v186 = vand.u32 %v173, 2147483648
    %v187 = vsel %vm185, %v186, %v184
    %v188 = vadd.f32 %v180, 1e-06
    %v189 = vadd.f32 %v187, 1e-06
    %v190 = vrcp.pop %v188
    %v191 = vrcp.pop %v189
    %v192 = vmul.f32 %v162, %v190
    %v193 = vmul.f32 %v163, %v191
    %v194 = vadd.f32 %v192, 0.0
    %v195 = vadd.f32 %v193, 0.0
    %v196 = vld [vmem:[%s3] sm:$0xf]
    %v197 = vld [vmem:[%s3 + $0x4] sm:$0xf]
    %v198 = vld [vmem:[%s3 + $0x8] sm:$0xf]
    %v199 = vld [vmem:[%s3 + $0xc] sm:$0xf]
    %v200 = vpack.c.bf16 %v195, %v194
    %v201 = vld [vmem:[%s4] sm:$0x1]
    %v203 = vlaneseq
    %v204 = vshrl.u32 %v203, 7
    %v205 = vsub.s32 0, %v204
    %v206 = vrot.slane %v201, %v205
    %v212 = vunpack.c.l.b16 %v196
    %v213 = vunpack.c.l.b16 %v197
    %v214 = vunpack.c.l.b16 %v198
    %v215 = vunpack.c.l.b16 %v199
    %v216 = vpack.c.b16 %v213, %v212
    %v217 = vpack.c.b16 %v215, %v214
    %v221 = vsel %vm152, %v200, 0
    %223 = vmatprep.subr.bf16.mxu0 0
    %224 = vmatpush1.bf16.msra.mxu0 %v216
    %225 = vmatprep.subr.bf16.mxu0 0
    %226 = vmatpush1.bf16.msra.mxu0 %v217
    %227 = vmatprep.subr.bf16.mxu0 0
    %228 = vmatpush1.bf16.msra.mxu0 0
    %229 = vmatprep.subr.bf16.mxu0 0
    %230 = vmatpush1.bf16.msra.mxu0 0
    %231 = vmatprep.subr.bf16.mxu0 0
    %232 = vmatpush1.bf16.msra.mxu0 0
    %233 = vmatprep.subr.bf16.mxu0 0
    %234 = vmatpush1.bf16.msra.mxu0 0
    %235 = vmatprep.subr.bf16.mxu0 0
    %236 = vmatpush1.bf16.msra.mxu0 0
    %237 = vmatprep.subr.bf16.mxu0 0
    %238 = vmatpush1.bf16.msra.mxu0 0
    %239 = vmatprep.subr.bf16.mxu0 0
    %240 = vmatpush1.bf16.msra.mxu0 0
    %241 = vmatprep.subr.bf16.mxu0 0
    %242 = vmatpush1.bf16.msra.mxu0 0
    %243 = vmatprep.subr.bf16.mxu0 0
    %244 = vmatpush1.bf16.msra.mxu0 0
    %245 = vmatprep.subr.bf16.mxu0 0
    %246 = vmatpush1.bf16.msra.mxu0 0
    %247 = vmatprep.subr.bf16.mxu0 0
    %248 = vmatpush1.bf16.msra.mxu0 0
    %249 = vmatprep.subr.bf16.mxu0 0
    %250 = vmatpush1.bf16.msra.mxu0 0
    %251 = vmatprep.subr.bf16.mxu0 0
    %252 = vmatpush1.bf16.msra.mxu0 0
    %253 = vmatprep.subr.bf16.mxu0 0
    %254 = vmatpush1.bf16.msra.mxu0 0
    %255 = vmatprep.mubr.bf16.mxu0 0
    %256 = vmatmul.mubr.bf16.gmra.mrb[0].mxu0 %v221
    %v257 = vpop.f32.mrb[0].mxu0
    %v258 = vadd.f32 %v206, %v257
    %v259 = vpop.f32.mrb[0].mxu0
    %v260 = vpop.f32.mrb[0].mxu0
    %v261 = vadd.f32 %v206, %v260
    %v262 = vpop.f32.mrb[0].mxu0
    %263 = vdwg.mxu0
    %v264 = vpack.c.bf16 %v258, %v258
    %v265 = vpack.c.bf16 %v261, %v261
    %267 = vrot.lane.b32.xlu0 %v264, 96
    %v268 = vpop.permute.xlu0 %267
    %vm269 = vcmask 64512
    %v271 = vsel %vm269, %v264, 0
    %v274 = vsel %vm269, %v268, 0
    %276 = vmatprep.subr.bf16.mxu0 0
    %277 = vmatpush1.bf16.xpose.msra.mxu0 %v274
    %278 = vmatprep.subr.bf16.mxu0 0
    %279 = vmatpush1.bf16.xpose.msra.mxu0 0
    %280 = vmatprep.subr.bf16.mxu0 0
    %281 = vmatpush1.bf16.xpose.msra.mxu0 0
    %282 = vmatprep.subr.bf16.mxu0 0
    %283 = vmatpush1.bf16.xpose.msra.mxu0 0
    %284 = vmatprep.subr.bf16.mxu0 0
    %285 = vmatpush1.bf16.xpose.msra.mxu0 0
    %286 = vmatprep.subr.bf16.mxu0 0
    %287 = vmatpush1.bf16.xpose.msra.mxu0 0
    %288 = vmatprep.subr.bf16.mxu0 0
    %289 = vmatpush1.bf16.xpose.msra.mxu0 0
    %290 = vmatprep.subr.bf16.mxu0 0
    %291 = vmatpush1.bf16.xpose.msra.mxu0 0
    %292 = vmatprep.subr.bf16.mxu0 0
    %293 = vmatpush1.bf16.xpose.msra.mxu0 0
    %294 = vmatprep.subr.bf16.mxu0 0
    %295 = vmatpush1.bf16.xpose.msra.mxu0 0
    %296 = vmatprep.subr.bf16.mxu0 0
    %297 = vmatpush1.bf16.xpose.msra.mxu0 0
    %298 = vmatprep.subr.bf16.mxu0 0
    %299 = vmatpush1.bf16.xpose.msra.mxu0 0
    %300 = vmatprep.subr.bf16.mxu0 0
    %301 = vmatpush1.bf16.xpose.msra.mxu0 0
    %302 = vmatprep.subr.bf16.mxu0 0
    %303 = vmatpush1.bf16.xpose.msra.mxu0 0
    %304 = vmatprep.subr.bf16.mxu0 0
    %305 = vmatpush1.bf16.xpose.msra.mxu0 0
    %306 = vmatprep.subr.bf16.mxu0 0
    %307 = vmatpush1.bf16.xpose.msra.mxu0 0
    %308 = vmatprep.mubr.bf16.mxu0 0
    %309 = vmatmul.mubr.bf16.gmra.mrb[0].mxu0 %v271
    %v310 = vpop.f32.mrb[0].mxu0
    %v311 = vadd.f32 0.0, %v310
    %v312 = vpop.f32.mrb[0].mxu0
    %v313 = vpop.f32.mrb[0].mxu0
    %v314 = vpop.f32.mrb[0].mxu0
    %315 = vdwg.mxu0
    %317 = vrot.lane.b32.xlu0 %v265, 96
    %v318 = vpop.permute.xlu0 %317
    %v320 = vsel %vm269, %v265, 0
    %v323 = vsel %vm269, %v318, 0
    %325 = vmatprep.subr.bf16.mxu0 0
    %326 = vmatpush1.bf16.xpose.msra.mxu0 %v323
    %327 = vmatprep.subr.bf16.mxu0 0
    %328 = vmatpush1.bf16.xpose.msra.mxu0 0
    %329 = vmatprep.subr.bf16.mxu0 0
    %330 = vmatpush1.bf16.xpose.msra.mxu0 0
    %331 = vmatprep.subr.bf16.mxu0 0
    %332 = vmatpush1.bf16.xpose.msra.mxu0 0
    %333 = vmatprep.subr.bf16.mxu0 0
    %334 = vmatpush1.bf16.xpose.msra.mxu0 0
    %335 = vmatprep.subr.bf16.mxu0 0
    %336 = vmatpush1.bf16.xpose.msra.mxu0 0
    %337 = vmatprep.subr.bf16.mxu0 0
    %338 = vmatpush1.bf16.xpose.msra.mxu0 0
    %339 = vmatprep.subr.bf16.mxu0 0
    %340 = vmatpush1.bf16.xpose.msra.mxu0 0
    %341 = vmatprep.subr.bf16.mxu0 0
    %342 = vmatpush1.bf16.xpose.msra.mxu0 0
    %343 = vmatprep.subr.bf16.mxu0 0
    %344 = vmatpush1.bf16.xpose.msra.mxu0 0
    %345 = vmatprep.subr.bf16.mxu0 0
    %346 = vmatpush1.bf16.xpose.msra.mxu0 0
    %347 = vmatprep.subr.bf16.mxu0 0
    %348 = vmatpush1.bf16.xpose.msra.mxu0 0
    %349 = vmatprep.subr.bf16.mxu0 0
    %350 = vmatpush1.bf16.xpose.msra.mxu0 0
    %351 = vmatprep.subr.bf16.mxu0 0
    %352 = vmatpush1.bf16.xpose.msra.mxu0 0
    %353 = vmatprep.subr.bf16.mxu0 0
    %354 = vmatpush1.bf16.xpose.msra.mxu0 0
    %355 = vmatprep.subr.bf16.mxu0 0
    %356 = vmatpush1.bf16.xpose.msra.mxu0 0
    %357 = vmatprep.mubr.bf16.mxu0 0
    %358 = vmatmul.mubr.bf16.gmra.mrb[0].mxu0 %v320
    %v359 = vpop.f32.mrb[0].mxu0
    %v360 = vadd.f32 0.0, %v359
    %v361 = vpop.f32.mrb[0].mxu0
    %v362 = vpop.f32.mrb[0].mxu0
    %v363 = vpop.f32.mrb[0].mxu0
    %364 = vdwg.mxu0
    %v365 = vmul.f32 %v311, 0.35355338
    %v366 = vmul.f32 %v360, 0.35355338
    %v367 = vsel %vm147, 1, 0
    %vm368 = vcmp.eq.s32.totalorder %v367, 1
    %v369 = vsel %vm368, %v365, -1e+20
    %v370 = vsel %vm368, %v366, -1e+20
    %v371 = vsel %vm269, %v369, -inf
    %372 = vmax.xlane.f32.xlu0 %v371
    %v373 = vpop.xlane.xlu0 %372
    %v374 = vsel %vm269, %v370, -inf
    %375 = vmax.xlane.f32.xlu0 %v374
    %v376 = vpop.xlane.xlu0 %375
    %v377 = vsub.f32 %v369, %v373
    %v378 = vsub.f32 %v370, %v376
    %v379 = vmul.f32 %v377, 1.442695
    %v380 = vpow.pop %v379
    %v381 = vmul.f32 %v378, 1.442695
    %v382 = vpow.pop %v381
    %v383 = vsel %vm269, %v380, 0.0
    %384 = vadd.xlane.f32.xlu0 %v383
    %v385 = vpop.xlane.xlu0 %384
    %v386 = vsel %vm269, %v382, 0.0
    %387 = vadd.xlane.f32.xlu0 %v386
    %v388 = vpop.xlane.xlu0 %387
    %v389 = vrcp.pop %v385
    %v390 = vrcp.pop %v388
    %v391 = vmul.f32 %v380, %v389
    %v392 = vmul.f32 %v382, %v390
    %v393 = vpack.c.bf16 %v391, %v391
    %v394 = vpack.c.bf16 %v392, %v392
    %395 = vrot.lane.b32.xlu0 %v264, 64
    %v396 = vpop.permute.xlu0 %395
    %v398 = vsel %vm269, %v393, 0
    %vm400 = vcmask 1043456
    %v402 = vsel %vm400, %v396, 0
    %404 = vmatprep.subr.bf16.mxu0 0
    %405 = vmatpush1.bf16.msra.mxu0 %v402
    %406 = vmatprep.subr.bf16.mxu0 0
    %407 = vmatpush1.bf16.msra.mxu0 0
    %408 = vmatprep.subr.bf16.mxu0 0
    %409 = vmatpush1.bf16.msra.mxu0 0
    %410 = vmatprep.subr.bf16.mxu0 0
    %411 = vmatpush1.bf16.msra.mxu0 0
    %412 = vmatprep.subr.bf16.mxu0 0
    %413 = vmatpush1.bf16.msra.mxu0 0
    %414 = vmatprep.subr.bf16.mxu0 0
    %415 = vmatpush1.bf16.msra.mxu0 0
    %416 = vmatprep.subr.bf16.mxu0 0
    %417 = vmatpush1.bf16.msra.mxu0 0
    %418 = vmatprep.subr.bf16.mxu0 0
    %419 = vmatpush1.bf16.msra.mxu0 0
    %420 = vmatprep.subr.bf16.mxu0 0
    %421 = vmatpush1.bf16.msra.mxu0 0
    %422 = vmatprep.subr.bf16.mxu0 0
    %423 = vmatpush1.bf16.msra.mxu0 0
    %424 = vmatprep.subr.bf16.mxu0 0
    %425 = vmatpush1.bf16.msra.mxu0 0
    %426 = vmatprep.subr.bf16.mxu0 0
    %427 = vmatpush1.bf16.msra.mxu0 0
    %428 = vmatprep.subr.bf16.mxu0 0
    %429 = vmatpush1.bf16.msra.mxu0 0
    %430 = vmatprep.subr.bf16.mxu0 0
    %431 = vmatpush1.bf16.msra.mxu0 0
    %432 = vmatprep.subr.bf16.mxu0 0
    %433 = vmatpush1.bf16.msra.mxu0 0
    %434 = vmatprep.subr.bf16.mxu0 0
    %435 = vmatpush1.bf16.msra.mxu0 0
    %436 = vmatprep.mubr.bf16.mxu0 0
    %437 = vmatmul.mubr.bf16.gmra.mrb[0].mxu0 %v398
    %v438 = vpop.f32.mrb[0].mxu0
    %v439 = vadd.f32 0.0, %v438
    %v440 = vpop.f32.mrb[0].mxu0
    %v441 = vpop.f32.mrb[0].mxu0
    %v442 = vpop.f32.mrb[0].mxu0
    %443 = vdwg.mxu0
    %444 = vrot.lane.b32.xlu0 %v265, 64
    %v445 = vpop.permute.xlu0 %444
    %v447 = vsel %vm269, %v394, 0
    %v450 = vsel %vm400, %v445, 0
    %452 = vmatprep.subr.bf16.mxu0 0
    %453 = vmatpush1.bf16.msra.mxu0 %v450
    %454 = vmatprep.subr.bf16.mxu0 0
    %455 = vmatpush1.bf16.msra.mxu0 0
    %456 = vmatprep.subr.bf16.mxu0 0
    %457 = vmatpush1.bf16.msra.mxu0 0
    %458 = vmatprep.subr.bf16.mxu0 0
    %459 = vmatpush1.bf16.msra.mxu0 0
    %460 = vmatprep.subr.bf16.mxu0 0
    %461 = vmatpush1.bf16.msra.mxu0 0
    %462 = vmatprep.subr.bf16.mxu0 0
    %463 = vmatpush1.bf16.msra.mxu0 0
    %464 = vmatprep.subr.bf16.mxu0 0
    %465 = vmatpush1.bf16.msra.mxu0 0
    %466 = vmatprep.subr.bf16.mxu0 0
    %467 = vmatpush1.bf16.msra.mxu0 0
    %468 = vmatprep.subr.bf16.mxu0 0
    %469 = vmatpush1.bf16.msra.mxu0 0
    %470 = vmatprep.subr.bf16.mxu0 0
    %471 = vmatpush1.bf16.msra.mxu0 0
    %472 = vmatprep.subr.bf16.mxu0 0
    %473 = vmatpush1.bf16.msra.mxu0 0
    %474 = vmatprep.subr.bf16.mxu0 0
    %475 = vmatpush1.bf16.msra.mxu0 0
    %476 = vmatprep.subr.bf16.mxu0 0
    %477 = vmatpush1.bf16.msra.mxu0 0
    %478 = vmatprep.subr.bf16.mxu0 0
    %479 = vmatpush1.bf16.msra.mxu0 0
    %480 = vmatprep.subr.bf16.mxu0 0
    %481 = vmatpush1.bf16.msra.mxu0 0
    %482 = vmatprep.subr.bf16.mxu0 0
    %483 = vmatpush1.bf16.msra.mxu0 0
    %484 = vmatprep.mubr.bf16.mxu0 0
    %485 = vmatmul.mubr.bf16.gmra.mrb[0].mxu0 %v447
    %v486 = vpop.f32.mrb[0].mxu0
    %v487 = vadd.f32 0.0, %v486
    %v488 = vpop.f32.mrb[0].mxu0
    %v489 = vpop.f32.mrb[0].mxu0
    %v490 = vpop.f32.mrb[0].mxu0
    %491 = vdwg.mxu0
    %492 = vrot.lane.b32.xlu0 %v264, 120
    %v493 = vpop.permute.xlu0 %492
    %494 = vrot.lane.b32.xlu0 %v264, 88
    %v495 = vpop.permute.xlu0 %494
    %v497 = vsel %vm269, %v493, 0
    %v500 = vsel %vm269, %v495, 0
    %502 = vmatprep.subr.bf16.mxu0 0
    %503 = vmatpush1.bf16.xpose.msra.mxu0 %v500
    %504 = vmatprep.subr.bf16.mxu0 0
    %505 = vmatpush1.bf16.xpose.msra.mxu0 0
    %506 = vmatprep.subr.bf16.mxu0 0
    %507 = vmatpush1.bf16.xpose.msra.mxu0 0
    %508 = vmatprep.subr.bf16.mxu0 0
    %509 = vmatpush1.bf16.xpose.msra.mxu0 0
    %510 = vmatprep.subr.bf16.mxu0 0
    %511 = vmatpush1.bf16.xpose.msra.mxu0 0
    %512 = vmatprep.subr.bf16.mxu0 0
    %513 = vmatpush1.bf16.xpose.msra.mxu0 0
    %514 = vmatprep.subr.bf16.mxu0 0
    %515 = vmatpush1.bf16.xpose.msra.mxu0 0
    %516 = vmatprep.subr.bf16.mxu0 0
    %517 = vmatpush1.bf16.xpose.msra.mxu0 0
    %518 = vmatprep.subr.bf16.mxu0 0
    %519 = vmatpush1.bf16.xpose.msra.mxu0 0
    %520 = vmatprep.subr.bf16.mxu0 0
    %521 = vmatpush1.bf16.xpose.msra.mxu0 0
    %522 = vmatprep.subr.bf16.mxu0 0
    %523 = vmatpush1.bf16.xpose.msra.mxu0 0
    %524 = vmatprep.subr.bf16.mxu0 0
    %525 = vmatpush1.bf16.xpose.msra.mxu0 0
    %526 = vmatprep.subr.bf16.mxu0 0
    %527 = vmatpush1.bf16.xpose.msra.mxu0 0
    %528 = vmatprep.subr.bf16.mxu0 0
    %529 = vmatpush1.bf16.xpose.msra.mxu0 0
    %530 = vmatprep.subr.bf16.mxu0 0
    %531 = vmatpush1.bf16.xpose.msra.mxu0 0
    %532 = vmatprep.subr.bf16.mxu0 0
    %533 = vmatpush1.bf16.xpose.msra.mxu0 0
    %534 = vmatprep.mubr.bf16.mxu0 0
    %535 = vmatmul.mubr.bf16.gmra.mrb[0].mxu0 %v497
    %v536 = vpop.f32.mrb[0].mxu0
    %v537 = vadd.f32 0.0, %v536
    %v538 = vpop.f32.mrb[0].mxu0
    %v539 = vpop.f32.mrb[0].mxu0
    %v540 = vpop.f32.mrb[0].mxu0
    %541 = vdwg.mxu0
    %542 = vrot.lane.b32.xlu0 %v265, 120
    %v543 = vpop.permute.xlu0 %542
    %544 = vrot.lane.b32.xlu0 %v265, 88
    %v545 = vpop.permute.xlu0 %544
    %v547 = vsel %vm269, %v543, 0
    %v550 = vsel %vm269, %v545, 0
    %552 = vmatprep.subr.bf16.mxu0 0
    %553 = vmatpush1.bf16.xpose.msra.mxu0 %v550
    %554 = vmatprep.subr.bf16.mxu0 0
    %555 = vmatpush1.bf16.xpose.msra.mxu0 0
    %556 = vmatprep.subr.bf16.mxu0 0
    %557 = vmatpush1.bf16.xpose.msra.mxu0 0
    %558 = vmatprep.subr.bf16.mxu0 0
    %559 = vmatpush1.bf16.xpose.msra.mxu0 0
    %560 = vmatprep.subr.bf16.mxu0 0
    %561 = vmatpush1.bf16.xpose.msra.mxu0 0
    %562 = vmatprep.subr.bf16.mxu0 0
    %563 = vmatpush1.bf16.xpose.msra.mxu0 0
    %564 = vmatprep.subr.bf16.mxu0 0
    %565 = vmatpush1.bf16.xpose.msra.mxu0 0
    %566 = vmatprep.subr.bf16.mxu0 0
    %567 = vmatpush1.bf16.xpose.msra.mxu0 0
    %568 = vmatprep.subr.bf16.mxu0 0
    %569 = vmatpush1.bf16.xpose.msra.mxu0 0
    %570 = vmatprep.subr.bf16.mxu0 0
    %571 = vmatpush1.bf16.xpose.msra.mxu0 0
    %572 = vmatprep.subr.bf16.mxu0 0
    %573 = vmatpush1.bf16.xpose.msra.mxu0 0
    %574 = vmatprep.subr.bf16.mxu0 0
    %575 = vmatpush1.bf16.xpose.msra.mxu0 0
    %576 = vmatprep.subr.bf16.mxu0 0
    %577 = vmatpush1.bf16.xpose.msra.mxu0 0
    %578 = vmatprep.subr.bf16.mxu0 0
    %579 = vmatpush1.bf16.xpose.msra.mxu0 0
    %580 = vmatprep.subr.bf16.mxu0 0
    %581 = vmatpush1.bf16.xpose.msra.mxu0 0
    %582 = vmatprep.subr.bf16.mxu0 0
    %583 = vmatpush1.bf16.xpose.msra.mxu0 0
    %584 = vmatprep.mubr.bf16.mxu0 0
    %585 = vmatmul.mubr.bf16.gmra.mrb[0].mxu0 %v547
    %v586 = vpop.f32.mrb[0].mxu0
    %v587 = vadd.f32 0.0, %v586
    %v588 = vpop.f32.mrb[0].mxu0
    %v589 = vpop.f32.mrb[0].mxu0
    %v590 = vpop.f32.mrb[0].mxu0
    %591 = vdwg.mxu0
    %v592 = vmul.f32 %v537, 0.35355338
    %v593 = vmul.f32 %v587, 0.35355338
    %v594 = vsel %vm368, %v592, -1e+20
    %v595 = vsel %vm368, %v593, -1e+20
    %v596 = vsel %vm269, %v594, -inf
    %597 = vmax.xlane.f32.xlu0 %v596
    %v598 = vpop.xlane.xlu0 %597
    %v599 = vsel %vm269, %v595, -inf
    %600 = vmax.xlane.f32.xlu0 %v599
    %v601 = vpop.xlane.xlu0 %600
    %v602 = vsub.f32 %v594, %v598
    %v603 = vsub.f32 %v595, %v601
    %v604 = vmul.f32 %v602, 1.442695
    %v605 = vpow.pop %v604
    %v606 = vmul.f32 %v603, 1.442695
    %v607 = vpow.pop %v606
    %v608 = vsel %vm269, %v605, 0.0
    %609 = vadd.xlane.f32.xlu0 %v608
    %v610 = vpop.xlane.xlu0 %609
    %v611 = vsel %vm269, %v607, 0.0
    %612 = vadd.xlane.f32.xlu0 %v611
    %v613 = vpop.xlane.xlu0 %612
    %v614 = vrcp.pop %v610
    %v615 = vrcp.pop %v613
    %v616 = vmul.f32 %v605, %v614
    %v617 = vmul.f32 %v607, %v615
    %v618 = vpack.c.bf16 %v616, %v616
    %v619 = vpack.c.bf16 %v617, %v617
    %620 = vrot.lane.b32.xlu0 %v264, 56
    %v621 = vpop.permute.xlu0 %620
    %v623 = vsel %vm269, %v618, 0
    %v626 = vsel %vm400, %v621, 0
    %628 = vmatprep.subr.bf16.mxu0 0
    %629 = vmatpush1.bf16.msra.mxu0 %v626
    %630 = vmatprep.subr.bf16.mxu0 0
    %631 = vmatpush1.bf16.msra.mxu0 0
    %632 = vmatprep.subr.bf16.mxu0 0
    %633 = vmatpush1.bf16.msra.mxu0 0
    %634 = vmatprep.subr.bf16.mxu0 0
    %635 = vmatpush1.bf16.msra.mxu0 0
    %636 = vmatprep.subr.bf16.mxu0 0
    %637 = vmatpush1.bf16.msra.mxu0 0
    %638 = vmatprep.subr.bf16.mxu0 0
    %639 = vmatpush1.bf16.msra.mxu0 0
    %640 = vmatprep.subr.bf16.mxu0 0
    %641 = vmatpush1.bf16.msra.mxu0 0
    %642 = vmatprep.subr.bf16.mxu0 0
    %643 = vmatpush1.bf16.msra.mxu0 0
    %644 = vmatprep.subr.bf16.mxu0 0
    %645 = vmatpush1.bf16.msra.mxu0 0
    %646 = vmatprep.subr.bf16.mxu0 0
    %647 = vmatpush1.bf16.msra.mxu0 0
    %648 = vmatprep.subr.bf16.mxu0 0
    %649 = vmatpush1.bf16.msra.mxu0 0
    %650 = vmatprep.subr.bf16.mxu0 0
    %651 = vmatpush1.bf16.msra.mxu0 0
    %652 = vmatprep.subr.bf16.mxu0 0
    %653 = vmatpush1.bf16.msra.mxu0 0
    %654 = vmatprep.subr.bf16.mxu0 0
    %655 = vmatpush1.bf16.msra.mxu0 0
    %656 = vmatprep.subr.bf16.mxu0 0
    %657 = vmatpush1.bf16.msra.mxu0 0
    %658 = vmatprep.subr.bf16.mxu0 0
    %659 = vmatpush1.bf16.msra.mxu0 0
    %660 = vmatprep.mubr.bf16.mxu0 0
    %661 = vmatmul.mubr.bf16.gmra.mrb[0].mxu0 %v623
    %v662 = vpop.f32.mrb[0].mxu0
    %v663 = vadd.f32 0.0, %v662
    %v664 = vpop.f32.mrb[0].mxu0
    %v665 = vpop.f32.mrb[0].mxu0
    %v666 = vpop.f32.mrb[0].mxu0
    %667 = vdwg.mxu0
    %668 = vrot.lane.b32.xlu0 %v265, 56
    %v669 = vpop.permute.xlu0 %668
    %v671 = vsel %vm269, %v619, 0
    %v674 = vsel %vm400, %v669, 0
    %676 = vmatprep.subr.bf16.mxu0 0
    %677 = vmatpush1.bf16.msra.mxu0 %v674
    %678 = vmatprep.subr.bf16.mxu0 0
    %679 = vmatpush1.bf16.msra.mxu0 0
    %680 = vmatprep.subr.bf16.mxu0 0
    %681 = vmatpush1.bf16.msra.mxu0 0
    %682 = vmatprep.subr.bf16.mxu0 0
    %683 = vmatpush1.bf16.msra.mxu0 0
    %684 = vmatprep.subr.bf16.mxu0 0
    %685 = vmatpush1.bf16.msra.mxu0 0
    %686 = vmatprep.subr.bf16.mxu0 0
    %687 = vmatpush1.bf16.msra.mxu0 0
    %688 = vmatprep.subr.bf16.mxu0 0
    %689 = vmatpush1.bf16.msra.mxu0 0
    %690 = vmatprep.subr.bf16.mxu0 0
    %691 = vmatpush1.bf16.msra.mxu0 0
    %692 = vmatprep.subr.bf16.mxu0 0
    %693 = vmatpush1.bf16.msra.mxu0 0
    %694 = vmatprep.subr.bf16.mxu0 0
    %695 = vmatpush1.bf16.msra.mxu0 0
    %696 = vmatprep.subr.bf16.mxu0 0
    %697 = vmatpush1.bf16.msra.mxu0 0
    %698 = vmatprep.subr.bf16.mxu0 0
    %699 = vmatpush1.bf16.msra.mxu0 0
    %700 = vmatprep.subr.bf16.mxu0 0
    %701 = vmatpush1.bf16.msra.mxu0 0
    %702 = vmatprep.subr.bf16.mxu0 0
    %703 = vmatpush1.bf16.msra.mxu0 0
    %704 = vmatprep.subr.bf16.mxu0 0
    %705 = vmatpush1.bf16.msra.mxu0 0
    %706 = vmatprep.subr.bf16.mxu0 0
    %707 = vmatpush1.bf16.msra.mxu0 0
    %708 = vmatprep.mubr.bf16.mxu0 0
    %709 = vmatmul.mubr.bf16.gmra.mrb[0].mxu0 %v671
    %v710 = vpop.f32.mrb[0].mxu0
    %v711 = vadd.f32 0.0, %v710
    %v712 = vpop.f32.mrb[0].mxu0
    %v713 = vpop.f32.mrb[0].mxu0
    %v714 = vpop.f32.mrb[0].mxu0
    %715 = vdwg.mxu0
    %716 = vrot.lane.b32.xlu0 %v264, 112
    %v717 = vpop.permute.xlu0 %716
    %718 = vrot.lane.b32.xlu0 %v264, 80
    %v719 = vpop.permute.xlu0 %718
    %v721 = vsel %vm269, %v717, 0
    %v724 = vsel %vm269, %v719, 0
    %726 = vmatprep.subr.bf16.mxu0 0
    %727 = vmatpush1.bf16.xpose.msra.mxu0 %v724
    %728 = vmatprep.subr.bf16.mxu0 0
    %729 = vmatpush1.bf16.xpose.msra.mxu0 0
    %730 = vmatprep.subr.bf16.mxu0 0
    %731 = vmatpush1.bf16.xpose.msra.mxu0 0
    %732 = vmatprep.subr.bf16.mxu0 0
    %733 = vmatpush1.bf16.xpose.msra.mxu0 0
    %734 = vmatprep.subr.bf16.mxu0 0
    %735 = vmatpush1.bf16.xpose.msra.mxu0 0
    %736 = vmatprep.subr.bf16.mxu0 0
    %737 = vmatpush1.bf16.xpose.msra.mxu0 0
    %738 = vmatprep.subr.bf16.mxu0 0
    %739 = vmatpush1.bf16.xpose.msra.mxu0 0
    %740 = vmatprep.subr.bf16.mxu0 0
    %741 = vmatpush1.bf16.xpose.msra.mxu0 0
    %742 = vmatprep.subr.bf16.mxu0 0
    %743 = vmatpush1.bf16.xpose.msra.mxu0 0
    %744 = vmatprep.subr.bf16.mxu0 0
    %745 = vmatpush1.bf16.xpose.msra.mxu0 0
    %746 = vmatprep.subr.bf16.mxu0 0
    %747 = vmatpush1.bf16.xpose.msra.mxu0 0
    %748 = vmatprep.subr.bf16.mxu0 0
    %749 = vmatpush1.bf16.xpose.msra.mxu0 0
    %750 = vmatprep.subr.bf16.mxu0 0
    %751 = vmatpush1.bf16.xpose.msra.mxu0 0
    %752 = vmatprep.subr.bf16.mxu0 0
    %753 = vmatpush1.bf16.xpose.msra.mxu0 0
    %754 = vmatprep.subr.bf16.mxu0 0
    %755 = vmatpush1.bf16.xpose.msra.mxu0 0
    %756 = vmatprep.subr.bf16.mxu0 0
    %757 = vmatpush1.bf16.xpose.msra.mxu0 0
    %758 = vmatprep.mubr.bf16.mxu0 0
    %759 = vmatmul.mubr.bf16.gmra.mrb[0].mxu0 %v721
    %v760 = vpop.f32.mrb[0].mxu0
    %v761 = vadd.f32 0.0, %v760
    %v762 = vpop.f32.mrb[0].mxu0
    %v763 = vpop.f32.mrb[0].mxu0
    %v764 = vpop.f32.mrb[0].mxu0
    %765 = vdwg.mxu0
    %766 = vrot.lane.b32.xlu0 %v265, 112
    %v767 = vpop.permute.xlu0 %766
    %768 = vrot.lane.b32.xlu0 %v265, 80
    %v769 = vpop.permute.xlu0 %768
    %v771 = vsel %vm269, %v767, 0
    %v774 = vsel %vm269, %v769, 0
    %776 = vmatprep.subr.bf16.mxu0 0
    %777 = vmatpush1.bf16.xpose.msra.mxu0 %v774
    %778 = vmatprep.subr.bf16.mxu0 0
    %779 = vmatpush1.bf16.xpose.msra.mxu0 0
    %780 = vmatprep.subr.bf16.mxu0 0
    %781 = vmatpush1.bf16.xpose.msra.mxu0 0
    %782 = vmatprep.subr.bf16.mxu0 0
    %783 = vmatpush1.bf16.xpose.msra.mxu0 0
    %784 = vmatprep.subr.bf16.mxu0 0
    %785 = vmatpush1.bf16.xpose.msra.mxu0 0
    %786 = vmatprep.subr.bf16.mxu0 0
    %787 = vmatpush1.bf16.xpose.msra.mxu0 0
    %788 = vmatprep.subr.bf16.mxu0 0
    %789 = vmatpush1.bf16.xpose.msra.mxu0 0
    %790 = vmatprep.subr.bf16.mxu0 0
    %791 = vmatpush1.bf16.xpose.msra.mxu0 0
    %792 = vmatprep.subr.bf16.mxu0 0
    %793 = vmatpush1.bf16.xpose.msra.mxu0 0
    %794 = vmatprep.subr.bf16.mxu0 0
    %795 = vmatpush1.bf16.xpose.msra.mxu0 0
    %796 = vmatprep.subr.bf16.mxu0 0
    %797 = vmatpush1.bf16.xpose.msra.mxu0 0
    %798 = vmatprep.subr.bf16.mxu0 0
    %799 = vmatpush1.bf16.xpose.msra.mxu0 0
    %800 = vmatprep.subr.bf16.mxu0 0
    %801 = vmatpush1.bf16.xpose.msra.mxu0 0
    %802 = vmatprep.subr.bf16.mxu0 0
    %803 = vmatpush1.bf16.xpose.msra.mxu0 0
    %804 = vmatprep.subr.bf16.mxu0 0
    %805 = vmatpush1.bf16.xpose.msra.mxu0 0
    %806 = vmatprep.subr.bf16.mxu0 0
    %807 = vmatpush1.bf16.xpose.msra.mxu0 0
    %808 = vmatprep.mubr.bf16.mxu0 0
    %809 = vmatmul.mubr.bf16.gmra.mrb[0].mxu0 %v771
    %v810 = vpop.f32.mrb[0].mxu0
    %v811 = vadd.f32 0.0, %v810
    %v812 = vpop.f32.mrb[0].mxu0
    %v813 = vpop.f32.mrb[0].mxu0
    %v814 = vpop.f32.mrb[0].mxu0
    %815 = vdwg.mxu0
    %v816 = vmul.f32 %v761, 0.35355338
    %v817 = vmul.f32 %v811, 0.35355338
    %v818 = vsel %vm368, %v816, -1e+20
    %v819 = vsel %vm368, %v817, -1e+20
    %v820 = vsel %vm269, %v818, -inf
    %821 = vmax.xlane.f32.xlu0 %v820
    %v822 = vpop.xlane.xlu0 %821
    %v823 = vsel %vm269, %v819, -inf
    %824 = vmax.xlane.f32.xlu0 %v823
    %v825 = vpop.xlane.xlu0 %824
    %v826 = vsub.f32 %v818, %v822
    %v827 = vsub.f32 %v819, %v825
    %v828 = vmul.f32 %v826, 1.442695
    %v829 = vpow.pop %v828
    %v830 = vmul.f32 %v827, 1.442695
    %v831 = vpow.pop %v830
    %v832 = vsel %vm269, %v829, 0.0
    %833 = vadd.xlane.f32.xlu0 %v832
    %v834 = vpop.xlane.xlu0 %833
    %v835 = vsel %vm269, %v831, 0.0
    %836 = vadd.xlane.f32.xlu0 %v835
    %v837 = vpop.xlane.xlu0 %836
    %v838 = vrcp.pop %v834
    %v839 = vrcp.pop %v837
    %v840 = vmul.f32 %v829, %v838
    %v841 = vmul.f32 %v831, %v839
    %v842 = vpack.c.bf16 %v840, %v840
    %v843 = vpack.c.bf16 %v841, %v841
    %844 = vrot.lane.b32.xlu0 %v264, 48
    %v845 = vpop.permute.xlu0 %844
    %v847 = vsel %vm269, %v842, 0
    %v850 = vsel %vm400, %v845, 0
    %852 = vmatprep.subr.bf16.mxu0 0
    %853 = vmatpush1.bf16.msra.mxu0 %v850
    %854 = vmatprep.subr.bf16.mxu0 0
    %855 = vmatpush1.bf16.msra.mxu0 0
    %856 = vmatprep.subr.bf16.mxu0 0
    %857 = vmatpush1.bf16.msra.mxu0 0
    %858 = vmatprep.subr.bf16.mxu0 0
    %859 = vmatpush1.bf16.msra.mxu0 0
    %860 = vmatprep.subr.bf16.mxu0 0
    %861 = vmatpush1.bf16.msra.mxu0 0
    %862 = vmatprep.subr.bf16.mxu0 0
    %863 = vmatpush1.bf16.msra.mxu0 0
    %864 = vmatprep.subr.bf16.mxu0 0
    %865 = vmatpush1.bf16.msra.mxu0 0
    %866 = vmatprep.subr.bf16.mxu0 0
    %867 = vmatpush1.bf16.msra.mxu0 0
    %868 = vmatprep.subr.bf16.mxu0 0
    %869 = vmatpush1.bf16.msra.mxu0 0
    %870 = vmatprep.subr.bf16.mxu0 0
    %871 = vmatpush1.bf16.msra.mxu0 0
    %872 = vmatprep.subr.bf16.mxu0 0
    %873 = vmatpush1.bf16.msra.mxu0 0
    %874 = vmatprep.subr.bf16.mxu0 0
    %875 = vmatpush1.bf16.msra.mxu0 0
    %876 = vmatprep.subr.bf16.mxu0 0
    %877 = vmatpush1.bf16.msra.mxu0 0
    %878 = vmatprep.subr.bf16.mxu0 0
    %879 = vmatpush1.bf16.msra.mxu0 0
    %880 = vmatprep.subr.bf16.mxu0 0
    %881 = vmatpush1.bf16.msra.mxu0 0
    %882 = vmatprep.subr.bf16.mxu0 0
    %883 = vmatpush1.bf16.msra.mxu0 0
    %884 = vmatprep.mubr.bf16.mxu0 0
    %885 = vmatmul.mubr.bf16.gmra.mrb[0].mxu0 %v847
    %v886 = vpop.f32.mrb[0].mxu0
    %v887 = vadd.f32 0.0, %v886
    %v888 = vpop.f32.mrb[0].mxu0
    %v889 = vpop.f32.mrb[0].mxu0
    %v890 = vpop.f32.mrb[0].mxu0
    %891 = vdwg.mxu0
    %892 = vrot.lane.b32.xlu0 %v265, 48
    %v893 = vpop.permute.xlu0 %892
    %v895 = vsel %vm269, %v843, 0
    %v898 = vsel %vm400, %v893, 0
    %900 = vmatprep.subr.bf16.mxu0 0
    %901 = vmatpush1.bf16.msra.mxu0 %v898
    %902 = vmatprep.subr.bf16.mxu0 0
    %903 = vmatpush1.bf16.msra.mxu0 0
    %904 = vmatprep.subr.bf16.mxu0 0
    %905 = vmatpush1.bf16.msra.mxu0 0
    %906 = vmatprep.subr.bf16.mxu0 0
    %907 = vmatpush1.bf16.msra.mxu0 0
    %908 = vmatprep.subr.bf16.mxu0 0
    %909 = vmatpush1.bf16.msra.mxu0 0
    %910 = vmatprep.subr.bf16.mxu0 0
    %911 = vmatpush1.bf16.msra.mxu0 0
    %912 = vmatprep.subr.bf16.mxu0 0
    %913 = vmatpush1.bf16.msra.mxu0 0
    %914 = vmatprep.subr.bf16.mxu0 0
    %915 = vmatpush1.bf16.msra.mxu0 0
    %916 = vmatprep.subr.bf16.mxu0 0
    %917 = vmatpush1.bf16.msra.mxu0 0
    %918 = vmatprep.subr.bf16.mxu0 0
    %919 = vmatpush1.bf16.msra.mxu0 0
    %920 = vmatprep.subr.bf16.mxu0 0
    %921 = vmatpush1.bf16.msra.mxu0 0
    %922 = vmatprep.subr.bf16.mxu0 0
    %923 = vmatpush1.bf16.msra.mxu0 0
    %924 = vmatprep.subr.bf16.mxu0 0
    %925 = vmatpush1.bf16.msra.mxu0 0
    %926 = vmatprep.subr.bf16.mxu0 0
    %927 = vmatpush1.bf16.msra.mxu0 0
    %928 = vmatprep.subr.bf16.mxu0 0
    %929 = vmatpush1.bf16.msra.mxu0 0
    %930 = vmatprep.subr.bf16.mxu0 0
    %931 = vmatpush1.bf16.msra.mxu0 0
    %932 = vmatprep.mubr.bf16.mxu0 0
    %933 = vmatmul.mubr.bf16.gmra.mrb[0].mxu0 %v895
    %v934 = vpop.f32.mrb[0].mxu0
    %v935 = vadd.f32 0.0, %v934
    %v936 = vpop.f32.mrb[0].mxu0
    %v937 = vpop.f32.mrb[0].mxu0
    %v938 = vpop.f32.mrb[0].mxu0
    %939 = vdwg.mxu0
    %940 = vrot.lane.b32.xlu0 %v264, 104
    %v941 = vpop.permute.xlu0 %940
    %942 = vrot.lane.b32.xlu0 %v264, 72
    %v943 = vpop.permute.xlu0 %942
    %v945 = vsel %vm269, %v941, 0
    %v948 = vsel %vm269, %v943, 0
    %950 = vmatprep.subr.bf16.mxu0 0
    %951 = vmatpush1.bf16.xpose.msra.mxu0 %v948
    %952 = vmatprep.subr.bf16.mxu0 0
    %953 = vmatpush1.bf16.xpose.msra.mxu0 0
    %954 = vmatprep.subr.bf16.mxu0 0
    %955 = vmatpush1.bf16.xpose.msra.mxu0 0
    %956 = vmatprep.subr.bf16.mxu0 0
    %957 = vmatpush1.bf16.xpose.msra.mxu0 0
    %958 = vmatprep.subr.bf16.mxu0 0
    %959 = vmatpush1.bf16.xpose.msra.mxu0 0
    %960 = vmatprep.subr.bf16.mxu0 0
    %961 = vmatpush1.bf16.xpose.msra.mxu0 0
    %962 = vmatprep.subr.bf16.mxu0 0
    %963 = vmatpush1.bf16.xpose.msra.mxu0 0
    %964 = vmatprep.subr.bf16.mxu0 0
    %965 = vmatpush1.bf16.xpose.msra.mxu0 0
    %966 = vmatprep.subr.bf16.mxu0 0
    %967 = vmatpush1.bf16.xpose.msra.mxu0 0
    %968 = vmatprep.subr.bf16.mxu0 0
    %969 = vmatpush1.bf16.xpose.msra.mxu0 0
    %970 = vmatprep.subr.bf16.mxu0 0
    %971 = vmatpush1.bf16.xpose.msra.mxu0 0
    %972 = vmatprep.subr.bf16.mxu0 0
    %973 = vmatpush1.bf16.xpose.msra.mxu0 0
    %974 = vmatprep.subr.bf16.mxu0 0
    %975 = vmatpush1.bf16.xpose.msra.mxu0 0
    %976 = vmatprep.subr.bf16.mxu0 0
    %977 = vmatpush1.bf16.xpose.msra.mxu0 0
    %978 = vmatprep.subr.bf16.mxu0 0
    %979 = vmatpush1.bf16.xpose.msra.mxu0 0
    %980 = vmatprep.subr.bf16.mxu0 0
    %981 = vmatpush1.bf16.xpose.msra.mxu0 0
    %982 = vmatprep.mubr.bf16.mxu0 0
    %983 = vmatmul.mubr.bf16.gmra.mrb[0].mxu0 %v945
    %v984 = vpop.f32.mrb[0].mxu0
    %v985 = vadd.f32 0.0, %v984
    %v986 = vpop.f32.mrb[0].mxu0
    %v987 = vpop.f32.mrb[0].mxu0
    %v988 = vpop.f32.mrb[0].mxu0
    %989 = vdwg.mxu0
    %990 = vrot.lane.b32.xlu0 %v265, 104
    %v991 = vpop.permute.xlu0 %990
    %992 = vrot.lane.b32.xlu0 %v265, 72
    %v993 = vpop.permute.xlu0 %992
    %v995 = vsel %vm269, %v991, 0
    %v998 = vsel %vm269, %v993, 0
    %1000 = vmatprep.subr.bf16.mxu0 0
    %1001 = vmatpush1.bf16.xpose.msra.mxu0 %v998
    %1002 = vmatprep.subr.bf16.mxu0 0
    %1003 = vmatpush1.bf16.xpose.msra.mxu0 0
    %1004 = vmatprep.subr.bf16.mxu0 0
    %1005 = vmatpush1.bf16.xpose.msra.mxu0 0
    %1006 = vmatprep.subr.bf16.mxu0 0
    %1007 = vmatpush1.bf16.xpose.msra.mxu0 0
    %1008 = vmatprep.subr.bf16.mxu0 0
    %1009 = vmatpush1.bf16.xpose.msra.mxu0 0
    %1010 = vmatprep.subr.bf16.mxu0 0
    %1011 = vmatpush1.bf16.xpose.msra.mxu0 0
    %1012 = vmatprep.subr.bf16.mxu0 0
    %1013 = vmatpush1.bf16.xpose.msra.mxu0 0
    %1014 = vmatprep.subr.bf16.mxu0 0
    %1015 = vmatpush1.bf16.xpose.msra.mxu0 0
    %1016 = vmatprep.subr.bf16.mxu0 0
    %1017 = vmatpush1.bf16.xpose.msra.mxu0 0
    %1018 = vmatprep.subr.bf16.mxu0 0
    %1019 = vmatpush1.bf16.xpose.msra.mxu0 0
    %1020 = vmatprep.subr.bf16.mxu0 0
    %1021 = vmatpush1.bf16.xpose.msra.mxu0 0
    %1022 = vmatprep.subr.bf16.mxu0 0
    %1023 = vmatpush1.bf16.xpose.msra.mxu0 0
    %1024 = vmatprep.subr.bf16.mxu0 0
    %1025 = vmatpush1.bf16.xpose.msra.mxu0 0
    %1026 = vmatprep.subr.bf16.mxu0 0
    %1027 = vmatpush1.bf16.xpose.msra.mxu0 0
    %1028 = vmatprep.subr.bf16.mxu0 0
    %1029 = vmatpush1.bf16.xpose.msra.mxu0 0
    %1030 = vmatprep.subr.bf16.mxu0 0
    %1031 = vmatpush1.bf16.xpose.msra.mxu0 0
    %1032 = vmatprep.mubr.bf16.mxu0 0
    %1033 = vmatmul.mubr.bf16.gmra.mrb[0].mxu0 %v995
    %v1034 = vpop.f32.mrb[0].mxu0
    %v1035 = vadd.f32 0.0, %v1034
    %v1036 = vpop.f32.mrb[0].mxu0
    %v1037 = vpop.f32.mrb[0].mxu0
    %v1038 = vpop.f32.mrb[0].mxu0
    %1039 = vdwg.mxu0
    %v1040 = vmul.f32 %v985, 0.35355338
    %v1041 = vmul.f32 %v1035, 0.35355338
    %v1042 = vsel %vm368, %v1040, -1e+20
    %v1043 = vsel %vm368, %v1041, -1e+20
    %v1044 = vsel %vm269, %v1042, -inf
    %1045 = vmax.xlane.f32.xlu0 %v1044
    %v1046 = vpop.xlane.xlu0 %1045
    %v1047 = vsel %vm269, %v1043, -inf
    %1048 = vmax.xlane.f32.xlu0 %v1047
    %v1049 = vpop.xlane.xlu0 %1048
    %v1050 = vsub.f32 %v1042, %v1046
    %v1051 = vsub.f32 %v1043, %v1049
    %v1052 = vmul.f32 %v1050, 1.442695
    %v1053 = vpow.pop %v1052
    %v1054 = vmul.f32 %v1051, 1.442695
    %v1055 = vpow.pop %v1054
    %v1056 = vsel %vm269, %v1053, 0.0
    %1057 = vadd.xlane.f32.xlu0 %v1056
    %v1058 = vpop.xlane.xlu0 %1057
    %v1059 = vsel %vm269, %v1055, 0.0
    %1060 = vadd.xlane.f32.xlu0 %v1059
    %v1061 = vpop.xlane.xlu0 %1060
    %v1062 = vrcp.pop %v1058
    %v1063 = vrcp.pop %v1061
    %v1064 = vmul.f32 %v1053, %v1062
    %v1065 = vmul.f32 %v1055, %v1063
    %v1066 = vpack.c.bf16 %v1064, %v1064
    %v1067 = vpack.c.bf16 %v1065, %v1065
    %1068 = vrot.lane.b32.xlu0 %v264, 40
    %v1069 = vpop.permute.xlu0 %1068
    %v1071 = vsel %vm269, %v1066, 0
    %v1074 = vsel %vm400, %v1069, 0
    %1076 = vmatprep.subr.bf16.mxu0 0
    %1077 = vmatpush1.bf16.msra.mxu0 %v1074
    %1078 = vmatprep.subr.bf16.mxu0 0
    %1079 = vmatpush1.bf16.msra.mxu0 0
    %1080 = vmatprep.subr.bf16.mxu0 0
    %1081 = vmatpush1.bf16.msra.mxu0 0
    %1082 = vmatprep.subr.bf16.mxu0 0
    %1083 = vmatpush1.bf16.msra.mxu0 0
    %1084 = vmatprep.subr.bf16.mxu0 0
    %1085 = vmatpush1.bf16.msra.mxu0 0
    %1086 = vmatprep.subr.bf16.mxu0 0
    %1087 = vmatpush1.bf16.msra.mxu0 0
    %1088 = vmatprep.subr.bf16.mxu0 0
    %1089 = vmatpush1.bf16.msra.mxu0 0
    %1090 = vmatprep.subr.bf16.mxu0 0
    %1091 = vmatpush1.bf16.msra.mxu0 0
    %1092 = vmatprep.subr.bf16.mxu0 0
    %1093 = vmatpush1.bf16.msra.mxu0 0
    %1094 = vmatprep.subr.bf16.mxu0 0
    %1095 = vmatpush1.bf16.msra.mxu0 0
    %1096 = vmatprep.subr.bf16.mxu0 0
    %1097 = vmatpush1.bf16.msra.mxu0 0
    %1098 = vmatprep.subr.bf16.mxu0 0
    %1099 = vmatpush1.bf16.msra.mxu0 0
    %1100 = vmatprep.subr.bf16.mxu0 0
    %1101 = vmatpush1.bf16.msra.mxu0 0
    %1102 = vmatprep.subr.bf16.mxu0 0
    %1103 = vmatpush1.bf16.msra.mxu0 0
    %1104 = vmatprep.subr.bf16.mxu0 0
    %1105 = vmatpush1.bf16.msra.mxu0 0
    %1106 = vmatprep.subr.bf16.mxu0 0
    %1107 = vmatpush1.bf16.msra.mxu0 0
    %1108 = vmatprep.mubr.bf16.mxu0 0
    %1109 = vmatmul.mubr.bf16.gmra.mrb[0].mxu0 %v1071
    %v1110 = vpop.f32.mrb[0].mxu0
    %v1111 = vadd.f32 0.0, %v1110
    %v1112 = vpop.f32.mrb[0].mxu0
    %v1113 = vpop.f32.mrb[0].mxu0
    %v1114 = vpop.f32.mrb[0].mxu0
    %1115 = vdwg.mxu0
    %1116 = vrot.lane.b32.xlu0 %v265, 40
    %v1117 = vpop.permute.xlu0 %1116
    %v1119 = vsel %vm269, %v1067, 0
    %v1122 = vsel %vm400, %v1117, 0
    %1124 = vmatprep.subr.bf16.mxu0 0
    %1125 = vmatpush1.bf16.msra.mxu0 %v1122
    %1126 = vmatprep.subr.bf16.mxu0 0
    %1127 = vmatpush1.bf16.msra.mxu0 0
    %1128 = vmatprep.subr.bf16.mxu0 0
    %1129 = vmatpush1.bf16.msra.mxu0 0
    %1130 = vmatprep.subr.bf16.mxu0 0
    %1131 = vmatpush1.bf16.msra.mxu0 0
    %1132 = vmatprep.subr.bf16.mxu0 0
    %1133 = vmatpush1.bf16.msra.mxu0 0
    %1134 = vmatprep.subr.bf16.mxu0 0
    %1135 = vmatpush1.bf16.msra.mxu0 0
    %1136 = vmatprep.subr.bf16.mxu0 0
    %1137 = vmatpush1.bf16.msra.mxu0 0
    %1138 = vmatprep.subr.bf16.mxu0 0
    %1139 = vmatpush1.bf16.msra.mxu0 0
    %1140 = vmatprep.subr.bf16.mxu0 0
    %1141 = vmatpush1.bf16.msra.mxu0 0
    %1142 = vmatprep.subr.bf16.mxu0 0
    %1143 = vmatpush1.bf16.msra.mxu0 0
    %1144 = vmatprep.subr.bf16.mxu0 0
    %1145 = vmatpush1.bf16.msra.mxu0 0
    %1146 = vmatprep.subr.bf16.mxu0 0
    %1147 = vmatpush1.bf16.msra.mxu0 0
    %1148 = vmatprep.subr.bf16.mxu0 0
    %1149 = vmatpush1.bf16.msra.mxu0 0
    %1150 = vmatprep.subr.bf16.mxu0 0
    %1151 = vmatpush1.bf16.msra.mxu0 0
    %1152 = vmatprep.subr.bf16.mxu0 0
    %1153 = vmatpush1.bf16.msra.mxu0 0
    %1154 = vmatprep.subr.bf16.mxu0 0
    %1155 = vmatpush1.bf16.msra.mxu0 0
    %1156 = vmatprep.mubr.bf16.mxu0 0
    %1157 = vmatmul.mubr.bf16.gmra.mrb[0].mxu0 %v1119
    %v1158 = vpop.f32.mrb[0].mxu0
    %v1159 = vadd.f32 0.0, %v1158
    %v1160 = vpop.f32.mrb[0].mxu0
    %v1161 = vpop.f32.mrb[0].mxu0
    %v1162 = vpop.f32.mrb[0].mxu0
    %1163 = vdwg.mxu0
    %1166 = vrot.lane.b32.xlu0 %v663, 8
    %v1167 = vpop.permute.xlu0 %1166
    %1168 = vrot.lane.b32.xlu0 %v711, 8
    %v1169 = vpop.permute.xlu0 %1168
    %1174 = vrot.lane.b32.xlu0 %v887, 16
    %v1175 = vpop.permute.xlu0 %1174
    %1176 = vrot.lane.b32.xlu0 %v935, 16
    %v1177 = vpop.permute.xlu0 %1176
    %1182 = vrot.lane.b32.xlu0 %v1111, 24
    %v1183 = vpop.permute.xlu0 %1182
    %1184 = vrot.lane.b32.xlu0 %v1159, 24
    %v1185 = vpop.permute.xlu0 %1184
    %v1188 = vsel %vm269, %v439, %v1167
    %v1189 = vsel %vm269, %v487, %v1169
    %vm1190 = vcmask 130048
    %v1191 = vsel %vm1190, %v1188, %v1175
    %v1192 = vsel %vm1190, %v1189, %v1177
    %vm1193 = vcmask 195584
    %v1194 = vsel %vm1193, %v1191, %v1183
    %v1195 = vsel %vm1193, %v1192, %v1185
    %v1196 = vld [vmem:[%s5] sm:$0xf]
    %v1197 = vld [vmem:[%s5 + $0x4] sm:$0xf]
    %v1198 = vld [vmem:[%s5 + $0x8] sm:$0xf]
    %v1199 = vld [vmem:[%s5 + $0xc] sm:$0xf]
    %v1200 = vpack.c.bf16 %v1195, %v1194
    %v1201 = vld [vmem:[%s6] sm:$0x1]
    %v1203 = vlaneseq
    %v1204 = vshrl.u32 %v1203, 7
    %v1205 = vsub.s32 0, %v1204
    %v1206 = vrot.slane %v1201, %v1205
    %v1212 = vunpack.c.l.b16 %v1196
    %v1213 = vunpack.c.l.b16 %v1197
    %v1214 = vunpack.c.l.b16 %v1198
    %v1215 = vunpack.c.l.b16 %v1199
    %v1216 = vpack.c.b16 %v1213, %v1212
    %v1217 = vpack.c.b16 %v1215, %v1214
    %v1221 = vsel %vm152, %v1200, 0
    %1223 = vmatprep.subr.bf16.mxu0 0
    %1224 = vmatpush1.bf16.msra.mxu0 %v1216
    %1225 = vmatprep.subr.bf16.mxu0 0
    %1226 = vmatpush1.bf16.msra.mxu0 %v1217
    %1227 = vmatprep.subr.bf16.mxu0 0
    %1228 = vmatpush1.bf16.msra.mxu0 0
    %1229 = vmatprep.subr.bf16.mxu0 0
    %1230 = vmatpush1.bf16.msra.mxu0 0
    %1231 = vmatprep.subr.bf16.mxu0 0
    %1232 = vmatpush1.bf16.msra.mxu0 0
    %1233 = vmatprep.subr.bf16.mxu0 0
    %1234 = vmatpush1.bf16.msra.mxu0 0
    %1235 = vmatprep.subr.bf16.mxu0 0
    %1236 = vmatpush1.bf16.msra.mxu0 0
    %1237 = vmatprep.subr.bf16.mxu0 0
    %1238 = vmatpush1.bf16.msra.mxu0 0
    %1239 = vmatprep.subr.bf16.mxu0 0
    %1240 = vmatpush1.bf16.msra.mxu0 0
    %1241 = vmatprep.subr.bf16.mxu0 0
    %1242 = vmatpush1.bf16.msra.mxu0 0
    %1243 = vmatprep.subr.bf16.mxu0 0
    %1244 = vmatpush1.bf16.msra.mxu0 0
    %1245 = vmatprep.subr.bf16.mxu0 0
    %1246 = vmatpush1.bf16.msra.mxu0 0
    %1247 = vmatprep.subr.bf16.mxu0 0
    %1248 = vmatpush1.bf16.msra.mxu0 0
    %1249 = vmatprep.subr.bf16.mxu0 0
    %1250 = vmatpush1.bf16.msra.mxu0 0
    %1251 = vmatprep.subr.bf16.mxu0 0
    %1252 = vmatpush1.bf16.msra.mxu0 0
    %1253 = vmatprep.subr.bf16.mxu0 0
    %1254 = vmatpush1.bf16.msra.mxu0 0
    %1255 = vmatprep.mubr.bf16.mxu0 0
    %1256 = vmatmul.mubr.bf16.gmra.mrb[0].mxu0 %v1221
    %v1257 = vpop.f32.mrb[0].mxu0
    %v1258 = vadd.f32 %v1206, %v1257
    %v1259 = vpop.f32.mrb[0].mxu0
    %v1260 = vpop.f32.mrb[0].mxu0
    %v1261 = vadd.f32 %v1206, %v1260
    %v1262 = vpop.f32.mrb[0].mxu0
    %1263 = vdwg.mxu0
    %v1264 = vadd.f32 %v139, %v1258
    %v1265 = vadd.f32 %v140, %v1261
    %v1266 = vsel %vm152, %v1264, 0.0
    %1267 = vadd.xlane.f32.xlu0 %v1266
    %v1268 = vpop.xlane.xlu0 %1267
    %v1269 = vsel %vm152, %v1265, 0.0
    %1270 = vadd.xlane.f32.xlu0 %v1269
    %v1271 = vpop.xlane.xlu0 %1270
    %v1272 = vmul.f32 %v1268, %v159
    %v1273 = vmul.f32 %v1271, %v159
    %v1274 = vsub.f32 %v1264, %v1272
    %v1275 = vsub.f32 %v1265, %v1273
    %v1276 = vmul.f32 %v1274, %v1274
    %v1277 = vmul.f32 %v1275, %v1275
    %v1278 = vsel %vm152, %v1276, 0.0
    %1279 = vadd.xlane.f32.xlu0 %v1278
    %v1280 = vpop.xlane.xlu0 %1279
    %v1281 = vsel %vm152, %v1277, 0.0
    %1282 = vadd.xlane.f32.xlu0 %v1281
    %v1283 = vpop.xlane.xlu0 %1282
    %v1284 = vmul.f32 %v1280, 0.032258064
    %v1285 = vmul.f32 %v1283, 0.032258064
    %v1286 = vrsqrt.pop %v1284
    %v1287 = vmul.f32 %v1284, %v1286
    %vm1288 = vcmp.eq.f32.partialorder %v1284, inf
    %v1289 = vsel %vm1288, %v1284, %v1287
    %vm1290 = vcmp.eq.f32.partialorder %v1284, 0.0
    %v1291 = vand.u32 %v1284, 2147483648
    %v1292 = vsel %vm1290, %v1291, %v1289
    %v1293 = vrsqrt.pop %v1285
    %v1294 = vmul.f32 %v1285, %v1293
    %vm1295 = vcmp.eq.f32.partialorder %v1285, inf
    %v1296 = vsel %vm1295, %v1285, %v1294
    %vm1297 = vcmp.eq.f32.partialorder %v1285, 0.0
    %v1298 = vand.u32 %v1285, 2147483648
    %v1299 = vsel %vm1297, %v1298, %v1296
    %v1300 = vadd.f32 %v1292, 1e-06
    %v1301 = vadd.f32 %v1299, 1e-06
    %v1302 = vrcp.pop %v1300
    %v1303 = vrcp.pop %v1301
    %v1304 = vmul.f32 %v1274, %v1302
    %v1305 = vmul.f32 %v1275, %v1303
    %v1306 = vadd.f32 %v1304, 0.0
    %v1307 = vadd.f32 %v1305, 0.0
    %v1308 = vld [vmem:[#allocation2] sm:$0xf]
    %v1309 = vld [vmem:[#allocation2 + $0x4] sm:$0xf]
    %v1310 = vld [vmem:[#allocation2 + $0x8] sm:$0xf]
    %v1311 = vld [vmem:[#allocation2 + $0xc] sm:$0xf]
    %v1312 = vpack.c.bf16 %v1307, %v1306
    %v1313 = vld [vmem:[#allocation5] sm:$0x1]
    %v1315 = vlaneseq
    %v1316 = vshrl.u32 %v1315, 7
    %v1317 = vsub.s32 0, %v1316
    %v1318 = vrot.slane %v1313, %v1317
    %v1324 = vunpack.c.l.b16 %v1308
    %v1325 = vunpack.c.l.b16 %v1309
    %v1326 = vunpack.c.l.b16 %v1310
    %v1327 = vunpack.c.l.b16 %v1311
    %v1328 = vpack.c.b16 %v1325, %v1324
    %v1329 = vpack.c.b16 %v1327, %v1326
    %v1333 = vsel %vm152, %v1312, 0
    %1335 = vmatprep.subr.bf16.mxu0 0
    %1336 = vmatpush1.bf16.msra.mxu0 %v1328
    %1337 = vmatprep.subr.bf16.mxu0 0
    %1338 = vmatpush1.bf16.msra.mxu0 %v1329
    %1339 = vmatprep.subr.bf16.mxu0 0
    %1340 = vmatpush1.bf16.msra.mxu0 0
    %1341 = vmatprep.subr.bf16.mxu0 0
    %1342 = vmatpush1.bf16.msra.mxu0 0
    %1343 = vmatprep.subr.bf16.mxu0 0
    %1344 = vmatpush1.bf16.msra.mxu0 0
    %1345 = vmatprep.subr.bf16.mxu0 0
    %1346 = vmatpush1.bf16.msra.mxu0 0
    %1347 = vmatprep.subr.bf16.mxu0 0
    %1348 = vmatpush1.bf16.msra.mxu0 0
    %1349 = vmatprep.subr.bf16.mxu0 0
    %1350 = vmatpush1.bf16.msra.mxu0 0
    %1351 = vmatprep.subr.bf16.mxu0 0
    %1352 = vmatpush1.bf16.msra.mxu0 0
    %1353 = vmatprep.subr.bf16.mxu0 0
    %1354 = vmatpush1.bf16.msra.mxu0 0
    %1355 = vmatprep.subr.bf16.mxu0 0
    %1356 = vmatpush1.bf16.msra.mxu0 0
    %1357 = vmatprep.subr.bf16.mxu0 0
    %1358 = vmatpush1.bf16.msra.mxu0 0
    %1359 = vmatprep.subr.bf16.mxu0 0
    %1360 = vmatpush1.bf16.msra.mxu0 0
    %1361 = vmatprep.subr.bf16.mxu0 0
    %1362 = vmatpush1.bf16.msra.mxu0 0
    %1363 = vmatprep.subr.bf16.mxu0 0
    %1364 = vmatpush1.bf16.msra.mxu0 0
    %1365 = vmatprep.subr.bf16.mxu0 0
    %1366 = vmatpush1.bf16.msra.mxu0 0
    %1367 = vmatprep.mubr.bf16.mxu0 0
    %1368 = vmatmul.mubr.bf16.gmra.mrb[0].mxu0 %v1333
    %v1369 = vpop.f32.mrb[0].mxu0
    %v1370 = vadd.f32 %v1318, %v1369
    %v1371 = vpop.f32.mrb[0].mxu0
    %v1372 = vpop.f32.mrb[0].mxu0
    %v1373 = vadd.f32 %v1318, %v1372
    %v1374 = vpop.f32.mrb[0].mxu0
    %1375 = vdwg.mxu0
    %v1376 = vpack.c.bf16 %v142, %v141
    %1377 = vrot.lane.b32.xlu0 %v1328, 96
    %v1378 = vpop.permute.xlu0 %1377
    %1379 = vrot.lane.b32.xlu0 %v1329, 96
    %v1380 = vpop.permute.xlu0 %1379
    %1383 = vrot.lane.b32.xlu0 %v1318, 96
    %v1384 = vpop.permute.xlu0 %1383
    %v1387 = vsel %vm152, %v1376, 0
    %1389 = vmatprep.subr.bf16.mxu0 0
    %1390 = vmatpush1.bf16.msra.mxu0 %v1378
    %1391 = vmatprep.subr.bf16.mxu0 0
    %1392 = vmatpush1.bf16.msra.mxu0 %v1380
    %1393 = vmatprep.subr.bf16.mxu0 0
    %1394 = vmatpush1.bf16.msra.mxu0 0
    %1395 = vmatprep.subr.bf16.mxu0 0
    %1396 = vmatpush1.bf16.msra.mxu0 0
    %1397 = vmatprep.subr.bf16.mxu0 0
    %1398 = vmatpush1.bf16.msra.mxu0 0
    %1399 = vmatprep.subr.bf16.mxu0 0
    %1400 = vmatpush1.bf16.msra.mxu0 0
    %1401 = vmatprep.subr.bf16.mxu0 0
    %1402 = vmatpush1.bf16.msra.mxu0 0
    %1403 = vmatprep.subr.bf16.mxu0 0
    %1404 = vmatpush1.bf16.msra.mxu0 0
    %1405 = vmatprep.subr.bf16.mxu0 0
    %1406 = vmatpush1.bf16.msra.mxu0 0
    %1407 = vmatprep.subr.bf16.mxu0 0
    %1408 = vmatpush1.bf16.msra.mxu0 0
    %1409 = vmatprep.subr.bf16.mxu0 0
    %1410 = vmatpush1.bf16.msra.mxu0 0
    %1411 = vmatprep.subr.bf16.mxu0 0
    %1412 = vmatpush1.bf16.msra.mxu0 0
    %1413 = vmatprep.subr.bf16.mxu0 0
    %1414 = vmatpush1.bf16.msra.mxu0 0
    %1415 = vmatprep.subr.bf16.mxu0 0
    %1416 = vmatpush1.bf16.msra.mxu0 0
    %1417 = vmatprep.subr.bf16.mxu0 0
    %1418 = vmatpush1.bf16.msra.mxu0 0
    %1419 = vmatprep.subr.bf16.mxu0 0
    %1420 = vmatpush1.bf16.msra.mxu0 0
    %1421 = vmatprep.mubr.bf16.mxu0 0
    %1422 = vmatmul.mubr.bf16.gmra.mrb[0].mxu0 %v1387
    %v1423 = vpop.f32.mrb[0].mxu0
    %v1424 = vadd.f32 %v1384, %v1423
    %v1425 = vpop.f32.mrb[0].mxu0
    %v1426 = vpop.f32.mrb[0].mxu0
    %v1427 = vadd.f32 %v1384, %v1426
    %v1428 = vpop.f32.mrb[0].mxu0
    %1429 = vdwg.mxu0
    %v1430 = vpack.c.bf16 %v1370, %v1370
    %v1431 = vpack.c.bf16 %v1373, %v1373
    %v1432 = vpack.c.bf16 %v1424, %v1424
    %v1433 = vpack.c.bf16 %v1427, %v1427
    %v1435 = vsel %vm269, %v1430, 0
    %v1438 = vsel %vm269, %v1432, 0
    %1440 = vmatprep.subr.bf16.mxu0 0
    %1441 = vmatpush1.bf16.xpose.msra.mxu0 %v1438
    %1442 = vmatprep.subr.bf16.mxu0 0
    %1443 = vmatpush1.bf16.xpose.msra.mxu0 0
    %1444 = vmatprep.subr.bf16.mxu0 0
    %1445 = vmatpush1.bf16.xpose.msra.mxu0 0
    %1446 = vmatprep.subr.bf16.mxu0 0
    %1447 = vmatpush1.bf16.xpose.msra.mxu0 0
    %1448 = vmatprep.subr.bf16.mxu0 0
    %1449 = vmatpush1.bf16.xpose.msra.mxu0 0
    %1450 = vmatprep.subr.bf16.mxu0 0
    %1451 = vmatpush1.bf16.xpose.msra.mxu0 0
    %1452 = vmatprep.subr.bf16.mxu0 0
    %1453 = vmatpush1.bf16.xpose.msra.mxu0 0
    %1454 = vmatprep.subr.bf16.mxu0 0
    %1455 = vmatpush1.bf16.xpose.msra.mxu0 0
    %1456 = vmatprep.subr.bf16.mxu0 0
    %1457 = vmatpush1.bf16.xpose.msra.mxu0 0
    %1458 = vmatprep.subr.bf16.mxu0 0
    %1459 = vmatpush1.bf16.xpose.msra.mxu0 0
    %1460 = vmatprep.subr.bf16.mxu0 0
    %1461 = vmatpush1.bf16.xpose.msra.mxu0 0
    %1462 = vmatprep.subr.bf16.mxu0 0
    %1463 = vmatpush1.bf16.xpose.msra.mxu0 0
    %1464 = vmatprep.subr.bf16.mxu0 0
    %1465 = vmatpush1.bf16.xpose.msra.mxu0 0
    %1466 = vmatprep.subr.bf16.mxu0 0
    %1467 = vmatpush1.bf16.xpose.msra.mxu0 0
    %1468 = vmatprep.subr.bf16.mxu0 0
    %1469 = vmatpush1.bf16.xpose.msra.mxu0 0
    %1470 = vmatprep.subr.bf16.mxu0 0
    %1471 = vmatpush1.bf16.xpose.msra.mxu0 0
    %1472 = vmatprep.mubr.bf16.mxu0 0
    %1473 = vmatmul.mubr.bf16.gmra.mrb[0].mxu0 %v1435
    %v1474 = vpop.f32.mrb[0].mxu0
    %v1475 = vadd.f32 0.0, %v1474
    %v1476 = vpop.f32.mrb[0].mxu0
    %v1477 = vpop.f32.mrb[0].mxu0
    %v1478 = vpop.f32.mrb[0].mxu0
    %1479 = vdwg.mxu0
    %v1481 = vsel %vm269, %v1431, 0
    %v1484 = vsel %vm269, %v1433, 0
    %1486 = vmatprep.subr.bf16.mxu0 0
    %1487 = vmatpush1.bf16.xpose.msra.mxu0 %v1484
    %1488 = vmatprep.subr.bf16.mxu0 0
    %1489 = vmatpush1.bf16.xpose.msra.mxu0 0
    %1490 = vmatprep.subr.bf16.mxu0 0
    %1491 = vmatpush1.bf16.xpose.msra.mxu0 0
    %1492 = vmatprep.subr.bf16.mxu0 0
    %1493 = vmatpush1.bf16.xpose.msra.mxu0 0
    %1494 = vmatprep.subr.bf16.mxu0 0
    %1495 = vmatpush1.bf16.xpose.msra.mxu0 0
    %1496 = vmatprep.subr.bf16.mxu0 0
    %1497 = vmatpush1.bf16.xpose.msra.mxu0 0
    %1498 = vmatprep.subr.bf16.mxu0 0
    %1499 = vmatpush1.bf16.xpose.msra.mxu0 0
    %1500 = vmatprep.subr.bf16.mxu0 0
    %1501 = vmatpush1.bf16.xpose.msra.mxu0 0
    %1502 = vmatprep.subr.bf16.mxu0 0
    %1503 = vmatpush1.bf16.xpose.msra.mxu0 0
    %1504 = vmatprep.subr.bf16.mxu0 0
    %1505 = vmatpush1.bf16.xpose.msra.mxu0 0
    %1506 = vmatprep.subr.bf16.mxu0 0
    %1507 = vmatpush1.bf16.xpose.msra.mxu0 0
    %1508 = vmatprep.subr.bf16.mxu0 0
    %1509 = vmatpush1.bf16.xpose.msra.mxu0 0
    %1510 = vmatprep.subr.bf16.mxu0 0
    %1511 = vmatpush1.bf16.xpose.msra.mxu0 0
    %1512 = vmatprep.subr.bf16.mxu0 0
    %1513 = vmatpush1.bf16.xpose.msra.mxu0 0
    %1514 = vmatprep.subr.bf16.mxu0 0
    %1515 = vmatpush1.bf16.xpose.msra.mxu0 0
    %1516 = vmatprep.subr.bf16.mxu0 0
    %1517 = vmatpush1.bf16.xpose.msra.mxu0 0
    %1518 = vmatprep.mubr.bf16.mxu0 0
    %1519 = vmatmul.mubr.bf16.gmra.mrb[0].mxu0 %v1481
    %v1520 = vpop.f32.mrb[0].mxu0
    %v1521 = vadd.f32 0.0, %v1520
    %v1522 = vpop.f32.mrb[0].mxu0
    %v1523 = vpop.f32.mrb[0].mxu0
    %v1524 = vpop.f32.mrb[0].mxu0
    %1525 = vdwg.mxu0
    %v1526 = vmul.f32 %v1475, 0.35355338
    %v1527 = vmul.f32 %v1521, 0.35355338
    %v1528 = vsel %vm150, 1, 0
    %v1529 = vsel %vm151, 1, 0
    %v1530 = vlaneseq
    %v1531 = vshrl.u32 %v1530, 7
    %v1532 = vsub.s32 0, %v1531
    %v1533 = vrot.slane %v1528, %v1532
    %v1534 = vlaneseq
    %v1535 = vshrl.u32 %v1534, 7
    %v1536 = vsub.s32 0, %v1535
    %v1537 = vrot.slane %v1529, %v1536
    %vm1538 = vcmp.eq.s32.totalorder %v1533, 1
    %vm1539 = vcmp.eq.s32.totalorder %v1537, 1
    %v1540 = vsel %vm1538, %v1526, -1e+20
    %v1541 = vsel %vm1539, %v1527, -1e+20
    %v1542 = vsel %vm269, %v1540, -inf
    %1543 = vmax.xlane.f32.xlu0 %v1542
    %v1544 = vpop.xlane.xlu0 %1543
    %v1545 = vsel %vm269, %v1541, -inf
    %1546 = vmax.xlane.f32.xlu0 %v1545
    %v1547 = vpop.xlane.xlu0 %1546
    %v1548 = vsub.f32 %v1540, %v1544
    %v1549 = vsub.f32 %v1541, %v1547
    %v1550 = vmul.f32 %v1548, 1.442695
    %v1551 = vpow.pop %v1550
    %v1552 = vmul.f32 %v1549, 1.442695
    %v1553 = vpow.pop %v1552
    %v1554 = vsel %vm269, %v1551, 0.0
    %1555 = vadd.xlane.f32.xlu0 %v1554
    %v1556 = vpop.xlane.xlu0 %1555
    %v1557 = vsel %vm269, %v1553, 0.0
    %1558 = vadd.xlane.f32.xlu0 %v1557
    %v1559 = vpop.xlane.xlu0 %1558
    %v1560 = vrcp.pop %v1556
    %v1561 = vrcp.pop %v1559
    %v1562 = vmul.f32 %v1551, %v1560
    %v1563 = vmul.f32 %v1553, %v1561
    %v1564 = vpack.c.bf16 %v1562, %v1562
    %v1565 = vpack.c.bf16 %v1563, %v1563
    %1567 = vrot.lane.b32.xlu0 %v1432, 96
    %v1568 = vpop.permute.xlu0 %1567
    %v1570 = vsel %vm269, %v1564, 0
    %v1573 = vsel %vm400, %v1568, 0
    %1575 = vmatprep.subr.bf16.mxu0 0
    %1576 = vmatpush1.bf16.msra.mxu0 %v1573
    %1577 = vmatprep.subr.bf16.mxu0 0
    %1578 = vmatpush1.bf16.msra.mxu0 0
    %1579 = vmatprep.subr.bf16.mxu0 0
    %1580 = vmatpush1.bf16.msra.mxu0 0
    %1581 = vmatprep.subr.bf16.mxu0 0
    %1582 = vmatpush1.bf16.msra.mxu0 0
    %1583 = vmatprep.subr.bf16.mxu0 0
    %1584 = vmatpush1.bf16.msra.mxu0 0
    %1585 = vmatprep.subr.bf16.mxu0 0
    %1586 = vmatpush1.bf16.msra.mxu0 0
    %1587 = vmatprep.subr.bf16.mxu0 0
    %1588 = vmatpush1.bf16.msra.mxu0 0
    %1589 = vmatprep.subr.bf16.mxu0 0
    %1590 = vmatpush1.bf16.msra.mxu0 0
    %1591 = vmatprep.subr.bf16.mxu0 0
    %1592 = vmatpush1.bf16.msra.mxu0 0
    %1593 = vmatprep.subr.bf16.mxu0 0
    %1594 = vmatpush1.bf16.msra.mxu0 0
    %1595 = vmatprep.subr.bf16.mxu0 0
    %1596 = vmatpush1.bf16.msra.mxu0 0
    %1597 = vmatprep.subr.bf16.mxu0 0
    %1598 = vmatpush1.bf16.msra.mxu0 0
    %1599 = vmatprep.subr.bf16.mxu0 0
    %1600 = vmatpush1.bf16.msra.mxu0 0
    %1601 = vmatprep.subr.bf16.mxu0 0
    %1602 = vmatpush1.bf16.msra.mxu0 0
    %1603 = vmatprep.subr.bf16.mxu0 0
    %1604 = vmatpush1.bf16.msra.mxu0 0
    %1605 = vmatprep.subr.bf16.mxu0 0
    %1606 = vmatpush1.bf16.msra.mxu0 0
    %1607 = vmatprep.mubr.bf16.mxu0 0
    %1608 = vmatmul.mubr.bf16.gmra.mrb[0].mxu0 %v1570
    %v1609 = vpop.f32.mrb[0].mxu0
    %v1610 = vadd.f32 0.0, %v1609
    %v1611 = vpop.f32.mrb[0].mxu0
    %v1612 = vpop.f32.mrb[0].mxu0
    %v1613 = vpop.f32.mrb[0].mxu0
    %1614 = vdwg.mxu0
    %1616 = vrot.lane.b32.xlu0 %v1433, 96
    %v1617 = vpop.permute.xlu0 %1616
    %v1619 = vsel %vm269, %v1565, 0
    %v1622 = vsel %vm400, %v1617, 0
    %1624 = vmatprep.subr.bf16.mxu0 0
    %1625 = vmatpush1.bf16.msra.mxu0 %v1622
    %1626 = vmatprep.subr.bf16.mxu0 0
    %1627 = vmatpush1.bf16.msra.mxu0 0
    %1628 = vmatprep.subr.bf16.mxu0 0
    %1629 = vmatpush1.bf16.msra.mxu0 0
    %1630 = vmatprep.subr.bf16.mxu0 0
    %1631 = vmatpush1.bf16.msra.mxu0 0
    %1632 = vmatprep.subr.bf16.mxu0 0
    %1633 = vmatpush1.bf16.msra.mxu0 0
    %1634 = vmatprep.subr.bf16.mxu0 0
    %1635 = vmatpush1.bf16.msra.mxu0 0
    %1636 = vmatprep.subr.bf16.mxu0 0
    %1637 = vmatpush1.bf16.msra.mxu0 0
    %1638 = vmatprep.subr.bf16.mxu0 0
    %1639 = vmatpush1.bf16.msra.mxu0 0
    %1640 = vmatprep.subr.bf16.mxu0 0
    %1641 = vmatpush1.bf16.msra.mxu0 0
    %1642 = vmatprep.subr.bf16.mxu0 0
    %1643 = vmatpush1.bf16.msra.mxu0 0
    %1644 = vmatprep.subr.bf16.mxu0 0
    %1645 = vmatpush1.bf16.msra.mxu0 0
    %1646 = vmatprep.subr.bf16.mxu0 0
    %1647 = vmatpush1.bf16.msra.mxu0 0
    %1648 = vmatprep.subr.bf16.mxu0 0
    %1649 = vmatpush1.bf16.msra.mxu0 0
    %1650 = vmatprep.subr.bf16.mxu0 0
    %1651 = vmatpush1.bf16.msra.mxu0 0
    %1652 = vmatprep.subr.bf16.mxu0 0
    %1653 = vmatpush1.bf16.msra.mxu0 0
    %1654 = vmatprep.subr.bf16.mxu0 0
    %1655 = vmatpush1.bf16.msra.mxu0 0
    %1656 = vmatprep.mubr.bf16.mxu0 0
    %1657 = vmatmul.mubr.bf16.gmra.mrb[0].mxu0 %v1619
    %v1658 = vpop.f32.mrb[0].mxu0
    %v1659 = vadd.f32 0.0, %v1658
    %v1660 = vpop.f32.mrb[0].mxu0
    %v1661 = vpop.f32.mrb[0].mxu0
    %v1662 = vpop.f32.mrb[0].mxu0
    %1663 = vdwg.mxu0
    %1665 = vrot.lane.b32.xlu0 %v1430, 120
    %v1666 = vpop.permute.xlu0 %1665
    %1667 = vrot.lane.b32.xlu0 %v1432, 120
    %v1668 = vpop.permute.xlu0 %1667
    %v1670 = vsel %vm269, %v1666, 0
    %v1673 = vsel %vm269, %v1668, 0
    %1675 = vmatprep.subr.bf16.mxu0 0
    %1676 = vmatpush1.bf16.xpose.msra.mxu0 %v1673
    %1677 = vmatprep.subr.bf16.mxu0 0
    %1678 = vmatpush1.bf16.xpose.msra.mxu0 0
    %1679 = vmatprep.subr.bf16.mxu0 0
    %1680 = vmatpush1.bf16.xpose.msra.mxu0 0
    %1681 = vmatprep.subr.bf16.mxu0 0
    %1682 = vmatpush1.bf16.xpose.msra.mxu0 0
    %1683 = vmatprep.subr.bf16.mxu0 0
    %1684 = vmatpush1.bf16.xpose.msra.mxu0 0
    %1685 = vmatprep.subr.bf16.mxu0 0
    %1686 = vmatpush1.bf16.xpose.msra.mxu0 0
    %1687 = vmatprep.subr.bf16.mxu0 0
    %1688 = vmatpush1.bf16.xpose.msra.mxu0 0
    %1689 = vmatprep.subr.bf16.mxu0 0
    %1690 = vmatpush1.bf16.xpose.msra.mxu0 0
    %1691 = vmatprep.subr.bf16.mxu0 0
    %1692 = vmatpush1.bf16.xpose.msra.mxu0 0
    %1693 = vmatprep.subr.bf16.mxu0 0
    %1694 = vmatpush1.bf16.xpose.msra.mxu0 0
    %1695 = vmatprep.subr.bf16.mxu0 0
    %1696 = vmatpush1.bf16.xpose.msra.mxu0 0
    %1697 = vmatprep.subr.bf16.mxu0 0
    %1698 = vmatpush1.bf16.xpose.msra.mxu0 0
    %1699 = vmatprep.subr.bf16.mxu0 0
    %1700 = vmatpush1.bf16.xpose.msra.mxu0 0
    %1701 = vmatprep.subr.bf16.mxu0 0
    %1702 = vmatpush1.bf16.xpose.msra.mxu0 0
    %1703 = vmatprep.subr.bf16.mxu0 0
    %1704 = vmatpush1.bf16.xpose.msra.mxu0 0
    %1705 = vmatprep.subr.bf16.mxu0 0
    %1706 = vmatpush1.bf16.xpose.msra.mxu0 0
    %1707 = vmatprep.mubr.bf16.mxu0 0
    %1708 = vmatmul.mubr.bf16.gmra.mrb[0].mxu0 %v1670
    %v1709 = vpop.f32.mrb[0].mxu0
    %v1710 = vadd.f32 0.0, %v1709
    %v1711 = vpop.f32.mrb[0].mxu0
    %v1712 = vpop.f32.mrb[0].mxu0
    %v1713 = vpop.f32.mrb[0].mxu0
    %1714 = vdwg.mxu0
    %1716 = vrot.lane.b32.xlu0 %v1431, 120
    %v1717 = vpop.permute.xlu0 %1716
    %1718 = vrot.lane.b32.xlu0 %v1433, 120
    %v1719 = vpop.permute.xlu0 %1718
    %v1721 = vsel %vm269, %v1717, 0
    %v1724 = vsel %vm269, %v1719, 0
    %1726 = vmatprep.subr.bf16.mxu0 0
    %1727 = vmatpush1.bf16.xpose.msra.mxu0 %v1724
    %1728 = vmatprep.subr.bf16.mxu0 0
    %1729 = vmatpush1.bf16.xpose.msra.mxu0 0
    %1730 = vmatprep.subr.bf16.mxu0 0
    %1731 = vmatpush1.bf16.xpose.msra.mxu0 0
    %1732 = vmatprep.subr.bf16.mxu0 0
    %1733 = vmatpush1.bf16.xpose.msra.mxu0 0
    %1734 = vmatprep.subr.bf16.mxu0 0
    %1735 = vmatpush1.bf16.xpose.msra.mxu0 0
    %1736 = vmatprep.subr.bf16.mxu0 0
    %1737 = vmatpush1.bf16.xpose.msra.mxu0 0
    %1738 = vmatprep.subr.bf16.mxu0 0
    %1739 = vmatpush1.bf16.xpose.msra.mxu0 0
    %1740 = vmatprep.subr.bf16.mxu0 0
    %1741 = vmatpush1.bf16.xpose.msra.mxu0 0
    %1742 = vmatprep.subr.bf16.mxu0 0
    %1743 = vmatpush1.bf16.xpose.msra.mxu0 0
    %1744 = vmatprep.subr.bf16.mxu0 0
    %1745 = vmatpush1.bf16.xpose.msra.mxu0 0
    %1746 = vmatprep.subr.bf16.mxu0 0
    %1747 = vmatpush1.bf16.xpose.msra.mxu0 0
    %1748 = vmatprep.subr.bf16.mxu0 0
    %1749 = vmatpush1.bf16.xpose.msra.mxu0 0
    %1750 = vmatprep.subr.bf16.mxu0 0
    %1751 = vmatpush1.bf16.xpose.msra.mxu0 0
    %1752 = vmatprep.subr.bf16.mxu0 0
    %1753 = vmatpush1.bf16.xpose.msra.mxu0 0
    %1754 = vmatprep.subr.bf16.mxu0 0
    %1755 = vmatpush1.bf16.xpose.msra.mxu0 0
    %1756 = vmatprep.subr.bf16.mxu0 0
    %1757 = vmatpush1.bf16.xpose.msra.mxu0 0
    %1758 = vmatprep.mubr.bf16.mxu0 0
    %1759 = vmatmul.mubr.bf16.gmra.mrb[0].mxu0 %v1721
    %v1760 = vpop.f32.mrb[0].mxu0
    %v1761 = vadd.f32 0.0, %v1760
    %v1762 = vpop.f32.mrb[0].mxu0
    %v1763 = vpop.f32.mrb[0].mxu0
    %v1764 = vpop.f32.mrb[0].mxu0
    %1765 = vdwg.mxu0
    %v1766 = vmul.f32 %v1710, 0.35355338
    %v1767 = vmul.f32 %v1761, 0.35355338
    %v1768 = vsel %vm1538, %v1766, -1e+20
    %v1769 = vsel %vm1539, %v1767, -1e+20
    %v1770 = vsel %vm269, %v1768, -inf
    %1771 = vmax.xlane.f32.xlu0 %v1770
    %v1772 = vpop.xlane.xlu0 %1771
    %v1773 = vsel %vm269, %v1769, -inf
    %1774 = vmax.xlane.f32.xlu0 %v1773
    %v1775 = vpop.xlane.xlu0 %1774
    %v1776 = vsub.f32 %v1768, %v1772
    %v1777 = vsub.f32 %v1769, %v1775
    %v1778 = vmul.f32 %v1776, 1.442695
    %v1779 = vpow.pop %v1778
    %v1780 = vmul.f32 %v1777, 1.442695
    %v1781 = vpow.pop %v1780
    %v1782 = vsel %vm269, %v1779, 0.0
    %1783 = vadd.xlane.f32.xlu0 %v1782
    %v1784 = vpop.xlane.xlu0 %1783
    %v1785 = vsel %vm269, %v1781, 0.0
    %1786 = vadd.xlane.f32.xlu0 %v1785
    %v1787 = vpop.xlane.xlu0 %1786
    %v1788 = vrcp.pop %v1784
    %v1789 = vrcp.pop %v1787
    %v1790 = vmul.f32 %v1779, %v1788
    %v1791 = vmul.f32 %v1781, %v1789
    %v1792 = vpack.c.bf16 %v1790, %v1790
    %v1793 = vpack.c.bf16 %v1791, %v1791
    %1794 = vrot.lane.b32.xlu0 %v1432, 88
    %v1795 = vpop.permute.xlu0 %1794
    %v1797 = vsel %vm269, %v1792, 0
    %v1800 = vsel %vm400, %v1795, 0
    %1802 = vmatprep.subr.bf16.mxu0 0
    %1803 = vmatpush1.bf16.msra.mxu0 %v1800
    %1804 = vmatprep.subr.bf16.mxu0 0
    %1805 = vmatpush1.bf16.msra.mxu0 0
    %1806 = vmatprep.subr.bf16.mxu0 0
    %1807 = vmatpush1.bf16.msra.mxu0 0
    %1808 = vmatprep.subr.bf16.mxu0 0
    %1809 = vmatpush1.bf16.msra.mxu0 0
    %1810 = vmatprep.subr.bf16.mxu0 0
    %1811 = vmatpush1.bf16.msra.mxu0 0
    %1812 = vmatprep.subr.bf16.mxu0 0
    %1813 = vmatpush1.bf16.msra.mxu0 0
    %1814 = vmatprep.subr.bf16.mxu0 0
    %1815 = vmatpush1.bf16.msra.mxu0 0
    %1816 = vmatprep.subr.bf16.mxu0 0
    %1817 = vmatpush1.bf16.msra.mxu0 0
    %1818 = vmatprep.subr.bf16.mxu0 0
    %1819 = vmatpush1.bf16.msra.mxu0 0
    %1820 = vmatprep.subr.bf16.mxu0 0
    %1821 = vmatpush1.bf16.msra.mxu0 0
    %1822 = vmatprep.subr.bf16.mxu0 0
    %1823 = vmatpush1.bf16.msra.mxu0 0
    %1824 = vmatprep.subr.bf16.mxu0 0
    %1825 = vmatpush1.bf16.msra.mxu0 0
    %1826 = vmatprep.subr.bf16.mxu0 0
    %1827 = vmatpush1.bf16.msra.mxu0 0
    %1828 = vmatprep.subr.bf16.mxu0 0
    %1829 = vmatpush1.bf16.msra.mxu0 0
    %1830 = vmatprep.subr.bf16.mxu0 0
    %1831 = vmatpush1.bf16.msra.mxu0 0
    %1832 = vmatprep.subr.bf16.mxu0 0
    %1833 = vmatpush1.bf16.msra.mxu0 0
    %1834 = vmatprep.mubr.bf16.mxu0 0
    %1835 = vmatmul.mubr.bf16.gmra.mrb[0].mxu0 %v1797
    %v1836 = vpop.f32.mrb[0].mxu0
    %v1837 = vadd.f32 0.0, %v1836
    %v1838 = vpop.f32.mrb[0].mxu0
    %v1839 = vpop.f32.mrb[0].mxu0
    %v1840 = vpop.f32.mrb[0].mxu0
    %1841 = vdwg.mxu0
    %1842 = vrot.lane.b32.xlu0 %v1433, 88
    %v1843 = vpop.permute.xlu0 %1842
    %v1845 = vsel %vm269, %v1793, 0
    %v1848 = vsel %vm400, %v1843, 0
    %1850 = vmatprep.subr.bf16.mxu0 0
    %1851 = vmatpush1.bf16.msra.mxu0 %v1848
    %1852 = vmatprep.subr.bf16.mxu0 0
    %1853 = vmatpush1.bf16.msra.mxu0 0
    %1854 = vmatprep.subr.bf16.mxu0 0
    %1855 = vmatpush1.bf16.msra.mxu0 0
    %1856 = vmatprep.subr.bf16.mxu0 0
    %1857 = vmatpush1.bf16.msra.mxu0 0
    %1858 = vmatprep.subr.bf16.mxu0 0
    %1859 = vmatpush1.bf16.msra.mxu0 0
    %1860 = vmatprep.subr.bf16.mxu0 0
    %1861 = vmatpush1.bf16.msra.mxu0 0
    %1862 = vmatprep.subr.bf16.mxu0 0
    %1863 = vmatpush1.bf16.msra.mxu0 0
    %1864 = vmatprep.subr.bf16.mxu0 0
    %1865 = vmatpush1.bf16.msra.mxu0 0
    %1866 = vmatprep.subr.bf16.mxu0 0
    %1867 = vmatpush1.bf16.msra.mxu0 0
    %1868 = vmatprep.subr.bf16.mxu0 0
    %1869 = vmatpush1.bf16.msra.mxu0 0
    %1870 = vmatprep.subr.bf16.mxu0 0
    %1871 = vmatpush1.bf16.msra.mxu0 0
    %1872 = vmatprep.subr.bf16.mxu0 0
    %1873 = vmatpush1.bf16.msra.mxu0 0
    %1874 = vmatprep.subr.bf16.mxu0 0
    %1875 = vmatpush1.bf16.msra.mxu0 0
    %1876 = vmatprep.subr.bf16.mxu0 0
    %1877 = vmatpush1.bf16.msra.mxu0 0
    %1878 = vmatprep.subr.bf16.mxu0 0
    %1879 = vmatpush1.bf16.msra.mxu0 0
    %1880 = vmatprep.subr.bf16.mxu0 0
    %1881 = vmatpush1.bf16.msra.mxu0 0
    %1882 = vmatprep.mubr.bf16.mxu0 0
    %1883 = vmatmul.mubr.bf16.gmra.mrb[0].mxu0 %v1845
    %v1884 = vpop.f32.mrb[0].mxu0
    %v1885 = vadd.f32 0.0, %v1884
    %v1886 = vpop.f32.mrb[0].mxu0
    %v1887 = vpop.f32.mrb[0].mxu0
    %v1888 = vpop.f32.mrb[0].mxu0
    %1889 = vdwg.mxu0
    %1890 = vrot.lane.b32.xlu0 %v1430, 112
    %v1891 = vpop.permute.xlu0 %1890
    %1892 = vrot.lane.b32.xlu0 %v1432, 112
    %v1893 = vpop.permute.xlu0 %1892
    %v1895 = vsel %vm269, %v1891, 0
    %v1898 = vsel %vm269, %v1893, 0
    %1900 = vmatprep.subr.bf16.mxu0 0
    %1901 = vmatpush1.bf16.xpose.msra.mxu0 %v1898
    %1902 = vmatprep.subr.bf16.mxu0 0
    %1903 = vmatpush1.bf16.xpose.msra.mxu0 0
    %1904 = vmatprep.subr.bf16.mxu0 0
    %1905 = vmatpush1.bf16.xpose.msra.mxu0 0
    %1906 = vmatprep.subr.bf16.mxu0 0
    %1907 = vmatpush1.bf16.xpose.msra.mxu0 0
    %1908 = vmatprep.subr.bf16.mxu0 0
    %1909 = vmatpush1.bf16.xpose.msra.mxu0 0
    %1910 = vmatprep.subr.bf16.mxu0 0
    %1911 = vmatpush1.bf16.xpose.msra.mxu0 0
    %1912 = vmatprep.subr.bf16.mxu0 0
    %1913 = vmatpush1.bf16.xpose.msra.mxu0 0
    %1914 = vmatprep.subr.bf16.mxu0 0
    %1915 = vmatpush1.bf16.xpose.msra.mxu0 0
    %1916 = vmatprep.subr.bf16.mxu0 0
    %1917 = vmatpush1.bf16.xpose.msra.mxu0 0
    %1918 = vmatprep.subr.bf16.mxu0 0
    %1919 = vmatpush1.bf16.xpose.msra.mxu0 0
    %1920 = vmatprep.subr.bf16.mxu0 0
    %1921 = vmatpush1.bf16.xpose.msra.mxu0 0
    %1922 = vmatprep.subr.bf16.mxu0 0
    %1923 = vmatpush1.bf16.xpose.msra.mxu0 0
    %1924 = vmatprep.subr.bf16.mxu0 0
    %1925 = vmatpush1.bf16.xpose.msra.mxu0 0
    %1926 = vmatprep.subr.bf16.mxu0 0
    %1927 = vmatpush1.bf16.xpose.msra.mxu0 0
    %1928 = vmatprep.subr.bf16.mxu0 0
    %1929 = vmatpush1.bf16.xpose.msra.mxu0 0
    %1930 = vmatprep.subr.bf16.mxu0 0
    %1931 = vmatpush1.bf16.xpose.msra.mxu0 0
    %1932 = vmatprep.mubr.bf16.mxu0 0
    %1933 = vmatmul.mubr.bf16.gmra.mrb[0].mxu0 %v1895
    %v1934 = vpop.f32.mrb[0].mxu0
    %v1935 = vadd.f32 0.0, %v1934
    %v1936 = vpop.f32.mrb[0].mxu0
    %v1937 = vpop.f32.mrb[0].mxu0
    %v1938 = vpop.f32.mrb[0].mxu0
    %1939 = vdwg.mxu0
    %1940 = vrot.lane.b32.xlu0 %v1431, 112
    %v1941 = vpop.permute.xlu0 %1940
    %1942 = vrot.lane.b32.xlu0 %v1433, 112
    %v1943 = vpop.permute.xlu0 %1942
    %v1945 = vsel %vm269, %v1941, 0
    %v1948 = vsel %vm269, %v1943, 0
    %1950 = vmatprep.subr.bf16.mxu0 0
    %1951 = vmatpush1.bf16.xpose.msra.mxu0 %v1948
    %1952 = vmatprep.subr.bf16.mxu0 0
    %1953 = vmatpush1.bf16.xpose.msra.mxu0 0
    %1954 = vmatprep.subr.bf16.mxu0 0
    %1955 = vmatpush1.bf16.xpose.msra.mxu0 0
    %1956 = vmatprep.subr.bf16.mxu0 0
    %1957 = vmatpush1.bf16.xpose.msra.mxu0 0
    %1958 = vmatprep.subr.bf16.mxu0 0
    %1959 = vmatpush1.bf16.xpose.msra.mxu0 0
    %1960 = vmatprep.subr.bf16.mxu0 0
    %1961 = vmatpush1.bf16.xpose.msra.mxu0 0
    %1962 = vmatprep.subr.bf16.mxu0 0
    %1963 = vmatpush1.bf16.xpose.msra.mxu0 0
    %1964 = vmatprep.subr.bf16.mxu0 0
    %1965 = vmatpush1.bf16.xpose.msra.mxu0 0
    %1966 = vmatprep.subr.bf16.mxu0 0
    %1967 = vmatpush1.bf16.xpose.msra.mxu0 0
    %1968 = vmatprep.subr.bf16.mxu0 0
    %1969 = vmatpush1.bf16.xpose.msra.mxu0 0
    %1970 = vmatprep.subr.bf16.mxu0 0
    %1971 = vmatpush1.bf16.xpose.msra.mxu0 0
    %1972 = vmatprep.subr.bf16.mxu0 0
    %1973 = vmatpush1.bf16.xpose.msra.mxu0 0
    %1974 = vmatprep.subr.bf16.mxu0 0
    %1975 = vmatpush1.bf16.xpose.msra.mxu0 0
    %1976 = vmatprep.subr.bf16.mxu0 0
    %1977 = vmatpush1.bf16.xpose.msra.mxu0 0
    %1978 = vmatprep.subr.bf16.mxu0 0
    %1979 = vmatpush1.bf16.xpose.msra.mxu0 0
    %1980 = vmatprep.subr.bf16.mxu0 0
    %1981 = vmatpush1.bf16.xpose.msra.mxu0 0
    %1982 = vmatprep.mubr.bf16.mxu0 0
    %1983 = vmatmul.mubr.bf16.gmra.mrb[0].mxu0 %v1945
    %v1984 = vpop.f32.mrb[0].mxu0
    %v1985 = vadd.f32 0.0, %v1984
    %v1986 = vpop.f32.mrb[0].mxu0
    %v1987 = vpop.f32.mrb[0].mxu0
    %v1988 = vpop.f32.mrb[0].mxu0
    %1989 = vdwg.mxu0
    %v1990 = vmul.f32 %v1935, 0.35355338
    %v1991 = vmul.f32 %v1985, 0.35355338
    %v1992 = vsel %vm1538, %v1990, -1e+20
    %v1993 = vsel %vm1539, %v1991, -1e+20
    %v1994 = vsel %vm269, %v1992, -inf
    %1995 = vmax.xlane.f32.xlu0 %v1994
    %v1996 = vpop.xlane.xlu0 %1995
    %v1997 = vsel %vm269, %v1993, -inf
    %1998 = vmax.xlane.f32.xlu0 %v1997
    %v1999 = vpop.xlane.xlu0 %1998
    %v2000 = vsub.f32 %v1992, %v1996
    %v2001 = vsub.f32 %v1993, %v1999
    %v2002 = vmul.f32 %v2000, 1.442695
    %v2003 = vpow.pop %v2002
    %v2004 = vmul.f32 %v2001, 1.442695
    %v2005 = vpow.pop %v2004
    %v2006 = vsel %vm269, %v2003, 0.0
    %2007 = vadd.xlane.f32.xlu0 %v2006
    %v2008 = vpop.xlane.xlu0 %2007
    %v2009 = vsel %vm269, %v2005, 0.0
    %2010 = vadd.xlane.f32.xlu0 %v2009
    %v2011 = vpop.xlane.xlu0 %2010
    %v2012 = vrcp.pop %v2008
    %v2013 = vrcp.pop %v2011
    %v2014 = vmul.f32 %v2003, %v2012
    %v2015 = vmul.f32 %v2005, %v2013
    %v2016 = vpack.c.bf16 %v2014, %v2014
    %v2017 = vpack.c.bf16 %v2015, %v2015
    %2018 = vrot.lane.b32.xlu0 %v1432, 80
    %v2019 = vpop.permute.xlu0 %2018
    %v2021 = vsel %vm269, %v2016, 0
    %v2024 = vsel %vm400, %v2019, 0
    %2026 = vmatprep.subr.bf16.mxu0 0
    %2027 = vmatpush1.bf16.msra.mxu0 %v2024
    %2028 = vmatprep.subr.bf16.mxu0 0
    %2029 = vmatpush1.bf16.msra.mxu0 0
    %2030 = vmatprep.subr.bf16.mxu0 0
    %2031 = vmatpush1.bf16.msra.mxu0 0
    %2032 = vmatprep.subr.bf16.mxu0 0
    %2033 = vmatpush1.bf16.msra.mxu0 0
    %2034 = vmatprep.subr.bf16.mxu0 0
    %2035 = vmatpush1.bf16.msra.mxu0 0
    %2036 = vmatprep.subr.bf16.mxu0 0
    %2037 = vmatpush1.bf16.msra.mxu0 0
    %2038 = vmatprep.subr.bf16.mxu0 0
    %2039 = vmatpush1.bf16.msra.mxu0 0
    %2040 = vmatprep.subr.bf16.mxu0 0
    %2041 = vmatpush1.bf16.msra.mxu0 0
    %2042 = vmatprep.subr.bf16.mxu0 0
    %2043 = vmatpush1.bf16.msra.mxu0 0
    %2044 = vmatprep.subr.bf16.mxu0 0
    %2045 = vmatpush1.bf16.msra.mxu0 0
    %2046 = vmatprep.subr.bf16.mxu0 0
    %2047 = vmatpush1.bf16.msra.mxu0 0
    %2048 = vmatprep.subr.bf16.mxu0 0
    %2049 = vmatpush1.bf16.msra.mxu0 0
    %2050 = vmatprep.subr.bf16.mxu0 0
    %2051 = vmatpush1.bf16.msra.mxu0 0
    %2052 = vmatprep.subr.bf16.mxu0 0
    %2053 = vmatpush1.bf16.msra.mxu0 0
    %2054 = vmatprep.subr.bf16.mxu0 0
    %2055 = vmatpush1.bf16.msra.mxu0 0
    %2056 = vmatprep.subr.bf16.mxu0 0
    %2057 = vmatpush1.bf16.msra.mxu0 0
    %2058 = vmatprep.mubr.bf16.mxu0 0
    %2059 = vmatmul.mubr.bf16.gmra.mrb[0].mxu0 %v2021
    %v2060 = vpop.f32.mrb[0].mxu0
    %v2061 = vadd.f32 0.0, %v2060
    %v2062 = vpop.f32.mrb[0].mxu0
    %v2063 = vpop.f32.mrb[0].mxu0
    %v2064 = vpop.f32.mrb[0].mxu0
    %2065 = vdwg.mxu0
    %2066 = vrot.lane.b32.xlu0 %v1433, 80
    %v2067 = vpop.permute.xlu0 %2066
    %v2069 = vsel %vm269, %v2017, 0
    %v2072 = vsel %vm400, %v2067, 0
    %2074 = vmatprep.subr.bf16.mxu0 0
    %2075 = vmatpush1.bf16.msra.mxu0 %v2072
    %2076 = vmatprep.subr.bf16.mxu0 0
    %2077 = vmatpush1.bf16.msra.mxu0 0
    %2078 = vmatprep.subr.bf16.mxu0 0
    %2079 = vmatpush1.bf16.msra.mxu0 0
    %2080 = vmatprep.subr.bf16.mxu0 0
    %2081 = vmatpush1.bf16.msra.mxu0 0
    %2082 = vmatprep.subr.bf16.mxu0 0
    %2083 = vmatpush1.bf16.msra.mxu0 0
    %2084 = vmatprep.subr.bf16.mxu0 0
    %2085 = vmatpush1.bf16.msra.mxu0 0
    %2086 = vmatprep.subr.bf16.mxu0 0
    %2087 = vmatpush1.bf16.msra.mxu0 0
    %2088 = vmatprep.subr.bf16.mxu0 0
    %2089 = vmatpush1.bf16.msra.mxu0 0
    %2090 = vmatprep.subr.bf16.mxu0 0
    %2091 = vmatpush1.bf16.msra.mxu0 0
    %2092 = vmatprep.subr.bf16.mxu0 0
    %2093 = vmatpush1.bf16.msra.mxu0 0
    %2094 = vmatprep.subr.bf16.mxu0 0
    %2095 = vmatpush1.bf16.msra.mxu0 0
    %2096 = vmatprep.subr.bf16.mxu0 0
    %2097 = vmatpush1.bf16.msra.mxu0 0
    %2098 = vmatprep.subr.bf16.mxu0 0
    %2099 = vmatpush1.bf16.msra.mxu0 0
    %2100 = vmatprep.subr.bf16.mxu0 0
    %2101 = vmatpush1.bf16.msra.mxu0 0
    %2102 = vmatprep.subr.bf16.mxu0 0
    %2103 = vmatpush1.bf16.msra.mxu0 0
    %2104 = vmatprep.subr.bf16.mxu0 0
    %2105 = vmatpush1.bf16.msra.mxu0 0
    %2106 = vmatprep.mubr.bf16.mxu0 0
    %2107 = vmatmul.mubr.bf16.gmra.mrb[0].mxu0 %v2069
    %v2108 = vpop.f32.mrb[0].mxu0
    %v2109 = vadd.f32 0.0, %v2108
    %v2110 = vpop.f32.mrb[0].mxu0
    %v2111 = vpop.f32.mrb[0].mxu0
    %v2112 = vpop.f32.mrb[0].mxu0
    %2113 = vdwg.mxu0
    %2114 = vrot.lane.b32.xlu0 %v1430, 104
    %v2115 = vpop.permute.xlu0 %2114
    %2116 = vrot.lane.b32.xlu0 %v1432, 104
    %v2117 = vpop.permute.xlu0 %2116
    %v2119 = vsel %vm269, %v2115, 0
    %v2122 = vsel %vm269, %v2117, 0
    %2124 = vmatprep.subr.bf16.mxu0 0
    %2125 = vmatpush1.bf16.xpose.msra.mxu0 %v2122
    %2126 = vmatprep.subr.bf16.mxu0 0
    %2127 = vmatpush1.bf16.xpose.msra.mxu0 0
    %2128 = vmatprep.subr.bf16.mxu0 0
    %2129 = vmatpush1.bf16.xpose.msra.mxu0 0
    %2130 = vmatprep.subr.bf16.mxu0 0
    %2131 = vmatpush1.bf16.xpose.msra.mxu0 0
    %2132 = vmatprep.subr.bf16.mxu0 0
    %2133 = vmatpush1.bf16.xpose.msra.mxu0 0
    %2134 = vmatprep.subr.bf16.mxu0 0
    %2135 = vmatpush1.bf16.xpose.msra.mxu0 0
    %2136 = vmatprep.subr.bf16.mxu0 0
    %2137 = vmatpush1.bf16.xpose.msra.mxu0 0
    %2138 = vmatprep.subr.bf16.mxu0 0
    %2139 = vmatpush1.bf16.xpose.msra.mxu0 0
    %2140 = vmatprep.subr.bf16.mxu0 0
    %2141 = vmatpush1.bf16.xpose.msra.mxu0 0
    %2142 = vmatprep.subr.bf16.mxu0 0
    %2143 = vmatpush1.bf16.xpose.msra.mxu0 0
    %2144 = vmatprep.subr.bf16.mxu0 0
    %2145 = vmatpush1.bf16.xpose.msra.mxu0 0
    %2146 = vmatprep.subr.bf16.mxu0 0
    %2147 = vmatpush1.bf16.xpose.msra.mxu0 0
    %2148 = vmatprep.subr.bf16.mxu0 0
    %2149 = vmatpush1.bf16.xpose.msra.mxu0 0
    %2150 = vmatprep.subr.bf16.mxu0 0
    %2151 = vmatpush1.bf16.xpose.msra.mxu0 0
    %2152 = vmatprep.subr.bf16.mxu0 0
    %2153 = vmatpush1.bf16.xpose.msra.mxu0 0
    %2154 = vmatprep.subr.bf16.mxu0 0
    %2155 = vmatpush1.bf16.xpose.msra.mxu0 0
    %2156 = vmatprep.mubr.bf16.mxu0 0
    %2157 = vmatmul.mubr.bf16.gmra.mrb[0].mxu0 %v2119
    %v2158 = vpop.f32.mrb[0].mxu0
    %v2159 = vadd.f32 0.0, %v2158
    %v2160 = vpop.f32.mrb[0].mxu0
    %v2161 = vpop.f32.mrb[0].mxu0
    %v2162 = vpop.f32.mrb[0].mxu0
    %2163 = vdwg.mxu0
    %2164 = vrot.lane.b32.xlu0 %v1431, 104
    %v2165 = vpop.permute.xlu0 %2164
    %2166 = vrot.lane.b32.xlu0 %v1433, 104
    %v2167 = vpop.permute.xlu0 %2166
    %v2169 = vsel %vm269, %v2165, 0
    %v2172 = vsel %vm269, %v2167, 0
    %2174 = vmatprep.subr.bf16.mxu0 0
    %2175 = vmatpush1.bf16.xpose.msra.mxu0 %v2172
    %2176 = vmatprep.subr.bf16.mxu0 0
    %2177 = vmatpush1.bf16.xpose.msra.mxu0 0
    %2178 = vmatprep.subr.bf16.mxu0 0
    %2179 = vmatpush1.bf16.xpose.msra.mxu0 0
    %2180 = vmatprep.subr.bf16.mxu0 0
    %2181 = vmatpush1.bf16.xpose.msra.mxu0 0
    %2182 = vmatprep.subr.bf16.mxu0 0
    %2183 = vmatpush1.bf16.xpose.msra.mxu0 0
    %2184 = vmatprep.subr.bf16.mxu0 0
    %2185 = vmatpush1.bf16.xpose.msra.mxu0 0
    %2186 = vmatprep.subr.bf16.mxu0 0
    %2187 = vmatpush1.bf16.xpose.msra.mxu0 0
    %2188 = vmatprep.subr.bf16.mxu0 0
    %2189 = vmatpush1.bf16.xpose.msra.mxu0 0
    %2190 = vmatprep.subr.bf16.mxu0 0
    %2191 = vmatpush1.bf16.xpose.msra.mxu0 0
    %2192 = vmatprep.subr.bf16.mxu0 0
    %2193 = vmatpush1.bf16.xpose.msra.mxu0 0
    %2194 = vmatprep.subr.bf16.mxu0 0
    %2195 = vmatpush1.bf16.xpose.msra.mxu0 0
    %2196 = vmatprep.subr.bf16.mxu0 0
    %2197 = vmatpush1.bf16.xpose.msra.mxu0 0
    %2198 = vmatprep.subr.bf16.mxu0 0
    %2199 = vmatpush1.bf16.xpose.msra.mxu0 0
    %2200 = vmatprep.subr.bf16.mxu0 0
    %2201 = vmatpush1.bf16.xpose.msra.mxu0 0
    %2202 = vmatprep.subr.bf16.mxu0 0
    %2203 = vmatpush1.bf16.xpose.msra.mxu0 0
    %2204 = vmatprep.subr.bf16.mxu0 0
    %2205 = vmatpush1.bf16.xpose.msra.mxu0 0
    %2206 = vmatprep.mubr.bf16.mxu0 0
    %2207 = vmatmul.mubr.bf16.gmra.mrb[0].mxu0 %v2169
    %v2208 = vpop.f32.mrb[0].mxu0
    %v2209 = vadd.f32 0.0, %v2208
    %v2210 = vpop.f32.mrb[0].mxu0
    %v2211 = vpop.f32.mrb[0].mxu0
    %v2212 = vpop.f32.mrb[0].mxu0
    %2213 = vdwg.mxu0
    %v2214 = vmul.f32 %v2159, 0.35355338
    %v2215 = vmul.f32 %v2209, 0.35355338
    %v2216 = vsel %vm1538, %v2214, -1e+20
    %v2217 = vsel %vm1539, %v2215, -1e+20
    %v2218 = vsel %vm269, %v2216, -inf
    %2219 = vmax.xlane.f32.xlu0 %v2218
    %v2220 = vpop.xlane.xlu0 %2219
    %v2221 = vsel %vm269, %v2217, -inf
    %2222 = vmax.xlane.f32.xlu0 %v2221
    %v2223 = vpop.xlane.xlu0 %2222
    %v2224 = vsub.f32 %v2216, %v2220
    %v2225 = vsub.f32 %v2217, %v2223
    %v2226 = vmul.f32 %v2224, 1.442695
    %v2227 = vpow.pop %v2226
    %v2228 = vmul.f32 %v2225, 1.442695
    %v2229 = vpow.pop %v2228
    %v2230 = vsel %vm269, %v2227, 0.0
    %2231 = vadd.xlane.f32.xlu0 %v2230
    %v2232 = vpop.xlane.xlu0 %2231
    %v2233 = vsel %vm269, %v2229, 0.0
    %2234 = vadd.xlane.f32.xlu0 %v2233
    %v2235 = vpop.xlane.xlu0 %2234
    %v2236 = vrcp.pop %v2232
    %v2237 = vrcp.pop %v2235
    %v2238 = vmul.f32 %v2227, %v2236
    %v2239 = vmul.f32 %v2229, %v2237
    %v2240 = vpack.c.bf16 %v2238, %v2238
    %v2241 = vpack.c.bf16 %v2239, %v2239
    %2242 = vrot.lane.b32.xlu0 %v1432, 72
    %v2243 = vpop.permute.xlu0 %2242
    %v2245 = vsel %vm269, %v2240, 0
    %v2248 = vsel %vm400, %v2243, 0
    %2250 = vmatprep.subr.bf16.mxu0 0
    %2251 = vmatpush1.bf16.msra.mxu0 %v2248
    %2252 = vmatprep.subr.bf16.mxu0 0
    %2253 = vmatpush1.bf16.msra.mxu0 0
    %2254 = vmatprep.subr.bf16.mxu0 0
    %2255 = vmatpush1.bf16.msra.mxu0 0
    %2256 = vmatprep.subr.bf16.mxu0 0
    %2257 = vmatpush1.bf16.msra.mxu0 0
    %2258 = vmatprep.subr.bf16.mxu0 0
    %2259 = vmatpush1.bf16.msra.mxu0 0
    %2260 = vmatprep.subr.bf16.mxu0 0
    %2261 = vmatpush1.bf16.msra.mxu0 0
    %2262 = vmatprep.subr.bf16.mxu0 0
    %2263 = vmatpush1.bf16.msra.mxu0 0
    %2264 = vmatprep.subr.bf16.mxu0 0
    %2265 = vmatpush1.bf16.msra.mxu0 0
    %2266 = vmatprep.subr.bf16.mxu0 0
    %2267 = vmatpush1.bf16.msra.mxu0 0
    %2268 = vmatprep.subr.bf16.mxu0 0
    %2269 = vmatpush1.bf16.msra.mxu0 0
    %2270 = vmatprep.subr.bf16.mxu0 0
    %2271 = vmatpush1.bf16.msra.mxu0 0
    %2272 = vmatprep.subr.bf16.mxu0 0
    %2273 = vmatpush1.bf16.msra.mxu0 0
    %2274 = vmatprep.subr.bf16.mxu0 0
    %2275 = vmatpush1.bf16.msra.mxu0 0
    %2276 = vmatprep.subr.bf16.mxu0 0
    %2277 = vmatpush1.bf16.msra.mxu0 0
    %2278 = vmatprep.subr.bf16.mxu0 0
    %2279 = vmatpush1.bf16.msra.mxu0 0
    %2280 = vmatprep.subr.bf16.mxu0 0
    %2281 = vmatpush1.bf16.msra.mxu0 0
    %2282 = vmatprep.mubr.bf16.mxu0 0
    %2283 = vmatmul.mubr.bf16.gmra.mrb[0].mxu0 %v2245
    %v2284 = vpop.f32.mrb[0].mxu0
    %v2285 = vadd.f32 0.0, %v2284
    %v2286 = vpop.f32.mrb[0].mxu0
    %v2287 = vpop.f32.mrb[0].mxu0
    %v2288 = vpop.f32.mrb[0].mxu0
    %2289 = vdwg.mxu0
    %2290 = vrot.lane.b32.xlu0 %v1433, 72
    %v2291 = vpop.permute.xlu0 %2290
    %v2293 = vsel %vm269, %v2241, 0
    %v2296 = vsel %vm400, %v2291, 0
    %2298 = vmatprep.subr.bf16.mxu0 0
    %2299 = vmatpush1.bf16.msra.mxu0 %v2296
    %2300 = vmatprep.subr.bf16.mxu0 0
    %2301 = vmatpush1.bf16.msra.mxu0 0
    %2302 = vmatprep.subr.bf16.mxu0 0
    %2303 = vmatpush1.bf16.msra.mxu0 0
    %2304 = vmatprep.subr.bf16.mxu0 0
    %2305 = vmatpush1.bf16.msra.mxu0 0
    %2306 = vmatprep.subr.bf16.mxu0 0
    %2307 = vmatpush1.bf16.msra.mxu0 0
    %2308 = vmatprep.subr.bf16.mxu0 0
    %2309 = vmatpush1.bf16.msra.mxu0 0
    %2310 = vmatprep.subr.bf16.mxu0 0
    %2311 = vmatpush1.bf16.msra.mxu0 0
    %2312 = vmatprep.subr.bf16.mxu0 0
    %2313 = vmatpush1.bf16.msra.mxu0 0
    %2314 = vmatprep.subr.bf16.mxu0 0
    %2315 = vmatpush1.bf16.msra.mxu0 0
    %2316 = vmatprep.subr.bf16.mxu0 0
    %2317 = vmatpush1.bf16.msra.mxu0 0
    %2318 = vmatprep.subr.bf16.mxu0 0
    %2319 = vmatpush1.bf16.msra.mxu0 0
    %2320 = vmatprep.subr.bf16.mxu0 0
    %2321 = vmatpush1.bf16.msra.mxu0 0
    %2322 = vmatprep.subr.bf16.mxu0 0
    %2323 = vmatpush1.bf16.msra.mxu0 0
    %2324 = vmatprep.subr.bf16.mxu0 0
    %2325 = vmatpush1.bf16.msra.mxu0 0
    %2326 = vmatprep.subr.bf16.mxu0 0
    %2327 = vmatpush1.bf16.msra.mxu0 0
    %2328 = vmatprep.subr.bf16.mxu0 0
    %2329 = vmatpush1.bf16.msra.mxu0 0
    %2330 = vmatprep.mubr.bf16.mxu0 0
    %2331 = vmatmul.mubr.bf16.gmra.mrb[0].mxu0 %v2293
    %v2332 = vpop.f32.mrb[0].mxu0
    %v2333 = vadd.f32 0.0, %v2332
    %v2334 = vpop.f32.mrb[0].mxu0
    %v2335 = vpop.f32.mrb[0].mxu0
    %v2336 = vpop.f32.mrb[0].mxu0
    %2337 = vdwg.mxu0
    %2340 = vrot.lane.b32.xlu0 %v1837, 8
    %v2341 = vpop.permute.xlu0 %2340
    %2342 = vrot.lane.b32.xlu0 %v1885, 8
    %v2343 = vpop.permute.xlu0 %2342
    %2348 = vrot.lane.b32.xlu0 %v2061, 16
    %v2349 = vpop.permute.xlu0 %2348
    %2350 = vrot.lane.b32.xlu0 %v2109, 16
    %v2351 = vpop.permute.xlu0 %2350
    %2356 = vrot.lane.b32.xlu0 %v2285, 24
    %v2357 = vpop.permute.xlu0 %2356
    %2358 = vrot.lane.b32.xlu0 %v2333, 24
    %v2359 = vpop.permute.xlu0 %2358
    %v2362 = vsel %vm269, %v1610, %v2341
    %v2363 = vsel %vm269, %v1659, %v2343
    %v2364 = vsel %vm1190, %v2362, %v2349
    %v2365 = vsel %vm1190, %v2363, %v2351
    %v2366 = vsel %vm1193, %v2364, %v2357
    %v2367 = vsel %vm1193, %v2365, %v2359
    %v2368 = vld [vmem:[#allocation7] sm:$0xf]
    %v2369 = vld [vmem:[#allocation7 + $0x4] sm:$0xf]
    %v2370 = vld [vmem:[#allocation7 + $0x8] sm:$0xf]
    %v2371 = vld [vmem:[#allocation7 + $0xc] sm:$0xf]
    %v2372 = vpack.c.bf16 %v2367, %v2366
    %v2373 = vld [vmem:[#allocation8] sm:$0x1]
    %v2375 = vlaneseq
    %v2376 = vshrl.u32 %v2375, 7
    %v2377 = vsub.s32 0, %v2376
    %v2378 = vrot.slane %v2373, %v2377
    %v2384 = vunpack.c.l.b16 %v2368
    %v2385 = vunpack.c.l.b16 %v2369
    %v2386 = vunpack.c.l.b16 %v2370
    %v2387 = vunpack.c.l.b16 %v2371
    %v2388 = vpack.c.b16 %v2385, %v2384
    %v2389 = vpack.c.b16 %v2387, %v2386
    %v2393 = vsel %vm152, %v2372, 0
    %2395 = vmatprep.subr.bf16.mxu0 0
    %2396 = vmatpush1.bf16.msra.mxu0 %v2388
    %2397 = vmatprep.subr.bf16.mxu0 0
    %2398 = vmatpush1.bf16.msra.mxu0 %v2389
    %2399 = vmatprep.subr.bf16.mxu0 0
    %2400 = vmatpush1.bf16.msra.mxu0 0
    %2401 = vmatprep.subr.bf16.mxu0 0
    %2402 = vmatpush1.bf16.msra.mxu0 0
    %2403 = vmatprep.subr.bf16.mxu0 0
    %2404 = vmatpush1.bf16.msra.mxu0 0
    %2405 = vmatprep.subr.bf16.mxu0 0
    %2406 = vmatpush1.bf16.msra.mxu0 0
    %2407 = vmatprep.subr.bf16.mxu0 0
    %2408 = vmatpush1.bf16.msra.mxu0 0
    %2409 = vmatprep.subr.bf16.mxu0 0
    %2410 = vmatpush1.bf16.msra.mxu0 0
    %2411 = vmatprep.subr.bf16.mxu0 0
    %2412 = vmatpush1.bf16.msra.mxu0 0
    %2413 = vmatprep.subr.bf16.mxu0 0
    %2414 = vmatpush1.bf16.msra.mxu0 0
    %2415 = vmatprep.subr.bf16.mxu0 0
    %2416 = vmatpush1.bf16.msra.mxu0 0
    %2417 = vmatprep.subr.bf16.mxu0 0
    %2418 = vmatpush1.bf16.msra.mxu0 0
    %2419 = vmatprep.subr.bf16.mxu0 0
    %2420 = vmatpush1.bf16.msra.mxu0 0
    %2421 = vmatprep.subr.bf16.mxu0 0
    %2422 = vmatpush1.bf16.msra.mxu0 0
    %2423 = vmatprep.subr.bf16.mxu0 0
    %2424 = vmatpush1.bf16.msra.mxu0 0
    %2425 = vmatprep.subr.bf16.mxu0 0
    %2426 = vmatpush1.bf16.msra.mxu0 0
    %2427 = vmatprep.mubr.bf16.mxu0 0
    %2428 = vmatmul.mubr.bf16.gmra.mrb[0].mxu0 %v2393
    %v2429 = vpop.f32.mrb[0].mxu0
    %v2430 = vadd.f32 %v2378, %v2429
    %v2431 = vpop.f32.mrb[0].mxu0
    %v2432 = vpop.f32.mrb[0].mxu0
    %v2433 = vadd.f32 %v2378, %v2432
    %v2434 = vpop.f32.mrb[0].mxu0
    %2435 = vdwg.mxu0
    %v2436 = vadd.f32 %v1264, %v2430
    %v2437 = vadd.f32 %v1265, %v2433
    %v2438 = vsel %vm152, %v2436, 0.0
    %2439 = vadd.xlane.f32.xlu0 %v2438
    %v2440 = vpop.xlane.xlu0 %2439
    %v2441 = vsel %vm152, %v2437, 0.0
    %2442 = vadd.xlane.f32.xlu0 %v2441
    %v2443 = vpop.xlane.xlu0 %2442
    %v2444 = vmul.f32 %v2440, %v159
    %v2445 = vmul.f32 %v2443, %v159
    %v2446 = vsub.f32 %v2436, %v2444
    %v2447 = vsub.f32 %v2437, %v2445
    %v2448 = vmul.f32 %v2446, %v2446
    %v2449 = vmul.f32 %v2447, %v2447
    %v2450 = vsel %vm152, %v2448, 0.0
    %2451 = vadd.xlane.f32.xlu0 %v2450
    %v2452 = vpop.xlane.xlu0 %2451
    %v2453 = vsel %vm152, %v2449, 0.0
    %2454 = vadd.xlane.f32.xlu0 %v2453
    %v2455 = vpop.xlane.xlu0 %2454
    %v2456 = vmul.f32 %v2452, 0.032258064
    %v2457 = vmul.f32 %v2455, 0.032258064
    %v2458 = vrsqrt.pop %v2456
    %v2459 = vmul.f32 %v2456, %v2458
    %vm2460 = vcmp.eq.f32.partialorder %v2456, inf
    %v2461 = vsel %vm2460, %v2456, %v2459
    %vm2462 = vcmp.eq.f32.partialorder %v2456, 0.0
    %v2463 = vand.u32 %v2456, 2147483648
    %v2464 = vsel %vm2462, %v2463, %v2461
    %v2465 = vrsqrt.pop %v2457
    %v2466 = vmul.f32 %v2457, %v2465
    %vm2467 = vcmp.eq.f32.partialorder %v2457, inf
    %v2468 = vsel %vm2467, %v2457, %v2466
    %vm2469 = vcmp.eq.f32.partialorder %v2457, 0.0
    %v2470 = vand.u32 %v2457, 2147483648
    %v2471 = vsel %vm2469, %v2470, %v2468
    %v2472 = vadd.f32 %v2464, 1e-06
    %v2473 = vadd.f32 %v2471, 1e-06
    %v2474 = vrcp.pop %v2472
    %v2475 = vrcp.pop %v2473
    %v2476 = vmul.f32 %v2446, %v2474
    %v2477 = vmul.f32 %v2447, %v2475
    %v2478 = vadd.f32 %v2476, 0.0
    %v2479 = vadd.f32 %v2477, 0.0
    %v2480 = vpack.c.bf16 %v2479, %v2478
    %v2481 = vld [vmem:[#allocation10] sm:$0xf]
    %v2482 = vld [vmem:[#allocation10 + $0x4] sm:$0xf]
    %v2483 = vld [vmem:[#allocation10 + $0x8] sm:$0xf]
    %v2484 = vld [vmem:[#allocation10 + $0xc] sm:$0xf]
    %v2485 = vld [vmem:[#allocation11] sm:$0x1]
    %v2487 = vlaneseq
    %v2488 = vshrl.u32 %v2487, 7
    %v2489 = vsub.s32 0, %v2488
    %v2490 = vrot.slane %v2485, %v2489
    %v2496 = vunpack.c.l.b16 %v2481
    %v2497 = vunpack.c.l.b16 %v2482
    %v2498 = vunpack.c.l.b16 %v2483
    %v2499 = vunpack.c.l.b16 %v2484
    %v2500 = vpack.c.b16 %v2497, %v2496
    %v2501 = vpack.c.b16 %v2499, %v2498
    %v2505 = vsel %vm152, %v2480, 0
    %2507 = vmatprep.subr.bf16.mxu0 0
    %2508 = vmatpush1.bf16.msra.mxu0 %v2500
    %2509 = vmatprep.subr.bf16.mxu0 0
    %2510 = vmatpush1.bf16.msra.mxu0 %v2501
    %2511 = vmatprep.subr.bf16.mxu0 0
    %2512 = vmatpush1.bf16.msra.mxu0 0
    %2513 = vmatprep.subr.bf16.mxu0 0
    %2514 = vmatpush1.bf16.msra.mxu0 0
    %2515 = vmatprep.subr.bf16.mxu0 0
    %2516 = vmatpush1.bf16.msra.mxu0 0
    %2517 = vmatprep.subr.bf16.mxu0 0
    %2518 = vmatpush1.bf16.msra.mxu0 0
    %2519 = vmatprep.subr.bf16.mxu0 0
    %2520 = vmatpush1.bf16.msra.mxu0 0
    %2521 = vmatprep.subr.bf16.mxu0 0
    %2522 = vmatpush1.bf16.msra.mxu0 0
    %2523 = vmatprep.subr.bf16.mxu0 0
    %2524 = vmatpush1.bf16.msra.mxu0 0
    %2525 = vmatprep.subr.bf16.mxu0 0
    %2526 = vmatpush1.bf16.msra.mxu0 0
    %2527 = vmatprep.subr.bf16.mxu0 0
    %2528 = vmatpush1.bf16.msra.mxu0 0
    %2529 = vmatprep.subr.bf16.mxu0 0
    %2530 = vmatpush1.bf16.msra.mxu0 0
    %2531 = vmatprep.subr.bf16.mxu0 0
    %2532 = vmatpush1.bf16.msra.mxu0 0
    %2533 = vmatprep.subr.bf16.mxu0 0
    %2534 = vmatpush1.bf16.msra.mxu0 0
    %2535 = vmatprep.subr.bf16.mxu0 0
    %2536 = vmatpush1.bf16.msra.mxu0 0
    %2537 = vmatprep.subr.bf16.mxu0 0
    %2538 = vmatpush1.bf16.msra.mxu0 0
    %2539 = vmatprep.mubr.bf16.mxu0 0
    %2540 = vmatmul.mubr.bf16.gmra.mrb[0].mxu0 %v2505
    %v2541 = vpop.f32.mrb[0].mxu0
    %v2542 = vadd.f32 %v2490, %v2541
    %v2543 = vpop.f32.mrb[0].mxu0
    %v2544 = vpop.f32.mrb[0].mxu0
    %v2545 = vadd.f32 %v2490, %v2544
    %v2546 = vpop.f32.mrb[0].mxu0
    %2547 = vdwg.mxu0
    %v2548 = vmul.f32 %v2542, %v2542
    %v2549 = vmul.f32 %v2545, %v2545
    %v2550 = vmul.f32 %v2542, %v2548
    %v2551 = vmul.f32 %v2545, %v2549
    %v2552 = vmul.f32 %v2550, 0.044715
    %v2553 = vmul.f32 %v2551, 0.044715
    %v2554 = vadd.f32 %v2542, %v2552
    %v2555 = vadd.f32 %v2545, %v2553
    %v2556 = vmul.f32 %v2554, 0.7978846
    %v2557 = vmul.f32 %v2555, 0.7978846
    %v2558 = vtanh.pop %v2556
    %v2559 = vtanh.pop %v2557
    %v2560 = vadd.f32 %v2558, 1.0
    %v2561 = vadd.f32 %v2559, 1.0
    %v2562 = vmul.f32 %v2560, 0.5
    %v2563 = vmul.f32 %v2561, 0.5
    %v2564 = vmul.f32 %v2542, %v2562
    %v2565 = vmul.f32 %v2545, %v2563
    %v2566 = vpack.c.bf16 %v2565, %v2564
    %v2567 = vld [vmem:[%s13] sm:$0xf]
    %v2568 = vld [vmem:[%s13 + $0x4] sm:$0xf]
    %v2569 = vld [vmem:[%s13 + $0x8] sm:$0xf]
    %v2570 = vld [vmem:[%s13 + $0xc] sm:$0xf]
    %v2571 = vld [vmem:[%s13 + $0x10] sm:$0xf]
    %v2572 = vld [vmem:[%s13 + $0x14] sm:$0xf]
    %v2573 = vld [vmem:[%s13 + $0x18] sm:$0xf]
    %v2574 = vld [vmem:[%s13 + $0x1c] sm:$0xf]
    %v2583 = vunpack.c.l.b16 %v2567
    %v2584 = vunpack.c.l.b16 %v2568
    %v2585 = vunpack.c.l.b16 %v2569
    %v2586 = vunpack.c.l.b16 %v2570
    %v2587 = vunpack.c.l.b16 %v2571
    %v2588 = vunpack.c.l.b16 %v2572
    %v2589 = vunpack.c.l.b16 %v2573
    %v2590 = vunpack.c.l.b16 %v2574
    %v2591 = vpack.c.b16 %v2584, %v2583
    %v2592 = vpack.c.b16 %v2586, %v2585
    %v2593 = vpack.c.b16 %v2588, %v2587
    %v2594 = vpack.c.b16 %v2590, %v2589
    %vm2599 = vcmask 523264
    %v2601 = vsel %vm2599, %v2566, 0
    %2603 = vmatprep.subr.bf16.mxu0 0
    %2604 = vmatpush1.bf16.msra.mxu0 %v2591
    %2605 = vmatprep.subr.bf16.mxu0 0
    %2606 = vmatpush1.bf16.msra.mxu0 %v2592
    %2607 = vmatprep.subr.bf16.mxu0 0
    %2608 = vmatpush1.bf16.msra.mxu0 %v2593
    %2609 = vmatprep.subr.bf16.mxu0 0
    %2610 = vmatpush1.bf16.msra.mxu0 %v2594
    %2611 = vmatprep.subr.bf16.mxu0 0
    %2612 = vmatpush1.bf16.msra.mxu0 0
    %2613 = vmatprep.subr.bf16.mxu0 0
    %2614 = vmatpush1.bf16.msra.mxu0 0
    %2615 = vmatprep.subr.bf16.mxu0 0
    %2616 = vmatpush1.bf16.msra.mxu0 0
    %2617 = vmatprep.subr.bf16.mxu0 0
    %2618 = vmatpush1.bf16.msra.mxu0 0
    %2619 = vmatprep.subr.bf16.mxu0 0
    %2620 = vmatpush1.bf16.msra.mxu0 0
    %2621 = vmatprep.subr.bf16.mxu0 0
    %2622 = vmatpush1.bf16.msra.mxu0 0
    %2623 = vmatprep.subr.bf16.mxu0 0
    %2624 = vmatpush1.bf16.msra.mxu0 0
    %2625 = vmatprep.subr.bf16.mxu0 0
    %2626 = vmatpush1.bf16.msra.mxu0 0
    %2627 = vmatprep.subr.bf16.mxu0 0
    %2628 = vmatpush1.bf16.msra.mxu0 0
    %2629 = vmatprep.subr.bf16.mxu0 0
    %2630 = vmatpush1.bf16.msra.mxu0 0
    %2631 = vmatprep.subr.bf16.mxu0 0
    %2632 = vmatpush1.bf16.msra.mxu0 0
    %2633 = vmatprep.subr.bf16.mxu0 0
    %2634 = vmatpush1.bf16.msra.mxu0 0
    %2635 = vmatprep.mubr.bf16.mxu0 0
    %2636 = vmatmul.mubr.bf16.gmra.mrb[0].mxu0 %v2601
    %v2637 = vpop.f32.mrb[0].mxu0
    %v2638 = vadd.f32 0.0, %v2637
    %v2639 = vpop.f32.mrb[0].mxu0
    %v2640 = vpop.f32.mrb[0].mxu0
    %v2641 = vadd.f32 0.0, %v2640
    %v2642 = vpop.f32.mrb[0].mxu0
    %2643 = vdwg.mxu0
    %v2644 = vadd.f32 %v2436, %v2638
    %v2645 = vadd.f32 %v2437, %v2641
    %v2646 = vld [vmem:[#allocation13] sm:$0x1]
    %v2648 = vlaneseq
    %v2649 = vshrl.u32 %v2648, 7
    %v2650 = vsub.s32 0, %v2649
    %v2651 = vrot.slane %v2646, %v2650
    %v2653 = vadd.f32 %v2644, %v2651
    %v2654 = vadd.f32 %v2645, %v2651
    %2655 = vst.msk [vmem:[#allocation14] sm:$0xff] %vm152, %v2653
    %2656 = vst.msk [vmem:[#allocation14 + $0x8] sm:$0xff] %vm152, %v2654
    // Predicated region
    $region90: #{decoder_block.1} parent=1 // pred_check
      _
    $region91: #{decoder_block.1} parent=1 // pred_check_branch
      %2658 = sbr.rel (0) target = $region93
    $region92: #{decoder_block.1} parent=1 // pred_region
      %s2660 = ssub.s32 256, 256
      %2661 = vsyncadd [#allocation4], %s2660
      %s2662 = sshll.u32 [#allocation14], 4
      %s2663 = int_to_ptr.vmem [resolvable:$true] %s2662
      %2668 = dma.vmem_to_hbm [thread:$0]  %s2663, 256, %s15, [#allocation4], 128, 128, 8
    $region93: #{decoder_block.1} parent=1 // pred_fallthru
      _
    // Predicated region
    $region94: #{decoder_block.1} parent=1 // pred_check
      _
    $region95: #{decoder_block.1} parent=1 // pred_check_branch
      %2670 = sbr.rel (0) target = $region97
    $region96: #{decoder_block.1} parent=1 // pred_region
      %2671 = dma.done [#allocation4], 256
    $region97: #{decoder_block.1} parent=1 // pred_fallthru
      _
    %2672 = vsyncpa [#allocation3], 1
    %2673 = vsyncpa [#allocation6], 1
    %2674 = vsyncpa [#allocation9], 1
    %2675 = vsyncpa [#allocation12], 1
    %2676 = vsyncpa [#allocation4], 1

</llo_original>
